<compile_context>
chip_gen: v7x
topology: tpu7x:2x2x1
jax: 0.10.0
libtpu: 0.0.40
codegen_flags: <defaults>
</compile_context>

<pallas_src>
import functools
import math

import jax
import jax.numpy as jnp
from jax import lax
from jax.experimental import pallas as pl
from jax.experimental.pallas import tpu as pltpu


# ---------------------------------------------------------------------------
# In-kernel helpers (traced / fully unrolled Python)
# ---------------------------------------------------------------------------
def _conv3x3_tanh(src, write_out, w_ref, b_ref, w_off, b_off,
                  Cin, Cout, H, WL, N):
    """3x3 same-conv + bias + tanh on a zero-padded VMEM tile.

    src:  Ref (Cin, H+2, WL + 2*N), zero-padded, lane index = w*N + n.
    write_out(co, y): stores the (H, WL) result for output channel co.
    Weights are flat in SMEM in PyTorch OIHW order [co, ci, kh, kw].
    """
    for co in range(Cout):
        parts = []
        for kh in range(3):           # 3 independent accumulation chains (ILP)
            acc = None
            for ci in range(Cin):
                for kw in range(3):
                    widx = w_off + ((co * Cin + ci) * 3 + kh) * 3 + kw
                    tap = src[ci, kh:kh + H, kw * N: kw * N + WL] * w_ref[widx]
                    acc = tap if acc is None else acc + tap
            parts.append(acc)
        y = jnp.tanh((parts[0] + parts[1]) + (parts[2] + b_ref[b_off + co]))
        write_out(co, y)


def _fused_kernel(Cin, H, W, N, w_offs, b_offs,
                  w_ref, b_ref, pa_ref, pb_ref, ua_ref, ub_ref,
                  x_ref, o_ref,
                  in_pad, big_a, big_b, small_a, small_b):
    Cmid = 3
    WL = W * N
    Hh, Wh = H // 2, W // 2
    WhL = Wh * N

    # Zero the padded scratch buffers (borders must be zero for "same" convs).
    in_pad[...] = jnp.zeros_like(in_pad)
    big_a[...] = jnp.zeros_like(big_a)
    big_b[...] = jnp.zeros_like(big_b)
    small_a[...] = jnp.zeros_like(small_a)
    small_b[...] = jnp.zeros_like(small_b)

    # Stage 0: place this batch-chunk's input into the padded buffer interior.
    in_pad[:, 1:1 + H, N:N + WL] = x_ref[0]

    def write_big(dst):
        def w(co, y):
            dst[co, 1:1 + H, N:N + WL] = y
        return w

    def write_small(dst):
        def w(co, y):
            dst[co, 1:1 + Hh, N:N + WhL] = y
        return w

    # conv_11 + tanh : (Cin, H, W) -> (3, H, W)
    _conv3x3_tanh(in_pad, write_big(big_a), w_ref, b_ref,
                  w_offs[0], b_offs[0], Cin, Cmid, H, WL, N)

    # avg_pool2d(2): big_a -> small_a   (out[c] = PA @ x[c] @ PB, lane-packed)
    PA = pa_ref[...]
    PB = pb_ref[...]
    for c in range(Cmid):
        t = jnp.dot(PA, big_a[c, 1:1 + H, N:N + WL],
                    preferred_element_type=jnp.float32)
        small_a[c, 1:1 + Hh, N:N + WhL] = jnp.dot(
            t, PB, preferred_element_type=jnp.float32)

    # conv_21 + tanh, conv_22 + tanh (half resolution)
    _conv3x3_tanh(small_a, write_small(small_b), w_ref, b_ref,
                  w_offs[1], b_offs[1], Cmid, Cmid, Hh, WhL, N)
    _conv3x3_tanh(small_b, write_small(small_a), w_ref, b_ref,
                  w_offs[2], b_offs[2], Cmid, Cmid, Hh, WhL, N)

    # nearest upsample x2: small_a -> big_a
    UA = ua_ref[...]
    UB = ub_ref[...]
    for c in range(Cmid):
        t = jnp.dot(UA, small_a[c, 1:1 + Hh, N:N + WhL],
                    preferred_element_type=jnp.float32)
        big_a[c, 1:1 + H, N:N + WL] = jnp.dot(
            t, UB, preferred_element_type=jnp.float32)

    # conv_31 + tanh
    _conv3x3_tanh(big_a, write_big(big_b), w_ref, b_ref,
                  w_offs[3], b_offs[3], Cmid, Cmid, H, WL, N)

    # conv_32 + tanh -> output (no padding needed for the destination)
    def write_out(co, y):
        o_ref[0, co, :, :] = y
    _conv3x3_tanh(big_b, write_out, w_ref, b_ref,
                  w_offs[4], b_offs[4], Cmid, Cin, H, WL, N)


# ---------------------------------------------------------------------------
# Host-side wrapper: layout glue + single pallas_call
# ---------------------------------------------------------------------------
_LAYERS = ["conv_11", "conv_21", "conv_22", "conv_31", "conv_32"]


def defensive_model1_forward(params, x):
    """x: (N, Cin, H, W) float32 -> (N, Cin, H, W) float32."""
    N, Cin, H, W = x.shape
    assert H % 2 == 0 and W % 2 == 0

    # Batch-in-lanes packing factor: aim for W*Nc == 128 lanes.
    cap = max(1, 128 // W) if W <= 128 else 1
    Nc = math.gcd(N, cap)
    G = N // Nc
    WL = W * Nc
    Hh, Wh = H // 2, W // 2
    WhL = Wh * Nc

    # Flatten all conv weights / biases into two SMEM scalar tables.
    w_list = [params[k][0].astype(jnp.float32) for k in _LAYERS]
    b_list = [params[k][1].astype(jnp.float32) for k in _LAYERS]
    w_offs, b_offs = [], []
    wo = bo = 0
    for w, b in zip(w_list, b_list):
        w_offs.append(wo)
        b_offs.append(bo)
        wo += int(w.size)
        bo += int(b.size)
    wf = jnp.concatenate([w.reshape(-1) for w in w_list])
    bf = jnp.concatenate([b.reshape(-1) for b in b_list])

    # Resampling matrices (exact 0.5 / 1.0 values), lane-packing aware.
    eye = functools.partial(jnp.eye, dtype=jnp.float32)
    ones = functools.partial(jnp.ones, dtype=jnp.float32)
    PA = 0.5 * jnp.kron(eye(Hh), ones((1, 2)))                    # (Hh, H)
    PB = jnp.kron(0.5 * jnp.kron(eye(Wh), ones((2, 1))), eye(Nc))  # (WL, WhL)
    UA = jnp.kron(eye(Hh), ones((2, 1)))                           # (H, Hh)
    UB = jnp.kron(jnp.kron(eye(Wh), ones((1, 2))), eye(Nc))        # (WhL, WL)

    # Layout glue: (N,C,H,W) -> (G, C, H, W*Nc) with lane index = w*Nc + n.
    xg = x.astype(jnp.float32).transpose(1, 2, 3, 0)               # (C,H,W,N)
    xg = xg.reshape(Cin, H, W, G, Nc).transpose(3, 0, 1, 2, 4)     # (G,C,H,W,Nc)
    xg = xg.reshape(G, Cin, H, WL)

    kernel = functools.partial(_fused_kernel, Cin, H, W, Nc,
                               tuple(w_offs), tuple(b_offs))

    out = pl.pallas_call(
        kernel,
        out_shape=jax.ShapeDtypeStruct((G, Cin, H, WL), jnp.float32),
        grid=(G,),
        in_specs=[
            pl.BlockSpec(memory_space=pltpu.MemorySpace.SMEM),   # weights
            pl.BlockSpec(memory_space=pltpu.MemorySpace.SMEM),   # biases
            pl.BlockSpec(PA.shape, lambda g: (0, 0)),
            pl.BlockSpec(PB.shape, lambda g: (0, 0)),
            pl.BlockSpec(UA.shape, lambda g: (0, 0)),
            pl.BlockSpec(UB.shape, lambda g: (0, 0)),
            pl.BlockSpec((1, Cin, H, WL), lambda g: (g, 0, 0, 0)),
        ],
        out_specs=pl.BlockSpec((1, Cin, H, WL), lambda g: (g, 0, 0, 0)),
        scratch_shapes=[
            pltpu.VMEM((Cin, H + 2, WL + 2 * Nc), jnp.float32),    # in_pad
            pltpu.VMEM((3, H + 2, WL + 2 * Nc), jnp.float32),      # big_a
            pltpu.VMEM((3, H + 2, WL + 2 * Nc), jnp.float32),      # big_b
            pltpu.VMEM((3, Hh + 2, WhL + 2 * Nc), jnp.float32),    # small_a
            pltpu.VMEM((3, Hh + 2, WhL + 2 * Nc), jnp.float32),    # small_b
        ],
        compiler_params=pltpu.CompilerParams(
            dimension_semantics=("parallel",)),
    )(wf, bf, PA, PB, UA, UB, xg)

    # Inverse layout glue back to (N, C, H, W).
    out = out.reshape(G, Cin, H, W, Nc).transpose(1, 2, 3, 0, 4)   # (C,H,W,G,Nc)
    out = out.reshape(Cin, H, W, N).transpose(3, 0, 1, 2)          # (N,C,H,W)
    return out


# ---------------------------------------------------------------------------
# Parameters (deterministic PyTorch-style Conv2d init) + pure-JAX reference
# ---------------------------------------------------------------------------
def init_params(key, in_channels=1):
    def conv_init(k, cin, cout):
        k1, k2 = jax.random.split(k)
        bound = 1.0 / float(cin * 3 * 3) ** 0.5
        w = jax.random.uniform(k1, (cout, cin, 3, 3), jnp.float32, -bound, bound)
        b = jax.random.uniform(k2, (cout,), jnp.float32, -bound, bound)
        return w, b

    ks = jax.random.split(key, 5)
    return {
        "conv_11": conv_init(ks[0], in_channels, 3),
        "conv_21": conv_init(ks[1], 3, 3),
        "conv_22": conv_init(ks[2], 3, 3),
        "conv_31": conv_init(ks[3], 3, 3),
        "conv_32": conv_init(ks[4], 3, in_channels),
    }


def _conv_ref(x, w, b):
    y = lax.conv_general_dilated(x, w, (1, 1), ((1, 1), (1, 1)),
                                 dimension_numbers=("NCHW", "OIHW", "NCHW"))
    return jnp.tanh(y + b[None, :, None, None])


def forward_ref(params, x):
    x = _conv_ref(x, *params["conv_11"])
    n, c, h, w = x.shape
    x = x.reshape(n, c, h // 2, 2, w // 2, 2).mean(axis=(3, 5))   # avg_pool2d(2)
    x = _conv_ref(x, *params["conv_21"])
    x = _conv_ref(x, *params["conv_22"])
    x = jnp.repeat(jnp.repeat(x, 2, axis=2), 2, axis=3)           # nearest x2
    x = _conv_ref(x, *params["conv_31"])
    x = _conv_ref(x, *params["conv_32"])
    return x


if __name__ == "__main__":
    key = jax.random.PRNGKey(0)
    pkey, xkey = jax.random.split(key)
    params = init_params(pkey, in_channels=1)

    # MNIST-like mini-batch [-1, 1, H, W]; batch 16 so each of the 2 grid
    # steps packs 8 samples into 128 lanes (and v7x megacore gets 2 chunks).
    x = jax.random.normal(xkey, (16, 1, 16, 16), jnp.float32)

    fwd = jax.jit(defensive_model1_forward)
    out = jax.block_until_ready(fwd(params, x))
    ref = jax.block_until_ready(forward_ref(params, x))

    assert out.shape == x.shape, out.shape
    assert out.dtype == jnp.float32
    err = float(jnp.max(jnp.abs(out - ref)))
    assert err < 2e-2, f"mismatch vs reference: {err}"

    print("KERNEL_OK")
</pallas_src>

<mosaic_0001>
module attributes {stable_mosaic.version = 11 : i64} {
  func.func @_fused_kernel(%arg0: i32, %arg1: memref<297xf32, #tpu.memory_space<smem>>, %arg2: memref<13xf32, #tpu.memory_space<smem>>, %arg3: memref<8x16xf32, #tpu.memory_space<vmem>>, %arg4: memref<128x64xf32, #tpu.memory_space<vmem>>, %arg5: memref<16x8xf32, #tpu.memory_space<vmem>>, %arg6: memref<64x128xf32, #tpu.memory_space<vmem>>, %arg7: memref<1x1x16x128xf32, #tpu.memory_space<vmem>>, %arg8: memref<1x1x16x128xf32, #tpu.memory_space<vmem>>, %arg9: memref<1x18x144xf32, #tpu.memory_space<vmem>>, %arg10: memref<3x18x144xf32, #tpu.memory_space<vmem>>, %arg11: memref<3x18x144xf32, #tpu.memory_space<vmem>>, %arg12: memref<3x10x80xf32, #tpu.memory_space<vmem>>, %arg13: memref<3x10x80xf32, #tpu.memory_space<vmem>>) attributes {dimension_semantics = [#tpu.dimension_semantics<parallel>], iteration_bounds = array<i64: 2>, scalar_prefetch = 0 : i64, scratch_operands = 5 : i64, tpu.core_type = #tpu.core_type<tc>, window_params = [{transform_indices = @transform_0, window_bounds = array<i64: 297>}, {transform_indices = @transform_1, window_bounds = array<i64: 13>}, {pipeline_mode = #tpu.pipeline_mode<synchronous>, transform_indices = @transform_2, window_bounds = array<i64: 8, 16>}, {pipeline_mode = #tpu.pipeline_mode<synchronous>, transform_indices = @transform_3, window_bounds = array<i64: 128, 64>}, {pipeline_mode = #tpu.pipeline_mode<synchronous>, transform_indices = @transform_4, window_bounds = array<i64: 16, 8>}, {pipeline_mode = #tpu.pipeline_mode<synchronous>, transform_indices = @transform_5, window_bounds = array<i64: 64, 128>}, {transform_indices = @transform_6, window_bounds = array<i64: 1, 1, 16, 128>}, {transform_indices = @transform_7, window_bounds = array<i64: 1, 1, 16, 128>}]} {
    %cst = arith.constant 0.000000e+00 : f32
    %0 = vector.broadcast %cst : f32 to vector<1x18x144xf32>
    %c0 = arith.constant 0 : index
    %c0_0 = arith.constant 0 : index
    %c0_1 = arith.constant 0 : index
    %1 = vector.load %arg9[%c0, %c0_0, %c0_1] : memref<1x18x144xf32, #tpu.memory_space<vmem>>, vector<1x18x144xf32>
    tpu.vector_store %arg9[%c0, %c0_0, %c0_1], %0 {strides = array<i32>} : memref<1x18x144xf32, #tpu.memory_space<vmem>>, vector<1x18x144xf32>,
    %cst_2 = arith.constant 0.000000e+00 : f32
    %2 = vector.broadcast %cst_2 : f32 to vector<3x18x144xf32>
    %c0_3 = arith.constant 0 : index
    %c0_4 = arith.constant 0 : index
    %c0_5 = arith.constant 0 : index
    %3 = vector.load %arg10[%c0_3, %c0_4, %c0_5] : memref<3x18x144xf32, #tpu.memory_space<vmem>>, vector<3x18x144xf32>
    tpu.vector_store %arg10[%c0_3, %c0_4, %c0_5], %2 {strides = array<i32>} : memref<3x18x144xf32, #tpu.memory_space<vmem>>, vector<3x18x144xf32>,
    %cst_6 = arith.constant 0.000000e+00 : f32
    %4 = vector.broadcast %cst_6 : f32 to vector<3x18x144xf32>
    %c0_7 = arith.constant 0 : index
    %c0_8 = arith.constant 0 : index
    %c0_9 = arith.constant 0 : index
    %5 = vector.load %arg11[%c0_7, %c0_8, %c0_9] : memref<3x18x144xf32, #tpu.memory_space<vmem>>, vector<3x18x144xf32>
    tpu.vector_store %arg11[%c0_7, %c0_8, %c0_9], %4 {strides = array<i32>} : memref<3x18x144xf32, #tpu.memory_space<vmem>>, vector<3x18x144xf32>,
    %cst_10 = arith.constant 0.000000e+00 : f32
    %6 = vector.broadcast %cst_10 : f32 to vector<3x10x80xf32>
    %c0_11 = arith.constant 0 : index
    %c0_12 = arith.constant 0 : index
    %c0_13 = arith.constant 0 : index
    %7 = vector.load %arg12[%c0_11, %c0_12, %c0_13] : memref<3x10x80xf32, #tpu.memory_space<vmem>>, vector<3x10x80xf32>
    tpu.vector_store %arg12[%c0_11, %c0_12, %c0_13], %6 {strides = array<i32>} : memref<3x10x80xf32, #tpu.memory_space<vmem>>, vector<3x10x80xf32>,
    %cst_14 = arith.constant 0.000000e+00 : f32
    %8 = vector.broadcast %cst_14 : f32 to vector<3x10x80xf32>
    %c0_15 = arith.constant 0 : index
    %c0_16 = arith.constant 0 : index
    %c0_17 = arith.constant 0 : index
    %9 = vector.load %arg13[%c0_15, %c0_16, %c0_17] : memref<3x10x80xf32, #tpu.memory_space<vmem>>, vector<3x10x80xf32>
    tpu.vector_store %arg13[%c0_15, %c0_16, %c0_17], %8 {strides = array<i32>} : memref<3x10x80xf32, #tpu.memory_space<vmem>>, vector<3x10x80xf32>,
    %c0_18 = arith.constant 0 : index
    %c0_19 = arith.constant 0 : index
    %c0_20 = arith.constant 0 : index
    %c0_21 = arith.constant 0 : index
    %10 = vector.load %arg7[%c0_18, %c0_19, %c0_20, %c0_21] : memref<1x1x16x128xf32, #tpu.memory_space<vmem>>, vector<1x1x16x128xf32>
    %11 = vector.shape_cast %10 : vector<1x1x16x128xf32> to vector<1x16x128xf32>
    %c0_22 = arith.constant 0 : index
    %c1 = arith.constant 1 : index
    %c8 = arith.constant 8 : index
    %12 = vector.load %arg9[%c0_22, %c1, %c8] : memref<1x18x144xf32, #tpu.memory_space<vmem>>, vector<1x16x128xf32>
    tpu.vector_store %arg9[%c0_22, %c1, %c8], %11 {strides = array<i32>} : memref<1x18x144xf32, #tpu.memory_space<vmem>>, vector<1x16x128xf32>,
    %c0_23 = arith.constant 0 : index
    %c0_24 = arith.constant 0 : index
    %c0_25 = arith.constant 0 : index
    %13 = vector.load %arg9[%c0_23, %c0_24, %c0_25] : memref<1x18x144xf32, #tpu.memory_space<vmem>>, vector<1x16x128xf32>
    %14 = vector.shape_cast %13 : vector<1x16x128xf32> to vector<16x128xf32>
    %c0_26 = arith.constant 0 : index
    %15 = memref.load %arg1[%c0_26] : memref<297xf32, #tpu.memory_space<smem>>
    %16 = vector.broadcast %15 : f32 to vector<16x128xf32>
    %17 = arith.mulf %14, %16 : vector<16x128xf32>
    %c0_27 = arith.constant 0 : index
    %c0_28 = arith.constant 0 : index
    %c8_29 = arith.constant 8 : index
    %18 = vector.load %arg9[%c0_27, %c0_28, %c8_29] : memref<1x18x144xf32, #tpu.memory_space<vmem>>, vector<1x16x128xf32>
    %19 = vector.shape_cast %18 : vector<1x16x128xf32> to vector<16x128xf32>
    %c1_30 = arith.constant 1 : index
    %20 = memref.load %arg1[%c1_30] : memref<297xf32, #tpu.memory_space<smem>>
    %21 = vector.broadcast %20 : f32 to vector<16x128xf32>
    %22 = arith.mulf %19, %21 : vector<16x128xf32>
    %23 = arith.addf %17, %22 : vector<16x128xf32>
    %c0_31 = arith.constant 0 : index
    %c0_32 = arith.constant 0 : index
    %c16 = arith.constant 16 : index
    %24 = vector.load %arg9[%c0_31, %c0_32, %c16] : memref<1x18x144xf32, #tpu.memory_space<vmem>>, vector<1x16x128xf32>
    %25 = vector.shape_cast %24 : vector<1x16x128xf32> to vector<16x128xf32>
    %c2 = arith.constant 2 : index
    %26 = memref.load %arg1[%c2] : memref<297xf32, #tpu.memory_space<smem>>
    %27 = vector.broadcast %26 : f32 to vector<16x128xf32>
    %28 = arith.mulf %25, %27 : vector<16x128xf32>
    %29 = arith.addf %23, %28 : vector<16x128xf32>
    %c0_33 = arith.constant 0 : index
    %c1_34 = arith.constant 1 : index
    %c0_35 = arith.constant 0 : index
    %30 = vector.load %arg9[%c0_33, %c1_34, %c0_35] : memref<1x18x144xf32, #tpu.memory_space<vmem>>, vector<1x16x128xf32>
    %31 = vector.shape_cast %30 : vector<1x16x128xf32> to vector<16x128xf32>
    %c3 = arith.constant 3 : index
    %32 = memref.load %arg1[%c3] : memref<297xf32, #tpu.memory_space<smem>>
    %33 = vector.broadcast %32 : f32 to vector<16x128xf32>
    %34 = arith.mulf %31, %33 : vector<16x128xf32>
    %c0_36 = arith.constant 0 : index
    %c1_37 = arith.constant 1 : index
    %c8_38 = arith.constant 8 : index
    %35 = vector.load %arg9[%c0_36, %c1_37, %c8_38] : memref<1x18x144xf32, #tpu.memory_space<vmem>>, vector<1x16x128xf32>
    %36 = vector.shape_cast %35 : vector<1x16x128xf32> to vector<16x128xf32>
    %c4 = arith.constant 4 : index
    %37 = memref.load %arg1[%c4] : memref<297xf32, #tpu.memory_space<smem>>
    %38 = vector.broadcast %37 : f32 to vector<16x128xf32>
    %39 = arith.mulf %36, %38 : vector<16x128xf32>
    %40 = arith.addf %34, %39 : vector<16x128xf32>
    %c0_39 = arith.constant 0 : index
    %c1_40 = arith.constant 1 : index
    %c16_41 = arith.constant 16 : index
    %41 = vector.load %arg9[%c0_39, %c1_40, %c16_41] : memref<1x18x144xf32, #tpu.memory_space<vmem>>, vector<1x16x128xf32>
    %42 = vector.shape_cast %41 : vector<1x16x128xf32> to vector<16x128xf32>
    %c5 = arith.constant 5 : index
    %43 = memref.load %arg1[%c5] : memref<297xf32, #tpu.memory_space<smem>>
    %44 = vector.broadcast %43 : f32 to vector<16x128xf32>
    %45 = arith.mulf %42, %44 : vector<16x128xf32>
    %46 = arith.addf %40, %45 : vector<16x128xf32>
    %c0_42 = arith.constant 0 : index
    %c2_43 = arith.constant 2 : index
    %c0_44 = arith.constant 0 : index
    %47 = vector.load %arg9[%c0_42, %c2_43, %c0_44] : memref<1x18x144xf32, #tpu.memory_space<vmem>>, vector<1x16x128xf32>
    %48 = vector.shape_cast %47 : vector<1x16x128xf32> to vector<16x128xf32>
    %c6 = arith.constant 6 : index
    %49 = memref.load %arg1[%c6] : memref<297xf32, #tpu.memory_space<smem>>
    %50 = vector.broadcast %49 : f32 to vector<16x128xf32>
    %51 = arith.mulf %48, %50 : vector<16x128xf32>
    %c0_45 = arith.constant 0 : index
    %c2_46 = arith.constant 2 : index
    %c8_47 = arith.constant 8 : index
    %52 = vector.load %arg9[%c0_45, %c2_46, %c8_47] : memref<1x18x144xf32, #tpu.memory_space<vmem>>, vector<1x16x128xf32>
    %53 = vector.shape_cast %52 : vector<1x16x128xf32> to vector<16x128xf32>
    %c7 = arith.constant 7 : index
    %54 = memref.load %arg1[%c7] : memref<297xf32, #tpu.memory_space<smem>>
    %55 = vector.broadcast %54 : f32 to vector<16x128xf32>
    %56 = arith.mulf %53, %55 : vector<16x128xf32>
    %57 = arith.addf %51, %56 : vector<16x128xf32>
    %c0_48 = arith.constant 0 : index
    %c2_49 = arith.constant 2 : index
    %c16_50 = arith.constant 16 : index
    %58 = vector.load %arg9[%c0_48, %c2_49, %c16_50] : memref<1x18x144xf32, #tpu.memory_space<vmem>>, vector<1x16x128xf32>
    %59 = vector.shape_cast %58 : vector<1x16x128xf32> to vector<16x128xf32>
    %c8_51 = arith.constant 8 : index
    %60 = memref.load %arg1[%c8_51] : memref<297xf32, #tpu.memory_space<smem>>
    %61 = vector.broadcast %60 : f32 to vector<16x128xf32>
    %62 = arith.mulf %59, %61 : vector<16x128xf32>
    %63 = arith.addf %57, %62 : vector<16x128xf32>
    %64 = arith.addf %29, %46 : vector<16x128xf32>
    %c0_52 = arith.constant 0 : index
    %65 = memref.load %arg2[%c0_52] : memref<13xf32, #tpu.memory_space<smem>>
    %66 = vector.broadcast %65 : f32 to vector<16x128xf32>
    %67 = arith.addf %63, %66 : vector<16x128xf32>
    %68 = arith.addf %64, %67 : vector<16x128xf32>
    %69 = math.tanh %68 : vector<16x128xf32>
    %c0_53 = arith.constant 0 : index
    %c1_54 = arith.constant 1 : index
    %c8_55 = arith.constant 8 : index
    %70 = vector.load %arg10[%c0_53, %c1_54, %c8_55] : memref<3x18x144xf32, #tpu.memory_space<vmem>>, vector<1x16x128xf32>
    %71 = vector.shape_cast %70 : vector<1x16x128xf32> to vector<16x128xf32>
    %72 = vector.shape_cast %69 : vector<16x128xf32> to vector<1x16x128xf32>
    tpu.vector_store %arg10[%c0_53, %c1_54, %c8_55], %72 {strides = array<i32>} : memref<3x18x144xf32, #tpu.memory_space<vmem>>, vector<1x16x128xf32>,
    %c0_56 = arith.constant 0 : index
    %c0_57 = arith.constant 0 : index
    %c0_58 = arith.constant 0 : index
    %73 = vector.load %arg9[%c0_56, %c0_57, %c0_58] : memref<1x18x144xf32, #tpu.memory_space<vmem>>, vector<1x16x128xf32>
    %74 = vector.shape_cast %73 : vector<1x16x128xf32> to vector<16x128xf32>
    %c9 = arith.constant 9 : index
    %75 = memref.load %arg1[%c9] : memref<297xf32, #tpu.memory_space<smem>>
    %76 = vector.broadcast %75 : f32 to vector<16x128xf32>
    %77 = arith.mulf %74, %76 : vector<16x128xf32>
    %c0_59 = arith.constant 0 : index
    %c0_60 = arith.constant 0 : index
    %c8_61 = arith.constant 8 : index
    %78 = vector.load %arg9[%c0_59, %c0_60, %c8_61] : memref<1x18x144xf32, #tpu.memory_space<vmem>>, vector<1x16x128xf32>
    %79 = vector.shape_cast %78 : vector<1x16x128xf32> to vector<16x128xf32>
    %c10 = arith.constant 10 : index
    %80 = memref.load %arg1[%c10] : memref<297xf32, #tpu.memory_space<smem>>
    %81 = vector.broadcast %80 : f32 to vector<16x128xf32>
    %82 = arith.mulf %79, %81 : vector<16x128xf32>
    %83 = arith.addf %77, %82 : vector<16x128xf32>
    %c0_62 = arith.constant 0 : index
    %c0_63 = arith.constant 0 : index
    %c16_64 = arith.constant 16 : index
    %84 = vector.load %arg9[%c0_62, %c0_63, %c16_64] : memref<1x18x144xf32, #tpu.memory_space<vmem>>, vector<1x16x128xf32>
    %85 = vector.shape_cast %84 : vector<1x16x128xf32> to vector<16x128xf32>
    %c11 = arith.constant 11 : index
    %86 = memref.load %arg1[%c11] : memref<297xf32, #tpu.memory_space<smem>>
    %87 = vector.broadcast %86 : f32 to vector<16x128xf32>
    %88 = arith.mulf %85, %87 : vector<16x128xf32>
    %89 = arith.addf %83, %88 : vector<16x128xf32>
    %c0_65 = arith.constant 0 : index
    %c1_66 = arith.constant 1 : index
    %c0_67 = arith.constant 0 : index
    %90 = vector.load %arg9[%c0_65, %c1_66, %c0_67] : memref<1x18x144xf32, #tpu.memory_space<vmem>>, vector<1x16x128xf32>
    %91 = vector.shape_cast %90 : vector<1x16x128xf32> to vector<16x128xf32>
    %c12 = arith.constant 12 : index
    %92 = memref.load %arg1[%c12] : memref<297xf32, #tpu.memory_space<smem>>
    %93 = vector.broadcast %92 : f32 to vector<16x128xf32>
    %94 = arith.mulf %91, %93 : vector<16x128xf32>
    %c0_68 = arith.constant 0 : index
    %c1_69 = arith.constant 1 : index
    %c8_70 = arith.constant 8 : index
    %95 = vector.load %arg9[%c0_68, %c1_69, %c8_70] : memref<1x18x144xf32, #tpu.memory_space<vmem>>, vector<1x16x128xf32>
    %96 = vector.shape_cast %95 : vector<1x16x128xf32> to vector<16x128xf32>
    %c13 = arith.constant 13 : index
    %97 = memref.load %arg1[%c13] : memref<297xf32, #tpu.memory_space<smem>>
    %98 = vector.broadcast %97 : f32 to vector<16x128xf32>
    %99 = arith.mulf %96, %98 : vector<16x128xf32>
    %100 = arith.addf %94, %99 : vector<16x128xf32>
    %c0_71 = arith.constant 0 : index
    %c1_72 = arith.constant 1 : index
    %c16_73 = arith.constant 16 : index
    %101 = vector.load %arg9[%c0_71, %c1_72, %c16_73] : memref<1x18x144xf32, #tpu.memory_space<vmem>>, vector<1x16x128xf32>
    %102 = vector.shape_cast %101 : vector<1x16x128xf32> to vector<16x128xf32>
    %c14 = arith.constant 14 : index
    %103 = memref.load %arg1[%c14] : memref<297xf32, #tpu.memory_space<smem>>
    %104 = vector.broadcast %103 : f32 to vector<16x128xf32>
    %105 = arith.mulf %102, %104 : vector<16x128xf32>
    %106 = arith.addf %100, %105 : vector<16x128xf32>
    %c0_74 = arith.constant 0 : index
    %c2_75 = arith.constant 2 : index
    %c0_76 = arith.constant 0 : index
    %107 = vector.load %arg9[%c0_74, %c2_75, %c0_76] : memref<1x18x144xf32, #tpu.memory_space<vmem>>, vector<1x16x128xf32>
    %108 = vector.shape_cast %107 : vector<1x16x128xf32> to vector<16x128xf32>
    %c15 = arith.constant 15 : index
    %109 = memref.load %arg1[%c15] : memref<297xf32, #tpu.memory_space<smem>>
    %110 = vector.broadcast %109 : f32 to vector<16x128xf32>
    %111 = arith.mulf %108, %110 : vector<16x128xf32>
    %c0_77 = arith.constant 0 : index
    %c2_78 = arith.constant 2 : index
    %c8_79 = arith.constant 8 : index
    %112 = vector.load %arg9[%c0_77, %c2_78, %c8_79] : memref<1x18x144xf32, #tpu.memory_space<vmem>>, vector<1x16x128xf32>
    %113 = vector.shape_cast %112 : vector<1x16x128xf32> to vector<16x128xf32>
    %c16_80 = arith.constant 16 : index
    %114 = memref.load %arg1[%c16_80] : memref<297xf32, #tpu.memory_space<smem>>
    %115 = vector.broadcast %114 : f32 to vector<16x128xf32>
    %116 = arith.mulf %113, %115 : vector<16x128xf32>
    %117 = arith.addf %111, %116 : vector<16x128xf32>
    %c0_81 = arith.constant 0 : index
    %c2_82 = arith.constant 2 : index
    %c16_83 = arith.constant 16 : index
    %118 = vector.load %arg9[%c0_81, %c2_82, %c16_83] : memref<1x18x144xf32, #tpu.memory_space<vmem>>, vector<1x16x128xf32>
    %119 = vector.shape_cast %118 : vector<1x16x128xf32> to vector<16x128xf32>
    %c17 = arith.constant 17 : index
    %120 = memref.load %arg1[%c17] : memref<297xf32, #tpu.memory_space<smem>>
    %121 = vector.broadcast %120 : f32 to vector<16x128xf32>
    %122 = arith.mulf %119, %121 : vector<16x128xf32>
    %123 = arith.addf %117, %122 : vector<16x128xf32>
    %124 = arith.addf %89, %106 : vector<16x128xf32>
    %c1_84 = arith.constant 1 : index
    %125 = memref.load %arg2[%c1_84] : memref<13xf32, #tpu.memory_space<smem>>
    %126 = vector.broadcast %125 : f32 to vector<16x128xf32>
    %127 = arith.addf %123, %126 : vector<16x128xf32>
    %128 = arith.addf %124, %127 : vector<16x128xf32>
    %129 = math.tanh %128 : vector<16x128xf32>
    %c1_85 = arith.constant 1 : index
    %c1_86 = arith.constant 1 : index
    %c8_87 = arith.constant 8 : index
    %130 = vector.load %arg10[%c1_85, %c1_86, %c8_87] : memref<3x18x144xf32, #tpu.memory_space<vmem>>, vector<1x16x128xf32>
    %131 = vector.shape_cast %130 : vector<1x16x128xf32> to vector<16x128xf32>
    %132 = vector.shape_cast %129 : vector<16x128xf32> to vector<1x16x128xf32>
    tpu.vector_store %arg10[%c1_85, %c1_86, %c8_87], %132 {strides = array<i32>} : memref<3x18x144xf32, #tpu.memory_space<vmem>>, vector<1x16x128xf32>,
    %c0_88 = arith.constant 0 : index
    %c0_89 = arith.constant 0 : index
    %c0_90 = arith.constant 0 : index
    %133 = vector.load %arg9[%c0_88, %c0_89, %c0_90] : memref<1x18x144xf32, #tpu.memory_space<vmem>>, vector<1x16x128xf32>
    %134 = vector.shape_cast %133 : vector<1x16x128xf32> to vector<16x128xf32>
    %c18 = arith.constant 18 : index
    %135 = memref.load %arg1[%c18] : memref<297xf32, #tpu.memory_space<smem>>
    %136 = vector.broadcast %135 : f32 to vector<16x128xf32>
    %137 = arith.mulf %134, %136 : vector<16x128xf32>
    %c0_91 = arith.constant 0 : index
    %c0_92 = arith.constant 0 : index
    %c8_93 = arith.constant 8 : index
    %138 = vector.load %arg9[%c0_91, %c0_92, %c8_93] : memref<1x18x144xf32, #tpu.memory_space<vmem>>, vector<1x16x128xf32>
    %139 = vector.shape_cast %138 : vector<1x16x128xf32> to vector<16x128xf32>
    %c19 = arith.constant 19 : index
    %140 = memref.load %arg1[%c19] : memref<297xf32, #tpu.memory_space<smem>>
    %141 = vector.broadcast %140 : f32 to vector<16x128xf32>
    %142 = arith.mulf %139, %141 : vector<16x128xf32>
    %143 = arith.addf %137, %142 : vector<16x128xf32>
    %c0_94 = arith.constant 0 : index
    %c0_95 = arith.constant 0 : index
    %c16_96 = arith.constant 16 : index
    %144 = vector.load %arg9[%c0_94, %c0_95, %c16_96] : memref<1x18x144xf32, #tpu.memory_space<vmem>>, vector<1x16x128xf32>
    %145 = vector.shape_cast %144 : vector<1x16x128xf32> to vector<16x128xf32>
    %c20 = arith.constant 20 : index
    %146 = memref.load %arg1[%c20] : memref<297xf32, #tpu.memory_space<smem>>
    %147 = vector.broadcast %146 : f32 to vector<16x128xf32>
    %148 = arith.mulf %145, %147 : vector<16x128xf32>
    %149 = arith.addf %143, %148 : vector<16x128xf32>
    %c0_97 = arith.constant 0 : index
    %c1_98 = arith.constant 1 : index
    %c0_99 = arith.constant 0 : index
    %150 = vector.load %arg9[%c0_97, %c1_98, %c0_99] : memref<1x18x144xf32, #tpu.memory_space<vmem>>, vector<1x16x128xf32>
    %151 = vector.shape_cast %150 : vector<1x16x128xf32> to vector<16x128xf32>
    %c21 = arith.constant 21 : index
    %152 = memref.load %arg1[%c21] : memref<297xf32, #tpu.memory_space<smem>>
    %153 = vector.broadcast %152 : f32 to vector<16x128xf32>
    %154 = arith.mulf %151, %153 : vector<16x128xf32>
    %c0_100 = arith.constant 0 : index
    %c1_101 = arith.constant 1 : index
    %c8_102 = arith.constant 8 : index
    %155 = vector.load %arg9[%c0_100, %c1_101, %c8_102] : memref<1x18x144xf32, #tpu.memory_space<vmem>>, vector<1x16x128xf32>
    %156 = vector.shape_cast %155 : vector<1x16x128xf32> to vector<16x128xf32>
    %c22 = arith.constant 22 : index
    %157 = memref.load %arg1[%c22] : memref<297xf32, #tpu.memory_space<smem>>
    %158 = vector.broadcast %157 : f32 to vector<16x128xf32>
    %159 = arith.mulf %156, %158 : vector<16x128xf32>
    %160 = arith.addf %154, %159 : vector<16x128xf32>
    %c0_103 = arith.constant 0 : index
    %c1_104 = arith.constant 1 : index
    %c16_105 = arith.constant 16 : index
    %161 = vector.load %arg9[%c0_103, %c1_104, %c16_105] : memref<1x18x144xf32, #tpu.memory_space<vmem>>, vector<1x16x128xf32>
    %162 = vector.shape_cast %161 : vector<1x16x128xf32> to vector<16x128xf32>
    %c23 = arith.constant 23 : index
    %163 = memref.load %arg1[%c23] : memref<297xf32, #tpu.memory_space<smem>>
    %164 = vector.broadcast %163 : f32 to vector<16x128xf32>
    %165 = arith.mulf %162, %164 : vector<16x128xf32>
    %166 = arith.addf %160, %165 : vector<16x128xf32>
    %c0_106 = arith.constant 0 : index
    %c2_107 = arith.constant 2 : index
    %c0_108 = arith.constant 0 : index
    %167 = vector.load %arg9[%c0_106, %c2_107, %c0_108] : memref<1x18x144xf32, #tpu.memory_space<vmem>>, vector<1x16x128xf32>
    %168 = vector.shape_cast %167 : vector<1x16x128xf32> to vector<16x128xf32>
    %c24 = arith.constant 24 : index
    %169 = memref.load %arg1[%c24] : memref<297xf32, #tpu.memory_space<smem>>
    %170 = vector.broadcast %169 : f32 to vector<16x128xf32>
    %171 = arith.mulf %168, %170 : vector<16x128xf32>
    %c0_109 = arith.constant 0 : index
    %c2_110 = arith.constant 2 : index
    %c8_111 = arith.constant 8 : index
    %172 = vector.load %arg9[%c0_109, %c2_110, %c8_111] : memref<1x18x144xf32, #tpu.memory_space<vmem>>, vector<1x16x128xf32>
    %173 = vector.shape_cast %172 : vector<1x16x128xf32> to vector<16x128xf32>
    %c25 = arith.constant 25 : index
    %174 = memref.load %arg1[%c25] : memref<297xf32, #tpu.memory_space<smem>>
    %175 = vector.broadcast %174 : f32 to vector<16x128xf32>
    %176 = arith.mulf %173, %175 : vector<16x128xf32>
    %177 = arith.addf %171, %176 : vector<16x128xf32>
    %c0_112 = arith.constant 0 : index
    %c2_113 = arith.constant 2 : index
    %c16_114 = arith.constant 16 : index
    %178 = vector.load %arg9[%c0_112, %c2_113, %c16_114] : memref<1x18x144xf32, #tpu.memory_space<vmem>>, vector<1x16x128xf32>
    %179 = vector.shape_cast %178 : vector<1x16x128xf32> to vector<16x128xf32>
    %c26 = arith.constant 26 : index
    %180 = memref.load %arg1[%c26] : memref<297xf32, #tpu.memory_space<smem>>
    %181 = vector.broadcast %180 : f32 to vector<16x128xf32>
    %182 = arith.mulf %179, %181 : vector<16x128xf32>
    %183 = arith.addf %177, %182 : vector<16x128xf32>
    %184 = arith.addf %149, %166 : vector<16x128xf32>
    %c2_115 = arith.constant 2 : index
    %185 = memref.load %arg2[%c2_115] : memref<13xf32, #tpu.memory_space<smem>>
    %186 = vector.broadcast %185 : f32 to vector<16x128xf32>
    %187 = arith.addf %183, %186 : vector<16x128xf32>
    %188 = arith.addf %184, %187 : vector<16x128xf32>
    %189 = math.tanh %188 : vector<16x128xf32>
    %c2_116 = arith.constant 2 : index
    %c1_117 = arith.constant 1 : index
    %c8_118 = arith.constant 8 : index
    %190 = vector.load %arg10[%c2_116, %c1_117, %c8_118] : memref<3x18x144xf32, #tpu.memory_space<vmem>>, vector<1x16x128xf32>
    %191 = vector.shape_cast %190 : vector<1x16x128xf32> to vector<16x128xf32>
    %192 = vector.shape_cast %189 : vector<16x128xf32> to vector<1x16x128xf32>
    tpu.vector_store %arg10[%c2_116, %c1_117, %c8_118], %192 {strides = array<i32>} : memref<3x18x144xf32, #tpu.memory_space<vmem>>, vector<1x16x128xf32>,
    %c0_119 = arith.constant 0 : index
    %c0_120 = arith.constant 0 : index
    %193 = vector.load %arg3[%c0_119, %c0_120] : memref<8x16xf32, #tpu.memory_space<vmem>>, vector<8x16xf32>
    %c0_121 = arith.constant 0 : index
    %c0_122 = arith.constant 0 : index
    %194 = vector.load %arg4[%c0_121, %c0_122] : memref<128x64xf32, #tpu.memory_space<vmem>>, vector<128x64xf32>
    %c0_123 = arith.constant 0 : index
    %c1_124 = arith.constant 1 : index
    %c8_125 = arith.constant 8 : index
    %195 = vector.load %arg10[%c0_123, %c1_124, %c8_125] : memref<3x18x144xf32, #tpu.memory_space<vmem>>, vector<1x16x128xf32>
    %196 = vector.shape_cast %195 : vector<1x16x128xf32> to vector<16x128xf32>
    %cst_126 = arith.constant dense<0.000000e+00> : vector<8x128xf32>
    %197 = tpu.matmul %193, %196, %cst_126 {dimension_numbers = #tpu.dot_dimension_numbers<[1], [0], [0], [1], [0, 0, 1, 1], [], []>} : vector<8x16xf32>, vector<16x128xf32>, vector<8x128xf32> -> vector<8x128xf32>
    %cst_127 = arith.constant dense<0.000000e+00> : vector<8x64xf32>
    %198 = tpu.matmul %197, %194, %cst_127 {dimension_numbers = #tpu.dot_dimension_numbers<[1], [0], [0], [1], [0, 0, 1, 1], [], []>} : vector<8x128xf32>, vector<128x64xf32>, vector<8x64xf32> -> vector<8x64xf32>
    %c0_128 = arith.constant 0 : index
    %c1_129 = arith.constant 1 : index
    %c8_130 = arith.constant 8 : index
    %199 = vector.load %arg12[%c0_128, %c1_129, %c8_130] : memref<3x10x80xf32, #tpu.memory_space<vmem>>, vector<1x8x64xf32>
    %200 = vector.shape_cast %199 : vector<1x8x64xf32> to vector<8x64xf32>
    %201 = vector.shape_cast %198 : vector<8x64xf32> to vector<1x8x64xf32>
    tpu.vector_store %arg12[%c0_128, %c1_129, %c8_130], %201 {strides = array<i32>} : memref<3x10x80xf32, #tpu.memory_space<vmem>>, vector<1x8x64xf32>,
    %c1_131 = arith.constant 1 : index
    %c1_132 = arith.constant 1 : index
    %c8_133 = arith.constant 8 : index
    %202 = vector.load %arg10[%c1_131, %c1_132, %c8_133] : memref<3x18x144xf32, #tpu.memory_space<vmem>>, vector<1x16x128xf32>
    %203 = vector.shape_cast %202 : vector<1x16x128xf32> to vector<16x128xf32>
    %cst_134 = arith.constant dense<0.000000e+00> : vector<8x128xf32>
    %204 = tpu.matmul %193, %203, %cst_134 {dimension_numbers = #tpu.dot_dimension_numbers<[1], [0], [0], [1], [0, 0, 1, 1], [], []>} : vector<8x16xf32>, vector<16x128xf32>, vector<8x128xf32> -> vector<8x128xf32>
    %cst_135 = arith.constant dense<0.000000e+00> : vector<8x64xf32>
    %205 = tpu.matmul %204, %194, %cst_135 {dimension_numbers = #tpu.dot_dimension_numbers<[1], [0], [0], [1], [0, 0, 1, 1], [], []>} : vector<8x128xf32>, vector<128x64xf32>, vector<8x64xf32> -> vector<8x64xf32>
    %c1_136 = arith.constant 1 : index
    %c1_137 = arith.constant 1 : index
    %c8_138 = arith.constant 8 : index
    %206 = vector.load %arg12[%c1_136, %c1_137, %c8_138] : memref<3x10x80xf32, #tpu.memory_space<vmem>>, vector<1x8x64xf32>
    %207 = vector.shape_cast %206 : vector<1x8x64xf32> to vector<8x64xf32>
    %208 = vector.shape_cast %205 : vector<8x64xf32> to vector<1x8x64xf32>
    tpu.vector_store %arg12[%c1_136, %c1_137, %c8_138], %208 {strides = array<i32>} : memref<3x10x80xf32, #tpu.memory_space<vmem>>, vector<1x8x64xf32>,
    %c2_139 = arith.constant 2 : index
    %c1_140 = arith.constant 1 : index
    %c8_141 = arith.constant 8 : index
    %209 = vector.load %arg10[%c2_139, %c1_140, %c8_141] : memref<3x18x144xf32, #tpu.memory_space<vmem>>, vector<1x16x128xf32>
    %210 = vector.shape_cast %209 : vector<1x16x128xf32> to vector<16x128xf32>
    %cst_142 = arith.constant dense<0.000000e+00> : vector<8x128xf32>
    %211 = tpu.matmul %193, %210, %cst_142 {dimension_numbers = #tpu.dot_dimension_numbers<[1], [0], [0], [1], [0, 0, 1, 1], [], []>} : vector<8x16xf32>, vector<16x128xf32>, vector<8x128xf32> -> vector<8x128xf32>
    %cst_143 = arith.constant dense<0.000000e+00> : vector<8x64xf32>
    %212 = tpu.matmul %211, %194, %cst_143 {dimension_numbers = #tpu.dot_dimension_numbers<[1], [0], [0], [1], [0, 0, 1, 1], [], []>} : vector<8x128xf32>, vector<128x64xf32>, vector<8x64xf32> -> vector<8x64xf32>
    %c2_144 = arith.constant 2 : index
    %c1_145 = arith.constant 1 : index
    %c8_146 = arith.constant 8 : index
    %213 = vector.load %arg12[%c2_144, %c1_145, %c8_146] : memref<3x10x80xf32, #tpu.memory_space<vmem>>, vector<1x8x64xf32>
    %214 = vector.shape_cast %213 : vector<1x8x64xf32> to vector<8x64xf32>
    %215 = vector.shape_cast %212 : vector<8x64xf32> to vector<1x8x64xf32>
    tpu.vector_store %arg12[%c2_144, %c1_145, %c8_146], %215 {strides = array<i32>} : memref<3x10x80xf32, #tpu.memory_space<vmem>>, vector<1x8x64xf32>,
    %c0_147 = arith.constant 0 : index
    %c0_148 = arith.constant 0 : index
    %c0_149 = arith.constant 0 : index
    %216 = vector.load %arg12[%c0_147, %c0_148, %c0_149] : memref<3x10x80xf32, #tpu.memory_space<vmem>>, vector<1x8x64xf32>
    %217 = vector.shape_cast %216 : vector<1x8x64xf32> to vector<8x64xf32>
    %c27 = arith.constant 27 : index
    %218 = memref.load %arg1[%c27] : memref<297xf32, #tpu.memory_space<smem>>
    %219 = vector.broadcast %218 : f32 to vector<8x64xf32>
    %220 = arith.mulf %217, %219 : vector<8x64xf32>
    %c0_150 = arith.constant 0 : index
    %c0_151 = arith.constant 0 : index
    %c8_152 = arith.constant 8 : index
    %221 = vector.load %arg12[%c0_150, %c0_151, %c8_152] : memref<3x10x80xf32, #tpu.memory_space<vmem>>, vector<1x8x64xf32>
    %222 = vector.shape_cast %221 : vector<1x8x64xf32> to vector<8x64xf32>
    %c28 = arith.constant 28 : index
    %223 = memref.load %arg1[%c28] : memref<297xf32, #tpu.memory_space<smem>>
    %224 = vector.broadcast %223 : f32 to vector<8x64xf32>
    %225 = arith.mulf %222, %224 : vector<8x64xf32>
    %226 = arith.addf %220, %225 : vector<8x64xf32>
    %c0_153 = arith.constant 0 : index
    %c0_154 = arith.constant 0 : index
    %c16_155 = arith.constant 16 : index
    %227 = vector.load %arg12[%c0_153, %c0_154, %c16_155] : memref<3x10x80xf32, #tpu.memory_space<vmem>>, vector<1x8x64xf32>
    %228 = vector.shape_cast %227 : vector<1x8x64xf32> to vector<8x64xf32>
    %c29 = arith.constant 29 : index
    %229 = memref.load %arg1[%c29] : memref<297xf32, #tpu.memory_space<smem>>
    %230 = vector.broadcast %229 : f32 to vector<8x64xf32>
    %231 = arith.mulf %228, %230 : vector<8x64xf32>
    %232 = arith.addf %226, %231 : vector<8x64xf32>
    %c1_156 = arith.constant 1 : index
    %c0_157 = arith.constant 0 : index
    %c0_158 = arith.constant 0 : index
    %233 = vector.load %arg12[%c1_156, %c0_157, %c0_158] : memref<3x10x80xf32, #tpu.memory_space<vmem>>, vector<1x8x64xf32>
    %234 = vector.shape_cast %233 : vector<1x8x64xf32> to vector<8x64xf32>
    %c36 = arith.constant 36 : index
    %235 = memref.load %arg1[%c36] : memref<297xf32, #tpu.memory_space<smem>>
    %236 = vector.broadcast %235 : f32 to vector<8x64xf32>
    %237 = arith.mulf %234, %236 : vector<8x64xf32>
    %238 = arith.addf %232, %237 : vector<8x64xf32>
    %c1_159 = arith.constant 1 : index
    %c0_160 = arith.constant 0 : index
    %c8_161 = arith.constant 8 : index
    %239 = vector.load %arg12[%c1_159, %c0_160, %c8_161] : memref<3x10x80xf32, #tpu.memory_space<vmem>>, vector<1x8x64xf32>
    %240 = vector.shape_cast %239 : vector<1x8x64xf32> to vector<8x64xf32>
    %c37 = arith.constant 37 : index
    %241 = memref.load %arg1[%c37] : memref<297xf32, #tpu.memory_space<smem>>
    %242 = vector.broadcast %241 : f32 to vector<8x64xf32>
    %243 = arith.mulf %240, %242 : vector<8x64xf32>
    %244 = arith.addf %238, %243 : vector<8x64xf32>
    %c1_162 = arith.constant 1 : index
    %c0_163 = arith.constant 0 : index
    %c16_164 = arith.constant 16 : index
    %245 = vector.load %arg12[%c1_162, %c0_163, %c16_164] : memref<3x10x80xf32, #tpu.memory_space<vmem>>, vector<1x8x64xf32>
    %246 = vector.shape_cast %245 : vector<1x8x64xf32> to vector<8x64xf32>
    %c38 = arith.constant 38 : index
    %247 = memref.load %arg1[%c38] : memref<297xf32, #tpu.memory_space<smem>>
    %248 = vector.broadcast %247 : f32 to vector<8x64xf32>
    %249 = arith.mulf %246, %248 : vector<8x64xf32>
    %250 = arith.addf %244, %249 : vector<8x64xf32>
    %c2_165 = arith.constant 2 : index
    %c0_166 = arith.constant 0 : index
    %c0_167 = arith.constant 0 : index
    %251 = vector.load %arg12[%c2_165, %c0_166, %c0_167] : memref<3x10x80xf32, #tpu.memory_space<vmem>>, vector<1x8x64xf32>
    %252 = vector.shape_cast %251 : vector<1x8x64xf32> to vector<8x64xf32>
    %c45 = arith.constant 45 : index
    %253 = memref.load %arg1[%c45] : memref<297xf32, #tpu.memory_space<smem>>
    %254 = vector.broadcast %253 : f32 to vector<8x64xf32>
    %255 = arith.mulf %252, %254 : vector<8x64xf32>
    %256 = arith.addf %250, %255 : vector<8x64xf32>
    %c2_168 = arith.constant 2 : index
    %c0_169 = arith.constant 0 : index
    %c8_170 = arith.constant 8 : index
    %257 = vector.load %arg12[%c2_168, %c0_169, %c8_170] : memref<3x10x80xf32, #tpu.memory_space<vmem>>, vector<1x8x64xf32>
    %258 = vector.shape_cast %257 : vector<1x8x64xf32> to vector<8x64xf32>
    %c46 = arith.constant 46 : index
    %259 = memref.load %arg1[%c46] : memref<297xf32, #tpu.memory_space<smem>>
    %260 = vector.broadcast %259 : f32 to vector<8x64xf32>
    %261 = arith.mulf %258, %260 : vector<8x64xf32>
    %262 = arith.addf %256, %261 : vector<8x64xf32>
    %c2_171 = arith.constant 2 : index
    %c0_172 = arith.constant 0 : index
    %c16_173 = arith.constant 16 : index
    %263 = vector.load %arg12[%c2_171, %c0_172, %c16_173] : memref<3x10x80xf32, #tpu.memory_space<vmem>>, vector<1x8x64xf32>
    %264 = vector.shape_cast %263 : vector<1x8x64xf32> to vector<8x64xf32>
    %c47 = arith.constant 47 : index
    %265 = memref.load %arg1[%c47] : memref<297xf32, #tpu.memory_space<smem>>
    %266 = vector.broadcast %265 : f32 to vector<8x64xf32>
    %267 = arith.mulf %264, %266 : vector<8x64xf32>
    %268 = arith.addf %262, %267 : vector<8x64xf32>
    %c0_174 = arith.constant 0 : index
    %c1_175 = arith.constant 1 : index
    %c0_176 = arith.constant 0 : index
    %269 = vector.load %arg12[%c0_174, %c1_175, %c0_176] : memref<3x10x80xf32, #tpu.memory_space<vmem>>, vector<1x8x64xf32>
    %270 = vector.shape_cast %269 : vector<1x8x64xf32> to vector<8x64xf32>
    %c30 = arith.constant 30 : index
    %271 = memref.load %arg1[%c30] : memref<297xf32, #tpu.memory_space<smem>>
    %272 = vector.broadcast %271 : f32 to vector<8x64xf32>
    %273 = arith.mulf %270, %272 : vector<8x64xf32>
    %c0_177 = arith.constant 0 : index
    %c1_178 = arith.constant 1 : index
    %c8_179 = arith.constant 8 : index
    %274 = vector.load %arg12[%c0_177, %c1_178, %c8_179] : memref<3x10x80xf32, #tpu.memory_space<vmem>>, vector<1x8x64xf32>
    %275 = vector.shape_cast %274 : vector<1x8x64xf32> to vector<8x64xf32>
    %c31 = arith.constant 31 : index
    %276 = memref.load %arg1[%c31] : memref<297xf32, #tpu.memory_space<smem>>
    %277 = vector.broadcast %276 : f32 to vector<8x64xf32>
    %278 = arith.mulf %275, %277 : vector<8x64xf32>
    %279 = arith.addf %273, %278 : vector<8x64xf32>
    %c0_180 = arith.constant 0 : index
    %c1_181 = arith.constant 1 : index
    %c16_182 = arith.constant 16 : index
    %280 = vector.load %arg12[%c0_180, %c1_181, %c16_182] : memref<3x10x80xf32, #tpu.memory_space<vmem>>, vector<1x8x64xf32>
    %281 = vector.shape_cast %280 : vector<1x8x64xf32> to vector<8x64xf32>
    %c32 = arith.constant 32 : index
    %282 = memref.load %arg1[%c32] : memref<297xf32, #tpu.memory_space<smem>>
    %283 = vector.broadcast %282 : f32 to vector<8x64xf32>
    %284 = arith.mulf %281, %283 : vector<8x64xf32>
    %285 = arith.addf %279, %284 : vector<8x64xf32>
    %c1_183 = arith.constant 1 : index
    %c1_184 = arith.constant 1 : index
    %c0_185 = arith.constant 0 : index
    %286 = vector.load %arg12[%c1_183, %c1_184, %c0_185] : memref<3x10x80xf32, #tpu.memory_space<vmem>>, vector<1x8x64xf32>
    %287 = vector.shape_cast %286 : vector<1x8x64xf32> to vector<8x64xf32>
    %c39 = arith.constant 39 : index
    %288 = memref.load %arg1[%c39] : memref<297xf32, #tpu.memory_space<smem>>
    %289 = vector.broadcast %288 : f32 to vector<8x64xf32>
    %290 = arith.mulf %287, %289 : vector<8x64xf32>
    %291 = arith.addf %285, %290 : vector<8x64xf32>
    %c1_186 = arith.constant 1 : index
    %c1_187 = arith.constant 1 : index
    %c8_188 = arith.constant 8 : index
    %292 = vector.load %arg12[%c1_186, %c1_187, %c8_188] : memref<3x10x80xf32, #tpu.memory_space<vmem>>, vector<1x8x64xf32>
    %293 = vector.shape_cast %292 : vector<1x8x64xf32> to vector<8x64xf32>
    %c40 = arith.constant 40 : index
    %294 = memref.load %arg1[%c40] : memref<297xf32, #tpu.memory_space<smem>>
    %295 = vector.broadcast %294 : f32 to vector<8x64xf32>
    %296 = arith.mulf %293, %295 : vector<8x64xf32>
    %297 = arith.addf %291, %296 : vector<8x64xf32>
    %c1_189 = arith.constant 1 : index
    %c1_190 = arith.constant 1 : index
    %c16_191 = arith.constant 16 : index
    %298 = vector.load %arg12[%c1_189, %c1_190, %c16_191] : memref<3x10x80xf32, #tpu.memory_space<vmem>>, vector<1x8x64xf32>
    %299 = vector.shape_cast %298 : vector<1x8x64xf32> to vector<8x64xf32>
    %c41 = arith.constant 41 : index
    %300 = memref.load %arg1[%c41] : memref<297xf32, #tpu.memory_space<smem>>
    %301 = vector.broadcast %300 : f32 to vector<8x64xf32>
    %302 = arith.mulf %299, %301 : vector<8x64xf32>
    %303 = arith.addf %297, %302 : vector<8x64xf32>
    %c2_192 = arith.constant 2 : index
    %c1_193 = arith.constant 1 : index
    %c0_194 = arith.constant 0 : index
    %304 = vector.load %arg12[%c2_192, %c1_193, %c0_194] : memref<3x10x80xf32, #tpu.memory_space<vmem>>, vector<1x8x64xf32>
    %305 = vector.shape_cast %304 : vector<1x8x64xf32> to vector<8x64xf32>
    %c48 = arith.constant 48 : index
    %306 = memref.load %arg1[%c48] : memref<297xf32, #tpu.memory_space<smem>>
    %307 = vector.broadcast %306 : f32 to vector<8x64xf32>
    %308 = arith.mulf %305, %307 : vector<8x64xf32>
    %309 = arith.addf %303, %308 : vector<8x64xf32>
    %c2_195 = arith.constant 2 : index
    %c1_196 = arith.constant 1 : index
    %c8_197 = arith.constant 8 : index
    %310 = vector.load %arg12[%c2_195, %c1_196, %c8_197] : memref<3x10x80xf32, #tpu.memory_space<vmem>>, vector<1x8x64xf32>
    %311 = vector.shape_cast %310 : vector<1x8x64xf32> to vector<8x64xf32>
    %c49 = arith.constant 49 : index
    %312 = memref.load %arg1[%c49] : memref<297xf32, #tpu.memory_space<smem>>
    %313 = vector.broadcast %312 : f32 to vector<8x64xf32>
    %314 = arith.mulf %311, %313 : vector<8x64xf32>
    %315 = arith.addf %309, %314 : vector<8x64xf32>
    %c2_198 = arith.constant 2 : index
    %c1_199 = arith.constant 1 : index
    %c16_200 = arith.constant 16 : index
    %316 = vector.load %arg12[%c2_198, %c1_199, %c16_200] : memref<3x10x80xf32, #tpu.memory_space<vmem>>, vector<1x8x64xf32>
    %317 = vector.shape_cast %316 : vector<1x8x64xf32> to vector<8x64xf32>
    %c50 = arith.constant 50 : index
    %318 = memref.load %arg1[%c50] : memref<297xf32, #tpu.memory_space<smem>>
    %319 = vector.broadcast %318 : f32 to vector<8x64xf32>
    %320 = arith.mulf %317, %319 : vector<8x64xf32>
    %321 = arith.addf %315, %320 : vector<8x64xf32>
    %c0_201 = arith.constant 0 : index
    %c2_202 = arith.constant 2 : index
    %c0_203 = arith.constant 0 : index
    %322 = vector.load %arg12[%c0_201, %c2_202, %c0_203] : memref<3x10x80xf32, #tpu.memory_space<vmem>>, vector<1x8x64xf32>
    %323 = vector.shape_cast %322 : vector<1x8x64xf32> to vector<8x64xf32>
    %c33 = arith.constant 33 : index
    %324 = memref.load %arg1[%c33] : memref<297xf32, #tpu.memory_space<smem>>
    %325 = vector.broadcast %324 : f32 to vector<8x64xf32>
    %326 = arith.mulf %323, %325 : vector<8x64xf32>
    %c0_204 = arith.constant 0 : index
    %c2_205 = arith.constant 2 : index
    %c8_206 = arith.constant 8 : index
    %327 = vector.load %arg12[%c0_204, %c2_205, %c8_206] : memref<3x10x80xf32, #tpu.memory_space<vmem>>, vector<1x8x64xf32>
    %328 = vector.shape_cast %327 : vector<1x8x64xf32> to vector<8x64xf32>
    %c34 = arith.constant 34 : index
    %329 = memref.load %arg1[%c34] : memref<297xf32, #tpu.memory_space<smem>>
    %330 = vector.broadcast %329 : f32 to vector<8x64xf32>
    %331 = arith.mulf %328, %330 : vector<8x64xf32>
    %332 = arith.addf %326, %331 : vector<8x64xf32>
    %c0_207 = arith.constant 0 : index
    %c2_208 = arith.constant 2 : index
    %c16_209 = arith.constant 16 : index
    %333 = vector.load %arg12[%c0_207, %c2_208, %c16_209] : memref<3x10x80xf32, #tpu.memory_space<vmem>>, vector<1x8x64xf32>
    %334 = vector.shape_cast %333 : vector<1x8x64xf32> to vector<8x64xf32>
    %c35 = arith.constant 35 : index
    %335 = memref.load %arg1[%c35] : memref<297xf32, #tpu.memory_space<smem>>
    %336 = vector.broadcast %335 : f32 to vector<8x64xf32>
    %337 = arith.mulf %334, %336 : vector<8x64xf32>
    %338 = arith.addf %332, %337 : vector<8x64xf32>
    %c1_210 = arith.constant 1 : index
    %c2_211 = arith.constant 2 : index
    %c0_212 = arith.constant 0 : index
    %339 = vector.load %arg12[%c1_210, %c2_211, %c0_212] : memref<3x10x80xf32, #tpu.memory_space<vmem>>, vector<1x8x64xf32>
    %340 = vector.shape_cast %339 : vector<1x8x64xf32> to vector<8x64xf32>
    %c42 = arith.constant 42 : index
    %341 = memref.load %arg1[%c42] : memref<297xf32, #tpu.memory_space<smem>>
    %342 = vector.broadcast %341 : f32 to vector<8x64xf32>
    %343 = arith.mulf %340, %342 : vector<8x64xf32>
    %344 = arith.addf %338, %343 : vector<8x64xf32>
    %c1_213 = arith.constant 1 : index
    %c2_214 = arith.constant 2 : index
    %c8_215 = arith.constant 8 : index
    %345 = vector.load %arg12[%c1_213, %c2_214, %c8_215] : memref<3x10x80xf32, #tpu.memory_space<vmem>>, vector<1x8x64xf32>
    %346 = vector.shape_cast %345 : vector<1x8x64xf32> to vector<8x64xf32>
    %c43 = arith.constant 43 : index
    %347 = memref.load %arg1[%c43] : memref<297xf32, #tpu.memory_space<smem>>
    %348 = vector.broadcast %347 : f32 to vector<8x64xf32>
    %349 = arith.mulf %346, %348 : vector<8x64xf32>
    %350 = arith.addf %344, %349 : vector<8x64xf32>
    %c1_216 = arith.constant 1 : index
    %c2_217 = arith.constant 2 : index
    %c16_218 = arith.constant 16 : index
    %351 = vector.load %arg12[%c1_216, %c2_217, %c16_218] : memref<3x10x80xf32, #tpu.memory_space<vmem>>, vector<1x8x64xf32>
    %352 = vector.shape_cast %351 : vector<1x8x64xf32> to vector<8x64xf32>
    %c44 = arith.constant 44 : index
    %353 = memref.load %arg1[%c44] : memref<297xf32, #tpu.memory_space<smem>>
    %354 = vector.broadcast %353 : f32 to vector<8x64xf32>
    %355 = arith.mulf %352, %354 : vector<8x64xf32>
    %356 = arith.addf %350, %355 : vector<8x64xf32>
    %c2_219 = arith.constant 2 : index
    %c2_220 = arith.constant 2 : index
    %c0_221 = arith.constant 0 : index
    %357 = vector.load %arg12[%c2_219, %c2_220, %c0_221] : memref<3x10x80xf32, #tpu.memory_space<vmem>>, vector<1x8x64xf32>
    %358 = vector.shape_cast %357 : vector<1x8x64xf32> to vector<8x64xf32>
    %c51 = arith.constant 51 : index
    %359 = memref.load %arg1[%c51] : memref<297xf32, #tpu.memory_space<smem>>
    %360 = vector.broadcast %359 : f32 to vector<8x64xf32>
    %361 = arith.mulf %358, %360 : vector<8x64xf32>
    %362 = arith.addf %356, %361 : vector<8x64xf32>
    %c2_222 = arith.constant 2 : index
    %c2_223 = arith.constant 2 : index
    %c8_224 = arith.constant 8 : index
    %363 = vector.load %arg12[%c2_222, %c2_223, %c8_224] : memref<3x10x80xf32, #tpu.memory_space<vmem>>, vector<1x8x64xf32>
    %364 = vector.shape_cast %363 : vector<1x8x64xf32> to vector<8x64xf32>
    %c52 = arith.constant 52 : index
    %365 = memref.load %arg1[%c52] : memref<297xf32, #tpu.memory_space<smem>>
    %366 = vector.broadcast %365 : f32 to vector<8x64xf32>
    %367 = arith.mulf %364, %366 : vector<8x64xf32>
    %368 = arith.addf %362, %367 : vector<8x64xf32>
    %c2_225 = arith.constant 2 : index
    %c2_226 = arith.constant 2 : index
    %c16_227 = arith.constant 16 : index
    %369 = vector.load %arg12[%c2_225, %c2_226, %c16_227] : memref<3x10x80xf32, #tpu.memory_space<vmem>>, vector<1x8x64xf32>
    %370 = vector.shape_cast %369 : vector<1x8x64xf32> to vector<8x64xf32>
    %c53 = arith.constant 53 : index
    %371 = memref.load %arg1[%c53] : memref<297xf32, #tpu.memory_space<smem>>
    %372 = vector.broadcast %371 : f32 to vector<8x64xf32>
    %373 = arith.mulf %370, %372 : vector<8x64xf32>
    %374 = arith.addf %368, %373 : vector<8x64xf32>
    %375 = arith.addf %268, %321 : vector<8x64xf32>
    %c3_228 = arith.constant 3 : index
    %376 = memref.load %arg2[%c3_228] : memref<13xf32, #tpu.memory_space<smem>>
    %377 = vector.broadcast %376 : f32 to vector<8x64xf32>
    %378 = arith.addf %374, %377 : vector<8x64xf32>
    %379 = arith.addf %375, %378 : vector<8x64xf32>
    %380 = math.tanh %379 : vector<8x64xf32>
    %c0_229 = arith.constant 0 : index
    %c1_230 = arith.constant 1 : index
    %c8_231 = arith.constant 8 : index
    %381 = vector.load %arg13[%c0_229, %c1_230, %c8_231] : memref<3x10x80xf32, #tpu.memory_space<vmem>>, vector<1x8x64xf32>
    %382 = vector.shape_cast %381 : vector<1x8x64xf32> to vector<8x64xf32>
    %383 = vector.shape_cast %380 : vector<8x64xf32> to vector<1x8x64xf32>
    tpu.vector_store %arg13[%c0_229, %c1_230, %c8_231], %383 {strides = array<i32>} : memref<3x10x80xf32, #tpu.memory_space<vmem>>, vector<1x8x64xf32>,
    %c0_232 = arith.constant 0 : index
    %c0_233 = arith.constant 0 : index
    %c0_234 = arith.constant 0 : index
    %384 = vector.load %arg12[%c0_232, %c0_233, %c0_234] : memref<3x10x80xf32, #tpu.memory_space<vmem>>, vector<1x8x64xf32>
    %385 = vector.shape_cast %384 : vector<1x8x64xf32> to vector<8x64xf32>
    %c54 = arith.constant 54 : index
    %386 = memref.load %arg1[%c54] : memref<297xf32, #tpu.memory_space<smem>>
    %387 = vector.broadcast %386 : f32 to vector<8x64xf32>
    %388 = arith.mulf %385, %387 : vector<8x64xf32>
    %c0_235 = arith.constant 0 : index
    %c0_236 = arith.constant 0 : index
    %c8_237 = arith.constant 8 : index
    %389 = vector.load %arg12[%c0_235, %c0_236, %c8_237] : memref<3x10x80xf32, #tpu.memory_space<vmem>>, vector<1x8x64xf32>
    %390 = vector.shape_cast %389 : vector<1x8x64xf32> to vector<8x64xf32>
    %c55 = arith.constant 55 : index
    %391 = memref.load %arg1[%c55] : memref<297xf32, #tpu.memory_space<smem>>
    %392 = vector.broadcast %391 : f32 to vector<8x64xf32>
    %393 = arith.mulf %390, %392 : vector<8x64xf32>
    %394 = arith.addf %388, %393 : vector<8x64xf32>
    %c0_238 = arith.constant 0 : index
    %c0_239 = arith.constant 0 : index
    %c16_240 = arith.constant 16 : index
    %395 = vector.load %arg12[%c0_238, %c0_239, %c16_240] : memref<3x10x80xf32, #tpu.memory_space<vmem>>, vector<1x8x64xf32>
    %396 = vector.shape_cast %395 : vector<1x8x64xf32> to vector<8x64xf32>
    %c56 = arith.constant 56 : index
    %397 = memref.load %arg1[%c56] : memref<297xf32, #tpu.memory_space<smem>>
    %398 = vector.broadcast %397 : f32 to vector<8x64xf32>
    %399 = arith.mulf %396, %398 : vector<8x64xf32>
    %400 = arith.addf %394, %399 : vector<8x64xf32>
    %c1_241 = arith.constant 1 : index
    %c0_242 = arith.constant 0 : index
    %c0_243 = arith.constant 0 : index
    %401 = vector.load %arg12[%c1_241, %c0_242, %c0_243] : memref<3x10x80xf32, #tpu.memory_space<vmem>>, vector<1x8x64xf32>
    %402 = vector.shape_cast %401 : vector<1x8x64xf32> to vector<8x64xf32>
    %c63 = arith.constant 63 : index
    %403 = memref.load %arg1[%c63] : memref<297xf32, #tpu.memory_space<smem>>
    %404 = vector.broadcast %403 : f32 to vector<8x64xf32>
    %405 = arith.mulf %402, %404 : vector<8x64xf32>
    %406 = arith.addf %400, %405 : vector<8x64xf32>
    %c1_244 = arith.constant 1 : index
    %c0_245 = arith.constant 0 : index
    %c8_246 = arith.constant 8 : index
    %407 = vector.load %arg12[%c1_244, %c0_245, %c8_246] : memref<3x10x80xf32, #tpu.memory_space<vmem>>, vector<1x8x64xf32>
    %408 = vector.shape_cast %407 : vector<1x8x64xf32> to vector<8x64xf32>
    %c64 = arith.constant 64 : index
    %409 = memref.load %arg1[%c64] : memref<297xf32, #tpu.memory_space<smem>>
    %410 = vector.broadcast %409 : f32 to vector<8x64xf32>
    %411 = arith.mulf %408, %410 : vector<8x64xf32>
    %412 = arith.addf %406, %411 : vector<8x64xf32>
    %c1_247 = arith.constant 1 : index
    %c0_248 = arith.constant 0 : index
    %c16_249 = arith.constant 16 : index
    %413 = vector.load %arg12[%c1_247, %c0_248, %c16_249] : memref<3x10x80xf32, #tpu.memory_space<vmem>>, vector<1x8x64xf32>
    %414 = vector.shape_cast %413 : vector<1x8x64xf32> to vector<8x64xf32>
    %c65 = arith.constant 65 : index
    %415 = memref.load %arg1[%c65] : memref<297xf32, #tpu.memory_space<smem>>
    %416 = vector.broadcast %415 : f32 to vector<8x64xf32>
    %417 = arith.mulf %414, %416 : vector<8x64xf32>
    %418 = arith.addf %412, %417 : vector<8x64xf32>
    %c2_250 = arith.constant 2 : index
    %c0_251 = arith.constant 0 : index
    %c0_252 = arith.constant 0 : index
    %419 = vector.load %arg12[%c2_250, %c0_251, %c0_252] : memref<3x10x80xf32, #tpu.memory_space<vmem>>, vector<1x8x64xf32>
    %420 = vector.shape_cast %419 : vector<1x8x64xf32> to vector<8x64xf32>
    %c72 = arith.constant 72 : index
    %421 = memref.load %arg1[%c72] : memref<297xf32, #tpu.memory_space<smem>>
    %422 = vector.broadcast %421 : f32 to vector<8x64xf32>
    %423 = arith.mulf %420, %422 : vector<8x64xf32>
    %424 = arith.addf %418, %423 : vector<8x64xf32>
    %c2_253 = arith.constant 2 : index
    %c0_254 = arith.constant 0 : index
    %c8_255 = arith.constant 8 : index
    %425 = vector.load %arg12[%c2_253, %c0_254, %c8_255] : memref<3x10x80xf32, #tpu.memory_space<vmem>>, vector<1x8x64xf32>
    %426 = vector.shape_cast %425 : vector<1x8x64xf32> to vector<8x64xf32>
    %c73 = arith.constant 73 : index
    %427 = memref.load %arg1[%c73] : memref<297xf32, #tpu.memory_space<smem>>
    %428 = vector.broadcast %427 : f32 to vector<8x64xf32>
    %429 = arith.mulf %426, %428 : vector<8x64xf32>
    %430 = arith.addf %424, %429 : vector<8x64xf32>
    %c2_256 = arith.constant 2 : index
    %c0_257 = arith.constant 0 : index
    %c16_258 = arith.constant 16 : index
    %431 = vector.load %arg12[%c2_256, %c0_257, %c16_258] : memref<3x10x80xf32, #tpu.memory_space<vmem>>, vector<1x8x64xf32>
    %432 = vector.shape_cast %431 : vector<1x8x64xf32> to vector<8x64xf32>
    %c74 = arith.constant 74 : index
    %433 = memref.load %arg1[%c74] : memref<297xf32, #tpu.memory_space<smem>>
    %434 = vector.broadcast %433 : f32 to vector<8x64xf32>
    %435 = arith.mulf %432, %434 : vector<8x64xf32>
    %436 = arith.addf %430, %435 : vector<8x64xf32>
    %c0_259 = arith.constant 0 : index
    %c1_260 = arith.constant 1 : index
    %c0_261 = arith.constant 0 : index
    %437 = vector.load %arg12[%c0_259, %c1_260, %c0_261] : memref<3x10x80xf32, #tpu.memory_space<vmem>>, vector<1x8x64xf32>
    %438 = vector.shape_cast %437 : vector<1x8x64xf32> to vector<8x64xf32>
    %c57 = arith.constant 57 : index
    %439 = memref.load %arg1[%c57] : memref<297xf32, #tpu.memory_space<smem>>
    %440 = vector.broadcast %439 : f32 to vector<8x64xf32>
    %441 = arith.mulf %438, %440 : vector<8x64xf32>
    %c0_262 = arith.constant 0 : index
    %c1_263 = arith.constant 1 : index
    %c8_264 = arith.constant 8 : index
    %442 = vector.load %arg12[%c0_262, %c1_263, %c8_264] : memref<3x10x80xf32, #tpu.memory_space<vmem>>, vector<1x8x64xf32>
    %443 = vector.shape_cast %442 : vector<1x8x64xf32> to vector<8x64xf32>
    %c58 = arith.constant 58 : index
    %444 = memref.load %arg1[%c58] : memref<297xf32, #tpu.memory_space<smem>>
    %445 = vector.broadcast %444 : f32 to vector<8x64xf32>
    %446 = arith.mulf %443, %445 : vector<8x64xf32>
    %447 = arith.addf %441, %446 : vector<8x64xf32>
    %c0_265 = arith.constant 0 : index
    %c1_266 = arith.constant 1 : index
    %c16_267 = arith.constant 16 : index
    %448 = vector.load %arg12[%c0_265, %c1_266, %c16_267] : memref<3x10x80xf32, #tpu.memory_space<vmem>>, vector<1x8x64xf32>
    %449 = vector.shape_cast %448 : vector<1x8x64xf32> to vector<8x64xf32>
    %c59 = arith.constant 59 : index
    %450 = memref.load %arg1[%c59] : memref<297xf32, #tpu.memory_space<smem>>
    %451 = vector.broadcast %450 : f32 to vector<8x64xf32>
    %452 = arith.mulf %449, %451 : vector<8x64xf32>
    %453 = arith.addf %447, %452 : vector<8x64xf32>
    %c1_268 = arith.constant 1 : index
    %c1_269 = arith.constant 1 : index
    %c0_270 = arith.constant 0 : index
    %454 = vector.load %arg12[%c1_268, %c1_269, %c0_270] : memref<3x10x80xf32, #tpu.memory_space<vmem>>, vector<1x8x64xf32>
    %455 = vector.shape_cast %454 : vector<1x8x64xf32> to vector<8x64xf32>
    %c66 = arith.constant 66 : index
    %456 = memref.load %arg1[%c66] : memref<297xf32, #tpu.memory_space<smem>>
    %457 = vector.broadcast %456 : f32 to vector<8x64xf32>
    %458 = arith.mulf %455, %457 : vector<8x64xf32>
    %459 = arith.addf %453, %458 : vector<8x64xf32>
    %c1_271 = arith.constant 1 : index
    %c1_272 = arith.constant 1 : index
    %c8_273 = arith.constant 8 : index
    %460 = vector.load %arg12[%c1_271, %c1_272, %c8_273] : memref<3x10x80xf32, #tpu.memory_space<vmem>>, vector<1x8x64xf32>
    %461 = vector.shape_cast %460 : vector<1x8x64xf32> to vector<8x64xf32>
    %c67 = arith.constant 67 : index
    %462 = memref.load %arg1[%c67] : memref<297xf32, #tpu.memory_space<smem>>
    %463 = vector.broadcast %462 : f32 to vector<8x64xf32>
    %464 = arith.mulf %461, %463 : vector<8x64xf32>
    %465 = arith.addf %459, %464 : vector<8x64xf32>
    %c1_274 = arith.constant 1 : index
    %c1_275 = arith.constant 1 : index
    %c16_276 = arith.constant 16 : index
    %466 = vector.load %arg12[%c1_274, %c1_275, %c16_276] : memref<3x10x80xf32, #tpu.memory_space<vmem>>, vector<1x8x64xf32>
    %467 = vector.shape_cast %466 : vector<1x8x64xf32> to vector<8x64xf32>
    %c68 = arith.constant 68 : index
    %468 = memref.load %arg1[%c68] : memref<297xf32, #tpu.memory_space<smem>>
    %469 = vector.broadcast %468 : f32 to vector<8x64xf32>
    %470 = arith.mulf %467, %469 : vector<8x64xf32>
    %471 = arith.addf %465, %470 : vector<8x64xf32>
    %c2_277 = arith.constant 2 : index
    %c1_278 = arith.constant 1 : index
    %c0_279 = arith.constant 0 : index
    %472 = vector.load %arg12[%c2_277, %c1_278, %c0_279] : memref<3x10x80xf32, #tpu.memory_space<vmem>>, vector<1x8x64xf32>
    %473 = vector.shape_cast %472 : vector<1x8x64xf32> to vector<8x64xf32>
    %c75 = arith.constant 75 : index
    %474 = memref.load %arg1[%c75] : memref<297xf32, #tpu.memory_space<smem>>
    %475 = vector.broadcast %474 : f32 to vector<8x64xf32>
    %476 = arith.mulf %473, %475 : vector<8x64xf32>
    %477 = arith.addf %471, %476 : vector<8x64xf32>
    %c2_280 = arith.constant 2 : index
    %c1_281 = arith.constant 1 : index
    %c8_282 = arith.constant 8 : index
    %478 = vector.load %arg12[%c2_280, %c1_281, %c8_282] : memref<3x10x80xf32, #tpu.memory_space<vmem>>, vector<1x8x64xf32>
    %479 = vector.shape_cast %478 : vector<1x8x64xf32> to vector<8x64xf32>
    %c76 = arith.constant 76 : index
    %480 = memref.load %arg1[%c76] : memref<297xf32, #tpu.memory_space<smem>>
    %481 = vector.broadcast %480 : f32 to vector<8x64xf32>
    %482 = arith.mulf %479, %481 : vector<8x64xf32>
    %483 = arith.addf %477, %482 : vector<8x64xf32>
    %c2_283 = arith.constant 2 : index
    %c1_284 = arith.constant 1 : index
    %c16_285 = arith.constant 16 : index
    %484 = vector.load %arg12[%c2_283, %c1_284, %c16_285] : memref<3x10x80xf32, #tpu.memory_space<vmem>>, vector<1x8x64xf32>
    %485 = vector.shape_cast %484 : vector<1x8x64xf32> to vector<8x64xf32>
    %c77 = arith.constant 77 : index
    %486 = memref.load %arg1[%c77] : memref<297xf32, #tpu.memory_space<smem>>
    %487 = vector.broadcast %486 : f32 to vector<8x64xf32>
    %488 = arith.mulf %485, %487 : vector<8x64xf32>
    %489 = arith.addf %483, %488 : vector<8x64xf32>
    %c0_286 = arith.constant 0 : index
    %c2_287 = arith.constant 2 : index
    %c0_288 = arith.constant 0 : index
    %490 = vector.load %arg12[%c0_286, %c2_287, %c0_288] : memref<3x10x80xf32, #tpu.memory_space<vmem>>, vector<1x8x64xf32>
    %491 = vector.shape_cast %490 : vector<1x8x64xf32> to vector<8x64xf32>
    %c60 = arith.constant 60 : index
    %492 = memref.load %arg1[%c60] : memref<297xf32, #tpu.memory_space<smem>>
    %493 = vector.broadcast %492 : f32 to vector<8x64xf32>
    %494 = arith.mulf %491, %493 : vector<8x64xf32>
    %c0_289 = arith.constant 0 : index
    %c2_290 = arith.constant 2 : index
    %c8_291 = arith.constant 8 : index
    %495 = vector.load %arg12[%c0_289, %c2_290, %c8_291] : memref<3x10x80xf32, #tpu.memory_space<vmem>>, vector<1x8x64xf32>
    %496 = vector.shape_cast %495 : vector<1x8x64xf32> to vector<8x64xf32>
    %c61 = arith.constant 61 : index
    %497 = memref.load %arg1[%c61] : memref<297xf32, #tpu.memory_space<smem>>
    %498 = vector.broadcast %497 : f32 to vector<8x64xf32>
    %499 = arith.mulf %496, %498 : vector<8x64xf32>
    %500 = arith.addf %494, %499 : vector<8x64xf32>
    %c0_292 = arith.constant 0 : index
    %c2_293 = arith.constant 2 : index
    %c16_294 = arith.constant 16 : index
    %501 = vector.load %arg12[%c0_292, %c2_293, %c16_294] : memref<3x10x80xf32, #tpu.memory_space<vmem>>, vector<1x8x64xf32>
    %502 = vector.shape_cast %501 : vector<1x8x64xf32> to vector<8x64xf32>
    %c62 = arith.constant 62 : index
    %503 = memref.load %arg1[%c62] : memref<297xf32, #tpu.memory_space<smem>>
    %504 = vector.broadcast %503 : f32 to vector<8x64xf32>
    %505 = arith.mulf %502, %504 : vector<8x64xf32>
    %506 = arith.addf %500, %505 : vector<8x64xf32>
    %c1_295 = arith.constant 1 : index
    %c2_296 = arith.constant 2 : index
    %c0_297 = arith.constant 0 : index
    %507 = vector.load %arg12[%c1_295, %c2_296, %c0_297] : memref<3x10x80xf32, #tpu.memory_space<vmem>>, vector<1x8x64xf32>
    %508 = vector.shape_cast %507 : vector<1x8x64xf32> to vector<8x64xf32>
    %c69 = arith.constant 69 : index
    %509 = memref.load %arg1[%c69] : memref<297xf32, #tpu.memory_space<smem>>
    %510 = vector.broadcast %509 : f32 to vector<8x64xf32>
    %511 = arith.mulf %508, %510 : vector<8x64xf32>
    %512 = arith.addf %506, %511 : vector<8x64xf32>
    %c1_298 = arith.constant 1 : index
    %c2_299 = arith.constant 2 : index
    %c8_300 = arith.constant 8 : index
    %513 = vector.load %arg12[%c1_298, %c2_299, %c8_300] : memref<3x10x80xf32, #tpu.memory_space<vmem>>, vector<1x8x64xf32>
    %514 = vector.shape_cast %513 : vector<1x8x64xf32> to vector<8x64xf32>
    %c70 = arith.constant 70 : index
    %515 = memref.load %arg1[%c70] : memref<297xf32, #tpu.memory_space<smem>>
    %516 = vector.broadcast %515 : f32 to vector<8x64xf32>
    %517 = arith.mulf %514, %516 : vector<8x64xf32>
    %518 = arith.addf %512, %517 : vector<8x64xf32>
    %c1_301 = arith.constant 1 : index
    %c2_302 = arith.constant 2 : index
    %c16_303 = arith.constant 16 : index
    %519 = vector.load %arg12[%c1_301, %c2_302, %c16_303] : memref<3x10x80xf32, #tpu.memory_space<vmem>>, vector<1x8x64xf32>
    %520 = vector.shape_cast %519 : vector<1x8x64xf32> to vector<8x64xf32>
    %c71 = arith.constant 71 : index
    %521 = memref.load %arg1[%c71] : memref<297xf32, #tpu.memory_space<smem>>
    %522 = vector.broadcast %521 : f32 to vector<8x64xf32>
    %523 = arith.mulf %520, %522 : vector<8x64xf32>
    %524 = arith.addf %518, %523 : vector<8x64xf32>
    %c2_304 = arith.constant 2 : index
    %c2_305 = arith.constant 2 : index
    %c0_306 = arith.constant 0 : index
    %525 = vector.load %arg12[%c2_304, %c2_305, %c0_306] : memref<3x10x80xf32, #tpu.memory_space<vmem>>, vector<1x8x64xf32>
    %526 = vector.shape_cast %525 : vector<1x8x64xf32> to vector<8x64xf32>
    %c78 = arith.constant 78 : index
    %527 = memref.load %arg1[%c78] : memref<297xf32, #tpu.memory_space<smem>>
    %528 = vector.broadcast %527 : f32 to vector<8x64xf32>
    %529 = arith.mulf %526, %528 : vector<8x64xf32>
    %530 = arith.addf %524, %529 : vector<8x64xf32>
    %c2_307 = arith.constant 2 : index
    %c2_308 = arith.constant 2 : index
    %c8_309 = arith.constant 8 : index
    %531 = vector.load %arg12[%c2_307, %c2_308, %c8_309] : memref<3x10x80xf32, #tpu.memory_space<vmem>>, vector<1x8x64xf32>
    %532 = vector.shape_cast %531 : vector<1x8x64xf32> to vector<8x64xf32>
    %c79 = arith.constant 79 : index
    %533 = memref.load %arg1[%c79] : memref<297xf32, #tpu.memory_space<smem>>
    %534 = vector.broadcast %533 : f32 to vector<8x64xf32>
    %535 = arith.mulf %532, %534 : vector<8x64xf32>
    %536 = arith.addf %530, %535 : vector<8x64xf32>
    %c2_310 = arith.constant 2 : index
    %c2_311 = arith.constant 2 : index
    %c16_312 = arith.constant 16 : index
    %537 = vector.load %arg12[%c2_310, %c2_311, %c16_312] : memref<3x10x80xf32, #tpu.memory_space<vmem>>, vector<1x8x64xf32>
    %538 = vector.shape_cast %537 : vector<1x8x64xf32> to vector<8x64xf32>
    %c80 = arith.constant 80 : index
    %539 = memref.load %arg1[%c80] : memref<297xf32, #tpu.memory_space<smem>>
    %540 = vector.broadcast %539 : f32 to vector<8x64xf32>
    %541 = arith.mulf %538, %540 : vector<8x64xf32>
    %542 = arith.addf %536, %541 : vector<8x64xf32>
    %543 = arith.addf %436, %489 : vector<8x64xf32>
    %c4_313 = arith.constant 4 : index
    %544 = memref.load %arg2[%c4_313] : memref<13xf32, #tpu.memory_space<smem>>
    %545 = vector.broadcast %544 : f32 to vector<8x64xf32>
    %546 = arith.addf %542, %545 : vector<8x64xf32>
    %547 = arith.addf %543, %546 : vector<8x64xf32>
    %548 = math.tanh %547 : vector<8x64xf32>
    %c1_314 = arith.constant 1 : index
    %c1_315 = arith.constant 1 : index
    %c8_316 = arith.constant 8 : index
    %549 = vector.load %arg13[%c1_314, %c1_315, %c8_316] : memref<3x10x80xf32, #tpu.memory_space<vmem>>, vector<1x8x64xf32>
    %550 = vector.shape_cast %549 : vector<1x8x64xf32> to vector<8x64xf32>
    %551 = vector.shape_cast %548 : vector<8x64xf32> to vector<1x8x64xf32>
    tpu.vector_store %arg13[%c1_314, %c1_315, %c8_316], %551 {strides = array<i32>} : memref<3x10x80xf32, #tpu.memory_space<vmem>>, vector<1x8x64xf32>,
    %c0_317 = arith.constant 0 : index
    %c0_318 = arith.constant 0 : index
    %c0_319 = arith.constant 0 : index
    %552 = vector.load %arg12[%c0_317, %c0_318, %c0_319] : memref<3x10x80xf32, #tpu.memory_space<vmem>>, vector<1x8x64xf32>
    %553 = vector.shape_cast %552 : vector<1x8x64xf32> to vector<8x64xf32>
    %c81 = arith.constant 81 : index
    %554 = memref.load %arg1[%c81] : memref<297xf32, #tpu.memory_space<smem>>
    %555 = vector.broadcast %554 : f32 to vector<8x64xf32>
    %556 = arith.mulf %553, %555 : vector<8x64xf32>
    %c0_320 = arith.constant 0 : index
    %c0_321 = arith.constant 0 : index
    %c8_322 = arith.constant 8 : index
    %557 = vector.load %arg12[%c0_320, %c0_321, %c8_322] : memref<3x10x80xf32, #tpu.memory_space<vmem>>, vector<1x8x64xf32>
    %558 = vector.shape_cast %557 : vector<1x8x64xf32> to vector<8x64xf32>
    %c82 = arith.constant 82 : index
    %559 = memref.load %arg1[%c82] : memref<297xf32, #tpu.memory_space<smem>>
    %560 = vector.broadcast %559 : f32 to vector<8x64xf32>
    %561 = arith.mulf %558, %560 : vector<8x64xf32>
    %562 = arith.addf %556, %561 : vector<8x64xf32>
    %c0_323 = arith.constant 0 : index
    %c0_324 = arith.constant 0 : index
    %c16_325 = arith.constant 16 : index
    %563 = vector.load %arg12[%c0_323, %c0_324, %c16_325] : memref<3x10x80xf32, #tpu.memory_space<vmem>>, vector<1x8x64xf32>
    %564 = vector.shape_cast %563 : vector<1x8x64xf32> to vector<8x64xf32>
    %c83 = arith.constant 83 : index
    %565 = memref.load %arg1[%c83] : memref<297xf32, #tpu.memory_space<smem>>
    %566 = vector.broadcast %565 : f32 to vector<8x64xf32>
    %567 = arith.mulf %564, %566 : vector<8x64xf32>
    %568 = arith.addf %562, %567 : vector<8x64xf32>
    %c1_326 = arith.constant 1 : index
    %c0_327 = arith.constant 0 : index
    %c0_328 = arith.constant 0 : index
    %569 = vector.load %arg12[%c1_326, %c0_327, %c0_328] : memref<3x10x80xf32, #tpu.memory_space<vmem>>, vector<1x8x64xf32>
    %570 = vector.shape_cast %569 : vector<1x8x64xf32> to vector<8x64xf32>
    %c90 = arith.constant 90 : index
    %571 = memref.load %arg1[%c90] : memref<297xf32, #tpu.memory_space<smem>>
    %572 = vector.broadcast %571 : f32 to vector<8x64xf32>
    %573 = arith.mulf %570, %572 : vector<8x64xf32>
    %574 = arith.addf %568, %573 : vector<8x64xf32>
    %c1_329 = arith.constant 1 : index
    %c0_330 = arith.constant 0 : index
    %c8_331 = arith.constant 8 : index
    %575 = vector.load %arg12[%c1_329, %c0_330, %c8_331] : memref<3x10x80xf32, #tpu.memory_space<vmem>>, vector<1x8x64xf32>
    %576 = vector.shape_cast %575 : vector<1x8x64xf32> to vector<8x64xf32>
    %c91 = arith.constant 91 : index
    %577 = memref.load %arg1[%c91] : memref<297xf32, #tpu.memory_space<smem>>
    %578 = vector.broadcast %577 : f32 to vector<8x64xf32>
    %579 = arith.mulf %576, %578 : vector<8x64xf32>
    %580 = arith.addf %574, %579 : vector<8x64xf32>
    %c1_332 = arith.constant 1 : index
    %c0_333 = arith.constant 0 : index
    %c16_334 = arith.constant 16 : index
    %581 = vector.load %arg12[%c1_332, %c0_333, %c16_334] : memref<3x10x80xf32, #tpu.memory_space<vmem>>, vector<1x8x64xf32>
    %582 = vector.shape_cast %581 : vector<1x8x64xf32> to vector<8x64xf32>
    %c92 = arith.constant 92 : index
    %583 = memref.load %arg1[%c92] : memref<297xf32, #tpu.memory_space<smem>>
    %584 = vector.broadcast %583 : f32 to vector<8x64xf32>
    %585 = arith.mulf %582, %584 : vector<8x64xf32>
    %586 = arith.addf %580, %585 : vector<8x64xf32>
    %c2_335 = arith.constant 2 : index
    %c0_336 = arith.constant 0 : index
    %c0_337 = arith.constant 0 : index
    %587 = vector.load %arg12[%c2_335, %c0_336, %c0_337] : memref<3x10x80xf32, #tpu.memory_space<vmem>>, vector<1x8x64xf32>
    %588 = vector.shape_cast %587 : vector<1x8x64xf32> to vector<8x64xf32>
    %c99 = arith.constant 99 : index
    %589 = memref.load %arg1[%c99] : memref<297xf32, #tpu.memory_space<smem>>
    %590 = vector.broadcast %589 : f32 to vector<8x64xf32>
    %591 = arith.mulf %588, %590 : vector<8x64xf32>
    %592 = arith.addf %586, %591 : vector<8x64xf32>
    %c2_338 = arith.constant 2 : index
    %c0_339 = arith.constant 0 : index
    %c8_340 = arith.constant 8 : index
    %593 = vector.load %arg12[%c2_338, %c0_339, %c8_340] : memref<3x10x80xf32, #tpu.memory_space<vmem>>, vector<1x8x64xf32>
    %594 = vector.shape_cast %593 : vector<1x8x64xf32> to vector<8x64xf32>
    %c100 = arith.constant 100 : index
    %595 = memref.load %arg1[%c100] : memref<297xf32, #tpu.memory_space<smem>>
    %596 = vector.broadcast %595 : f32 to vector<8x64xf32>
    %597 = arith.mulf %594, %596 : vector<8x64xf32>
    %598 = arith.addf %592, %597 : vector<8x64xf32>
    %c2_341 = arith.constant 2 : index
    %c0_342 = arith.constant 0 : index
    %c16_343 = arith.constant 16 : index
    %599 = vector.load %arg12[%c2_341, %c0_342, %c16_343] : memref<3x10x80xf32, #tpu.memory_space<vmem>>, vector<1x8x64xf32>
    %600 = vector.shape_cast %599 : vector<1x8x64xf32> to vector<8x64xf32>
    %c101 = arith.constant 101 : index
    %601 = memref.load %arg1[%c101] : memref<297xf32, #tpu.memory_space<smem>>
    %602 = vector.broadcast %601 : f32 to vector<8x64xf32>
    %603 = arith.mulf %600, %602 : vector<8x64xf32>
    %604 = arith.addf %598, %603 : vector<8x64xf32>
    %c0_344 = arith.constant 0 : index
    %c1_345 = arith.constant 1 : index
    %c0_346 = arith.constant 0 : index
    %605 = vector.load %arg12[%c0_344, %c1_345, %c0_346] : memref<3x10x80xf32, #tpu.memory_space<vmem>>, vector<1x8x64xf32>
    %606 = vector.shape_cast %605 : vector<1x8x64xf32> to vector<8x64xf32>
    %c84 = arith.constant 84 : index
    %607 = memref.load %arg1[%c84] : memref<297xf32, #tpu.memory_space<smem>>
    %608 = vector.broadcast %607 : f32 to vector<8x64xf32>
    %609 = arith.mulf %606, %608 : vector<8x64xf32>
    %c0_347 = arith.constant 0 : index
    %c1_348 = arith.constant 1 : index
    %c8_349 = arith.constant 8 : index
    %610 = vector.load %arg12[%c0_347, %c1_348, %c8_349] : memref<3x10x80xf32, #tpu.memory_space<vmem>>, vector<1x8x64xf32>
    %611 = vector.shape_cast %610 : vector<1x8x64xf32> to vector<8x64xf32>
    %c85 = arith.constant 85 : index
    %612 = memref.load %arg1[%c85] : memref<297xf32, #tpu.memory_space<smem>>
    %613 = vector.broadcast %612 : f32 to vector<8x64xf32>
    %614 = arith.mulf %611, %613 : vector<8x64xf32>
    %615 = arith.addf %609, %614 : vector<8x64xf32>
    %c0_350 = arith.constant 0 : index
    %c1_351 = arith.constant 1 : index
    %c16_352 = arith.constant 16 : index
    %616 = vector.load %arg12[%c0_350, %c1_351, %c16_352] : memref<3x10x80xf32, #tpu.memory_space<vmem>>, vector<1x8x64xf32>
    %617 = vector.shape_cast %616 : vector<1x8x64xf32> to vector<8x64xf32>
    %c86 = arith.constant 86 : index
    %618 = memref.load %arg1[%c86] : memref<297xf32, #tpu.memory_space<smem>>
    %619 = vector.broadcast %618 : f32 to vector<8x64xf32>
    %620 = arith.mulf %617, %619 : vector<8x64xf32>
    %621 = arith.addf %615, %620 : vector<8x64xf32>
    %c1_353 = arith.constant 1 : index
    %c1_354 = arith.constant 1 : index
    %c0_355 = arith.constant 0 : index
    %622 = vector.load %arg12[%c1_353, %c1_354, %c0_355] : memref<3x10x80xf32, #tpu.memory_space<vmem>>, vector<1x8x64xf32>
    %623 = vector.shape_cast %622 : vector<1x8x64xf32> to vector<8x64xf32>
    %c93 = arith.constant 93 : index
    %624 = memref.load %arg1[%c93] : memref<297xf32, #tpu.memory_space<smem>>
    %625 = vector.broadcast %624 : f32 to vector<8x64xf32>
    %626 = arith.mulf %623, %625 : vector<8x64xf32>
    %627 = arith.addf %621, %626 : vector<8x64xf32>
    %c1_356 = arith.constant 1 : index
    %c1_357 = arith.constant 1 : index
    %c8_358 = arith.constant 8 : index
    %628 = vector.load %arg12[%c1_356, %c1_357, %c8_358] : memref<3x10x80xf32, #tpu.memory_space<vmem>>, vector<1x8x64xf32>
    %629 = vector.shape_cast %628 : vector<1x8x64xf32> to vector<8x64xf32>
    %c94 = arith.constant 94 : index
    %630 = memref.load %arg1[%c94] : memref<297xf32, #tpu.memory_space<smem>>
    %631 = vector.broadcast %630 : f32 to vector<8x64xf32>
    %632 = arith.mulf %629, %631 : vector<8x64xf32>
    %633 = arith.addf %627, %632 : vector<8x64xf32>
    %c1_359 = arith.constant 1 : index
    %c1_360 = arith.constant 1 : index
    %c16_361 = arith.constant 16 : index
    %634 = vector.load %arg12[%c1_359, %c1_360, %c16_361] : memref<3x10x80xf32, #tpu.memory_space<vmem>>, vector<1x8x64xf32>
    %635 = vector.shape_cast %634 : vector<1x8x64xf32> to vector<8x64xf32>
    %c95 = arith.constant 95 : index
    %636 = memref.load %arg1[%c95] : memref<297xf32, #tpu.memory_space<smem>>
    %637 = vector.broadcast %636 : f32 to vector<8x64xf32>
    %638 = arith.mulf %635, %637 : vector<8x64xf32>
    %639 = arith.addf %633, %638 : vector<8x64xf32>
    %c2_362 = arith.constant 2 : index
    %c1_363 = arith.constant 1 : index
    %c0_364 = arith.constant 0 : index
    %640 = vector.load %arg12[%c2_362, %c1_363, %c0_364] : memref<3x10x80xf32, #tpu.memory_space<vmem>>, vector<1x8x64xf32>
    %641 = vector.shape_cast %640 : vector<1x8x64xf32> to vector<8x64xf32>
    %c102 = arith.constant 102 : index
    %642 = memref.load %arg1[%c102] : memref<297xf32, #tpu.memory_space<smem>>
    %643 = vector.broadcast %642 : f32 to vector<8x64xf32>
    %644 = arith.mulf %641, %643 : vector<8x64xf32>
    %645 = arith.addf %639, %644 : vector<8x64xf32>
    %c2_365 = arith.constant 2 : index
    %c1_366 = arith.constant 1 : index
    %c8_367 = arith.constant 8 : index
    %646 = vector.load %arg12[%c2_365, %c1_366, %c8_367] : memref<3x10x80xf32, #tpu.memory_space<vmem>>, vector<1x8x64xf32>
    %647 = vector.shape_cast %646 : vector<1x8x64xf32> to vector<8x64xf32>
    %c103 = arith.constant 103 : index
    %648 = memref.load %arg1[%c103] : memref<297xf32, #tpu.memory_space<smem>>
    %649 = vector.broadcast %648 : f32 to vector<8x64xf32>
    %650 = arith.mulf %647, %649 : vector<8x64xf32>
    %651 = arith.addf %645, %650 : vector<8x64xf32>
    %c2_368 = arith.constant 2 : index
    %c1_369 = arith.constant 1 : index
    %c16_370 = arith.constant 16 : index
    %652 = vector.load %arg12[%c2_368, %c1_369, %c16_370] : memref<3x10x80xf32, #tpu.memory_space<vmem>>, vector<1x8x64xf32>
    %653 = vector.shape_cast %652 : vector<1x8x64xf32> to vector<8x64xf32>
    %c104 = arith.constant 104 : index
    %654 = memref.load %arg1[%c104] : memref<297xf32, #tpu.memory_space<smem>>
    %655 = vector.broadcast %654 : f32 to vector<8x64xf32>
    %656 = arith.mulf %653, %655 : vector<8x64xf32>
    %657 = arith.addf %651, %656 : vector<8x64xf32>
    %c0_371 = arith.constant 0 : index
    %c2_372 = arith.constant 2 : index
    %c0_373 = arith.constant 0 : index
    %658 = vector.load %arg12[%c0_371, %c2_372, %c0_373] : memref<3x10x80xf32, #tpu.memory_space<vmem>>, vector<1x8x64xf32>
    %659 = vector.shape_cast %658 : vector<1x8x64xf32> to vector<8x64xf32>
    %c87 = arith.constant 87 : index
    %660 = memref.load %arg1[%c87] : memref<297xf32, #tpu.memory_space<smem>>
    %661 = vector.broadcast %660 : f32 to vector<8x64xf32>
    %662 = arith.mulf %659, %661 : vector<8x64xf32>
    %c0_374 = arith.constant 0 : index
    %c2_375 = arith.constant 2 : index
    %c8_376 = arith.constant 8 : index
    %663 = vector.load %arg12[%c0_374, %c2_375, %c8_376] : memref<3x10x80xf32, #tpu.memory_space<vmem>>, vector<1x8x64xf32>
    %664 = vector.shape_cast %663 : vector<1x8x64xf32> to vector<8x64xf32>
    %c88 = arith.constant 88 : index
    %665 = memref.load %arg1[%c88] : memref<297xf32, #tpu.memory_space<smem>>
    %666 = vector.broadcast %665 : f32 to vector<8x64xf32>
    %667 = arith.mulf %664, %666 : vector<8x64xf32>
    %668 = arith.addf %662, %667 : vector<8x64xf32>
    %c0_377 = arith.constant 0 : index
    %c2_378 = arith.constant 2 : index
    %c16_379 = arith.constant 16 : index
    %669 = vector.load %arg12[%c0_377, %c2_378, %c16_379] : memref<3x10x80xf32, #tpu.memory_space<vmem>>, vector<1x8x64xf32>
    %670 = vector.shape_cast %669 : vector<1x8x64xf32> to vector<8x64xf32>
    %c89 = arith.constant 89 : index
    %671 = memref.load %arg1[%c89] : memref<297xf32, #tpu.memory_space<smem>>
    %672 = vector.broadcast %671 : f32 to vector<8x64xf32>
    %673 = arith.mulf %670, %672 : vector<8x64xf32>
    %674 = arith.addf %668, %673 : vector<8x64xf32>
    %c1_380 = arith.constant 1 : index
    %c2_381 = arith.constant 2 : index
    %c0_382 = arith.constant 0 : index
    %675 = vector.load %arg12[%c1_380, %c2_381, %c0_382] : memref<3x10x80xf32, #tpu.memory_space<vmem>>, vector<1x8x64xf32>
    %676 = vector.shape_cast %675 : vector<1x8x64xf32> to vector<8x64xf32>
    %c96 = arith.constant 96 : index
    %677 = memref.load %arg1[%c96] : memref<297xf32, #tpu.memory_space<smem>>
    %678 = vector.broadcast %677 : f32 to vector<8x64xf32>
    %679 = arith.mulf %676, %678 : vector<8x64xf32>
    %680 = arith.addf %674, %679 : vector<8x64xf32>
    %c1_383 = arith.constant 1 : index
    %c2_384 = arith.constant 2 : index
    %c8_385 = arith.constant 8 : index
    %681 = vector.load %arg12[%c1_383, %c2_384, %c8_385] : memref<3x10x80xf32, #tpu.memory_space<vmem>>, vector<1x8x64xf32>
    %682 = vector.shape_cast %681 : vector<1x8x64xf32> to vector<8x64xf32>
    %c97 = arith.constant 97 : index
    %683 = memref.load %arg1[%c97] : memref<297xf32, #tpu.memory_space<smem>>
    %684 = vector.broadcast %683 : f32 to vector<8x64xf32>
    %685 = arith.mulf %682, %684 : vector<8x64xf32>
    %686 = arith.addf %680, %685 : vector<8x64xf32>
    %c1_386 = arith.constant 1 : index
    %c2_387 = arith.constant 2 : index
    %c16_388 = arith.constant 16 : index
    %687 = vector.load %arg12[%c1_386, %c2_387, %c16_388] : memref<3x10x80xf32, #tpu.memory_space<vmem>>, vector<1x8x64xf32>
    %688 = vector.shape_cast %687 : vector<1x8x64xf32> to vector<8x64xf32>
    %c98 = arith.constant 98 : index
    %689 = memref.load %arg1[%c98] : memref<297xf32, #tpu.memory_space<smem>>
    %690 = vector.broadcast %689 : f32 to vector<8x64xf32>
    %691 = arith.mulf %688, %690 : vector<8x64xf32>
    %692 = arith.addf %686, %691 : vector<8x64xf32>
    %c2_389 = arith.constant 2 : index
    %c2_390 = arith.constant 2 : index
    %c0_391 = arith.constant 0 : index
    %693 = vector.load %arg12[%c2_389, %c2_390, %c0_391] : memref<3x10x80xf32, #tpu.memory_space<vmem>>, vector<1x8x64xf32>
    %694 = vector.shape_cast %693 : vector<1x8x64xf32> to vector<8x64xf32>
    %c105 = arith.constant 105 : index
    %695 = memref.load %arg1[%c105] : memref<297xf32, #tpu.memory_space<smem>>
    %696 = vector.broadcast %695 : f32 to vector<8x64xf32>
    %697 = arith.mulf %694, %696 : vector<8x64xf32>
    %698 = arith.addf %692, %697 : vector<8x64xf32>
    %c2_392 = arith.constant 2 : index
    %c2_393 = arith.constant 2 : index
    %c8_394 = arith.constant 8 : index
    %699 = vector.load %arg12[%c2_392, %c2_393, %c8_394] : memref<3x10x80xf32, #tpu.memory_space<vmem>>, vector<1x8x64xf32>
    %700 = vector.shape_cast %699 : vector<1x8x64xf32> to vector<8x64xf32>
    %c106 = arith.constant 106 : index
    %701 = memref.load %arg1[%c106] : memref<297xf32, #tpu.memory_space<smem>>
    %702 = vector.broadcast %701 : f32 to vector<8x64xf32>
    %703 = arith.mulf %700, %702 : vector<8x64xf32>
    %704 = arith.addf %698, %703 : vector<8x64xf32>
    %c2_395 = arith.constant 2 : index
    %c2_396 = arith.constant 2 : index
    %c16_397 = arith.constant 16 : index
    %705 = vector.load %arg12[%c2_395, %c2_396, %c16_397] : memref<3x10x80xf32, #tpu.memory_space<vmem>>, vector<1x8x64xf32>
    %706 = vector.shape_cast %705 : vector<1x8x64xf32> to vector<8x64xf32>
    %c107 = arith.constant 107 : index
    %707 = memref.load %arg1[%c107] : memref<297xf32, #tpu.memory_space<smem>>
    %708 = vector.broadcast %707 : f32 to vector<8x64xf32>
    %709 = arith.mulf %706, %708 : vector<8x64xf32>
    %710 = arith.addf %704, %709 : vector<8x64xf32>
    %711 = arith.addf %604, %657 : vector<8x64xf32>
    %c5_398 = arith.constant 5 : index
    %712 = memref.load %arg2[%c5_398] : memref<13xf32, #tpu.memory_space<smem>>
    %713 = vector.broadcast %712 : f32 to vector<8x64xf32>
    %714 = arith.addf %710, %713 : vector<8x64xf32>
    %715 = arith.addf %711, %714 : vector<8x64xf32>
    %716 = math.tanh %715 : vector<8x64xf32>
    %c2_399 = arith.constant 2 : index
    %c1_400 = arith.constant 1 : index
    %c8_401 = arith.constant 8 : index
    %717 = vector.load %arg13[%c2_399, %c1_400, %c8_401] : memref<3x10x80xf32, #tpu.memory_space<vmem>>, vector<1x8x64xf32>
    %718 = vector.shape_cast %717 : vector<1x8x64xf32> to vector<8x64xf32>
    %719 = vector.shape_cast %716 : vector<8x64xf32> to vector<1x8x64xf32>
    tpu.vector_store %arg13[%c2_399, %c1_400, %c8_401], %719 {strides = array<i32>} : memref<3x10x80xf32, #tpu.memory_space<vmem>>, vector<1x8x64xf32>,
    %c0_402 = arith.constant 0 : index
    %c0_403 = arith.constant 0 : index
    %c0_404 = arith.constant 0 : index
    %720 = vector.load %arg13[%c0_402, %c0_403, %c0_404] : memref<3x10x80xf32, #tpu.memory_space<vmem>>, vector<1x8x64xf32>
    %721 = vector.shape_cast %720 : vector<1x8x64xf32> to vector<8x64xf32>
    %c108 = arith.constant 108 : index
    %722 = memref.load %arg1[%c108] : memref<297xf32, #tpu.memory_space<smem>>
    %723 = vector.broadcast %722 : f32 to vector<8x64xf32>
    %724 = arith.mulf %721, %723 : vector<8x64xf32>
    %c0_405 = arith.constant 0 : index
    %c0_406 = arith.constant 0 : index
    %c8_407 = arith.constant 8 : index
    %725 = vector.load %arg13[%c0_405, %c0_406, %c8_407] : memref<3x10x80xf32, #tpu.memory_space<vmem>>, vector<1x8x64xf32>
    %726 = vector.shape_cast %725 : vector<1x8x64xf32> to vector<8x64xf32>
    %c109 = arith.constant 109 : index
    %727 = memref.load %arg1[%c109] : memref<297xf32, #tpu.memory_space<smem>>
    %728 = vector.broadcast %727 : f32 to vector<8x64xf32>
    %729 = arith.mulf %726, %728 : vector<8x64xf32>
    %730 = arith.addf %724, %729 : vector<8x64xf32>
    %c0_408 = arith.constant 0 : index
    %c0_409 = arith.constant 0 : index
    %c16_410 = arith.constant 16 : index
    %731 = vector.load %arg13[%c0_408, %c0_409, %c16_410] : memref<3x10x80xf32, #tpu.memory_space<vmem>>, vector<1x8x64xf32>
    %732 = vector.shape_cast %731 : vector<1x8x64xf32> to vector<8x64xf32>
    %c110 = arith.constant 110 : index
    %733 = memref.load %arg1[%c110] : memref<297xf32, #tpu.memory_space<smem>>
    %734 = vector.broadcast %733 : f32 to vector<8x64xf32>
    %735 = arith.mulf %732, %734 : vector<8x64xf32>
    %736 = arith.addf %730, %735 : vector<8x64xf32>
    %c1_411 = arith.constant 1 : index
    %c0_412 = arith.constant 0 : index
    %c0_413 = arith.constant 0 : index
    %737 = vector.load %arg13[%c1_411, %c0_412, %c0_413] : memref<3x10x80xf32, #tpu.memory_space<vmem>>, vector<1x8x64xf32>
    %738 = vector.shape_cast %737 : vector<1x8x64xf32> to vector<8x64xf32>
    %c117 = arith.constant 117 : index
    %739 = memref.load %arg1[%c117] : memref<297xf32, #tpu.memory_space<smem>>
    %740 = vector.broadcast %739 : f32 to vector<8x64xf32>
    %741 = arith.mulf %738, %740 : vector<8x64xf32>
    %742 = arith.addf %736, %741 : vector<8x64xf32>
    %c1_414 = arith.constant 1 : index
    %c0_415 = arith.constant 0 : index
    %c8_416 = arith.constant 8 : index
    %743 = vector.load %arg13[%c1_414, %c0_415, %c8_416] : memref<3x10x80xf32, #tpu.memory_space<vmem>>, vector<1x8x64xf32>
    %744 = vector.shape_cast %743 : vector<1x8x64xf32> to vector<8x64xf32>
    %c118 = arith.constant 118 : index
    %745 = memref.load %arg1[%c118] : memref<297xf32, #tpu.memory_space<smem>>
    %746 = vector.broadcast %745 : f32 to vector<8x64xf32>
    %747 = arith.mulf %744, %746 : vector<8x64xf32>
    %748 = arith.addf %742, %747 : vector<8x64xf32>
    %c1_417 = arith.constant 1 : index
    %c0_418 = arith.constant 0 : index
    %c16_419 = arith.constant 16 : index
    %749 = vector.load %arg13[%c1_417, %c0_418, %c16_419] : memref<3x10x80xf32, #tpu.memory_space<vmem>>, vector<1x8x64xf32>
    %750 = vector.shape_cast %749 : vector<1x8x64xf32> to vector<8x64xf32>
    %c119 = arith.constant 119 : index
    %751 = memref.load %arg1[%c119] : memref<297xf32, #tpu.memory_space<smem>>
    %752 = vector.broadcast %751 : f32 to vector<8x64xf32>
    %753 = arith.mulf %750, %752 : vector<8x64xf32>
    %754 = arith.addf %748, %753 : vector<8x64xf32>
    %c2_420 = arith.constant 2 : index
    %c0_421 = arith.constant 0 : index
    %c0_422 = arith.constant 0 : index
    %755 = vector.load %arg13[%c2_420, %c0_421, %c0_422] : memref<3x10x80xf32, #tpu.memory_space<vmem>>, vector<1x8x64xf32>
    %756 = vector.shape_cast %755 : vector<1x8x64xf32> to vector<8x64xf32>
    %c126 = arith.constant 126 : index
    %757 = memref.load %arg1[%c126] : memref<297xf32, #tpu.memory_space<smem>>
    %758 = vector.broadcast %757 : f32 to vector<8x64xf32>
    %759 = arith.mulf %756, %758 : vector<8x64xf32>
    %760 = arith.addf %754, %759 : vector<8x64xf32>
    %c2_423 = arith.constant 2 : index
    %c0_424 = arith.constant 0 : index
    %c8_425 = arith.constant 8 : index
    %761 = vector.load %arg13[%c2_423, %c0_424, %c8_425] : memref<3x10x80xf32, #tpu.memory_space<vmem>>, vector<1x8x64xf32>
    %762 = vector.shape_cast %761 : vector<1x8x64xf32> to vector<8x64xf32>
    %c127 = arith.constant 127 : index
    %763 = memref.load %arg1[%c127] : memref<297xf32, #tpu.memory_space<smem>>
    %764 = vector.broadcast %763 : f32 to vector<8x64xf32>
    %765 = arith.mulf %762, %764 : vector<8x64xf32>
    %766 = arith.addf %760, %765 : vector<8x64xf32>
    %c2_426 = arith.constant 2 : index
    %c0_427 = arith.constant 0 : index
    %c16_428 = arith.constant 16 : index
    %767 = vector.load %arg13[%c2_426, %c0_427, %c16_428] : memref<3x10x80xf32, #tpu.memory_space<vmem>>, vector<1x8x64xf32>
    %768 = vector.shape_cast %767 : vector<1x8x64xf32> to vector<8x64xf32>
    %c128 = arith.constant 128 : index
    %769 = memref.load %arg1[%c128] : memref<297xf32, #tpu.memory_space<smem>>
    %770 = vector.broadcast %769 : f32 to vector<8x64xf32>
    %771 = arith.mulf %768, %770 : vector<8x64xf32>
    %772 = arith.addf %766, %771 : vector<8x64xf32>
    %c0_429 = arith.constant 0 : index
    %c1_430 = arith.constant 1 : index
    %c0_431 = arith.constant 0 : index
    %773 = vector.load %arg13[%c0_429, %c1_430, %c0_431] : memref<3x10x80xf32, #tpu.memory_space<vmem>>, vector<1x8x64xf32>
    %774 = vector.shape_cast %773 : vector<1x8x64xf32> to vector<8x64xf32>
    %c111 = arith.constant 111 : index
    %775 = memref.load %arg1[%c111] : memref<297xf32, #tpu.memory_space<smem>>
    %776 = vector.broadcast %775 : f32 to vector<8x64xf32>
    %777 = arith.mulf %774, %776 : vector<8x64xf32>
    %c0_432 = arith.constant 0 : index
    %c1_433 = arith.constant 1 : index
    %c8_434 = arith.constant 8 : index
    %778 = vector.load %arg13[%c0_432, %c1_433, %c8_434] : memref<3x10x80xf32, #tpu.memory_space<vmem>>, vector<1x8x64xf32>
    %779 = vector.shape_cast %778 : vector<1x8x64xf32> to vector<8x64xf32>
    %c112 = arith.constant 112 : index
    %780 = memref.load %arg1[%c112] : memref<297xf32, #tpu.memory_space<smem>>
    %781 = vector.broadcast %780 : f32 to vector<8x64xf32>
    %782 = arith.mulf %779, %781 : vector<8x64xf32>
    %783 = arith.addf %777, %782 : vector<8x64xf32>
    %c0_435 = arith.constant 0 : index
    %c1_436 = arith.constant 1 : index
    %c16_437 = arith.constant 16 : index
    %784 = vector.load %arg13[%c0_435, %c1_436, %c16_437] : memref<3x10x80xf32, #tpu.memory_space<vmem>>, vector<1x8x64xf32>
    %785 = vector.shape_cast %784 : vector<1x8x64xf32> to vector<8x64xf32>
    %c113 = arith.constant 113 : index
    %786 = memref.load %arg1[%c113] : memref<297xf32, #tpu.memory_space<smem>>
    %787 = vector.broadcast %786 : f32 to vector<8x64xf32>
    %788 = arith.mulf %785, %787 : vector<8x64xf32>
    %789 = arith.addf %783, %788 : vector<8x64xf32>
    %c1_438 = arith.constant 1 : index
    %c1_439 = arith.constant 1 : index
    %c0_440 = arith.constant 0 : index
    %790 = vector.load %arg13[%c1_438, %c1_439, %c0_440] : memref<3x10x80xf32, #tpu.memory_space<vmem>>, vector<1x8x64xf32>
    %791 = vector.shape_cast %790 : vector<1x8x64xf32> to vector<8x64xf32>
    %c120 = arith.constant 120 : index
    %792 = memref.load %arg1[%c120] : memref<297xf32, #tpu.memory_space<smem>>
    %793 = vector.broadcast %792 : f32 to vector<8x64xf32>
    %794 = arith.mulf %791, %793 : vector<8x64xf32>
    %795 = arith.addf %789, %794 : vector<8x64xf32>
    %c1_441 = arith.constant 1 : index
    %c1_442 = arith.constant 1 : index
    %c8_443 = arith.constant 8 : index
    %796 = vector.load %arg13[%c1_441, %c1_442, %c8_443] : memref<3x10x80xf32, #tpu.memory_space<vmem>>, vector<1x8x64xf32>
    %797 = vector.shape_cast %796 : vector<1x8x64xf32> to vector<8x64xf32>
    %c121 = arith.constant 121 : index
    %798 = memref.load %arg1[%c121] : memref<297xf32, #tpu.memory_space<smem>>
    %799 = vector.broadcast %798 : f32 to vector<8x64xf32>
    %800 = arith.mulf %797, %799 : vector<8x64xf32>
    %801 = arith.addf %795, %800 : vector<8x64xf32>
    %c1_444 = arith.constant 1 : index
    %c1_445 = arith.constant 1 : index
    %c16_446 = arith.constant 16 : index
    %802 = vector.load %arg13[%c1_444, %c1_445, %c16_446] : memref<3x10x80xf32, #tpu.memory_space<vmem>>, vector<1x8x64xf32>
    %803 = vector.shape_cast %802 : vector<1x8x64xf32> to vector<8x64xf32>
    %c122 = arith.constant 122 : index
    %804 = memref.load %arg1[%c122] : memref<297xf32, #tpu.memory_space<smem>>
    %805 = vector.broadcast %804 : f32 to vector<8x64xf32>
    %806 = arith.mulf %803, %805 : vector<8x64xf32>
    %807 = arith.addf %801, %806 : vector<8x64xf32>
    %c2_447 = arith.constant 2 : index
    %c1_448 = arith.constant 1 : index
    %c0_449 = arith.constant 0 : index
    %808 = vector.load %arg13[%c2_447, %c1_448, %c0_449] : memref<3x10x80xf32, #tpu.memory_space<vmem>>, vector<1x8x64xf32>
    %809 = vector.shape_cast %808 : vector<1x8x64xf32> to vector<8x64xf32>
    %c129 = arith.constant 129 : index
    %810 = memref.load %arg1[%c129] : memref<297xf32, #tpu.memory_space<smem>>
    %811 = vector.broadcast %810 : f32 to vector<8x64xf32>
    %812 = arith.mulf %809, %811 : vector<8x64xf32>
    %813 = arith.addf %807, %812 : vector<8x64xf32>
    %c2_450 = arith.constant 2 : index
    %c1_451 = arith.constant 1 : index
    %c8_452 = arith.constant 8 : index
    %814 = vector.load %arg13[%c2_450, %c1_451, %c8_452] : memref<3x10x80xf32, #tpu.memory_space<vmem>>, vector<1x8x64xf32>
    %815 = vector.shape_cast %814 : vector<1x8x64xf32> to vector<8x64xf32>
    %c130 = arith.constant 130 : index
    %816 = memref.load %arg1[%c130] : memref<297xf32, #tpu.memory_space<smem>>
    %817 = vector.broadcast %816 : f32 to vector<8x64xf32>
    %818 = arith.mulf %815, %817 : vector<8x64xf32>
    %819 = arith.addf %813, %818 : vector<8x64xf32>
    %c2_453 = arith.constant 2 : index
    %c1_454 = arith.constant 1 : index
    %c16_455 = arith.constant 16 : index
    %820 = vector.load %arg13[%c2_453, %c1_454, %c16_455] : memref<3x10x80xf32, #tpu.memory_space<vmem>>, vector<1x8x64xf32>
    %821 = vector.shape_cast %820 : vector<1x8x64xf32> to vector<8x64xf32>
    %c131 = arith.constant 131 : index
    %822 = memref.load %arg1[%c131] : memref<297xf32, #tpu.memory_space<smem>>
    %823 = vector.broadcast %822 : f32 to vector<8x64xf32>
    %824 = arith.mulf %821, %823 : vector<8x64xf32>
    %825 = arith.addf %819, %824 : vector<8x64xf32>
    %c0_456 = arith.constant 0 : index
    %c2_457 = arith.constant 2 : index
    %c0_458 = arith.constant 0 : index
    %826 = vector.load %arg13[%c0_456, %c2_457, %c0_458] : memref<3x10x80xf32, #tpu.memory_space<vmem>>, vector<1x8x64xf32>
    %827 = vector.shape_cast %826 : vector<1x8x64xf32> to vector<8x64xf32>
    %c114 = arith.constant 114 : index
    %828 = memref.load %arg1[%c114] : memref<297xf32, #tpu.memory_space<smem>>
    %829 = vector.broadcast %828 : f32 to vector<8x64xf32>
    %830 = arith.mulf %827, %829 : vector<8x64xf32>
    %c0_459 = arith.constant 0 : index
    %c2_460 = arith.constant 2 : index
    %c8_461 = arith.constant 8 : index
    %831 = vector.load %arg13[%c0_459, %c2_460, %c8_461] : memref<3x10x80xf32, #tpu.memory_space<vmem>>, vector<1x8x64xf32>
    %832 = vector.shape_cast %831 : vector<1x8x64xf32> to vector<8x64xf32>
    %c115 = arith.constant 115 : index
    %833 = memref.load %arg1[%c115] : memref<297xf32, #tpu.memory_space<smem>>
    %834 = vector.broadcast %833 : f32 to vector<8x64xf32>
    %835 = arith.mulf %832, %834 : vector<8x64xf32>
    %836 = arith.addf %830, %835 : vector<8x64xf32>
    %c0_462 = arith.constant 0 : index
    %c2_463 = arith.constant 2 : index
    %c16_464 = arith.constant 16 : index
    %837 = vector.load %arg13[%c0_462, %c2_463, %c16_464] : memref<3x10x80xf32, #tpu.memory_space<vmem>>, vector<1x8x64xf32>
    %838 = vector.shape_cast %837 : vector<1x8x64xf32> to vector<8x64xf32>
    %c116 = arith.constant 116 : index
    %839 = memref.load %arg1[%c116] : memref<297xf32, #tpu.memory_space<smem>>
    %840 = vector.broadcast %839 : f32 to vector<8x64xf32>
    %841 = arith.mulf %838, %840 : vector<8x64xf32>
    %842 = arith.addf %836, %841 : vector<8x64xf32>
    %c1_465 = arith.constant 1 : index
    %c2_466 = arith.constant 2 : index
    %c0_467 = arith.constant 0 : index
    %843 = vector.load %arg13[%c1_465, %c2_466, %c0_467] : memref<3x10x80xf32, #tpu.memory_space<vmem>>, vector<1x8x64xf32>
    %844 = vector.shape_cast %843 : vector<1x8x64xf32> to vector<8x64xf32>
    %c123 = arith.constant 123 : index
    %845 = memref.load %arg1[%c123] : memref<297xf32, #tpu.memory_space<smem>>
    %846 = vector.broadcast %845 : f32 to vector<8x64xf32>
    %847 = arith.mulf %844, %846 : vector<8x64xf32>
    %848 = arith.addf %842, %847 : vector<8x64xf32>
    %c1_468 = arith.constant 1 : index
    %c2_469 = arith.constant 2 : index
    %c8_470 = arith.constant 8 : index
    %849 = vector.load %arg13[%c1_468, %c2_469, %c8_470] : memref<3x10x80xf32, #tpu.memory_space<vmem>>, vector<1x8x64xf32>
    %850 = vector.shape_cast %849 : vector<1x8x64xf32> to vector<8x64xf32>
    %c124 = arith.constant 124 : index
    %851 = memref.load %arg1[%c124] : memref<297xf32, #tpu.memory_space<smem>>
    %852 = vector.broadcast %851 : f32 to vector<8x64xf32>
    %853 = arith.mulf %850, %852 : vector<8x64xf32>
    %854 = arith.addf %848, %853 : vector<8x64xf32>
    %c1_471 = arith.constant 1 : index
    %c2_472 = arith.constant 2 : index
    %c16_473 = arith.constant 16 : index
    %855 = vector.load %arg13[%c1_471, %c2_472, %c16_473] : memref<3x10x80xf32, #tpu.memory_space<vmem>>, vector<1x8x64xf32>
    %856 = vector.shape_cast %855 : vector<1x8x64xf32> to vector<8x64xf32>
    %c125 = arith.constant 125 : index
    %857 = memref.load %arg1[%c125] : memref<297xf32, #tpu.memory_space<smem>>
    %858 = vector.broadcast %857 : f32 to vector<8x64xf32>
    %859 = arith.mulf %856, %858 : vector<8x64xf32>
    %860 = arith.addf %854, %859 : vector<8x64xf32>
    %c2_474 = arith.constant 2 : index
    %c2_475 = arith.constant 2 : index
    %c0_476 = arith.constant 0 : index
    %861 = vector.load %arg13[%c2_474, %c2_475, %c0_476] : memref<3x10x80xf32, #tpu.memory_space<vmem>>, vector<1x8x64xf32>
    %862 = vector.shape_cast %861 : vector<1x8x64xf32> to vector<8x64xf32>
    %c132 = arith.constant 132 : index
    %863 = memref.load %arg1[%c132] : memref<297xf32, #tpu.memory_space<smem>>
    %864 = vector.broadcast %863 : f32 to vector<8x64xf32>
    %865 = arith.mulf %862, %864 : vector<8x64xf32>
    %866 = arith.addf %860, %865 : vector<8x64xf32>
    %c2_477 = arith.constant 2 : index
    %c2_478 = arith.constant 2 : index
    %c8_479 = arith.constant 8 : index
    %867 = vector.load %arg13[%c2_477, %c2_478, %c8_479] : memref<3x10x80xf32, #tpu.memory_space<vmem>>, vector<1x8x64xf32>
    %868 = vector.shape_cast %867 : vector<1x8x64xf32> to vector<8x64xf32>
    %c133 = arith.constant 133 : index
    %869 = memref.load %arg1[%c133] : memref<297xf32, #tpu.memory_space<smem>>
    %870 = vector.broadcast %869 : f32 to vector<8x64xf32>
    %871 = arith.mulf %868, %870 : vector<8x64xf32>
    %872 = arith.addf %866, %871 : vector<8x64xf32>
    %c2_480 = arith.constant 2 : index
    %c2_481 = arith.constant 2 : index
    %c16_482 = arith.constant 16 : index
    %873 = vector.load %arg13[%c2_480, %c2_481, %c16_482] : memref<3x10x80xf32, #tpu.memory_space<vmem>>, vector<1x8x64xf32>
    %874 = vector.shape_cast %873 : vector<1x8x64xf32> to vector<8x64xf32>
    %c134 = arith.constant 134 : index
    %875 = memref.load %arg1[%c134] : memref<297xf32, #tpu.memory_space<smem>>
    %876 = vector.broadcast %875 : f32 to vector<8x64xf32>
    %877 = arith.mulf %874, %876 : vector<8x64xf32>
    %878 = arith.addf %872, %877 : vector<8x64xf32>
    %879 = arith.addf %772, %825 : vector<8x64xf32>
    %c6_483 = arith.constant 6 : index
    %880 = memref.load %arg2[%c6_483] : memref<13xf32, #tpu.memory_space<smem>>
    %881 = vector.broadcast %880 : f32 to vector<8x64xf32>
    %882 = arith.addf %878, %881 : vector<8x64xf32>
    %883 = arith.addf %879, %882 : vector<8x64xf32>
    %884 = math.tanh %883 : vector<8x64xf32>
    %c0_484 = arith.constant 0 : index
    %c1_485 = arith.constant 1 : index
    %c8_486 = arith.constant 8 : index
    %885 = vector.load %arg12[%c0_484, %c1_485, %c8_486] : memref<3x10x80xf32, #tpu.memory_space<vmem>>, vector<1x8x64xf32>
    %886 = vector.shape_cast %885 : vector<1x8x64xf32> to vector<8x64xf32>
    %887 = vector.shape_cast %884 : vector<8x64xf32> to vector<1x8x64xf32>
    tpu.vector_store %arg12[%c0_484, %c1_485, %c8_486], %887 {strides = array<i32>} : memref<3x10x80xf32, #tpu.memory_space<vmem>>, vector<1x8x64xf32>,
    %c0_487 = arith.constant 0 : index
    %c0_488 = arith.constant 0 : index
    %c0_489 = arith.constant 0 : index
    %888 = vector.load %arg13[%c0_487, %c0_488, %c0_489] : memref<3x10x80xf32, #tpu.memory_space<vmem>>, vector<1x8x64xf32>
    %889 = vector.shape_cast %888 : vector<1x8x64xf32> to vector<8x64xf32>
    %c135 = arith.constant 135 : index
    %890 = memref.load %arg1[%c135] : memref<297xf32, #tpu.memory_space<smem>>
    %891 = vector.broadcast %890 : f32 to vector<8x64xf32>
    %892 = arith.mulf %889, %891 : vector<8x64xf32>
    %c0_490 = arith.constant 0 : index
    %c0_491 = arith.constant 0 : index
    %c8_492 = arith.constant 8 : index
    %893 = vector.load %arg13[%c0_490, %c0_491, %c8_492] : memref<3x10x80xf32, #tpu.memory_space<vmem>>, vector<1x8x64xf32>
    %894 = vector.shape_cast %893 : vector<1x8x64xf32> to vector<8x64xf32>
    %c136 = arith.constant 136 : index
    %895 = memref.load %arg1[%c136] : memref<297xf32, #tpu.memory_space<smem>>
    %896 = vector.broadcast %895 : f32 to vector<8x64xf32>
    %897 = arith.mulf %894, %896 : vector<8x64xf32>
    %898 = arith.addf %892, %897 : vector<8x64xf32>
    %c0_493 = arith.constant 0 : index
    %c0_494 = arith.constant 0 : index
    %c16_495 = arith.constant 16 : index
    %899 = vector.load %arg13[%c0_493, %c0_494, %c16_495] : memref<3x10x80xf32, #tpu.memory_space<vmem>>, vector<1x8x64xf32>
    %900 = vector.shape_cast %899 : vector<1x8x64xf32> to vector<8x64xf32>
    %c137 = arith.constant 137 : index
    %901 = memref.load %arg1[%c137] : memref<297xf32, #tpu.memory_space<smem>>
    %902 = vector.broadcast %901 : f32 to vector<8x64xf32>
    %903 = arith.mulf %900, %902 : vector<8x64xf32>
    %904 = arith.addf %898, %903 : vector<8x64xf32>
    %c1_496 = arith.constant 1 : index
    %c0_497 = arith.constant 0 : index
    %c0_498 = arith.constant 0 : index
    %905 = vector.load %arg13[%c1_496, %c0_497, %c0_498] : memref<3x10x80xf32, #tpu.memory_space<vmem>>, vector<1x8x64xf32>
    %906 = vector.shape_cast %905 : vector<1x8x64xf32> to vector<8x64xf32>
    %c144 = arith.constant 144 : index
    %907 = memref.load %arg1[%c144] : memref<297xf32, #tpu.memory_space<smem>>
    %908 = vector.broadcast %907 : f32 to vector<8x64xf32>
    %909 = arith.mulf %906, %908 : vector<8x64xf32>
    %910 = arith.addf %904, %909 : vector<8x64xf32>
    %c1_499 = arith.constant 1 : index
    %c0_500 = arith.constant 0 : index
    %c8_501 = arith.constant 8 : index
    %911 = vector.load %arg13[%c1_499, %c0_500, %c8_501] : memref<3x10x80xf32, #tpu.memory_space<vmem>>, vector<1x8x64xf32>
    %912 = vector.shape_cast %911 : vector<1x8x64xf32> to vector<8x64xf32>
    %c145 = arith.constant 145 : index
    %913 = memref.load %arg1[%c145] : memref<297xf32, #tpu.memory_space<smem>>
    %914 = vector.broadcast %913 : f32 to vector<8x64xf32>
    %915 = arith.mulf %912, %914 : vector<8x64xf32>
    %916 = arith.addf %910, %915 : vector<8x64xf32>
    %c1_502 = arith.constant 1 : index
    %c0_503 = arith.constant 0 : index
    %c16_504 = arith.constant 16 : index
    %917 = vector.load %arg13[%c1_502, %c0_503, %c16_504] : memref<3x10x80xf32, #tpu.memory_space<vmem>>, vector<1x8x64xf32>
    %918 = vector.shape_cast %917 : vector<1x8x64xf32> to vector<8x64xf32>
    %c146 = arith.constant 146 : index
    %919 = memref.load %arg1[%c146] : memref<297xf32, #tpu.memory_space<smem>>
    %920 = vector.broadcast %919 : f32 to vector<8x64xf32>
    %921 = arith.mulf %918, %920 : vector<8x64xf32>
    %922 = arith.addf %916, %921 : vector<8x64xf32>
    %c2_505 = arith.constant 2 : index
    %c0_506 = arith.constant 0 : index
    %c0_507 = arith.constant 0 : index
    %923 = vector.load %arg13[%c2_505, %c0_506, %c0_507] : memref<3x10x80xf32, #tpu.memory_space<vmem>>, vector<1x8x64xf32>
    %924 = vector.shape_cast %923 : vector<1x8x64xf32> to vector<8x64xf32>
    %c153 = arith.constant 153 : index
    %925 = memref.load %arg1[%c153] : memref<297xf32, #tpu.memory_space<smem>>
    %926 = vector.broadcast %925 : f32 to vector<8x64xf32>
    %927 = arith.mulf %924, %926 : vector<8x64xf32>
    %928 = arith.addf %922, %927 : vector<8x64xf32>
    %c2_508 = arith.constant 2 : index
    %c0_509 = arith.constant 0 : index
    %c8_510 = arith.constant 8 : index
    %929 = vector.load %arg13[%c2_508, %c0_509, %c8_510] : memref<3x10x80xf32, #tpu.memory_space<vmem>>, vector<1x8x64xf32>
    %930 = vector.shape_cast %929 : vector<1x8x64xf32> to vector<8x64xf32>
    %c154 = arith.constant 154 : index
    %931 = memref.load %arg1[%c154] : memref<297xf32, #tpu.memory_space<smem>>
    %932 = vector.broadcast %931 : f32 to vector<8x64xf32>
    %933 = arith.mulf %930, %932 : vector<8x64xf32>
    %934 = arith.addf %928, %933 : vector<8x64xf32>
    %c2_511 = arith.constant 2 : index
    %c0_512 = arith.constant 0 : index
    %c16_513 = arith.constant 16 : index
    %935 = vector.load %arg13[%c2_511, %c0_512, %c16_513] : memref<3x10x80xf32, #tpu.memory_space<vmem>>, vector<1x8x64xf32>
    %936 = vector.shape_cast %935 : vector<1x8x64xf32> to vector<8x64xf32>
    %c155 = arith.constant 155 : index
    %937 = memref.load %arg1[%c155] : memref<297xf32, #tpu.memory_space<smem>>
    %938 = vector.broadcast %937 : f32 to vector<8x64xf32>
    %939 = arith.mulf %936, %938 : vector<8x64xf32>
    %940 = arith.addf %934, %939 : vector<8x64xf32>
    %c0_514 = arith.constant 0 : index
    %c1_515 = arith.constant 1 : index
    %c0_516 = arith.constant 0 : index
    %941 = vector.load %arg13[%c0_514, %c1_515, %c0_516] : memref<3x10x80xf32, #tpu.memory_space<vmem>>, vector<1x8x64xf32>
    %942 = vector.shape_cast %941 : vector<1x8x64xf32> to vector<8x64xf32>
    %c138 = arith.constant 138 : index
    %943 = memref.load %arg1[%c138] : memref<297xf32, #tpu.memory_space<smem>>
    %944 = vector.broadcast %943 : f32 to vector<8x64xf32>
    %945 = arith.mulf %942, %944 : vector<8x64xf32>
    %c0_517 = arith.constant 0 : index
    %c1_518 = arith.constant 1 : index
    %c8_519 = arith.constant 8 : index
    %946 = vector.load %arg13[%c0_517, %c1_518, %c8_519] : memref<3x10x80xf32, #tpu.memory_space<vmem>>, vector<1x8x64xf32>
    %947 = vector.shape_cast %946 : vector<1x8x64xf32> to vector<8x64xf32>
    %c139 = arith.constant 139 : index
    %948 = memref.load %arg1[%c139] : memref<297xf32, #tpu.memory_space<smem>>
    %949 = vector.broadcast %948 : f32 to vector<8x64xf32>
    %950 = arith.mulf %947, %949 : vector<8x64xf32>
    %951 = arith.addf %945, %950 : vector<8x64xf32>
    %c0_520 = arith.constant 0 : index
    %c1_521 = arith.constant 1 : index
    %c16_522 = arith.constant 16 : index
    %952 = vector.load %arg13[%c0_520, %c1_521, %c16_522] : memref<3x10x80xf32, #tpu.memory_space<vmem>>, vector<1x8x64xf32>
    %953 = vector.shape_cast %952 : vector<1x8x64xf32> to vector<8x64xf32>
    %c140 = arith.constant 140 : index
    %954 = memref.load %arg1[%c140] : memref<297xf32, #tpu.memory_space<smem>>
    %955 = vector.broadcast %954 : f32 to vector<8x64xf32>
    %956 = arith.mulf %953, %955 : vector<8x64xf32>
    %957 = arith.addf %951, %956 : vector<8x64xf32>
    %c1_523 = arith.constant 1 : index
    %c1_524 = arith.constant 1 : index
    %c0_525 = arith.constant 0 : index
    %958 = vector.load %arg13[%c1_523, %c1_524, %c0_525] : memref<3x10x80xf32, #tpu.memory_space<vmem>>, vector<1x8x64xf32>
    %959 = vector.shape_cast %958 : vector<1x8x64xf32> to vector<8x64xf32>
    %c147 = arith.constant 147 : index
    %960 = memref.load %arg1[%c147] : memref<297xf32, #tpu.memory_space<smem>>
    %961 = vector.broadcast %960 : f32 to vector<8x64xf32>
    %962 = arith.mulf %959, %961 : vector<8x64xf32>
    %963 = arith.addf %957, %962 : vector<8x64xf32>
    %c1_526 = arith.constant 1 : index
    %c1_527 = arith.constant 1 : index
    %c8_528 = arith.constant 8 : index
    %964 = vector.load %arg13[%c1_526, %c1_527, %c8_528] : memref<3x10x80xf32, #tpu.memory_space<vmem>>, vector<1x8x64xf32>
    %965 = vector.shape_cast %964 : vector<1x8x64xf32> to vector<8x64xf32>
    %c148 = arith.constant 148 : index
    %966 = memref.load %arg1[%c148] : memref<297xf32, #tpu.memory_space<smem>>
    %967 = vector.broadcast %966 : f32 to vector<8x64xf32>
    %968 = arith.mulf %965, %967 : vector<8x64xf32>
    %969 = arith.addf %963, %968 : vector<8x64xf32>
    %c1_529 = arith.constant 1 : index
    %c1_530 = arith.constant 1 : index
    %c16_531 = arith.constant 16 : index
    %970 = vector.load %arg13[%c1_529, %c1_530, %c16_531] : memref<3x10x80xf32, #tpu.memory_space<vmem>>, vector<1x8x64xf32>
    %971 = vector.shape_cast %970 : vector<1x8x64xf32> to vector<8x64xf32>
    %c149 = arith.constant 149 : index
    %972 = memref.load %arg1[%c149] : memref<297xf32, #tpu.memory_space<smem>>
    %973 = vector.broadcast %972 : f32 to vector<8x64xf32>
    %974 = arith.mulf %971, %973 : vector<8x64xf32>
    %975 = arith.addf %969, %974 : vector<8x64xf32>
    %c2_532 = arith.constant 2 : index
    %c1_533 = arith.constant 1 : index
    %c0_534 = arith.constant 0 : index
    %976 = vector.load %arg13[%c2_532, %c1_533, %c0_534] : memref<3x10x80xf32, #tpu.memory_space<vmem>>, vector<1x8x64xf32>
    %977 = vector.shape_cast %976 : vector<1x8x64xf32> to vector<8x64xf32>
    %c156 = arith.constant 156 : index
    %978 = memref.load %arg1[%c156] : memref<297xf32, #tpu.memory_space<smem>>
    %979 = vector.broadcast %978 : f32 to vector<8x64xf32>
    %980 = arith.mulf %977, %979 : vector<8x64xf32>
    %981 = arith.addf %975, %980 : vector<8x64xf32>
    %c2_535 = arith.constant 2 : index
    %c1_536 = arith.constant 1 : index
    %c8_537 = arith.constant 8 : index
    %982 = vector.load %arg13[%c2_535, %c1_536, %c8_537] : memref<3x10x80xf32, #tpu.memory_space<vmem>>, vector<1x8x64xf32>
    %983 = vector.shape_cast %982 : vector<1x8x64xf32> to vector<8x64xf32>
    %c157 = arith.constant 157 : index
    %984 = memref.load %arg1[%c157] : memref<297xf32, #tpu.memory_space<smem>>
    %985 = vector.broadcast %984 : f32 to vector<8x64xf32>
    %986 = arith.mulf %983, %985 : vector<8x64xf32>
    %987 = arith.addf %981, %986 : vector<8x64xf32>
    %c2_538 = arith.constant 2 : index
    %c1_539 = arith.constant 1 : index
    %c16_540 = arith.constant 16 : index
    %988 = vector.load %arg13[%c2_538, %c1_539, %c16_540] : memref<3x10x80xf32, #tpu.memory_space<vmem>>, vector<1x8x64xf32>
    %989 = vector.shape_cast %988 : vector<1x8x64xf32> to vector<8x64xf32>
    %c158 = arith.constant 158 : index
    %990 = memref.load %arg1[%c158] : memref<297xf32, #tpu.memory_space<smem>>
    %991 = vector.broadcast %990 : f32 to vector<8x64xf32>
    %992 = arith.mulf %989, %991 : vector<8x64xf32>
    %993 = arith.addf %987, %992 : vector<8x64xf32>
    %c0_541 = arith.constant 0 : index
    %c2_542 = arith.constant 2 : index
    %c0_543 = arith.constant 0 : index
    %994 = vector.load %arg13[%c0_541, %c2_542, %c0_543] : memref<3x10x80xf32, #tpu.memory_space<vmem>>, vector<1x8x64xf32>
    %995 = vector.shape_cast %994 : vector<1x8x64xf32> to vector<8x64xf32>
    %c141 = arith.constant 141 : index
    %996 = memref.load %arg1[%c141] : memref<297xf32, #tpu.memory_space<smem>>
    %997 = vector.broadcast %996 : f32 to vector<8x64xf32>
    %998 = arith.mulf %995, %997 : vector<8x64xf32>
    %c0_544 = arith.constant 0 : index
    %c2_545 = arith.constant 2 : index
    %c8_546 = arith.constant 8 : index
    %999 = vector.load %arg13[%c0_544, %c2_545, %c8_546] : memref<3x10x80xf32, #tpu.memory_space<vmem>>, vector<1x8x64xf32>
    %1000 = vector.shape_cast %999 : vector<1x8x64xf32> to vector<8x64xf32>
    %c142 = arith.constant 142 : index
    %1001 = memref.load %arg1[%c142] : memref<297xf32, #tpu.memory_space<smem>>
    %1002 = vector.broadcast %1001 : f32 to vector<8x64xf32>
    %1003 = arith.mulf %1000, %1002 : vector<8x64xf32>
    %1004 = arith.addf %998, %1003 : vector<8x64xf32>
    %c0_547 = arith.constant 0 : index
    %c2_548 = arith.constant 2 : index
    %c16_549 = arith.constant 16 : index
    %1005 = vector.load %arg13[%c0_547, %c2_548, %c16_549] : memref<3x10x80xf32, #tpu.memory_space<vmem>>, vector<1x8x64xf32>
    %1006 = vector.shape_cast %1005 : vector<1x8x64xf32> to vector<8x64xf32>
    %c143 = arith.constant 143 : index
    %1007 = memref.load %arg1[%c143] : memref<297xf32, #tpu.memory_space<smem>>
    %1008 = vector.broadcast %1007 : f32 to vector<8x64xf32>
    %1009 = arith.mulf %1006, %1008 : vector<8x64xf32>
    %1010 = arith.addf %1004, %1009 : vector<8x64xf32>
    %c1_550 = arith.constant 1 : index
    %c2_551 = arith.constant 2 : index
    %c0_552 = arith.constant 0 : index
    %1011 = vector.load %arg13[%c1_550, %c2_551, %c0_552] : memref<3x10x80xf32, #tpu.memory_space<vmem>>, vector<1x8x64xf32>
    %1012 = vector.shape_cast %1011 : vector<1x8x64xf32> to vector<8x64xf32>
    %c150 = arith.constant 150 : index
    %1013 = memref.load %arg1[%c150] : memref<297xf32, #tpu.memory_space<smem>>
    %1014 = vector.broadcast %1013 : f32 to vector<8x64xf32>
    %1015 = arith.mulf %1012, %1014 : vector<8x64xf32>
    %1016 = arith.addf %1010, %1015 : vector<8x64xf32>
    %c1_553 = arith.constant 1 : index
    %c2_554 = arith.constant 2 : index
    %c8_555 = arith.constant 8 : index
    %1017 = vector.load %arg13[%c1_553, %c2_554, %c8_555] : memref<3x10x80xf32, #tpu.memory_space<vmem>>, vector<1x8x64xf32>
    %1018 = vector.shape_cast %1017 : vector<1x8x64xf32> to vector<8x64xf32>
    %c151 = arith.constant 151 : index
    %1019 = memref.load %arg1[%c151] : memref<297xf32, #tpu.memory_space<smem>>
    %1020 = vector.broadcast %1019 : f32 to vector<8x64xf32>
    %1021 = arith.mulf %1018, %1020 : vector<8x64xf32>
    %1022 = arith.addf %1016, %1021 : vector<8x64xf32>
    %c1_556 = arith.constant 1 : index
    %c2_557 = arith.constant 2 : index
    %c16_558 = arith.constant 16 : index
    %1023 = vector.load %arg13[%c1_556, %c2_557, %c16_558] : memref<3x10x80xf32, #tpu.memory_space<vmem>>, vector<1x8x64xf32>
    %1024 = vector.shape_cast %1023 : vector<1x8x64xf32> to vector<8x64xf32>
    %c152 = arith.constant 152 : index
    %1025 = memref.load %arg1[%c152] : memref<297xf32, #tpu.memory_space<smem>>
    %1026 = vector.broadcast %1025 : f32 to vector<8x64xf32>
    %1027 = arith.mulf %1024, %1026 : vector<8x64xf32>
    %1028 = arith.addf %1022, %1027 : vector<8x64xf32>
    %c2_559 = arith.constant 2 : index
    %c2_560 = arith.constant 2 : index
    %c0_561 = arith.constant 0 : index
    %1029 = vector.load %arg13[%c2_559, %c2_560, %c0_561] : memref<3x10x80xf32, #tpu.memory_space<vmem>>, vector<1x8x64xf32>
    %1030 = vector.shape_cast %1029 : vector<1x8x64xf32> to vector<8x64xf32>
    %c159 = arith.constant 159 : index
    %1031 = memref.load %arg1[%c159] : memref<297xf32, #tpu.memory_space<smem>>
    %1032 = vector.broadcast %1031 : f32 to vector<8x64xf32>
    %1033 = arith.mulf %1030, %1032 : vector<8x64xf32>
    %1034 = arith.addf %1028, %1033 : vector<8x64xf32>
    %c2_562 = arith.constant 2 : index
    %c2_563 = arith.constant 2 : index
    %c8_564 = arith.constant 8 : index
    %1035 = vector.load %arg13[%c2_562, %c2_563, %c8_564] : memref<3x10x80xf32, #tpu.memory_space<vmem>>, vector<1x8x64xf32>
    %1036 = vector.shape_cast %1035 : vector<1x8x64xf32> to vector<8x64xf32>
    %c160 = arith.constant 160 : index
    %1037 = memref.load %arg1[%c160] : memref<297xf32, #tpu.memory_space<smem>>
    %1038 = vector.broadcast %1037 : f32 to vector<8x64xf32>
    %1039 = arith.mulf %1036, %1038 : vector<8x64xf32>
    %1040 = arith.addf %1034, %1039 : vector<8x64xf32>
    %c2_565 = arith.constant 2 : index
    %c2_566 = arith.constant 2 : index
    %c16_567 = arith.constant 16 : index
    %1041 = vector.load %arg13[%c2_565, %c2_566, %c16_567] : memref<3x10x80xf32, #tpu.memory_space<vmem>>, vector<1x8x64xf32>
    %1042 = vector.shape_cast %1041 : vector<1x8x64xf32> to vector<8x64xf32>
    %c161 = arith.constant 161 : index
    %1043 = memref.load %arg1[%c161] : memref<297xf32, #tpu.memory_space<smem>>
    %1044 = vector.broadcast %1043 : f32 to vector<8x64xf32>
    %1045 = arith.mulf %1042, %1044 : vector<8x64xf32>
    %1046 = arith.addf %1040, %1045 : vector<8x64xf32>
    %1047 = arith.addf %940, %993 : vector<8x64xf32>
    %c7_568 = arith.constant 7 : index
    %1048 = memref.load %arg2[%c7_568] : memref<13xf32, #tpu.memory_space<smem>>
    %1049 = vector.broadcast %1048 : f32 to vector<8x64xf32>
    %1050 = arith.addf %1046, %1049 : vector<8x64xf32>
    %1051 = arith.addf %1047, %1050 : vector<8x64xf32>
    %1052 = math.tanh %1051 : vector<8x64xf32>
    %c1_569 = arith.constant 1 : index
    %c1_570 = arith.constant 1 : index
    %c8_571 = arith.constant 8 : index
    %1053 = vector.load %arg12[%c1_569, %c1_570, %c8_571] : memref<3x10x80xf32, #tpu.memory_space<vmem>>, vector<1x8x64xf32>
    %1054 = vector.shape_cast %1053 : vector<1x8x64xf32> to vector<8x64xf32>
    %1055 = vector.shape_cast %1052 : vector<8x64xf32> to vector<1x8x64xf32>
    tpu.vector_store %arg12[%c1_569, %c1_570, %c8_571], %1055 {strides = array<i32>} : memref<3x10x80xf32, #tpu.memory_space<vmem>>, vector<1x8x64xf32>,
    %c0_572 = arith.constant 0 : index
    %c0_573 = arith.constant 0 : index
    %c0_574 = arith.constant 0 : index
    %1056 = vector.load %arg13[%c0_572, %c0_573, %c0_574] : memref<3x10x80xf32, #tpu.memory_space<vmem>>, vector<1x8x64xf32>
    %1057 = vector.shape_cast %1056 : vector<1x8x64xf32> to vector<8x64xf32>
    %c162 = arith.constant 162 : index
    %1058 = memref.load %arg1[%c162] : memref<297xf32, #tpu.memory_space<smem>>
    %1059 = vector.broadcast %1058 : f32 to vector<8x64xf32>
    %1060 = arith.mulf %1057, %1059 : vector<8x64xf32>
    %c0_575 = arith.constant 0 : index
    %c0_576 = arith.constant 0 : index
    %c8_577 = arith.constant 8 : index
    %1061 = vector.load %arg13[%c0_575, %c0_576, %c8_577] : memref<3x10x80xf32, #tpu.memory_space<vmem>>, vector<1x8x64xf32>
    %1062 = vector.shape_cast %1061 : vector<1x8x64xf32> to vector<8x64xf32>
    %c163 = arith.constant 163 : index
    %1063 = memref.load %arg1[%c163] : memref<297xf32, #tpu.memory_space<smem>>
    %1064 = vector.broadcast %1063 : f32 to vector<8x64xf32>
    %1065 = arith.mulf %1062, %1064 : vector<8x64xf32>
    %1066 = arith.addf %1060, %1065 : vector<8x64xf32>
    %c0_578 = arith.constant 0 : index
    %c0_579 = arith.constant 0 : index
    %c16_580 = arith.constant 16 : index
    %1067 = vector.load %arg13[%c0_578, %c0_579, %c16_580] : memref<3x10x80xf32, #tpu.memory_space<vmem>>, vector<1x8x64xf32>
    %1068 = vector.shape_cast %1067 : vector<1x8x64xf32> to vector<8x64xf32>
    %c164 = arith.constant 164 : index
    %1069 = memref.load %arg1[%c164] : memref<297xf32, #tpu.memory_space<smem>>
    %1070 = vector.broadcast %1069 : f32 to vector<8x64xf32>
    %1071 = arith.mulf %1068, %1070 : vector<8x64xf32>
    %1072 = arith.addf %1066, %1071 : vector<8x64xf32>
    %c1_581 = arith.constant 1 : index
    %c0_582 = arith.constant 0 : index
    %c0_583 = arith.constant 0 : index
    %1073 = vector.load %arg13[%c1_581, %c0_582, %c0_583] : memref<3x10x80xf32, #tpu.memory_space<vmem>>, vector<1x8x64xf32>
    %1074 = vector.shape_cast %1073 : vector<1x8x64xf32> to vector<8x64xf32>
    %c171 = arith.constant 171 : index
    %1075 = memref.load %arg1[%c171] : memref<297xf32, #tpu.memory_space<smem>>
    %1076 = vector.broadcast %1075 : f32 to vector<8x64xf32>
    %1077 = arith.mulf %1074, %1076 : vector<8x64xf32>
    %1078 = arith.addf %1072, %1077 : vector<8x64xf32>
    %c1_584 = arith.constant 1 : index
    %c0_585 = arith.constant 0 : index
    %c8_586 = arith.constant 8 : index
    %1079 = vector.load %arg13[%c1_584, %c0_585, %c8_586] : memref<3x10x80xf32, #tpu.memory_space<vmem>>, vector<1x8x64xf32>
    %1080 = vector.shape_cast %1079 : vector<1x8x64xf32> to vector<8x64xf32>
    %c172 = arith.constant 172 : index
    %1081 = memref.load %arg1[%c172] : memref<297xf32, #tpu.memory_space<smem>>
    %1082 = vector.broadcast %1081 : f32 to vector<8x64xf32>
    %1083 = arith.mulf %1080, %1082 : vector<8x64xf32>
    %1084 = arith.addf %1078, %1083 : vector<8x64xf32>
    %c1_587 = arith.constant 1 : index
    %c0_588 = arith.constant 0 : index
    %c16_589 = arith.constant 16 : index
    %1085 = vector.load %arg13[%c1_587, %c0_588, %c16_589] : memref<3x10x80xf32, #tpu.memory_space<vmem>>, vector<1x8x64xf32>
    %1086 = vector.shape_cast %1085 : vector<1x8x64xf32> to vector<8x64xf32>
    %c173 = arith.constant 173 : index
    %1087 = memref.load %arg1[%c173] : memref<297xf32, #tpu.memory_space<smem>>
    %1088 = vector.broadcast %1087 : f32 to vector<8x64xf32>
    %1089 = arith.mulf %1086, %1088 : vector<8x64xf32>
    %1090 = arith.addf %1084, %1089 : vector<8x64xf32>
    %c2_590 = arith.constant 2 : index
    %c0_591 = arith.constant 0 : index
    %c0_592 = arith.constant 0 : index
    %1091 = vector.load %arg13[%c2_590, %c0_591, %c0_592] : memref<3x10x80xf32, #tpu.memory_space<vmem>>, vector<1x8x64xf32>
    %1092 = vector.shape_cast %1091 : vector<1x8x64xf32> to vector<8x64xf32>
    %c180 = arith.constant 180 : index
    %1093 = memref.load %arg1[%c180] : memref<297xf32, #tpu.memory_space<smem>>
    %1094 = vector.broadcast %1093 : f32 to vector<8x64xf32>
    %1095 = arith.mulf %1092, %1094 : vector<8x64xf32>
    %1096 = arith.addf %1090, %1095 : vector<8x64xf32>
    %c2_593 = arith.constant 2 : index
    %c0_594 = arith.constant 0 : index
    %c8_595 = arith.constant 8 : index
    %1097 = vector.load %arg13[%c2_593, %c0_594, %c8_595] : memref<3x10x80xf32, #tpu.memory_space<vmem>>, vector<1x8x64xf32>
    %1098 = vector.shape_cast %1097 : vector<1x8x64xf32> to vector<8x64xf32>
    %c181 = arith.constant 181 : index
    %1099 = memref.load %arg1[%c181] : memref<297xf32, #tpu.memory_space<smem>>
    %1100 = vector.broadcast %1099 : f32 to vector<8x64xf32>
    %1101 = arith.mulf %1098, %1100 : vector<8x64xf32>
    %1102 = arith.addf %1096, %1101 : vector<8x64xf32>
    %c2_596 = arith.constant 2 : index
    %c0_597 = arith.constant 0 : index
    %c16_598 = arith.constant 16 : index
    %1103 = vector.load %arg13[%c2_596, %c0_597, %c16_598] : memref<3x10x80xf32, #tpu.memory_space<vmem>>, vector<1x8x64xf32>
    %1104 = vector.shape_cast %1103 : vector<1x8x64xf32> to vector<8x64xf32>
    %c182 = arith.constant 182 : index
    %1105 = memref.load %arg1[%c182] : memref<297xf32, #tpu.memory_space<smem>>
    %1106 = vector.broadcast %1105 : f32 to vector<8x64xf32>
    %1107 = arith.mulf %1104, %1106 : vector<8x64xf32>
    %1108 = arith.addf %1102, %1107 : vector<8x64xf32>
    %c0_599 = arith.constant 0 : index
    %c1_600 = arith.constant 1 : index
    %c0_601 = arith.constant 0 : index
    %1109 = vector.load %arg13[%c0_599, %c1_600, %c0_601] : memref<3x10x80xf32, #tpu.memory_space<vmem>>, vector<1x8x64xf32>
    %1110 = vector.shape_cast %1109 : vector<1x8x64xf32> to vector<8x64xf32>
    %c165 = arith.constant 165 : index
    %1111 = memref.load %arg1[%c165] : memref<297xf32, #tpu.memory_space<smem>>
    %1112 = vector.broadcast %1111 : f32 to vector<8x64xf32>
    %1113 = arith.mulf %1110, %1112 : vector<8x64xf32>
    %c0_602 = arith.constant 0 : index
    %c1_603 = arith.constant 1 : index
    %c8_604 = arith.constant 8 : index
    %1114 = vector.load %arg13[%c0_602, %c1_603, %c8_604] : memref<3x10x80xf32, #tpu.memory_space<vmem>>, vector<1x8x64xf32>
    %1115 = vector.shape_cast %1114 : vector<1x8x64xf32> to vector<8x64xf32>
    %c166 = arith.constant 166 : index
    %1116 = memref.load %arg1[%c166] : memref<297xf32, #tpu.memory_space<smem>>
    %1117 = vector.broadcast %1116 : f32 to vector<8x64xf32>
    %1118 = arith.mulf %1115, %1117 : vector<8x64xf32>
    %1119 = arith.addf %1113, %1118 : vector<8x64xf32>
    %c0_605 = arith.constant 0 : index
    %c1_606 = arith.constant 1 : index
    %c16_607 = arith.constant 16 : index
    %1120 = vector.load %arg13[%c0_605, %c1_606, %c16_607] : memref<3x10x80xf32, #tpu.memory_space<vmem>>, vector<1x8x64xf32>
    %1121 = vector.shape_cast %1120 : vector<1x8x64xf32> to vector<8x64xf32>
    %c167 = arith.constant 167 : index
    %1122 = memref.load %arg1[%c167] : memref<297xf32, #tpu.memory_space<smem>>
    %1123 = vector.broadcast %1122 : f32 to vector<8x64xf32>
    %1124 = arith.mulf %1121, %1123 : vector<8x64xf32>
    %1125 = arith.addf %1119, %1124 : vector<8x64xf32>
    %c1_608 = arith.constant 1 : index
    %c1_609 = arith.constant 1 : index
    %c0_610 = arith.constant 0 : index
    %1126 = vector.load %arg13[%c1_608, %c1_609, %c0_610] : memref<3x10x80xf32, #tpu.memory_space<vmem>>, vector<1x8x64xf32>
    %1127 = vector.shape_cast %1126 : vector<1x8x64xf32> to vector<8x64xf32>
    %c174 = arith.constant 174 : index
    %1128 = memref.load %arg1[%c174] : memref<297xf32, #tpu.memory_space<smem>>
    %1129 = vector.broadcast %1128 : f32 to vector<8x64xf32>
    %1130 = arith.mulf %1127, %1129 : vector<8x64xf32>
    %1131 = arith.addf %1125, %1130 : vector<8x64xf32>
    %c1_611 = arith.constant 1 : index
    %c1_612 = arith.constant 1 : index
    %c8_613 = arith.constant 8 : index
    %1132 = vector.load %arg13[%c1_611, %c1_612, %c8_613] : memref<3x10x80xf32, #tpu.memory_space<vmem>>, vector<1x8x64xf32>
    %1133 = vector.shape_cast %1132 : vector<1x8x64xf32> to vector<8x64xf32>
    %c175 = arith.constant 175 : index
    %1134 = memref.load %arg1[%c175] : memref<297xf32, #tpu.memory_space<smem>>
    %1135 = vector.broadcast %1134 : f32 to vector<8x64xf32>
    %1136 = arith.mulf %1133, %1135 : vector<8x64xf32>
    %1137 = arith.addf %1131, %1136 : vector<8x64xf32>
    %c1_614 = arith.constant 1 : index
    %c1_615 = arith.constant 1 : index
    %c16_616 = arith.constant 16 : index
    %1138 = vector.load %arg13[%c1_614, %c1_615, %c16_616] : memref<3x10x80xf32, #tpu.memory_space<vmem>>, vector<1x8x64xf32>
    %1139 = vector.shape_cast %1138 : vector<1x8x64xf32> to vector<8x64xf32>
    %c176 = arith.constant 176 : index
    %1140 = memref.load %arg1[%c176] : memref<297xf32, #tpu.memory_space<smem>>
    %1141 = vector.broadcast %1140 : f32 to vector<8x64xf32>
    %1142 = arith.mulf %1139, %1141 : vector<8x64xf32>
    %1143 = arith.addf %1137, %1142 : vector<8x64xf32>
    %c2_617 = arith.constant 2 : index
    %c1_618 = arith.constant 1 : index
    %c0_619 = arith.constant 0 : index
    %1144 = vector.load %arg13[%c2_617, %c1_618, %c0_619] : memref<3x10x80xf32, #tpu.memory_space<vmem>>, vector<1x8x64xf32>
    %1145 = vector.shape_cast %1144 : vector<1x8x64xf32> to vector<8x64xf32>
    %c183 = arith.constant 183 : index
    %1146 = memref.load %arg1[%c183] : memref<297xf32, #tpu.memory_space<smem>>
    %1147 = vector.broadcast %1146 : f32 to vector<8x64xf32>
    %1148 = arith.mulf %1145, %1147 : vector<8x64xf32>
    %1149 = arith.addf %1143, %1148 : vector<8x64xf32>
    %c2_620 = arith.constant 2 : index
    %c1_621 = arith.constant 1 : index
    %c8_622 = arith.constant 8 : index
    %1150 = vector.load %arg13[%c2_620, %c1_621, %c8_622] : memref<3x10x80xf32, #tpu.memory_space<vmem>>, vector<1x8x64xf32>
    %1151 = vector.shape_cast %1150 : vector<1x8x64xf32> to vector<8x64xf32>
    %c184 = arith.constant 184 : index
    %1152 = memref.load %arg1[%c184] : memref<297xf32, #tpu.memory_space<smem>>
    %1153 = vector.broadcast %1152 : f32 to vector<8x64xf32>
    %1154 = arith.mulf %1151, %1153 : vector<8x64xf32>
    %1155 = arith.addf %1149, %1154 : vector<8x64xf32>
    %c2_623 = arith.constant 2 : index
    %c1_624 = arith.constant 1 : index
    %c16_625 = arith.constant 16 : index
    %1156 = vector.load %arg13[%c2_623, %c1_624, %c16_625] : memref<3x10x80xf32, #tpu.memory_space<vmem>>, vector<1x8x64xf32>
    %1157 = vector.shape_cast %1156 : vector<1x8x64xf32> to vector<8x64xf32>
    %c185 = arith.constant 185 : index
    %1158 = memref.load %arg1[%c185] : memref<297xf32, #tpu.memory_space<smem>>
    %1159 = vector.broadcast %1158 : f32 to vector<8x64xf32>
    %1160 = arith.mulf %1157, %1159 : vector<8x64xf32>
    %1161 = arith.addf %1155, %1160 : vector<8x64xf32>
    %c0_626 = arith.constant 0 : index
    %c2_627 = arith.constant 2 : index
    %c0_628 = arith.constant 0 : index
    %1162 = vector.load %arg13[%c0_626, %c2_627, %c0_628] : memref<3x10x80xf32, #tpu.memory_space<vmem>>, vector<1x8x64xf32>
    %1163 = vector.shape_cast %1162 : vector<1x8x64xf32> to vector<8x64xf32>
    %c168 = arith.constant 168 : index
    %1164 = memref.load %arg1[%c168] : memref<297xf32, #tpu.memory_space<smem>>
    %1165 = vector.broadcast %1164 : f32 to vector<8x64xf32>
    %1166 = arith.mulf %1163, %1165 : vector<8x64xf32>
    %c0_629 = arith.constant 0 : index
    %c2_630 = arith.constant 2 : index
    %c8_631 = arith.constant 8 : index
    %1167 = vector.load %arg13[%c0_629, %c2_630, %c8_631] : memref<3x10x80xf32, #tpu.memory_space<vmem>>, vector<1x8x64xf32>
    %1168 = vector.shape_cast %1167 : vector<1x8x64xf32> to vector<8x64xf32>
    %c169 = arith.constant 169 : index
    %1169 = memref.load %arg1[%c169] : memref<297xf32, #tpu.memory_space<smem>>
    %1170 = vector.broadcast %1169 : f32 to vector<8x64xf32>
    %1171 = arith.mulf %1168, %1170 : vector<8x64xf32>
    %1172 = arith.addf %1166, %1171 : vector<8x64xf32>
    %c0_632 = arith.constant 0 : index
    %c2_633 = arith.constant 2 : index
    %c16_634 = arith.constant 16 : index
    %1173 = vector.load %arg13[%c0_632, %c2_633, %c16_634] : memref<3x10x80xf32, #tpu.memory_space<vmem>>, vector<1x8x64xf32>
    %1174 = vector.shape_cast %1173 : vector<1x8x64xf32> to vector<8x64xf32>
    %c170 = arith.constant 170 : index
    %1175 = memref.load %arg1[%c170] : memref<297xf32, #tpu.memory_space<smem>>
    %1176 = vector.broadcast %1175 : f32 to vector<8x64xf32>
    %1177 = arith.mulf %1174, %1176 : vector<8x64xf32>
    %1178 = arith.addf %1172, %1177 : vector<8x64xf32>
    %c1_635 = arith.constant 1 : index
    %c2_636 = arith.constant 2 : index
    %c0_637 = arith.constant 0 : index
    %1179 = vector.load %arg13[%c1_635, %c2_636, %c0_637] : memref<3x10x80xf32, #tpu.memory_space<vmem>>, vector<1x8x64xf32>
    %1180 = vector.shape_cast %1179 : vector<1x8x64xf32> to vector<8x64xf32>
    %c177 = arith.constant 177 : index
    %1181 = memref.load %arg1[%c177] : memref<297xf32, #tpu.memory_space<smem>>
    %1182 = vector.broadcast %1181 : f32 to vector<8x64xf32>
    %1183 = arith.mulf %1180, %1182 : vector<8x64xf32>
    %1184 = arith.addf %1178, %1183 : vector<8x64xf32>
    %c1_638 = arith.constant 1 : index
    %c2_639 = arith.constant 2 : index
    %c8_640 = arith.constant 8 : index
    %1185 = vector.load %arg13[%c1_638, %c2_639, %c8_640] : memref<3x10x80xf32, #tpu.memory_space<vmem>>, vector<1x8x64xf32>
    %1186 = vector.shape_cast %1185 : vector<1x8x64xf32> to vector<8x64xf32>
    %c178 = arith.constant 178 : index
    %1187 = memref.load %arg1[%c178] : memref<297xf32, #tpu.memory_space<smem>>
    %1188 = vector.broadcast %1187 : f32 to vector<8x64xf32>
    %1189 = arith.mulf %1186, %1188 : vector<8x64xf32>
    %1190 = arith.addf %1184, %1189 : vector<8x64xf32>
    %c1_641 = arith.constant 1 : index
    %c2_642 = arith.constant 2 : index
    %c16_643 = arith.constant 16 : index
    %1191 = vector.load %arg13[%c1_641, %c2_642, %c16_643] : memref<3x10x80xf32, #tpu.memory_space<vmem>>, vector<1x8x64xf32>
    %1192 = vector.shape_cast %1191 : vector<1x8x64xf32> to vector<8x64xf32>
    %c179 = arith.constant 179 : index
    %1193 = memref.load %arg1[%c179] : memref<297xf32, #tpu.memory_space<smem>>
    %1194 = vector.broadcast %1193 : f32 to vector<8x64xf32>
    %1195 = arith.mulf %1192, %1194 : vector<8x64xf32>
    %1196 = arith.addf %1190, %1195 : vector<8x64xf32>
    %c2_644 = arith.constant 2 : index
    %c2_645 = arith.constant 2 : index
    %c0_646 = arith.constant 0 : index
    %1197 = vector.load %arg13[%c2_644, %c2_645, %c0_646] : memref<3x10x80xf32, #tpu.memory_space<vmem>>, vector<1x8x64xf32>
    %1198 = vector.shape_cast %1197 : vector<1x8x64xf32> to vector<8x64xf32>
    %c186 = arith.constant 186 : index
    %1199 = memref.load %arg1[%c186] : memref<297xf32, #tpu.memory_space<smem>>
    %1200 = vector.broadcast %1199 : f32 to vector<8x64xf32>
    %1201 = arith.mulf %1198, %1200 : vector<8x64xf32>
    %1202 = arith.addf %1196, %1201 : vector<8x64xf32>
    %c2_647 = arith.constant 2 : index
    %c2_648 = arith.constant 2 : index
    %c8_649 = arith.constant 8 : index
    %1203 = vector.load %arg13[%c2_647, %c2_648, %c8_649] : memref<3x10x80xf32, #tpu.memory_space<vmem>>, vector<1x8x64xf32>
    %1204 = vector.shape_cast %1203 : vector<1x8x64xf32> to vector<8x64xf32>
    %c187 = arith.constant 187 : index
    %1205 = memref.load %arg1[%c187] : memref<297xf32, #tpu.memory_space<smem>>
    %1206 = vector.broadcast %1205 : f32 to vector<8x64xf32>
    %1207 = arith.mulf %1204, %1206 : vector<8x64xf32>
    %1208 = arith.addf %1202, %1207 : vector<8x64xf32>
    %c2_650 = arith.constant 2 : index
    %c2_651 = arith.constant 2 : index
    %c16_652 = arith.constant 16 : index
    %1209 = vector.load %arg13[%c2_650, %c2_651, %c16_652] : memref<3x10x80xf32, #tpu.memory_space<vmem>>, vector<1x8x64xf32>
    %1210 = vector.shape_cast %1209 : vector<1x8x64xf32> to vector<8x64xf32>
    %c188 = arith.constant 188 : index
    %1211 = memref.load %arg1[%c188] : memref<297xf32, #tpu.memory_space<smem>>
    %1212 = vector.broadcast %1211 : f32 to vector<8x64xf32>
    %1213 = arith.mulf %1210, %1212 : vector<8x64xf32>
    %1214 = arith.addf %1208, %1213 : vector<8x64xf32>
    %1215 = arith.addf %1108, %1161 : vector<8x64xf32>
    %c8_653 = arith.constant 8 : index
    %1216 = memref.load %arg2[%c8_653] : memref<13xf32, #tpu.memory_space<smem>>
    %1217 = vector.broadcast %1216 : f32 to vector<8x64xf32>
    %1218 = arith.addf %1214, %1217 : vector<8x64xf32>
    %1219 = arith.addf %1215, %1218 : vector<8x64xf32>
    %1220 = math.tanh %1219 : vector<8x64xf32>
    %c2_654 = arith.constant 2 : index
    %c1_655 = arith.constant 1 : index
    %c8_656 = arith.constant 8 : index
    %1221 = vector.load %arg12[%c2_654, %c1_655, %c8_656] : memref<3x10x80xf32, #tpu.memory_space<vmem>>, vector<1x8x64xf32>
    %1222 = vector.shape_cast %1221 : vector<1x8x64xf32> to vector<8x64xf32>
    %1223 = vector.shape_cast %1220 : vector<8x64xf32> to vector<1x8x64xf32>
    tpu.vector_store %arg12[%c2_654, %c1_655, %c8_656], %1223 {strides = array<i32>} : memref<3x10x80xf32, #tpu.memory_space<vmem>>, vector<1x8x64xf32>,
    %c0_657 = arith.constant 0 : index
    %c0_658 = arith.constant 0 : index
    %1224 = vector.load %arg5[%c0_657, %c0_658] : memref<16x8xf32, #tpu.memory_space<vmem>>, vector<16x8xf32>
    %c0_659 = arith.constant 0 : index
    %c0_660 = arith.constant 0 : index
    %1225 = vector.load %arg6[%c0_659, %c0_660] : memref<64x128xf32, #tpu.memory_space<vmem>>, vector<64x128xf32>
    %c0_661 = arith.constant 0 : index
    %c1_662 = arith.constant 1 : index
    %c8_663 = arith.constant 8 : index
    %1226 = vector.load %arg12[%c0_661, %c1_662, %c8_663] : memref<3x10x80xf32, #tpu.memory_space<vmem>>, vector<1x8x64xf32>
    %1227 = vector.shape_cast %1226 : vector<1x8x64xf32> to vector<8x64xf32>
    %cst_664 = arith.constant dense<0.000000e+00> : vector<16x64xf32>
    %1228 = tpu.matmul %1224, %1227, %cst_664 {dimension_numbers = #tpu.dot_dimension_numbers<[1], [0], [0], [1], [0, 0, 1, 1], [], []>} : vector<16x8xf32>, vector<8x64xf32>, vector<16x64xf32> -> vector<16x64xf32>
    %cst_665 = arith.constant dense<0.000000e+00> : vector<16x128xf32>
    %1229 = tpu.matmul %1228, %1225, %cst_665 {dimension_numbers = #tpu.dot_dimension_numbers<[1], [0], [0], [1], [0, 0, 1, 1], [], []>} : vector<16x64xf32>, vector<64x128xf32>, vector<16x128xf32> -> vector<16x128xf32>
    %c0_666 = arith.constant 0 : index
    %c1_667 = arith.constant 1 : index
    %c8_668 = arith.constant 8 : index
    %1230 = vector.load %arg10[%c0_666, %c1_667, %c8_668] : memref<3x18x144xf32, #tpu.memory_space<vmem>>, vector<1x16x128xf32>
    %1231 = vector.shape_cast %1230 : vector<1x16x128xf32> to vector<16x128xf32>
    %1232 = vector.shape_cast %1229 : vector<16x128xf32> to vector<1x16x128xf32>
    tpu.vector_store %arg10[%c0_666, %c1_667, %c8_668], %1232 {strides = array<i32>} : memref<3x18x144xf32, #tpu.memory_space<vmem>>, vector<1x16x128xf32>,
    %c1_669 = arith.constant 1 : index
    %c1_670 = arith.constant 1 : index
    %c8_671 = arith.constant 8 : index
    %1233 = vector.load %arg12[%c1_669, %c1_670, %c8_671] : memref<3x10x80xf32, #tpu.memory_space<vmem>>, vector<1x8x64xf32>
    %1234 = vector.shape_cast %1233 : vector<1x8x64xf32> to vector<8x64xf32>
    %cst_672 = arith.constant dense<0.000000e+00> : vector<16x64xf32>
    %1235 = tpu.matmul %1224, %1234, %cst_672 {dimension_numbers = #tpu.dot_dimension_numbers<[1], [0], [0], [1], [0, 0, 1, 1], [], []>} : vector<16x8xf32>, vector<8x64xf32>, vector<16x64xf32> -> vector<16x64xf32>
    %cst_673 = arith.constant dense<0.000000e+00> : vector<16x128xf32>
    %1236 = tpu.matmul %1235, %1225, %cst_673 {dimension_numbers = #tpu.dot_dimension_numbers<[1], [0], [0], [1], [0, 0, 1, 1], [], []>} : vector<16x64xf32>, vector<64x128xf32>, vector<16x128xf32> -> vector<16x128xf32>
    %c1_674 = arith.constant 1 : index
    %c1_675 = arith.constant 1 : index
    %c8_676 = arith.constant 8 : index
    %1237 = vector.load %arg10[%c1_674, %c1_675, %c8_676] : memref<3x18x144xf32, #tpu.memory_space<vmem>>, vector<1x16x128xf32>
    %1238 = vector.shape_cast %1237 : vector<1x16x128xf32> to vector<16x128xf32>
    %1239 = vector.shape_cast %1236 : vector<16x128xf32> to vector<1x16x128xf32>
    tpu.vector_store %arg10[%c1_674, %c1_675, %c8_676], %1239 {strides = array<i32>} : memref<3x18x144xf32, #tpu.memory_space<vmem>>, vector<1x16x128xf32>,
    %c2_677 = arith.constant 2 : index
    %c1_678 = arith.constant 1 : index
    %c8_679 = arith.constant 8 : index
    %1240 = vector.load %arg12[%c2_677, %c1_678, %c8_679] : memref<3x10x80xf32, #tpu.memory_space<vmem>>, vector<1x8x64xf32>
    %1241 = vector.shape_cast %1240 : vector<1x8x64xf32> to vector<8x64xf32>
    %cst_680 = arith.constant dense<0.000000e+00> : vector<16x64xf32>
    %1242 = tpu.matmul %1224, %1241, %cst_680 {dimension_numbers = #tpu.dot_dimension_numbers<[1], [0], [0], [1], [0, 0, 1, 1], [], []>} : vector<16x8xf32>, vector<8x64xf32>, vector<16x64xf32> -> vector<16x64xf32>
    %cst_681 = arith.constant dense<0.000000e+00> : vector<16x128xf32>
    %1243 = tpu.matmul %1242, %1225, %cst_681 {dimension_numbers = #tpu.dot_dimension_numbers<[1], [0], [0], [1], [0, 0, 1, 1], [], []>} : vector<16x64xf32>, vector<64x128xf32>, vector<16x128xf32> -> vector<16x128xf32>
    %c2_682 = arith.constant 2 : index
    %c1_683 = arith.constant 1 : index
    %c8_684 = arith.constant 8 : index
    %1244 = vector.load %arg10[%c2_682, %c1_683, %c8_684] : memref<3x18x144xf32, #tpu.memory_space<vmem>>, vector<1x16x128xf32>
    %1245 = vector.shape_cast %1244 : vector<1x16x128xf32> to vector<16x128xf32>
    %1246 = vector.shape_cast %1243 : vector<16x128xf32> to vector<1x16x128xf32>
    tpu.vector_store %arg10[%c2_682, %c1_683, %c8_684], %1246 {strides = array<i32>} : memref<3x18x144xf32, #tpu.memory_space<vmem>>, vector<1x16x128xf32>,
    %c0_685 = arith.constant 0 : index
    %c0_686 = arith.constant 0 : index
    %c0_687 = arith.constant 0 : index
    %1247 = vector.load %arg10[%c0_685, %c0_686, %c0_687] : memref<3x18x144xf32, #tpu.memory_space<vmem>>, vector<1x16x128xf32>
    %1248 = vector.shape_cast %1247 : vector<1x16x128xf32> to vector<16x128xf32>
    %c189 = arith.constant 189 : index
    %1249 = memref.load %arg1[%c189] : memref<297xf32, #tpu.memory_space<smem>>
    %1250 = vector.broadcast %1249 : f32 to vector<16x128xf32>
    %1251 = arith.mulf %1248, %1250 : vector<16x128xf32>
    %c0_688 = arith.constant 0 : index
    %c0_689 = arith.constant 0 : index
    %c8_690 = arith.constant 8 : index
    %1252 = vector.load %arg10[%c0_688, %c0_689, %c8_690] : memref<3x18x144xf32, #tpu.memory_space<vmem>>, vector<1x16x128xf32>
    %1253 = vector.shape_cast %1252 : vector<1x16x128xf32> to vector<16x128xf32>
    %c190 = arith.constant 190 : index
    %1254 = memref.load %arg1[%c190] : memref<297xf32, #tpu.memory_space<smem>>
    %1255 = vector.broadcast %1254 : f32 to vector<16x128xf32>
    %1256 = arith.mulf %1253, %1255 : vector<16x128xf32>
    %1257 = arith.addf %1251, %1256 : vector<16x128xf32>
    %c0_691 = arith.constant 0 : index
    %c0_692 = arith.constant 0 : index
    %c16_693 = arith.constant 16 : index
    %1258 = vector.load %arg10[%c0_691, %c0_692, %c16_693] : memref<3x18x144xf32, #tpu.memory_space<vmem>>, vector<1x16x128xf32>
    %1259 = vector.shape_cast %1258 : vector<1x16x128xf32> to vector<16x128xf32>
    %c191 = arith.constant 191 : index
    %1260 = memref.load %arg1[%c191] : memref<297xf32, #tpu.memory_space<smem>>
    %1261 = vector.broadcast %1260 : f32 to vector<16x128xf32>
    %1262 = arith.mulf %1259, %1261 : vector<16x128xf32>
    %1263 = arith.addf %1257, %1262 : vector<16x128xf32>
    %c1_694 = arith.constant 1 : index
    %c0_695 = arith.constant 0 : index
    %c0_696 = arith.constant 0 : index
    %1264 = vector.load %arg10[%c1_694, %c0_695, %c0_696] : memref<3x18x144xf32, #tpu.memory_space<vmem>>, vector<1x16x128xf32>
    %1265 = vector.shape_cast %1264 : vector<1x16x128xf32> to vector<16x128xf32>
    %c198 = arith.constant 198 : index
    %1266 = memref.load %arg1[%c198] : memref<297xf32, #tpu.memory_space<smem>>
    %1267 = vector.broadcast %1266 : f32 to vector<16x128xf32>
    %1268 = arith.mulf %1265, %1267 : vector<16x128xf32>
    %1269 = arith.addf %1263, %1268 : vector<16x128xf32>
    %c1_697 = arith.constant 1 : index
    %c0_698 = arith.constant 0 : index
    %c8_699 = arith.constant 8 : index
    %1270 = vector.load %arg10[%c1_697, %c0_698, %c8_699] : memref<3x18x144xf32, #tpu.memory_space<vmem>>, vector<1x16x128xf32>
    %1271 = vector.shape_cast %1270 : vector<1x16x128xf32> to vector<16x128xf32>
    %c199 = arith.constant 199 : index
    %1272 = memref.load %arg1[%c199] : memref<297xf32, #tpu.memory_space<smem>>
    %1273 = vector.broadcast %1272 : f32 to vector<16x128xf32>
    %1274 = arith.mulf %1271, %1273 : vector<16x128xf32>
    %1275 = arith.addf %1269, %1274 : vector<16x128xf32>
    %c1_700 = arith.constant 1 : index
    %c0_701 = arith.constant 0 : index
    %c16_702 = arith.constant 16 : index
    %1276 = vector.load %arg10[%c1_700, %c0_701, %c16_702] : memref<3x18x144xf32, #tpu.memory_space<vmem>>, vector<1x16x128xf32>
    %1277 = vector.shape_cast %1276 : vector<1x16x128xf32> to vector<16x128xf32>
    %c200 = arith.constant 200 : index
    %1278 = memref.load %arg1[%c200] : memref<297xf32, #tpu.memory_space<smem>>
    %1279 = vector.broadcast %1278 : f32 to vector<16x128xf32>
    %1280 = arith.mulf %1277, %1279 : vector<16x128xf32>
    %1281 = arith.addf %1275, %1280 : vector<16x128xf32>
    %c2_703 = arith.constant 2 : index
    %c0_704 = arith.constant 0 : index
    %c0_705 = arith.constant 0 : index
    %1282 = vector.load %arg10[%c2_703, %c0_704, %c0_705] : memref<3x18x144xf32, #tpu.memory_space<vmem>>, vector<1x16x128xf32>
    %1283 = vector.shape_cast %1282 : vector<1x16x128xf32> to vector<16x128xf32>
    %c207 = arith.constant 207 : index
    %1284 = memref.load %arg1[%c207] : memref<297xf32, #tpu.memory_space<smem>>
    %1285 = vector.broadcast %1284 : f32 to vector<16x128xf32>
    %1286 = arith.mulf %1283, %1285 : vector<16x128xf32>
    %1287 = arith.addf %1281, %1286 : vector<16x128xf32>
    %c2_706 = arith.constant 2 : index
    %c0_707 = arith.constant 0 : index
    %c8_708 = arith.constant 8 : index
    %1288 = vector.load %arg10[%c2_706, %c0_707, %c8_708] : memref<3x18x144xf32, #tpu.memory_space<vmem>>, vector<1x16x128xf32>
    %1289 = vector.shape_cast %1288 : vector<1x16x128xf32> to vector<16x128xf32>
    %c208 = arith.constant 208 : index
    %1290 = memref.load %arg1[%c208] : memref<297xf32, #tpu.memory_space<smem>>
    %1291 = vector.broadcast %1290 : f32 to vector<16x128xf32>
    %1292 = arith.mulf %1289, %1291 : vector<16x128xf32>
    %1293 = arith.addf %1287, %1292 : vector<16x128xf32>
    %c2_709 = arith.constant 2 : index
    %c0_710 = arith.constant 0 : index
    %c16_711 = arith.constant 16 : index
    %1294 = vector.load %arg10[%c2_709, %c0_710, %c16_711] : memref<3x18x144xf32, #tpu.memory_space<vmem>>, vector<1x16x128xf32>
    %1295 = vector.shape_cast %1294 : vector<1x16x128xf32> to vector<16x128xf32>
    %c209 = arith.constant 209 : index
    %1296 = memref.load %arg1[%c209] : memref<297xf32, #tpu.memory_space<smem>>
    %1297 = vector.broadcast %1296 : f32 to vector<16x128xf32>
    %1298 = arith.mulf %1295, %1297 : vector<16x128xf32>
    %1299 = arith.addf %1293, %1298 : vector<16x128xf32>
    %c0_712 = arith.constant 0 : index
    %c1_713 = arith.constant 1 : index
    %c0_714 = arith.constant 0 : index
    %1300 = vector.load %arg10[%c0_712, %c1_713, %c0_714] : memref<3x18x144xf32, #tpu.memory_space<vmem>>, vector<1x16x128xf32>
    %1301 = vector.shape_cast %1300 : vector<1x16x128xf32> to vector<16x128xf32>
    %c192 = arith.constant 192 : index
    %1302 = memref.load %arg1[%c192] : memref<297xf32, #tpu.memory_space<smem>>
    %1303 = vector.broadcast %1302 : f32 to vector<16x128xf32>
    %1304 = arith.mulf %1301, %1303 : vector<16x128xf32>
    %c0_715 = arith.constant 0 : index
    %c1_716 = arith.constant 1 : index
    %c8_717 = arith.constant 8 : index
    %1305 = vector.load %arg10[%c0_715, %c1_716, %c8_717] : memref<3x18x144xf32, #tpu.memory_space<vmem>>, vector<1x16x128xf32>
    %1306 = vector.shape_cast %1305 : vector<1x16x128xf32> to vector<16x128xf32>
    %c193 = arith.constant 193 : index
    %1307 = memref.load %arg1[%c193] : memref<297xf32, #tpu.memory_space<smem>>
    %1308 = vector.broadcast %1307 : f32 to vector<16x128xf32>
    %1309 = arith.mulf %1306, %1308 : vector<16x128xf32>
    %1310 = arith.addf %1304, %1309 : vector<16x128xf32>
    %c0_718 = arith.constant 0 : index
    %c1_719 = arith.constant 1 : index
    %c16_720 = arith.constant 16 : index
    %1311 = vector.load %arg10[%c0_718, %c1_719, %c16_720] : memref<3x18x144xf32, #tpu.memory_space<vmem>>, vector<1x16x128xf32>
    %1312 = vector.shape_cast %1311 : vector<1x16x128xf32> to vector<16x128xf32>
    %c194 = arith.constant 194 : index
    %1313 = memref.load %arg1[%c194] : memref<297xf32, #tpu.memory_space<smem>>
    %1314 = vector.broadcast %1313 : f32 to vector<16x128xf32>
    %1315 = arith.mulf %1312, %1314 : vector<16x128xf32>
    %1316 = arith.addf %1310, %1315 : vector<16x128xf32>
    %c1_721 = arith.constant 1 : index
    %c1_722 = arith.constant 1 : index
    %c0_723 = arith.constant 0 : index
    %1317 = vector.load %arg10[%c1_721, %c1_722, %c0_723] : memref<3x18x144xf32, #tpu.memory_space<vmem>>, vector<1x16x128xf32>
    %1318 = vector.shape_cast %1317 : vector<1x16x128xf32> to vector<16x128xf32>
    %c201 = arith.constant 201 : index
    %1319 = memref.load %arg1[%c201] : memref<297xf32, #tpu.memory_space<smem>>
    %1320 = vector.broadcast %1319 : f32 to vector<16x128xf32>
    %1321 = arith.mulf %1318, %1320 : vector<16x128xf32>
    %1322 = arith.addf %1316, %1321 : vector<16x128xf32>
    %c1_724 = arith.constant 1 : index
    %c1_725 = arith.constant 1 : index
    %c8_726 = arith.constant 8 : index
    %1323 = vector.load %arg10[%c1_724, %c1_725, %c8_726] : memref<3x18x144xf32, #tpu.memory_space<vmem>>, vector<1x16x128xf32>
    %1324 = vector.shape_cast %1323 : vector<1x16x128xf32> to vector<16x128xf32>
    %c202 = arith.constant 202 : index
    %1325 = memref.load %arg1[%c202] : memref<297xf32, #tpu.memory_space<smem>>
    %1326 = vector.broadcast %1325 : f32 to vector<16x128xf32>
    %1327 = arith.mulf %1324, %1326 : vector<16x128xf32>
    %1328 = arith.addf %1322, %1327 : vector<16x128xf32>
    %c1_727 = arith.constant 1 : index
    %c1_728 = arith.constant 1 : index
    %c16_729 = arith.constant 16 : index
    %1329 = vector.load %arg10[%c1_727, %c1_728, %c16_729] : memref<3x18x144xf32, #tpu.memory_space<vmem>>, vector<1x16x128xf32>
    %1330 = vector.shape_cast %1329 : vector<1x16x128xf32> to vector<16x128xf32>
    %c203 = arith.constant 203 : index
    %1331 = memref.load %arg1[%c203] : memref<297xf32, #tpu.memory_space<smem>>
    %1332 = vector.broadcast %1331 : f32 to vector<16x128xf32>
    %1333 = arith.mulf %1330, %1332 : vector<16x128xf32>
    %1334 = arith.addf %1328, %1333 : vector<16x128xf32>
    %c2_730 = arith.constant 2 : index
    %c1_731 = arith.constant 1 : index
    %c0_732 = arith.constant 0 : index
    %1335 = vector.load %arg10[%c2_730, %c1_731, %c0_732] : memref<3x18x144xf32, #tpu.memory_space<vmem>>, vector<1x16x128xf32>
    %1336 = vector.shape_cast %1335 : vector<1x16x128xf32> to vector<16x128xf32>
    %c210 = arith.constant 210 : index
    %1337 = memref.load %arg1[%c210] : memref<297xf32, #tpu.memory_space<smem>>
    %1338 = vector.broadcast %1337 : f32 to vector<16x128xf32>
    %1339 = arith.mulf %1336, %1338 : vector<16x128xf32>
    %1340 = arith.addf %1334, %1339 : vector<16x128xf32>
    %c2_733 = arith.constant 2 : index
    %c1_734 = arith.constant 1 : index
    %c8_735 = arith.constant 8 : index
    %1341 = vector.load %arg10[%c2_733, %c1_734, %c8_735] : memref<3x18x144xf32, #tpu.memory_space<vmem>>, vector<1x16x128xf32>
    %1342 = vector.shape_cast %1341 : vector<1x16x128xf32> to vector<16x128xf32>
    %c211 = arith.constant 211 : index
    %1343 = memref.load %arg1[%c211] : memref<297xf32, #tpu.memory_space<smem>>
    %1344 = vector.broadcast %1343 : f32 to vector<16x128xf32>
    %1345 = arith.mulf %1342, %1344 : vector<16x128xf32>
    %1346 = arith.addf %1340, %1345 : vector<16x128xf32>
    %c2_736 = arith.constant 2 : index
    %c1_737 = arith.constant 1 : index
    %c16_738 = arith.constant 16 : index
    %1347 = vector.load %arg10[%c2_736, %c1_737, %c16_738] : memref<3x18x144xf32, #tpu.memory_space<vmem>>, vector<1x16x128xf32>
    %1348 = vector.shape_cast %1347 : vector<1x16x128xf32> to vector<16x128xf32>
    %c212 = arith.constant 212 : index
    %1349 = memref.load %arg1[%c212] : memref<297xf32, #tpu.memory_space<smem>>
    %1350 = vector.broadcast %1349 : f32 to vector<16x128xf32>
    %1351 = arith.mulf %1348, %1350 : vector<16x128xf32>
    %1352 = arith.addf %1346, %1351 : vector<16x128xf32>
    %c0_739 = arith.constant 0 : index
    %c2_740 = arith.constant 2 : index
    %c0_741 = arith.constant 0 : index
    %1353 = vector.load %arg10[%c0_739, %c2_740, %c0_741] : memref<3x18x144xf32, #tpu.memory_space<vmem>>, vector<1x16x128xf32>
    %1354 = vector.shape_cast %1353 : vector<1x16x128xf32> to vector<16x128xf32>
    %c195 = arith.constant 195 : index
    %1355 = memref.load %arg1[%c195] : memref<297xf32, #tpu.memory_space<smem>>
    %1356 = vector.broadcast %1355 : f32 to vector<16x128xf32>
    %1357 = arith.mulf %1354, %1356 : vector<16x128xf32>
    %c0_742 = arith.constant 0 : index
    %c2_743 = arith.constant 2 : index
    %c8_744 = arith.constant 8 : index
    %1358 = vector.load %arg10[%c0_742, %c2_743, %c8_744] : memref<3x18x144xf32, #tpu.memory_space<vmem>>, vector<1x16x128xf32>
    %1359 = vector.shape_cast %1358 : vector<1x16x128xf32> to vector<16x128xf32>
    %c196 = arith.constant 196 : index
    %1360 = memref.load %arg1[%c196] : memref<297xf32, #tpu.memory_space<smem>>
    %1361 = vector.broadcast %1360 : f32 to vector<16x128xf32>
    %1362 = arith.mulf %1359, %1361 : vector<16x128xf32>
    %1363 = arith.addf %1357, %1362 : vector<16x128xf32>
    %c0_745 = arith.constant 0 : index
    %c2_746 = arith.constant 2 : index
    %c16_747 = arith.constant 16 : index
    %1364 = vector.load %arg10[%c0_745, %c2_746, %c16_747] : memref<3x18x144xf32, #tpu.memory_space<vmem>>, vector<1x16x128xf32>
    %1365 = vector.shape_cast %1364 : vector<1x16x128xf32> to vector<16x128xf32>
    %c197 = arith.constant 197 : index
    %1366 = memref.load %arg1[%c197] : memref<297xf32, #tpu.memory_space<smem>>
    %1367 = vector.broadcast %1366 : f32 to vector<16x128xf32>
    %1368 = arith.mulf %1365, %1367 : vector<16x128xf32>
    %1369 = arith.addf %1363, %1368 : vector<16x128xf32>
    %c1_748 = arith.constant 1 : index
    %c2_749 = arith.constant 2 : index
    %c0_750 = arith.constant 0 : index
    %1370 = vector.load %arg10[%c1_748, %c2_749, %c0_750] : memref<3x18x144xf32, #tpu.memory_space<vmem>>, vector<1x16x128xf32>
    %1371 = vector.shape_cast %1370 : vector<1x16x128xf32> to vector<16x128xf32>
    %c204 = arith.constant 204 : index
    %1372 = memref.load %arg1[%c204] : memref<297xf32, #tpu.memory_space<smem>>
    %1373 = vector.broadcast %1372 : f32 to vector<16x128xf32>
    %1374 = arith.mulf %1371, %1373 : vector<16x128xf32>
    %1375 = arith.addf %1369, %1374 : vector<16x128xf32>
    %c1_751 = arith.constant 1 : index
    %c2_752 = arith.constant 2 : index
    %c8_753 = arith.constant 8 : index
    %1376 = vector.load %arg10[%c1_751, %c2_752, %c8_753] : memref<3x18x144xf32, #tpu.memory_space<vmem>>, vector<1x16x128xf32>
    %1377 = vector.shape_cast %1376 : vector<1x16x128xf32> to vector<16x128xf32>
    %c205 = arith.constant 205 : index
    %1378 = memref.load %arg1[%c205] : memref<297xf32, #tpu.memory_space<smem>>
    %1379 = vector.broadcast %1378 : f32 to vector<16x128xf32>
    %1380 = arith.mulf %1377, %1379 : vector<16x128xf32>
    %1381 = arith.addf %1375, %1380 : vector<16x128xf32>
    %c1_754 = arith.constant 1 : index
    %c2_755 = arith.constant 2 : index
    %c16_756 = arith.constant 16 : index
    %1382 = vector.load %arg10[%c1_754, %c2_755, %c16_756] : memref<3x18x144xf32, #tpu.memory_space<vmem>>, vector<1x16x128xf32>
    %1383 = vector.shape_cast %1382 : vector<1x16x128xf32> to vector<16x128xf32>
    %c206 = arith.constant 206 : index
    %1384 = memref.load %arg1[%c206] : memref<297xf32, #tpu.memory_space<smem>>
    %1385 = vector.broadcast %1384 : f32 to vector<16x128xf32>
    %1386 = arith.mulf %1383, %1385 : vector<16x128xf32>
    %1387 = arith.addf %1381, %1386 : vector<16x128xf32>
    %c2_757 = arith.constant 2 : index
    %c2_758 = arith.constant 2 : index
    %c0_759 = arith.constant 0 : index
    %1388 = vector.load %arg10[%c2_757, %c2_758, %c0_759] : memref<3x18x144xf32, #tpu.memory_space<vmem>>, vector<1x16x128xf32>
    %1389 = vector.shape_cast %1388 : vector<1x16x128xf32> to vector<16x128xf32>
    %c213 = arith.constant 213 : index
    %1390 = memref.load %arg1[%c213] : memref<297xf32, #tpu.memory_space<smem>>
    %1391 = vector.broadcast %1390 : f32 to vector<16x128xf32>
    %1392 = arith.mulf %1389, %1391 : vector<16x128xf32>
    %1393 = arith.addf %1387, %1392 : vector<16x128xf32>
    %c2_760 = arith.constant 2 : index
    %c2_761 = arith.constant 2 : index
    %c8_762 = arith.constant 8 : index
    %1394 = vector.load %arg10[%c2_760, %c2_761, %c8_762] : memref<3x18x144xf32, #tpu.memory_space<vmem>>, vector<1x16x128xf32>
    %1395 = vector.shape_cast %1394 : vector<1x16x128xf32> to vector<16x128xf32>
    %c214 = arith.constant 214 : index
    %1396 = memref.load %arg1[%c214] : memref<297xf32, #tpu.memory_space<smem>>
    %1397 = vector.broadcast %1396 : f32 to vector<16x128xf32>
    %1398 = arith.mulf %1395, %1397 : vector<16x128xf32>
    %1399 = arith.addf %1393, %1398 : vector<16x128xf32>
    %c2_763 = arith.constant 2 : index
    %c2_764 = arith.constant 2 : index
    %c16_765 = arith.constant 16 : index
    %1400 = vector.load %arg10[%c2_763, %c2_764, %c16_765] : memref<3x18x144xf32, #tpu.memory_space<vmem>>, vector<1x16x128xf32>
    %1401 = vector.shape_cast %1400 : vector<1x16x128xf32> to vector<16x128xf32>
    %c215 = arith.constant 215 : index
    %1402 = memref.load %arg1[%c215] : memref<297xf32, #tpu.memory_space<smem>>
    %1403 = vector.broadcast %1402 : f32 to vector<16x128xf32>
    %1404 = arith.mulf %1401, %1403 : vector<16x128xf32>
    %1405 = arith.addf %1399, %1404 : vector<16x128xf32>
    %1406 = arith.addf %1299, %1352 : vector<16x128xf32>
    %c9_766 = arith.constant 9 : index
    %1407 = memref.load %arg2[%c9_766] : memref<13xf32, #tpu.memory_space<smem>>
    %1408 = vector.broadcast %1407 : f32 to vector<16x128xf32>
    %1409 = arith.addf %1405, %1408 : vector<16x128xf32>
    %1410 = arith.addf %1406, %1409 : vector<16x128xf32>
    %1411 = math.tanh %1410 : vector<16x128xf32>
    %c0_767 = arith.constant 0 : index
    %c1_768 = arith.constant 1 : index
    %c8_769 = arith.constant 8 : index
    %1412 = vector.load %arg11[%c0_767, %c1_768, %c8_769] : memref<3x18x144xf32, #tpu.memory_space<vmem>>, vector<1x16x128xf32>
    %1413 = vector.shape_cast %1412 : vector<1x16x128xf32> to vector<16x128xf32>
    %1414 = vector.shape_cast %1411 : vector<16x128xf32> to vector<1x16x128xf32>
    tpu.vector_store %arg11[%c0_767, %c1_768, %c8_769], %1414 {strides = array<i32>} : memref<3x18x144xf32, #tpu.memory_space<vmem>>, vector<1x16x128xf32>,
    %c0_770 = arith.constant 0 : index
    %c0_771 = arith.constant 0 : index
    %c0_772 = arith.constant 0 : index
    %1415 = vector.load %arg10[%c0_770, %c0_771, %c0_772] : memref<3x18x144xf32, #tpu.memory_space<vmem>>, vector<1x16x128xf32>
    %1416 = vector.shape_cast %1415 : vector<1x16x128xf32> to vector<16x128xf32>
    %c216 = arith.constant 216 : index
    %1417 = memref.load %arg1[%c216] : memref<297xf32, #tpu.memory_space<smem>>
    %1418 = vector.broadcast %1417 : f32 to vector<16x128xf32>
    %1419 = arith.mulf %1416, %1418 : vector<16x128xf32>
    %c0_773 = arith.constant 0 : index
    %c0_774 = arith.constant 0 : index
    %c8_775 = arith.constant 8 : index
    %1420 = vector.load %arg10[%c0_773, %c0_774, %c8_775] : memref<3x18x144xf32, #tpu.memory_space<vmem>>, vector<1x16x128xf32>
    %1421 = vector.shape_cast %1420 : vector<1x16x128xf32> to vector<16x128xf32>
    %c217 = arith.constant 217 : index
    %1422 = memref.load %arg1[%c217] : memref<297xf32, #tpu.memory_space<smem>>
    %1423 = vector.broadcast %1422 : f32 to vector<16x128xf32>
    %1424 = arith.mulf %1421, %1423 : vector<16x128xf32>
    %1425 = arith.addf %1419, %1424 : vector<16x128xf32>
    %c0_776 = arith.constant 0 : index
    %c0_777 = arith.constant 0 : index
    %c16_778 = arith.constant 16 : index
    %1426 = vector.load %arg10[%c0_776, %c0_777, %c16_778] : memref<3x18x144xf32, #tpu.memory_space<vmem>>, vector<1x16x128xf32>
    %1427 = vector.shape_cast %1426 : vector<1x16x128xf32> to vector<16x128xf32>
    %c218 = arith.constant 218 : index
    %1428 = memref.load %arg1[%c218] : memref<297xf32, #tpu.memory_space<smem>>
    %1429 = vector.broadcast %1428 : f32 to vector<16x128xf32>
    %1430 = arith.mulf %1427, %1429 : vector<16x128xf32>
    %1431 = arith.addf %1425, %1430 : vector<16x128xf32>
    %c1_779 = arith.constant 1 : index
    %c0_780 = arith.constant 0 : index
    %c0_781 = arith.constant 0 : index
    %1432 = vector.load %arg10[%c1_779, %c0_780, %c0_781] : memref<3x18x144xf32, #tpu.memory_space<vmem>>, vector<1x16x128xf32>
    %1433 = vector.shape_cast %1432 : vector<1x16x128xf32> to vector<16x128xf32>
    %c225 = arith.constant 225 : index
    %1434 = memref.load %arg1[%c225] : memref<297xf32, #tpu.memory_space<smem>>
    %1435 = vector.broadcast %1434 : f32 to vector<16x128xf32>
    %1436 = arith.mulf %1433, %1435 : vector<16x128xf32>
    %1437 = arith.addf %1431, %1436 : vector<16x128xf32>
    %c1_782 = arith.constant 1 : index
    %c0_783 = arith.constant 0 : index
    %c8_784 = arith.constant 8 : index
    %1438 = vector.load %arg10[%c1_782, %c0_783, %c8_784] : memref<3x18x144xf32, #tpu.memory_space<vmem>>, vector<1x16x128xf32>
    %1439 = vector.shape_cast %1438 : vector<1x16x128xf32> to vector<16x128xf32>
    %c226 = arith.constant 226 : index
    %1440 = memref.load %arg1[%c226] : memref<297xf32, #tpu.memory_space<smem>>
    %1441 = vector.broadcast %1440 : f32 to vector<16x128xf32>
    %1442 = arith.mulf %1439, %1441 : vector<16x128xf32>
    %1443 = arith.addf %1437, %1442 : vector<16x128xf32>
    %c1_785 = arith.constant 1 : index
    %c0_786 = arith.constant 0 : index
    %c16_787 = arith.constant 16 : index
    %1444 = vector.load %arg10[%c1_785, %c0_786, %c16_787] : memref<3x18x144xf32, #tpu.memory_space<vmem>>, vector<1x16x128xf32>
    %1445 = vector.shape_cast %1444 : vector<1x16x128xf32> to vector<16x128xf32>
    %c227 = arith.constant 227 : index
    %1446 = memref.load %arg1[%c227] : memref<297xf32, #tpu.memory_space<smem>>
    %1447 = vector.broadcast %1446 : f32 to vector<16x128xf32>
    %1448 = arith.mulf %1445, %1447 : vector<16x128xf32>
    %1449 = arith.addf %1443, %1448 : vector<16x128xf32>
    %c2_788 = arith.constant 2 : index
    %c0_789 = arith.constant 0 : index
    %c0_790 = arith.constant 0 : index
    %1450 = vector.load %arg10[%c2_788, %c0_789, %c0_790] : memref<3x18x144xf32, #tpu.memory_space<vmem>>, vector<1x16x128xf32>
    %1451 = vector.shape_cast %1450 : vector<1x16x128xf32> to vector<16x128xf32>
    %c234 = arith.constant 234 : index
    %1452 = memref.load %arg1[%c234] : memref<297xf32, #tpu.memory_space<smem>>
    %1453 = vector.broadcast %1452 : f32 to vector<16x128xf32>
    %1454 = arith.mulf %1451, %1453 : vector<16x128xf32>
    %1455 = arith.addf %1449, %1454 : vector<16x128xf32>
    %c2_791 = arith.constant 2 : index
    %c0_792 = arith.constant 0 : index
    %c8_793 = arith.constant 8 : index
    %1456 = vector.load %arg10[%c2_791, %c0_792, %c8_793] : memref<3x18x144xf32, #tpu.memory_space<vmem>>, vector<1x16x128xf32>
    %1457 = vector.shape_cast %1456 : vector<1x16x128xf32> to vector<16x128xf32>
    %c235 = arith.constant 235 : index
    %1458 = memref.load %arg1[%c235] : memref<297xf32, #tpu.memory_space<smem>>
    %1459 = vector.broadcast %1458 : f32 to vector<16x128xf32>
    %1460 = arith.mulf %1457, %1459 : vector<16x128xf32>
    %1461 = arith.addf %1455, %1460 : vector<16x128xf32>
    %c2_794 = arith.constant 2 : index
    %c0_795 = arith.constant 0 : index
    %c16_796 = arith.constant 16 : index
    %1462 = vector.load %arg10[%c2_794, %c0_795, %c16_796] : memref<3x18x144xf32, #tpu.memory_space<vmem>>, vector<1x16x128xf32>
    %1463 = vector.shape_cast %1462 : vector<1x16x128xf32> to vector<16x128xf32>
    %c236 = arith.constant 236 : index
    %1464 = memref.load %arg1[%c236] : memref<297xf32, #tpu.memory_space<smem>>
    %1465 = vector.broadcast %1464 : f32 to vector<16x128xf32>
    %1466 = arith.mulf %1463, %1465 : vector<16x128xf32>
    %1467 = arith.addf %1461, %1466 : vector<16x128xf32>
    %c0_797 = arith.constant 0 : index
    %c1_798 = arith.constant 1 : index
    %c0_799 = arith.constant 0 : index
    %1468 = vector.load %arg10[%c0_797, %c1_798, %c0_799] : memref<3x18x144xf32, #tpu.memory_space<vmem>>, vector<1x16x128xf32>
    %1469 = vector.shape_cast %1468 : vector<1x16x128xf32> to vector<16x128xf32>
    %c219 = arith.constant 219 : index
    %1470 = memref.load %arg1[%c219] : memref<297xf32, #tpu.memory_space<smem>>
    %1471 = vector.broadcast %1470 : f32 to vector<16x128xf32>
    %1472 = arith.mulf %1469, %1471 : vector<16x128xf32>
    %c0_800 = arith.constant 0 : index
    %c1_801 = arith.constant 1 : index
    %c8_802 = arith.constant 8 : index
    %1473 = vector.load %arg10[%c0_800, %c1_801, %c8_802] : memref<3x18x144xf32, #tpu.memory_space<vmem>>, vector<1x16x128xf32>
    %1474 = vector.shape_cast %1473 : vector<1x16x128xf32> to vector<16x128xf32>
    %c220 = arith.constant 220 : index
    %1475 = memref.load %arg1[%c220] : memref<297xf32, #tpu.memory_space<smem>>
    %1476 = vector.broadcast %1475 : f32 to vector<16x128xf32>
    %1477 = arith.mulf %1474, %1476 : vector<16x128xf32>
    %1478 = arith.addf %1472, %1477 : vector<16x128xf32>
    %c0_803 = arith.constant 0 : index
    %c1_804 = arith.constant 1 : index
    %c16_805 = arith.constant 16 : index
    %1479 = vector.load %arg10[%c0_803, %c1_804, %c16_805] : memref<3x18x144xf32, #tpu.memory_space<vmem>>, vector<1x16x128xf32>
    %1480 = vector.shape_cast %1479 : vector<1x16x128xf32> to vector<16x128xf32>
    %c221 = arith.constant 221 : index
    %1481 = memref.load %arg1[%c221] : memref<297xf32, #tpu.memory_space<smem>>
    %1482 = vector.broadcast %1481 : f32 to vector<16x128xf32>
    %1483 = arith.mulf %1480, %1482 : vector<16x128xf32>
    %1484 = arith.addf %1478, %1483 : vector<16x128xf32>
    %c1_806 = arith.constant 1 : index
    %c1_807 = arith.constant 1 : index
    %c0_808 = arith.constant 0 : index
    %1485 = vector.load %arg10[%c1_806, %c1_807, %c0_808] : memref<3x18x144xf32, #tpu.memory_space<vmem>>, vector<1x16x128xf32>
    %1486 = vector.shape_cast %1485 : vector<1x16x128xf32> to vector<16x128xf32>
    %c228 = arith.constant 228 : index
    %1487 = memref.load %arg1[%c228] : memref<297xf32, #tpu.memory_space<smem>>
    %1488 = vector.broadcast %1487 : f32 to vector<16x128xf32>
    %1489 = arith.mulf %1486, %1488 : vector<16x128xf32>
    %1490 = arith.addf %1484, %1489 : vector<16x128xf32>
    %c1_809 = arith.constant 1 : index
    %c1_810 = arith.constant 1 : index
    %c8_811 = arith.constant 8 : index
    %1491 = vector.load %arg10[%c1_809, %c1_810, %c8_811] : memref<3x18x144xf32, #tpu.memory_space<vmem>>, vector<1x16x128xf32>
    %1492 = vector.shape_cast %1491 : vector<1x16x128xf32> to vector<16x128xf32>
    %c229 = arith.constant 229 : index
    %1493 = memref.load %arg1[%c229] : memref<297xf32, #tpu.memory_space<smem>>
    %1494 = vector.broadcast %1493 : f32 to vector<16x128xf32>
    %1495 = arith.mulf %1492, %1494 : vector<16x128xf32>
    %1496 = arith.addf %1490, %1495 : vector<16x128xf32>
    %c1_812 = arith.constant 1 : index
    %c1_813 = arith.constant 1 : index
    %c16_814 = arith.constant 16 : index
    %1497 = vector.load %arg10[%c1_812, %c1_813, %c16_814] : memref<3x18x144xf32, #tpu.memory_space<vmem>>, vector<1x16x128xf32>
    %1498 = vector.shape_cast %1497 : vector<1x16x128xf32> to vector<16x128xf32>
    %c230 = arith.constant 230 : index
    %1499 = memref.load %arg1[%c230] : memref<297xf32, #tpu.memory_space<smem>>
    %1500 = vector.broadcast %1499 : f32 to vector<16x128xf32>
    %1501 = arith.mulf %1498, %1500 : vector<16x128xf32>
    %1502 = arith.addf %1496, %1501 : vector<16x128xf32>
    %c2_815 = arith.constant 2 : index
    %c1_816 = arith.constant 1 : index
    %c0_817 = arith.constant 0 : index
    %1503 = vector.load %arg10[%c2_815, %c1_816, %c0_817] : memref<3x18x144xf32, #tpu.memory_space<vmem>>, vector<1x16x128xf32>
    %1504 = vector.shape_cast %1503 : vector<1x16x128xf32> to vector<16x128xf32>
    %c237 = arith.constant 237 : index
    %1505 = memref.load %arg1[%c237] : memref<297xf32, #tpu.memory_space<smem>>
    %1506 = vector.broadcast %1505 : f32 to vector<16x128xf32>
    %1507 = arith.mulf %1504, %1506 : vector<16x128xf32>
    %1508 = arith.addf %1502, %1507 : vector<16x128xf32>
    %c2_818 = arith.constant 2 : index
    %c1_819 = arith.constant 1 : index
    %c8_820 = arith.constant 8 : index
    %1509 = vector.load %arg10[%c2_818, %c1_819, %c8_820] : memref<3x18x144xf32, #tpu.memory_space<vmem>>, vector<1x16x128xf32>
    %1510 = vector.shape_cast %1509 : vector<1x16x128xf32> to vector<16x128xf32>
    %c238 = arith.constant 238 : index
    %1511 = memref.load %arg1[%c238] : memref<297xf32, #tpu.memory_space<smem>>
    %1512 = vector.broadcast %1511 : f32 to vector<16x128xf32>
    %1513 = arith.mulf %1510, %1512 : vector<16x128xf32>
    %1514 = arith.addf %1508, %1513 : vector<16x128xf32>
    %c2_821 = arith.constant 2 : index
    %c1_822 = arith.constant 1 : index
    %c16_823 = arith.constant 16 : index
    %1515 = vector.load %arg10[%c2_821, %c1_822, %c16_823] : memref<3x18x144xf32, #tpu.memory_space<vmem>>, vector<1x16x128xf32>
    %1516 = vector.shape_cast %1515 : vector<1x16x128xf32> to vector<16x128xf32>
    %c239 = arith.constant 239 : index
    %1517 = memref.load %arg1[%c239] : memref<297xf32, #tpu.memory_space<smem>>
    %1518 = vector.broadcast %1517 : f32 to vector<16x128xf32>
    %1519 = arith.mulf %1516, %1518 : vector<16x128xf32>
    %1520 = arith.addf %1514, %1519 : vector<16x128xf32>
    %c0_824 = arith.constant 0 : index
    %c2_825 = arith.constant 2 : index
    %c0_826 = arith.constant 0 : index
    %1521 = vector.load %arg10[%c0_824, %c2_825, %c0_826] : memref<3x18x144xf32, #tpu.memory_space<vmem>>, vector<1x16x128xf32>
    %1522 = vector.shape_cast %1521 : vector<1x16x128xf32> to vector<16x128xf32>
    %c222 = arith.constant 222 : index
    %1523 = memref.load %arg1[%c222] : memref<297xf32, #tpu.memory_space<smem>>
    %1524 = vector.broadcast %1523 : f32 to vector<16x128xf32>
    %1525 = arith.mulf %1522, %1524 : vector<16x128xf32>
    %c0_827 = arith.constant 0 : index
    %c2_828 = arith.constant 2 : index
    %c8_829 = arith.constant 8 : index
    %1526 = vector.load %arg10[%c0_827, %c2_828, %c8_829] : memref<3x18x144xf32, #tpu.memory_space<vmem>>, vector<1x16x128xf32>
    %1527 = vector.shape_cast %1526 : vector<1x16x128xf32> to vector<16x128xf32>
    %c223 = arith.constant 223 : index
    %1528 = memref.load %arg1[%c223] : memref<297xf32, #tpu.memory_space<smem>>
    %1529 = vector.broadcast %1528 : f32 to vector<16x128xf32>
    %1530 = arith.mulf %1527, %1529 : vector<16x128xf32>
    %1531 = arith.addf %1525, %1530 : vector<16x128xf32>
    %c0_830 = arith.constant 0 : index
    %c2_831 = arith.constant 2 : index
    %c16_832 = arith.constant 16 : index
    %1532 = vector.load %arg10[%c0_830, %c2_831, %c16_832] : memref<3x18x144xf32, #tpu.memory_space<vmem>>, vector<1x16x128xf32>
    %1533 = vector.shape_cast %1532 : vector<1x16x128xf32> to vector<16x128xf32>
    %c224 = arith.constant 224 : index
    %1534 = memref.load %arg1[%c224] : memref<297xf32, #tpu.memory_space<smem>>
    %1535 = vector.broadcast %1534 : f32 to vector<16x128xf32>
    %1536 = arith.mulf %1533, %1535 : vector<16x128xf32>
    %1537 = arith.addf %1531, %1536 : vector<16x128xf32>
    %c1_833 = arith.constant 1 : index
    %c2_834 = arith.constant 2 : index
    %c0_835 = arith.constant 0 : index
    %1538 = vector.load %arg10[%c1_833, %c2_834, %c0_835] : memref<3x18x144xf32, #tpu.memory_space<vmem>>, vector<1x16x128xf32>
    %1539 = vector.shape_cast %1538 : vector<1x16x128xf32> to vector<16x128xf32>
    %c231 = arith.constant 231 : index
    %1540 = memref.load %arg1[%c231] : memref<297xf32, #tpu.memory_space<smem>>
    %1541 = vector.broadcast %1540 : f32 to vector<16x128xf32>
    %1542 = arith.mulf %1539, %1541 : vector<16x128xf32>
    %1543 = arith.addf %1537, %1542 : vector<16x128xf32>
    %c1_836 = arith.constant 1 : index
    %c2_837 = arith.constant 2 : index
    %c8_838 = arith.constant 8 : index
    %1544 = vector.load %arg10[%c1_836, %c2_837, %c8_838] : memref<3x18x144xf32, #tpu.memory_space<vmem>>, vector<1x16x128xf32>
    %1545 = vector.shape_cast %1544 : vector<1x16x128xf32> to vector<16x128xf32>
    %c232 = arith.constant 232 : index
    %1546 = memref.load %arg1[%c232] : memref<297xf32, #tpu.memory_space<smem>>
    %1547 = vector.broadcast %1546 : f32 to vector<16x128xf32>
    %1548 = arith.mulf %1545, %1547 : vector<16x128xf32>
    %1549 = arith.addf %1543, %1548 : vector<16x128xf32>
    %c1_839 = arith.constant 1 : index
    %c2_840 = arith.constant 2 : index
    %c16_841 = arith.constant 16 : index
    %1550 = vector.load %arg10[%c1_839, %c2_840, %c16_841] : memref<3x18x144xf32, #tpu.memory_space<vmem>>, vector<1x16x128xf32>
    %1551 = vector.shape_cast %1550 : vector<1x16x128xf32> to vector<16x128xf32>
    %c233 = arith.constant 233 : index
    %1552 = memref.load %arg1[%c233] : memref<297xf32, #tpu.memory_space<smem>>
    %1553 = vector.broadcast %1552 : f32 to vector<16x128xf32>
    %1554 = arith.mulf %1551, %1553 : vector<16x128xf32>
    %1555 = arith.addf %1549, %1554 : vector<16x128xf32>
    %c2_842 = arith.constant 2 : index
    %c2_843 = arith.constant 2 : index
    %c0_844 = arith.constant 0 : index
    %1556 = vector.load %arg10[%c2_842, %c2_843, %c0_844] : memref<3x18x144xf32, #tpu.memory_space<vmem>>, vector<1x16x128xf32>
    %1557 = vector.shape_cast %1556 : vector<1x16x128xf32> to vector<16x128xf32>
    %c240 = arith.constant 240 : index
    %1558 = memref.load %arg1[%c240] : memref<297xf32, #tpu.memory_space<smem>>
    %1559 = vector.broadcast %1558 : f32 to vector<16x128xf32>
    %1560 = arith.mulf %1557, %1559 : vector<16x128xf32>
    %1561 = arith.addf %1555, %1560 : vector<16x128xf32>
    %c2_845 = arith.constant 2 : index
    %c2_846 = arith.constant 2 : index
    %c8_847 = arith.constant 8 : index
    %1562 = vector.load %arg10[%c2_845, %c2_846, %c8_847] : memref<3x18x144xf32, #tpu.memory_space<vmem>>, vector<1x16x128xf32>
    %1563 = vector.shape_cast %1562 : vector<1x16x128xf32> to vector<16x128xf32>
    %c241 = arith.constant 241 : index
    %1564 = memref.load %arg1[%c241] : memref<297xf32, #tpu.memory_space<smem>>
    %1565 = vector.broadcast %1564 : f32 to vector<16x128xf32>
    %1566 = arith.mulf %1563, %1565 : vector<16x128xf32>
    %1567 = arith.addf %1561, %1566 : vector<16x128xf32>
    %c2_848 = arith.constant 2 : index
    %c2_849 = arith.constant 2 : index
    %c16_850 = arith.constant 16 : index
    %1568 = vector.load %arg10[%c2_848, %c2_849, %c16_850] : memref<3x18x144xf32, #tpu.memory_space<vmem>>, vector<1x16x128xf32>
    %1569 = vector.shape_cast %1568 : vector<1x16x128xf32> to vector<16x128xf32>
    %c242 = arith.constant 242 : index
    %1570 = memref.load %arg1[%c242] : memref<297xf32, #tpu.memory_space<smem>>
    %1571 = vector.broadcast %1570 : f32 to vector<16x128xf32>
    %1572 = arith.mulf %1569, %1571 : vector<16x128xf32>
    %1573 = arith.addf %1567, %1572 : vector<16x128xf32>
    %1574 = arith.addf %1467, %1520 : vector<16x128xf32>
    %c10_851 = arith.constant 10 : index
    %1575 = memref.load %arg2[%c10_851] : memref<13xf32, #tpu.memory_space<smem>>
    %1576 = vector.broadcast %1575 : f32 to vector<16x128xf32>
    %1577 = arith.addf %1573, %1576 : vector<16x128xf32>
    %1578 = arith.addf %1574, %1577 : vector<16x128xf32>
    %1579 = math.tanh %1578 : vector<16x128xf32>
    %c1_852 = arith.constant 1 : index
    %c1_853 = arith.constant 1 : index
    %c8_854 = arith.constant 8 : index
    %1580 = vector.load %arg11[%c1_852, %c1_853, %c8_854] : memref<3x18x144xf32, #tpu.memory_space<vmem>>, vector<1x16x128xf32>
    %1581 = vector.shape_cast %1580 : vector<1x16x128xf32> to vector<16x128xf32>
    %1582 = vector.shape_cast %1579 : vector<16x128xf32> to vector<1x16x128xf32>
    tpu.vector_store %arg11[%c1_852, %c1_853, %c8_854], %1582 {strides = array<i32>} : memref<3x18x144xf32, #tpu.memory_space<vmem>>, vector<1x16x128xf32>,
    %c0_855 = arith.constant 0 : index
    %c0_856 = arith.constant 0 : index
    %c0_857 = arith.constant 0 : index
    %1583 = vector.load %arg10[%c0_855, %c0_856, %c0_857] : memref<3x18x144xf32, #tpu.memory_space<vmem>>, vector<1x16x128xf32>
    %1584 = vector.shape_cast %1583 : vector<1x16x128xf32> to vector<16x128xf32>
    %c243 = arith.constant 243 : index
    %1585 = memref.load %arg1[%c243] : memref<297xf32, #tpu.memory_space<smem>>
    %1586 = vector.broadcast %1585 : f32 to vector<16x128xf32>
    %1587 = arith.mulf %1584, %1586 : vector<16x128xf32>
    %c0_858 = arith.constant 0 : index
    %c0_859 = arith.constant 0 : index
    %c8_860 = arith.constant 8 : index
    %1588 = vector.load %arg10[%c0_858, %c0_859, %c8_860] : memref<3x18x144xf32, #tpu.memory_space<vmem>>, vector<1x16x128xf32>
    %1589 = vector.shape_cast %1588 : vector<1x16x128xf32> to vector<16x128xf32>
    %c244 = arith.constant 244 : index
    %1590 = memref.load %arg1[%c244] : memref<297xf32, #tpu.memory_space<smem>>
    %1591 = vector.broadcast %1590 : f32 to vector<16x128xf32>
    %1592 = arith.mulf %1589, %1591 : vector<16x128xf32>
    %1593 = arith.addf %1587, %1592 : vector<16x128xf32>
    %c0_861 = arith.constant 0 : index
    %c0_862 = arith.constant 0 : index
    %c16_863 = arith.constant 16 : index
    %1594 = vector.load %arg10[%c0_861, %c0_862, %c16_863] : memref<3x18x144xf32, #tpu.memory_space<vmem>>, vector<1x16x128xf32>
    %1595 = vector.shape_cast %1594 : vector<1x16x128xf32> to vector<16x128xf32>
    %c245 = arith.constant 245 : index
    %1596 = memref.load %arg1[%c245] : memref<297xf32, #tpu.memory_space<smem>>
    %1597 = vector.broadcast %1596 : f32 to vector<16x128xf32>
    %1598 = arith.mulf %1595, %1597 : vector<16x128xf32>
    %1599 = arith.addf %1593, %1598 : vector<16x128xf32>
    %c1_864 = arith.constant 1 : index
    %c0_865 = arith.constant 0 : index
    %c0_866 = arith.constant 0 : index
    %1600 = vector.load %arg10[%c1_864, %c0_865, %c0_866] : memref<3x18x144xf32, #tpu.memory_space<vmem>>, vector<1x16x128xf32>
    %1601 = vector.shape_cast %1600 : vector<1x16x128xf32> to vector<16x128xf32>
    %c252 = arith.constant 252 : index
    %1602 = memref.load %arg1[%c252] : memref<297xf32, #tpu.memory_space<smem>>
    %1603 = vector.broadcast %1602 : f32 to vector<16x128xf32>
    %1604 = arith.mulf %1601, %1603 : vector<16x128xf32>
    %1605 = arith.addf %1599, %1604 : vector<16x128xf32>
    %c1_867 = arith.constant 1 : index
    %c0_868 = arith.constant 0 : index
    %c8_869 = arith.constant 8 : index
    %1606 = vector.load %arg10[%c1_867, %c0_868, %c8_869] : memref<3x18x144xf32, #tpu.memory_space<vmem>>, vector<1x16x128xf32>
    %1607 = vector.shape_cast %1606 : vector<1x16x128xf32> to vector<16x128xf32>
    %c253 = arith.constant 253 : index
    %1608 = memref.load %arg1[%c253] : memref<297xf32, #tpu.memory_space<smem>>
    %1609 = vector.broadcast %1608 : f32 to vector<16x128xf32>
    %1610 = arith.mulf %1607, %1609 : vector<16x128xf32>
    %1611 = arith.addf %1605, %1610 : vector<16x128xf32>
    %c1_870 = arith.constant 1 : index
    %c0_871 = arith.constant 0 : index
    %c16_872 = arith.constant 16 : index
    %1612 = vector.load %arg10[%c1_870, %c0_871, %c16_872] : memref<3x18x144xf32, #tpu.memory_space<vmem>>, vector<1x16x128xf32>
    %1613 = vector.shape_cast %1612 : vector<1x16x128xf32> to vector<16x128xf32>
    %c254 = arith.constant 254 : index
    %1614 = memref.load %arg1[%c254] : memref<297xf32, #tpu.memory_space<smem>>
    %1615 = vector.broadcast %1614 : f32 to vector<16x128xf32>
    %1616 = arith.mulf %1613, %1615 : vector<16x128xf32>
    %1617 = arith.addf %1611, %1616 : vector<16x128xf32>
    %c2_873 = arith.constant 2 : index
    %c0_874 = arith.constant 0 : index
    %c0_875 = arith.constant 0 : index
    %1618 = vector.load %arg10[%c2_873, %c0_874, %c0_875] : memref<3x18x144xf32, #tpu.memory_space<vmem>>, vector<1x16x128xf32>
    %1619 = vector.shape_cast %1618 : vector<1x16x128xf32> to vector<16x128xf32>
    %c261 = arith.constant 261 : index
    %1620 = memref.load %arg1[%c261] : memref<297xf32, #tpu.memory_space<smem>>
    %1621 = vector.broadcast %1620 : f32 to vector<16x128xf32>
    %1622 = arith.mulf %1619, %1621 : vector<16x128xf32>
    %1623 = arith.addf %1617, %1622 : vector<16x128xf32>
    %c2_876 = arith.constant 2 : index
    %c0_877 = arith.constant 0 : index
    %c8_878 = arith.constant 8 : index
    %1624 = vector.load %arg10[%c2_876, %c0_877, %c8_878] : memref<3x18x144xf32, #tpu.memory_space<vmem>>, vector<1x16x128xf32>
    %1625 = vector.shape_cast %1624 : vector<1x16x128xf32> to vector<16x128xf32>
    %c262 = arith.constant 262 : index
    %1626 = memref.load %arg1[%c262] : memref<297xf32, #tpu.memory_space<smem>>
    %1627 = vector.broadcast %1626 : f32 to vector<16x128xf32>
    %1628 = arith.mulf %1625, %1627 : vector<16x128xf32>
    %1629 = arith.addf %1623, %1628 : vector<16x128xf32>
    %c2_879 = arith.constant 2 : index
    %c0_880 = arith.constant 0 : index
    %c16_881 = arith.constant 16 : index
    %1630 = vector.load %arg10[%c2_879, %c0_880, %c16_881] : memref<3x18x144xf32, #tpu.memory_space<vmem>>, vector<1x16x128xf32>
    %1631 = vector.shape_cast %1630 : vector<1x16x128xf32> to vector<16x128xf32>
    %c263 = arith.constant 263 : index
    %1632 = memref.load %arg1[%c263] : memref<297xf32, #tpu.memory_space<smem>>
    %1633 = vector.broadcast %1632 : f32 to vector<16x128xf32>
    %1634 = arith.mulf %1631, %1633 : vector<16x128xf32>
    %1635 = arith.addf %1629, %1634 : vector<16x128xf32>
    %c0_882 = arith.constant 0 : index
    %c1_883 = arith.constant 1 : index
    %c0_884 = arith.constant 0 : index
    %1636 = vector.load %arg10[%c0_882, %c1_883, %c0_884] : memref<3x18x144xf32, #tpu.memory_space<vmem>>, vector<1x16x128xf32>
    %1637 = vector.shape_cast %1636 : vector<1x16x128xf32> to vector<16x128xf32>
    %c246 = arith.constant 246 : index
    %1638 = memref.load %arg1[%c246] : memref<297xf32, #tpu.memory_space<smem>>
    %1639 = vector.broadcast %1638 : f32 to vector<16x128xf32>
    %1640 = arith.mulf %1637, %1639 : vector<16x128xf32>
    %c0_885 = arith.constant 0 : index
    %c1_886 = arith.constant 1 : index
    %c8_887 = arith.constant 8 : index
    %1641 = vector.load %arg10[%c0_885, %c1_886, %c8_887] : memref<3x18x144xf32, #tpu.memory_space<vmem>>, vector<1x16x128xf32>
    %1642 = vector.shape_cast %1641 : vector<1x16x128xf32> to vector<16x128xf32>
    %c247 = arith.constant 247 : index
    %1643 = memref.load %arg1[%c247] : memref<297xf32, #tpu.memory_space<smem>>
    %1644 = vector.broadcast %1643 : f32 to vector<16x128xf32>
    %1645 = arith.mulf %1642, %1644 : vector<16x128xf32>
    %1646 = arith.addf %1640, %1645 : vector<16x128xf32>
    %c0_888 = arith.constant 0 : index
    %c1_889 = arith.constant 1 : index
    %c16_890 = arith.constant 16 : index
    %1647 = vector.load %arg10[%c0_888, %c1_889, %c16_890] : memref<3x18x144xf32, #tpu.memory_space<vmem>>, vector<1x16x128xf32>
    %1648 = vector.shape_cast %1647 : vector<1x16x128xf32> to vector<16x128xf32>
    %c248 = arith.constant 248 : index
    %1649 = memref.load %arg1[%c248] : memref<297xf32, #tpu.memory_space<smem>>
    %1650 = vector.broadcast %1649 : f32 to vector<16x128xf32>
    %1651 = arith.mulf %1648, %1650 : vector<16x128xf32>
    %1652 = arith.addf %1646, %1651 : vector<16x128xf32>
    %c1_891 = arith.constant 1 : index
    %c1_892 = arith.constant 1 : index
    %c0_893 = arith.constant 0 : index
    %1653 = vector.load %arg10[%c1_891, %c1_892, %c0_893] : memref<3x18x144xf32, #tpu.memory_space<vmem>>, vector<1x16x128xf32>
    %1654 = vector.shape_cast %1653 : vector<1x16x128xf32> to vector<16x128xf32>
    %c255 = arith.constant 255 : index
    %1655 = memref.load %arg1[%c255] : memref<297xf32, #tpu.memory_space<smem>>
    %1656 = vector.broadcast %1655 : f32 to vector<16x128xf32>
    %1657 = arith.mulf %1654, %1656 : vector<16x128xf32>
    %1658 = arith.addf %1652, %1657 : vector<16x128xf32>
    %c1_894 = arith.constant 1 : index
    %c1_895 = arith.constant 1 : index
    %c8_896 = arith.constant 8 : index
    %1659 = vector.load %arg10[%c1_894, %c1_895, %c8_896] : memref<3x18x144xf32, #tpu.memory_space<vmem>>, vector<1x16x128xf32>
    %1660 = vector.shape_cast %1659 : vector<1x16x128xf32> to vector<16x128xf32>
    %c256 = arith.constant 256 : index
    %1661 = memref.load %arg1[%c256] : memref<297xf32, #tpu.memory_space<smem>>
    %1662 = vector.broadcast %1661 : f32 to vector<16x128xf32>
    %1663 = arith.mulf %1660, %1662 : vector<16x128xf32>
    %1664 = arith.addf %1658, %1663 : vector<16x128xf32>
    %c1_897 = arith.constant 1 : index
    %c1_898 = arith.constant 1 : index
    %c16_899 = arith.constant 16 : index
    %1665 = vector.load %arg10[%c1_897, %c1_898, %c16_899] : memref<3x18x144xf32, #tpu.memory_space<vmem>>, vector<1x16x128xf32>
    %1666 = vector.shape_cast %1665 : vector<1x16x128xf32> to vector<16x128xf32>
    %c257 = arith.constant 257 : index
    %1667 = memref.load %arg1[%c257] : memref<297xf32, #tpu.memory_space<smem>>
    %1668 = vector.broadcast %1667 : f32 to vector<16x128xf32>
    %1669 = arith.mulf %1666, %1668 : vector<16x128xf32>
    %1670 = arith.addf %1664, %1669 : vector<16x128xf32>
    %c2_900 = arith.constant 2 : index
    %c1_901 = arith.constant 1 : index
    %c0_902 = arith.constant 0 : index
    %1671 = vector.load %arg10[%c2_900, %c1_901, %c0_902] : memref<3x18x144xf32, #tpu.memory_space<vmem>>, vector<1x16x128xf32>
    %1672 = vector.shape_cast %1671 : vector<1x16x128xf32> to vector<16x128xf32>
    %c264 = arith.constant 264 : index
    %1673 = memref.load %arg1[%c264] : memref<297xf32, #tpu.memory_space<smem>>
    %1674 = vector.broadcast %1673 : f32 to vector<16x128xf32>
    %1675 = arith.mulf %1672, %1674 : vector<16x128xf32>
    %1676 = arith.addf %1670, %1675 : vector<16x128xf32>
    %c2_903 = arith.constant 2 : index
    %c1_904 = arith.constant 1 : index
    %c8_905 = arith.constant 8 : index
    %1677 = vector.load %arg10[%c2_903, %c1_904, %c8_905] : memref<3x18x144xf32, #tpu.memory_space<vmem>>, vector<1x16x128xf32>
    %1678 = vector.shape_cast %1677 : vector<1x16x128xf32> to vector<16x128xf32>
    %c265 = arith.constant 265 : index
    %1679 = memref.load %arg1[%c265] : memref<297xf32, #tpu.memory_space<smem>>
    %1680 = vector.broadcast %1679 : f32 to vector<16x128xf32>
    %1681 = arith.mulf %1678, %1680 : vector<16x128xf32>
    %1682 = arith.addf %1676, %1681 : vector<16x128xf32>
    %c2_906 = arith.constant 2 : index
    %c1_907 = arith.constant 1 : index
    %c16_908 = arith.constant 16 : index
    %1683 = vector.load %arg10[%c2_906, %c1_907, %c16_908] : memref<3x18x144xf32, #tpu.memory_space<vmem>>, vector<1x16x128xf32>
    %1684 = vector.shape_cast %1683 : vector<1x16x128xf32> to vector<16x128xf32>
    %c266 = arith.constant 266 : index
    %1685 = memref.load %arg1[%c266] : memref<297xf32, #tpu.memory_space<smem>>
    %1686 = vector.broadcast %1685 : f32 to vector<16x128xf32>
    %1687 = arith.mulf %1684, %1686 : vector<16x128xf32>
    %1688 = arith.addf %1682, %1687 : vector<16x128xf32>
    %c0_909 = arith.constant 0 : index
    %c2_910 = arith.constant 2 : index
    %c0_911 = arith.constant 0 : index
    %1689 = vector.load %arg10[%c0_909, %c2_910, %c0_911] : memref<3x18x144xf32, #tpu.memory_space<vmem>>, vector<1x16x128xf32>
    %1690 = vector.shape_cast %1689 : vector<1x16x128xf32> to vector<16x128xf32>
    %c249 = arith.constant 249 : index
    %1691 = memref.load %arg1[%c249] : memref<297xf32, #tpu.memory_space<smem>>
    %1692 = vector.broadcast %1691 : f32 to vector<16x128xf32>
    %1693 = arith.mulf %1690, %1692 : vector<16x128xf32>
    %c0_912 = arith.constant 0 : index
    %c2_913 = arith.constant 2 : index
    %c8_914 = arith.constant 8 : index
    %1694 = vector.load %arg10[%c0_912, %c2_913, %c8_914] : memref<3x18x144xf32, #tpu.memory_space<vmem>>, vector<1x16x128xf32>
    %1695 = vector.shape_cast %1694 : vector<1x16x128xf32> to vector<16x128xf32>
    %c250 = arith.constant 250 : index
    %1696 = memref.load %arg1[%c250] : memref<297xf32, #tpu.memory_space<smem>>
    %1697 = vector.broadcast %1696 : f32 to vector<16x128xf32>
    %1698 = arith.mulf %1695, %1697 : vector<16x128xf32>
    %1699 = arith.addf %1693, %1698 : vector<16x128xf32>
    %c0_915 = arith.constant 0 : index
    %c2_916 = arith.constant 2 : index
    %c16_917 = arith.constant 16 : index
    %1700 = vector.load %arg10[%c0_915, %c2_916, %c16_917] : memref<3x18x144xf32, #tpu.memory_space<vmem>>, vector<1x16x128xf32>
    %1701 = vector.shape_cast %1700 : vector<1x16x128xf32> to vector<16x128xf32>
    %c251 = arith.constant 251 : index
    %1702 = memref.load %arg1[%c251] : memref<297xf32, #tpu.memory_space<smem>>
    %1703 = vector.broadcast %1702 : f32 to vector<16x128xf32>
    %1704 = arith.mulf %1701, %1703 : vector<16x128xf32>
    %1705 = arith.addf %1699, %1704 : vector<16x128xf32>
    %c1_918 = arith.constant 1 : index
    %c2_919 = arith.constant 2 : index
    %c0_920 = arith.constant 0 : index
    %1706 = vector.load %arg10[%c1_918, %c2_919, %c0_920] : memref<3x18x144xf32, #tpu.memory_space<vmem>>, vector<1x16x128xf32>
    %1707 = vector.shape_cast %1706 : vector<1x16x128xf32> to vector<16x128xf32>
    %c258 = arith.constant 258 : index
    %1708 = memref.load %arg1[%c258] : memref<297xf32, #tpu.memory_space<smem>>
    %1709 = vector.broadcast %1708 : f32 to vector<16x128xf32>
    %1710 = arith.mulf %1707, %1709 : vector<16x128xf32>
    %1711 = arith.addf %1705, %1710 : vector<16x128xf32>
    %c1_921 = arith.constant 1 : index
    %c2_922 = arith.constant 2 : index
    %c8_923 = arith.constant 8 : index
    %1712 = vector.load %arg10[%c1_921, %c2_922, %c8_923] : memref<3x18x144xf32, #tpu.memory_space<vmem>>, vector<1x16x128xf32>
    %1713 = vector.shape_cast %1712 : vector<1x16x128xf32> to vector<16x128xf32>
    %c259 = arith.constant 259 : index
    %1714 = memref.load %arg1[%c259] : memref<297xf32, #tpu.memory_space<smem>>
    %1715 = vector.broadcast %1714 : f32 to vector<16x128xf32>
    %1716 = arith.mulf %1713, %1715 : vector<16x128xf32>
    %1717 = arith.addf %1711, %1716 : vector<16x128xf32>
    %c1_924 = arith.constant 1 : index
    %c2_925 = arith.constant 2 : index
    %c16_926 = arith.constant 16 : index
    %1718 = vector.load %arg10[%c1_924, %c2_925, %c16_926] : memref<3x18x144xf32, #tpu.memory_space<vmem>>, vector<1x16x128xf32>
    %1719 = vector.shape_cast %1718 : vector<1x16x128xf32> to vector<16x128xf32>
    %c260 = arith.constant 260 : index
    %1720 = memref.load %arg1[%c260] : memref<297xf32, #tpu.memory_space<smem>>
    %1721 = vector.broadcast %1720 : f32 to vector<16x128xf32>
    %1722 = arith.mulf %1719, %1721 : vector<16x128xf32>
    %1723 = arith.addf %1717, %1722 : vector<16x128xf32>
    %c2_927 = arith.constant 2 : index
    %c2_928 = arith.constant 2 : index
    %c0_929 = arith.constant 0 : index
    %1724 = vector.load %arg10[%c2_927, %c2_928, %c0_929] : memref<3x18x144xf32, #tpu.memory_space<vmem>>, vector<1x16x128xf32>
    %1725 = vector.shape_cast %1724 : vector<1x16x128xf32> to vector<16x128xf32>
    %c267 = arith.constant 267 : index
    %1726 = memref.load %arg1[%c267] : memref<297xf32, #tpu.memory_space<smem>>
    %1727 = vector.broadcast %1726 : f32 to vector<16x128xf32>
    %1728 = arith.mulf %1725, %1727 : vector<16x128xf32>
    %1729 = arith.addf %1723, %1728 : vector<16x128xf32>
    %c2_930 = arith.constant 2 : index
    %c2_931 = arith.constant 2 : index
    %c8_932 = arith.constant 8 : index
    %1730 = vector.load %arg10[%c2_930, %c2_931, %c8_932] : memref<3x18x144xf32, #tpu.memory_space<vmem>>, vector<1x16x128xf32>
    %1731 = vector.shape_cast %1730 : vector<1x16x128xf32> to vector<16x128xf32>
    %c268 = arith.constant 268 : index
    %1732 = memref.load %arg1[%c268] : memref<297xf32, #tpu.memory_space<smem>>
    %1733 = vector.broadcast %1732 : f32 to vector<16x128xf32>
    %1734 = arith.mulf %1731, %1733 : vector<16x128xf32>
    %1735 = arith.addf %1729, %1734 : vector<16x128xf32>
    %c2_933 = arith.constant 2 : index
    %c2_934 = arith.constant 2 : index
    %c16_935 = arith.constant 16 : index
    %1736 = vector.load %arg10[%c2_933, %c2_934, %c16_935] : memref<3x18x144xf32, #tpu.memory_space<vmem>>, vector<1x16x128xf32>
    %1737 = vector.shape_cast %1736 : vector<1x16x128xf32> to vector<16x128xf32>
    %c269 = arith.constant 269 : index
    %1738 = memref.load %arg1[%c269] : memref<297xf32, #tpu.memory_space<smem>>
    %1739 = vector.broadcast %1738 : f32 to vector<16x128xf32>
    %1740 = arith.mulf %1737, %1739 : vector<16x128xf32>
    %1741 = arith.addf %1735, %1740 : vector<16x128xf32>
    %1742 = arith.addf %1635, %1688 : vector<16x128xf32>
    %c11_936 = arith.constant 11 : index
    %1743 = memref.load %arg2[%c11_936] : memref<13xf32, #tpu.memory_space<smem>>
    %1744 = vector.broadcast %1743 : f32 to vector<16x128xf32>
    %1745 = arith.addf %1741, %1744 : vector<16x128xf32>
    %1746 = arith.addf %1742, %1745 : vector<16x128xf32>
    %1747 = math.tanh %1746 : vector<16x128xf32>
    %c2_937 = arith.constant 2 : index
    %c1_938 = arith.constant 1 : index
    %c8_939 = arith.constant 8 : index
    %1748 = vector.load %arg11[%c2_937, %c1_938, %c8_939] : memref<3x18x144xf32, #tpu.memory_space<vmem>>, vector<1x16x128xf32>
    %1749 = vector.shape_cast %1748 : vector<1x16x128xf32> to vector<16x128xf32>
    %1750 = vector.shape_cast %1747 : vector<16x128xf32> to vector<1x16x128xf32>
    tpu.vector_store %arg11[%c2_937, %c1_938, %c8_939], %1750 {strides = array<i32>} : memref<3x18x144xf32, #tpu.memory_space<vmem>>, vector<1x16x128xf32>,
    %c0_940 = arith.constant 0 : index
    %c0_941 = arith.constant 0 : index
    %c0_942 = arith.constant 0 : index
    %1751 = vector.load %arg11[%c0_940, %c0_941, %c0_942] : memref<3x18x144xf32, #tpu.memory_space<vmem>>, vector<1x16x128xf32>
    %1752 = vector.shape_cast %1751 : vector<1x16x128xf32> to vector<16x128xf32>
    %c270 = arith.constant 270 : index
    %1753 = memref.load %arg1[%c270] : memref<297xf32, #tpu.memory_space<smem>>
    %1754 = vector.broadcast %1753 : f32 to vector<16x128xf32>
    %1755 = arith.mulf %1752, %1754 : vector<16x128xf32>
    %c0_943 = arith.constant 0 : index
    %c0_944 = arith.constant 0 : index
    %c8_945 = arith.constant 8 : index
    %1756 = vector.load %arg11[%c0_943, %c0_944, %c8_945] : memref<3x18x144xf32, #tpu.memory_space<vmem>>, vector<1x16x128xf32>
    %1757 = vector.shape_cast %1756 : vector<1x16x128xf32> to vector<16x128xf32>
    %c271 = arith.constant 271 : index
    %1758 = memref.load %arg1[%c271] : memref<297xf32, #tpu.memory_space<smem>>
    %1759 = vector.broadcast %1758 : f32 to vector<16x128xf32>
    %1760 = arith.mulf %1757, %1759 : vector<16x128xf32>
    %1761 = arith.addf %1755, %1760 : vector<16x128xf32>
    %c0_946 = arith.constant 0 : index
    %c0_947 = arith.constant 0 : index
    %c16_948 = arith.constant 16 : index
    %1762 = vector.load %arg11[%c0_946, %c0_947, %c16_948] : memref<3x18x144xf32, #tpu.memory_space<vmem>>, vector<1x16x128xf32>
    %1763 = vector.shape_cast %1762 : vector<1x16x128xf32> to vector<16x128xf32>
    %c272 = arith.constant 272 : index
    %1764 = memref.load %arg1[%c272] : memref<297xf32, #tpu.memory_space<smem>>
    %1765 = vector.broadcast %1764 : f32 to vector<16x128xf32>
    %1766 = arith.mulf %1763, %1765 : vector<16x128xf32>
    %1767 = arith.addf %1761, %1766 : vector<16x128xf32>
    %c1_949 = arith.constant 1 : index
    %c0_950 = arith.constant 0 : index
    %c0_951 = arith.constant 0 : index
    %1768 = vector.load %arg11[%c1_949, %c0_950, %c0_951] : memref<3x18x144xf32, #tpu.memory_space<vmem>>, vector<1x16x128xf32>
    %1769 = vector.shape_cast %1768 : vector<1x16x128xf32> to vector<16x128xf32>
    %c279 = arith.constant 279 : index
    %1770 = memref.load %arg1[%c279] : memref<297xf32, #tpu.memory_space<smem>>
    %1771 = vector.broadcast %1770 : f32 to vector<16x128xf32>
    %1772 = arith.mulf %1769, %1771 : vector<16x128xf32>
    %1773 = arith.addf %1767, %1772 : vector<16x128xf32>
    %c1_952 = arith.constant 1 : index
    %c0_953 = arith.constant 0 : index
    %c8_954 = arith.constant 8 : index
    %1774 = vector.load %arg11[%c1_952, %c0_953, %c8_954] : memref<3x18x144xf32, #tpu.memory_space<vmem>>, vector<1x16x128xf32>
    %1775 = vector.shape_cast %1774 : vector<1x16x128xf32> to vector<16x128xf32>
    %c280 = arith.constant 280 : index
    %1776 = memref.load %arg1[%c280] : memref<297xf32, #tpu.memory_space<smem>>
    %1777 = vector.broadcast %1776 : f32 to vector<16x128xf32>
    %1778 = arith.mulf %1775, %1777 : vector<16x128xf32>
    %1779 = arith.addf %1773, %1778 : vector<16x128xf32>
    %c1_955 = arith.constant 1 : index
    %c0_956 = arith.constant 0 : index
    %c16_957 = arith.constant 16 : index
    %1780 = vector.load %arg11[%c1_955, %c0_956, %c16_957] : memref<3x18x144xf32, #tpu.memory_space<vmem>>, vector<1x16x128xf32>
    %1781 = vector.shape_cast %1780 : vector<1x16x128xf32> to vector<16x128xf32>
    %c281 = arith.constant 281 : index
    %1782 = memref.load %arg1[%c281] : memref<297xf32, #tpu.memory_space<smem>>
    %1783 = vector.broadcast %1782 : f32 to vector<16x128xf32>
    %1784 = arith.mulf %1781, %1783 : vector<16x128xf32>
    %1785 = arith.addf %1779, %1784 : vector<16x128xf32>
    %c2_958 = arith.constant 2 : index
    %c0_959 = arith.constant 0 : index
    %c0_960 = arith.constant 0 : index
    %1786 = vector.load %arg11[%c2_958, %c0_959, %c0_960] : memref<3x18x144xf32, #tpu.memory_space<vmem>>, vector<1x16x128xf32>
    %1787 = vector.shape_cast %1786 : vector<1x16x128xf32> to vector<16x128xf32>
    %c288 = arith.constant 288 : index
    %1788 = memref.load %arg1[%c288] : memref<297xf32, #tpu.memory_space<smem>>
    %1789 = vector.broadcast %1788 : f32 to vector<16x128xf32>
    %1790 = arith.mulf %1787, %1789 : vector<16x128xf32>
    %1791 = arith.addf %1785, %1790 : vector<16x128xf32>
    %c2_961 = arith.constant 2 : index
    %c0_962 = arith.constant 0 : index
    %c8_963 = arith.constant 8 : index
    %1792 = vector.load %arg11[%c2_961, %c0_962, %c8_963] : memref<3x18x144xf32, #tpu.memory_space<vmem>>, vector<1x16x128xf32>
    %1793 = vector.shape_cast %1792 : vector<1x16x128xf32> to vector<16x128xf32>
    %c289 = arith.constant 289 : index
    %1794 = memref.load %arg1[%c289] : memref<297xf32, #tpu.memory_space<smem>>
    %1795 = vector.broadcast %1794 : f32 to vector<16x128xf32>
    %1796 = arith.mulf %1793, %1795 : vector<16x128xf32>
    %1797 = arith.addf %1791, %1796 : vector<16x128xf32>
    %c2_964 = arith.constant 2 : index
    %c0_965 = arith.constant 0 : index
    %c16_966 = arith.constant 16 : index
    %1798 = vector.load %arg11[%c2_964, %c0_965, %c16_966] : memref<3x18x144xf32, #tpu.memory_space<vmem>>, vector<1x16x128xf32>
    %1799 = vector.shape_cast %1798 : vector<1x16x128xf32> to vector<16x128xf32>
    %c290 = arith.constant 290 : index
    %1800 = memref.load %arg1[%c290] : memref<297xf32, #tpu.memory_space<smem>>
    %1801 = vector.broadcast %1800 : f32 to vector<16x128xf32>
    %1802 = arith.mulf %1799, %1801 : vector<16x128xf32>
    %1803 = arith.addf %1797, %1802 : vector<16x128xf32>
    %c0_967 = arith.constant 0 : index
    %c1_968 = arith.constant 1 : index
    %c0_969 = arith.constant 0 : index
    %1804 = vector.load %arg11[%c0_967, %c1_968, %c0_969] : memref<3x18x144xf32, #tpu.memory_space<vmem>>, vector<1x16x128xf32>
    %1805 = vector.shape_cast %1804 : vector<1x16x128xf32> to vector<16x128xf32>
    %c273 = arith.constant 273 : index
    %1806 = memref.load %arg1[%c273] : memref<297xf32, #tpu.memory_space<smem>>
    %1807 = vector.broadcast %1806 : f32 to vector<16x128xf32>
    %1808 = arith.mulf %1805, %1807 : vector<16x128xf32>
    %c0_970 = arith.constant 0 : index
    %c1_971 = arith.constant 1 : index
    %c8_972 = arith.constant 8 : index
    %1809 = vector.load %arg11[%c0_970, %c1_971, %c8_972] : memref<3x18x144xf32, #tpu.memory_space<vmem>>, vector<1x16x128xf32>
    %1810 = vector.shape_cast %1809 : vector<1x16x128xf32> to vector<16x128xf32>
    %c274 = arith.constant 274 : index
    %1811 = memref.load %arg1[%c274] : memref<297xf32, #tpu.memory_space<smem>>
    %1812 = vector.broadcast %1811 : f32 to vector<16x128xf32>
    %1813 = arith.mulf %1810, %1812 : vector<16x128xf32>
    %1814 = arith.addf %1808, %1813 : vector<16x128xf32>
    %c0_973 = arith.constant 0 : index
    %c1_974 = arith.constant 1 : index
    %c16_975 = arith.constant 16 : index
    %1815 = vector.load %arg11[%c0_973, %c1_974, %c16_975] : memref<3x18x144xf32, #tpu.memory_space<vmem>>, vector<1x16x128xf32>
    %1816 = vector.shape_cast %1815 : vector<1x16x128xf32> to vector<16x128xf32>
    %c275 = arith.constant 275 : index
    %1817 = memref.load %arg1[%c275] : memref<297xf32, #tpu.memory_space<smem>>
    %1818 = vector.broadcast %1817 : f32 to vector<16x128xf32>
    %1819 = arith.mulf %1816, %1818 : vector<16x128xf32>
    %1820 = arith.addf %1814, %1819 : vector<16x128xf32>
    %c1_976 = arith.constant 1 : index
    %c1_977 = arith.constant 1 : index
    %c0_978 = arith.constant 0 : index
    %1821 = vector.load %arg11[%c1_976, %c1_977, %c0_978] : memref<3x18x144xf32, #tpu.memory_space<vmem>>, vector<1x16x128xf32>
    %1822 = vector.shape_cast %1821 : vector<1x16x128xf32> to vector<16x128xf32>
    %c282 = arith.constant 282 : index
    %1823 = memref.load %arg1[%c282] : memref<297xf32, #tpu.memory_space<smem>>
    %1824 = vector.broadcast %1823 : f32 to vector<16x128xf32>
    %1825 = arith.mulf %1822, %1824 : vector<16x128xf32>
    %1826 = arith.addf %1820, %1825 : vector<16x128xf32>
    %c1_979 = arith.constant 1 : index
    %c1_980 = arith.constant 1 : index
    %c8_981 = arith.constant 8 : index
    %1827 = vector.load %arg11[%c1_979, %c1_980, %c8_981] : memref<3x18x144xf32, #tpu.memory_space<vmem>>, vector<1x16x128xf32>
    %1828 = vector.shape_cast %1827 : vector<1x16x128xf32> to vector<16x128xf32>
    %c283 = arith.constant 283 : index
    %1829 = memref.load %arg1[%c283] : memref<297xf32, #tpu.memory_space<smem>>
    %1830 = vector.broadcast %1829 : f32 to vector<16x128xf32>
    %1831 = arith.mulf %1828, %1830 : vector<16x128xf32>
    %1832 = arith.addf %1826, %1831 : vector<16x128xf32>
    %c1_982 = arith.constant 1 : index
    %c1_983 = arith.constant 1 : index
    %c16_984 = arith.constant 16 : index
    %1833 = vector.load %arg11[%c1_982, %c1_983, %c16_984] : memref<3x18x144xf32, #tpu.memory_space<vmem>>, vector<1x16x128xf32>
    %1834 = vector.shape_cast %1833 : vector<1x16x128xf32> to vector<16x128xf32>
    %c284 = arith.constant 284 : index
    %1835 = memref.load %arg1[%c284] : memref<297xf32, #tpu.memory_space<smem>>
    %1836 = vector.broadcast %1835 : f32 to vector<16x128xf32>
    %1837 = arith.mulf %1834, %1836 : vector<16x128xf32>
    %1838 = arith.addf %1832, %1837 : vector<16x128xf32>
    %c2_985 = arith.constant 2 : index
    %c1_986 = arith.constant 1 : index
    %c0_987 = arith.constant 0 : index
    %1839 = vector.load %arg11[%c2_985, %c1_986, %c0_987] : memref<3x18x144xf32, #tpu.memory_space<vmem>>, vector<1x16x128xf32>
    %1840 = vector.shape_cast %1839 : vector<1x16x128xf32> to vector<16x128xf32>
    %c291 = arith.constant 291 : index
    %1841 = memref.load %arg1[%c291] : memref<297xf32, #tpu.memory_space<smem>>
    %1842 = vector.broadcast %1841 : f32 to vector<16x128xf32>
    %1843 = arith.mulf %1840, %1842 : vector<16x128xf32>
    %1844 = arith.addf %1838, %1843 : vector<16x128xf32>
    %c2_988 = arith.constant 2 : index
    %c1_989 = arith.constant 1 : index
    %c8_990 = arith.constant 8 : index
    %1845 = vector.load %arg11[%c2_988, %c1_989, %c8_990] : memref<3x18x144xf32, #tpu.memory_space<vmem>>, vector<1x16x128xf32>
    %1846 = vector.shape_cast %1845 : vector<1x16x128xf32> to vector<16x128xf32>
    %c292 = arith.constant 292 : index
    %1847 = memref.load %arg1[%c292] : memref<297xf32, #tpu.memory_space<smem>>
    %1848 = vector.broadcast %1847 : f32 to vector<16x128xf32>
    %1849 = arith.mulf %1846, %1848 : vector<16x128xf32>
    %1850 = arith.addf %1844, %1849 : vector<16x128xf32>
    %c2_991 = arith.constant 2 : index
    %c1_992 = arith.constant 1 : index
    %c16_993 = arith.constant 16 : index
    %1851 = vector.load %arg11[%c2_991, %c1_992, %c16_993] : memref<3x18x144xf32, #tpu.memory_space<vmem>>, vector<1x16x128xf32>
    %1852 = vector.shape_cast %1851 : vector<1x16x128xf32> to vector<16x128xf32>
    %c293 = arith.constant 293 : index
    %1853 = memref.load %arg1[%c293] : memref<297xf32, #tpu.memory_space<smem>>
    %1854 = vector.broadcast %1853 : f32 to vector<16x128xf32>
    %1855 = arith.mulf %1852, %1854 : vector<16x128xf32>
    %1856 = arith.addf %1850, %1855 : vector<16x128xf32>
    %c0_994 = arith.constant 0 : index
    %c2_995 = arith.constant 2 : index
    %c0_996 = arith.constant 0 : index
    %1857 = vector.load %arg11[%c0_994, %c2_995, %c0_996] : memref<3x18x144xf32, #tpu.memory_space<vmem>>, vector<1x16x128xf32>
    %1858 = vector.shape_cast %1857 : vector<1x16x128xf32> to vector<16x128xf32>
    %c276 = arith.constant 276 : index
    %1859 = memref.load %arg1[%c276] : memref<297xf32, #tpu.memory_space<smem>>
    %1860 = vector.broadcast %1859 : f32 to vector<16x128xf32>
    %1861 = arith.mulf %1858, %1860 : vector<16x128xf32>
    %c0_997 = arith.constant 0 : index
    %c2_998 = arith.constant 2 : index
    %c8_999 = arith.constant 8 : index
    %1862 = vector.load %arg11[%c0_997, %c2_998, %c8_999] : memref<3x18x144xf32, #tpu.memory_space<vmem>>, vector<1x16x128xf32>
    %1863 = vector.shape_cast %1862 : vector<1x16x128xf32> to vector<16x128xf32>
    %c277 = arith.constant 277 : index
    %1864 = memref.load %arg1[%c277] : memref<297xf32, #tpu.memory_space<smem>>
    %1865 = vector.broadcast %1864 : f32 to vector<16x128xf32>
    %1866 = arith.mulf %1863, %1865 : vector<16x128xf32>
    %1867 = arith.addf %1861, %1866 : vector<16x128xf32>
    %c0_1000 = arith.constant 0 : index
    %c2_1001 = arith.constant 2 : index
    %c16_1002 = arith.constant 16 : index
    %1868 = vector.load %arg11[%c0_1000, %c2_1001, %c16_1002] : memref<3x18x144xf32, #tpu.memory_space<vmem>>, vector<1x16x128xf32>
    %1869 = vector.shape_cast %1868 : vector<1x16x128xf32> to vector<16x128xf32>
    %c278 = arith.constant 278 : index
    %1870 = memref.load %arg1[%c278] : memref<297xf32, #tpu.memory_space<smem>>
    %1871 = vector.broadcast %1870 : f32 to vector<16x128xf32>
    %1872 = arith.mulf %1869, %1871 : vector<16x128xf32>
    %1873 = arith.addf %1867, %1872 : vector<16x128xf32>
    %c1_1003 = arith.constant 1 : index
    %c2_1004 = arith.constant 2 : index
    %c0_1005 = arith.constant 0 : index
    %1874 = vector.load %arg11[%c1_1003, %c2_1004, %c0_1005] : memref<3x18x144xf32, #tpu.memory_space<vmem>>, vector<1x16x128xf32>
    %1875 = vector.shape_cast %1874 : vector<1x16x128xf32> to vector<16x128xf32>
    %c285 = arith.constant 285 : index
    %1876 = memref.load %arg1[%c285] : memref<297xf32, #tpu.memory_space<smem>>
    %1877 = vector.broadcast %1876 : f32 to vector<16x128xf32>
    %1878 = arith.mulf %1875, %1877 : vector<16x128xf32>
    %1879 = arith.addf %1873, %1878 : vector<16x128xf32>
    %c1_1006 = arith.constant 1 : index
    %c2_1007 = arith.constant 2 : index
    %c8_1008 = arith.constant 8 : index
    %1880 = vector.load %arg11[%c1_1006, %c2_1007, %c8_1008] : memref<3x18x144xf32, #tpu.memory_space<vmem>>, vector<1x16x128xf32>
    %1881 = vector.shape_cast %1880 : vector<1x16x128xf32> to vector<16x128xf32>
    %c286 = arith.constant 286 : index
    %1882 = memref.load %arg1[%c286] : memref<297xf32, #tpu.memory_space<smem>>
    %1883 = vector.broadcast %1882 : f32 to vector<16x128xf32>
    %1884 = arith.mulf %1881, %1883 : vector<16x128xf32>
    %1885 = arith.addf %1879, %1884 : vector<16x128xf32>
    %c1_1009 = arith.constant 1 : index
    %c2_1010 = arith.constant 2 : index
    %c16_1011 = arith.constant 16 : index
    %1886 = vector.load %arg11[%c1_1009, %c2_1010, %c16_1011] : memref<3x18x144xf32, #tpu.memory_space<vmem>>, vector<1x16x128xf32>
    %1887 = vector.shape_cast %1886 : vector<1x16x128xf32> to vector<16x128xf32>
    %c287 = arith.constant 287 : index
    %1888 = memref.load %arg1[%c287] : memref<297xf32, #tpu.memory_space<smem>>
    %1889 = vector.broadcast %1888 : f32 to vector<16x128xf32>
    %1890 = arith.mulf %1887, %1889 : vector<16x128xf32>
    %1891 = arith.addf %1885, %1890 : vector<16x128xf32>
    %c2_1012 = arith.constant 2 : index
    %c2_1013 = arith.constant 2 : index
    %c0_1014 = arith.constant 0 : index
    %1892 = vector.load %arg11[%c2_1012, %c2_1013, %c0_1014] : memref<3x18x144xf32, #tpu.memory_space<vmem>>, vector<1x16x128xf32>
    %1893 = vector.shape_cast %1892 : vector<1x16x128xf32> to vector<16x128xf32>
    %c294 = arith.constant 294 : index
    %1894 = memref.load %arg1[%c294] : memref<297xf32, #tpu.memory_space<smem>>
    %1895 = vector.broadcast %1894 : f32 to vector<16x128xf32>
    %1896 = arith.mulf %1893, %1895 : vector<16x128xf32>
    %1897 = arith.addf %1891, %1896 : vector<16x128xf32>
    %c2_1015 = arith.constant 2 : index
    %c2_1016 = arith.constant 2 : index
    %c8_1017 = arith.constant 8 : index
    %1898 = vector.load %arg11[%c2_1015, %c2_1016, %c8_1017] : memref<3x18x144xf32, #tpu.memory_space<vmem>>, vector<1x16x128xf32>
    %1899 = vector.shape_cast %1898 : vector<1x16x128xf32> to vector<16x128xf32>
    %c295 = arith.constant 295 : index
    %1900 = memref.load %arg1[%c295] : memref<297xf32, #tpu.memory_space<smem>>
    %1901 = vector.broadcast %1900 : f32 to vector<16x128xf32>
    %1902 = arith.mulf %1899, %1901 : vector<16x128xf32>
    %1903 = arith.addf %1897, %1902 : vector<16x128xf32>
    %c2_1018 = arith.constant 2 : index
    %c2_1019 = arith.constant 2 : index
    %c16_1020 = arith.constant 16 : index
    %1904 = vector.load %arg11[%c2_1018, %c2_1019, %c16_1020] : memref<3x18x144xf32, #tpu.memory_space<vmem>>, vector<1x16x128xf32>
    %1905 = vector.shape_cast %1904 : vector<1x16x128xf32> to vector<16x128xf32>
    %c296 = arith.constant 296 : index
    %1906 = memref.load %arg1[%c296] : memref<297xf32, #tpu.memory_space<smem>>
    %1907 = vector.broadcast %1906 : f32 to vector<16x128xf32>
    %1908 = arith.mulf %1905, %1907 : vector<16x128xf32>
    %1909 = arith.addf %1903, %1908 : vector<16x128xf32>
    %1910 = arith.addf %1803, %1856 : vector<16x128xf32>
    %c12_1021 = arith.constant 12 : index
    %1911 = memref.load %arg2[%c12_1021] : memref<13xf32, #tpu.memory_space<smem>>
    %1912 = vector.broadcast %1911 : f32 to vector<16x128xf32>
    %1913 = arith.addf %1909, %1912 : vector<16x128xf32>
    %1914 = arith.addf %1910, %1913 : vector<16x128xf32>
    %1915 = math.tanh %1914 : vector<16x128xf32>
    %c0_1022 = arith.constant 0 : index
    %c0_1023 = arith.constant 0 : index
    %c0_1024 = arith.constant 0 : index
    %c0_1025 = arith.constant 0 : index
    %1916 = vector.load %arg8[%c0_1022, %c0_1023, %c0_1024, %c0_1025] : memref<1x1x16x128xf32, #tpu.memory_space<vmem>>, vector<1x1x16x128xf32>
    %1917 = vector.shape_cast %1916 : vector<1x1x16x128xf32> to vector<16x128xf32>
    %1918 = vector.shape_cast %1915 : vector<16x128xf32> to vector<1x1x16x128xf32>
    tpu.vector_store %arg8[%c0_1022, %c0_1023, %c0_1024, %c0_1025], %1918 {strides = array<i32>} : memref<1x1x16x128xf32, #tpu.memory_space<vmem>>, vector<1x1x16x128xf32>,
    return
  }
  func.func @transform_0(%arg0: i32) -> i32 {
    %c0_i32 = arith.constant 0 : i32
    %c0_i32_0 = arith.constant 0 : i32
    return %c0_i32 : i32
  }
  func.func @transform_1(%arg0: i32) -> i32 {
    %c0_i32 = arith.constant 0 : i32
    %c0_i32_0 = arith.constant 0 : i32
    return %c0_i32 : i32
  }
  func.func @transform_2(%arg0: i32) -> (i32, i32) {
    %c0_i32 = arith.constant 0 : i32
    %c0_i32_0 = arith.constant 0 : i32
    %c0_i32_1 = arith.constant 0 : i32
    return %c0_i32, %c0_i32_0 : i32, i32
  }
  func.func @transform_3(%arg0: i32) -> (i32, i32) {
    %c0_i32 = arith.constant 0 : i32
    %c0_i32_0 = arith.constant 0 : i32
    %c0_i32_1 = arith.constant 0 : i32
    return %c0_i32, %c0_i32_0 : i32, i32
  }
  func.func @transform_4(%arg0: i32) -> (i32, i32) {
    %c0_i32 = arith.constant 0 : i32
    %c0_i32_0 = arith.constant 0 : i32
    %c0_i32_1 = arith.constant 0 : i32
    return %c0_i32, %c0_i32_0 : i32, i32
  }
  func.func @transform_5(%arg0: i32) -> (i32, i32) {
    %c0_i32 = arith.constant 0 : i32
    %c0_i32_0 = arith.constant 0 : i32
    %c0_i32_1 = arith.constant 0 : i32
    return %c0_i32, %c0_i32_0 : i32, i32
  }
  func.func @transform_6(%arg0: i32) -> (i32, i32, i32, i32) {
    %c0_i32 = arith.constant 0 : i32
    %c0_i32_0 = arith.constant 0 : i32
    %c0_i32_1 = arith.constant 0 : i32
    %c0_i32_2 = arith.constant 0 : i32
    return %arg0, %c0_i32, %c0_i32_0, %c0_i32_1 : i32, i32, i32, i32
  }
  func.func @transform_7(%arg0: i32) -> (i32, i32, i32, i32) {
    %c0_i32 = arith.constant 0 : i32
    %c0_i32_0 = arith.constant 0 : i32
    %c0_i32_1 = arith.constant 0 : i32
    %c0_i32_2 = arith.constant 0 : i32
    return %arg0, %c0_i32, %c0_i32_0, %c0_i32_1 : i32, i32, i32, i32
  }
}

</mosaic_0001>

<llo_original>
// kernel: defensive_model1_forward.1
$region0: #{defensive_model1_forward.1}
  #allocation0 [shape = 'u32[]', space=smem, size = 0x4, offset = 0x4, fixed_abs, tag = 'smem constant byte address 0x4 - core index']
  #allocation1 [shape = 'u32[144,128]{1,0:T(1,128)}', space=vmem, size = 0x12000, scoped, tag = 'internal scratch']
  #allocation2 [shape = 'f32[1,18,144]{2,1,0:T(8,128)}', space=vmem, size = 0x6000, scoped, tag = 'scratch operand']
  #allocation3 [shape = 'f32[3,18,144]{2,1,0:T(8,128)}', space=vmem, size = 0x12000, scoped, tag = 'scratch operand']
  #allocation4 [shape = 'f32[3,18,144]{2,1,0:T(8,128)}', space=vmem, size = 0x12000, scoped, tag = 'scratch operand']
  #allocation5 [shape = 'f32[3,10,80]{2,1,0:T(8,128)}', space=vmem, size = 0x6000, scoped, tag = 'scratch operand']
  #allocation6 [shape = 'f32[3,10,80]{2,1,0:T(8,128)}', space=vmem, size = 0x6000, scoped, tag = 'scratch operand']
  %s0 = inlined_call_operand.vmem [shape: f32[297], index: 0, kind: input, shape index: {}]
  %s1 = inlined_call_operand.vmem [shape: f32[13], index: 1, kind: input, shape index: {}]
  %s2 = inlined_call_operand.vmem [shape: f32[8,16], index: 2, kind: input, shape index: {}]
  %s3 = inlined_call_operand.vmem [shape: f32[128,64], index: 3, kind: input, shape index: {}]
  %s4 = inlined_call_operand.vmem [shape: f32[16,8], index: 4, kind: input, shape index: {}]
  %s5 = inlined_call_operand.vmem [shape: f32[64,128], index: 5, kind: input, shape index: {}]
  %s6 = inlined_call_operand.vmem [shape: f32[2,1,16,128], index: 6, kind: input, shape index: {}]
  %s7 = inlined_call_operand.vmem [shape: f32[2,1,16,128], index: 7, kind: output, shape index: {}]
  %s8 = sld [smem:[#allocation0]]
  $region69: #{defensive_model1_forward.1} parent=0
    _
  %s10 = ssub.s32 1, %s8
  %s11 = scalar_select 0, %s10, %s8
  $region1: #{defensive_model1_forward.1} parent=0
    #allocation7 [shape = 'u8[1536]{0}', space=smem, size = 0x600, scoped, tag = 'input window, operand 0, single buffered']
    #allocation8 [shape = 's32[2]{0}', space=sflag, size = 0x8, scoped, tag = 'scoped memory for defensive_model1_forward.1']
    #allocation9 [shape = 'u8[512]{0}', space=smem, size = 0x200, scoped, tag = 'input window, operand 1, single buffered']
    #allocation10 [shape = 's32[1]{0}', space=sflag, size = 0x4, scoped, tag = 'scoped memory for defensive_model1_forward.1']
    %12 = vsyncpa [#allocation8], 0
    %13 = vsyncpa [#allocation10], 0
    loop: start=0, step=1, limit=4
    $region2: #{defensive_model1_forward.1} parent=1 // loop_pre_header
      _
    $region3: #{defensive_model1_forward.1} parent=1 // loop_header
      %s15 = sphi 0, %s19
      %p16 = scmp.ge.s32.totalorder %s15, 4
      %s23 = sphi 0, %s23
      %s25 = sphi 0, %s23
      %s26 = sphi 0, %s25
      %s40 = sphi 0, %s26
      %s44 = sphi 0, %s44
      %s46 = sphi 0, %s44
      %s47 = sphi 0, %s46
      %s61 = sphi 0, %s47
      %s65 = sphi 0, %s65
      %s67 = sphi 0, %s65
      %s68 = sphi 0, %s67
      %s82 = sphi 0, %s68
      %s86 = sphi 0, %s86
      %s88 = sphi 0, %s86
      %s89 = sphi 0, %s88
      %s103 = sphi 0, %s89
      %s107 = sphi 0, %s107
      %s109 = sphi 0, %s107
      %s110 = sphi 0, %s109
      %s124 = sphi 0, %s110
      %s128 = sphi 0, %s128
      %s130 = sphi 0, %s128
      %s131 = sphi 0, %s130
      %s145 = sphi 0, %s131
      %s151 = sphi 0, %s153
      %s154 = sphi 0, %s151
      %s155 = sphi 0, %s154
      %s171 = sphi 0, %s155
      %s177 = sphi 0, %s179
      %s180 = sphi 0, %s177
      %s181 = sphi 0, %s180
      %s197 = sphi 0, %s181
    $region4: #{defensive_model1_forward.1} parent=1 // loop_header_branch
      %18 = sbr.rel (%p16) target = $region8
    $region5: #{defensive_model1_forward.1} parent=1 // loop_body
      %s20 = ssub.s32 %s15, 1
      %s21 = ssub.s32 %s15, 2
      %s22 = sadd.s32 %s15, 1
      %s24 = sadd.s32 %s23, 1
      %p27 = scmp.eq.s32.totalorder %s15, 1
      %p28 = scmp.ne.s32.totalorder %s23, %s25
      %p29 = scmp.eq.s32.totalorder %s15, 0
      %p30 = por %p28, %p29
      %p31 = scmp.ne.s32.totalorder %s23, %s25
      %p32 = scmp.eq.s32.totalorder %s20, 1
      %p33 = por %p31, %p32
      %p34 = scmp.ne.s32.totalorder %s25, %s26
      %p35 = scmp.eq.s32.totalorder %s20, 0
      %p36 = por %p34, %p35
      %p37 = scmp.ne.s32.totalorder %s25, %s26
      %p38 = scmp.eq.s32.totalorder %s21, 1
      %p39 = por %p37, %p38
      %p41 = scmp.ne.s32.totalorder %s26, %s40
      %p42 = scmp.eq.s32.totalorder %s21, 0
      %p43 = por %p41, %p42
      %s45 = sadd.s32 %s44, 1
      %p48 = scmp.eq.s32.totalorder %s15, 1
      %p49 = scmp.ne.s32.totalorder %s44, %s46
      %p50 = scmp.eq.s32.totalorder %s15, 0
      %p51 = por %p49, %p50
      %p52 = scmp.ne.s32.totalorder %s44, %s46
      %p53 = scmp.eq.s32.totalorder %s20, 1
      %p54 = por %p52, %p53
      %p55 = scmp.ne.s32.totalorder %s46, %s47
      %p56 = scmp.eq.s32.totalorder %s20, 0
      %p57 = por %p55, %p56
      %p58 = scmp.ne.s32.totalorder %s46, %s47
      %p59 = scmp.eq.s32.totalorder %s21, 1
      %p60 = por %p58, %p59
      %p62 = scmp.ne.s32.totalorder %s47, %s61
      %p63 = scmp.eq.s32.totalorder %s21, 0
      %p64 = por %p62, %p63
      %s66 = sadd.s32 %s65, 1
      %p69 = scmp.eq.s32.totalorder %s15, 1
      %p70 = scmp.ne.s32.totalorder %s65, %s67
      %p71 = scmp.eq.s32.totalorder %s15, 0
      %p72 = por %p70, %p71
      %p73 = scmp.ne.s32.totalorder %s65, %s67
      %p74 = scmp.eq.s32.totalorder %s20, 1
      %p75 = por %p73, %p74
      %p76 = scmp.ne.s32.totalorder %s67, %s68
      %p77 = scmp.eq.s32.totalorder %s20, 0
      %p78 = por %p76, %p77
      %p79 = scmp.ne.s32.totalorder %s67, %s68
      %p80 = scmp.eq.s32.totalorder %s21, 1
      %p81 = por %p79, %p80
      %p83 = scmp.ne.s32.totalorder %s68, %s82
      %p84 = scmp.eq.s32.totalorder %s21, 0
      %p85 = por %p83, %p84
      %s87 = sadd.s32 %s86, 1
      %p90 = scmp.eq.s32.totalorder %s15, 1
      %p91 = scmp.ne.s32.totalorder %s86, %s88
      %p92 = scmp.eq.s32.totalorder %s15, 0
      %p93 = por %p91, %p92
      %p94 = scmp.ne.s32.totalorder %s86, %s88
      %p95 = scmp.eq.s32.totalorder %s20, 1
      %p96 = por %p94, %p95
      %p97 = scmp.ne.s32.totalorder %s88, %s89
      %p98 = scmp.eq.s32.totalorder %s20, 0
      %p99 = por %p97, %p98
      %p100 = scmp.ne.s32.totalorder %s88, %s89
      %p101 = scmp.eq.s32.totalorder %s21, 1
      %p102 = por %p100, %p101
      %p104 = scmp.ne.s32.totalorder %s89, %s103
      %p105 = scmp.eq.s32.totalorder %s21, 0
      %p106 = por %p104, %p105
      %s108 = sadd.s32 %s107, 1
      %p111 = scmp.eq.s32.totalorder %s15, 1
      %p112 = scmp.ne.s32.totalorder %s107, %s109
      %p113 = scmp.eq.s32.totalorder %s15, 0
      %p114 = por %p112, %p113
      %p115 = scmp.ne.s32.totalorder %s107, %s109
      %p116 = scmp.eq.s32.totalorder %s20, 1
      %p117 = por %p115, %p116
      %p118 = scmp.ne.s32.totalorder %s109, %s110
      %p119 = scmp.eq.s32.totalorder %s20, 0
      %p120 = por %p118, %p119
      %p121 = scmp.ne.s32.totalorder %s109, %s110
      %p122 = scmp.eq.s32.totalorder %s21, 1
      %p123 = por %p121, %p122
      %p125 = scmp.ne.s32.totalorder %s110, %s124
      %p126 = scmp.eq.s32.totalorder %s21, 0
      %p127 = por %p125, %p126
      %s129 = sadd.s32 %s128, 1
      %p132 = scmp.eq.s32.totalorder %s15, 1
      %p133 = scmp.ne.s32.totalorder %s128, %s130
      %p134 = scmp.eq.s32.totalorder %s15, 0
      %p135 = por %p133, %p134
      %p136 = scmp.ne.s32.totalorder %s128, %s130
      %p137 = scmp.eq.s32.totalorder %s20, 1
      %p138 = por %p136, %p137
      %p139 = scmp.ne.s32.totalorder %s130, %s131
      %p140 = scmp.eq.s32.totalorder %s20, 0
      %p141 = por %p139, %p140
      %p142 = scmp.ne.s32.totalorder %s130, %s131
      %p143 = scmp.eq.s32.totalorder %s21, 1
      %p144 = por %p142, %p143
      %p146 = scmp.ne.s32.totalorder %s131, %s145
      %p147 = scmp.eq.s32.totalorder %s21, 0
      %p148 = por %p146, %p147
      %s149 = ssub.s32 %s15, %s22
      %p150 = scmp.eq.s32.totalorder %s149, 0
      %s152 = sadd.s32 %s151, 1
      %s153 = scalar_select %p150, %s151, %s152
      %p156 = pneg %p150
      %p157 = scmp.eq.s32.totalorder %s15, 1
      %p158 = por %p156, %p157
      %p159 = scmp.ne.s32.totalorder %s151, %s154
      %p160 = scmp.eq.s32.totalorder %s15, 0
      %p161 = por %p159, %p160
      %p162 = scmp.ne.s32.totalorder %s151, %s154
      %p163 = scmp.eq.s32.totalorder %s20, 1
      %p164 = por %p162, %p163
      %p165 = scmp.ne.s32.totalorder %s154, %s155
      %p166 = scmp.eq.s32.totalorder %s20, 0
      %p167 = por %p165, %p166
      %p168 = scmp.ne.s32.totalorder %s154, %s155
      %p169 = scmp.eq.s32.totalorder %s21, 1
      %p170 = por %p168, %p169
      %p172 = scmp.ne.s32.totalorder %s155, %s171
      %p173 = scmp.eq.s32.totalorder %s21, 0
      %p174 = por %p172, %p173
      %s175 = ssub.s32 %s15, %s22
      %p176 = scmp.eq.s32.totalorder %s175, 0
      %s178 = sadd.s32 %s177, 1
      %s179 = scalar_select %p176, %s177, %s178
      %p182 = pneg %p176
      %p183 = scmp.eq.s32.totalorder %s15, 1
      %p184 = por %p182, %p183
      %p185 = scmp.ne.s32.totalorder %s177, %s180
      %p186 = scmp.eq.s32.totalorder %s15, 0
      %p187 = por %p185, %p186
      %p188 = scmp.ne.s32.totalorder %s177, %s180
      %p189 = scmp.eq.s32.totalorder %s20, 1
      %p190 = por %p188, %p189
      %p191 = scmp.ne.s32.totalorder %s180, %s181
      %p192 = scmp.eq.s32.totalorder %s20, 0
      %p193 = por %p191, %p192
      %p194 = scmp.ne.s32.totalorder %s180, %s181
      %p195 = scmp.eq.s32.totalorder %s21, 1
      %p196 = por %p194, %p195
      %p198 = scmp.ne.s32.totalorder %s181, %s197
      %p199 = scmp.eq.s32.totalorder %s21, 0
      %p200 = por %p198, %p199
      %p201 = scmp.le.s32.totalorder 1, %s15
      %p202 = scmp.lt.s32.totalorder %s15, 3
      %p203 = pnand %p201, %p202
      %p204 = pneg %p203
      // Predicated region
      $region9: #{defensive_model1_forward.1} parent=5 // pred_check
        _
      $region10: #{defensive_model1_forward.1} parent=5 // pred_check_branch
        %206 = sbr.rel (%p203) target = $region12
      $region11: #{defensive_model1_forward.1} parent=5 // pred_region
        %s207 = ssub.s32 %s15, 1
        // Predicated region
        $region13: #{defensive_model1_forward.1} parent=11 // pred_check
          %p208 = pneg %p36
        $region14: #{defensive_model1_forward.1} parent=11 // pred_check_branch
          %210 = sbr.rel (%p208) target = $region16
        $region15: #{defensive_model1_forward.1} parent=11 // pred_region
          %s212 = ssub.s32 48, 48
          %213 = vsyncadd [#allocation8], %s212
          %s215 = sshll.u32 %s0, 4
          %s216 = int_to_ptr.vmem [resolvable:$true] %s215
          %218 = dma.vmem_to_smem %s216, 48, [#allocation7], [#allocation8]
        $region16: #{defensive_model1_forward.1} parent=11 // pred_fallthru
          _
        // Predicated region
        $region17: #{defensive_model1_forward.1} parent=11 // pred_check
          %p219 = pneg %p57
        $region18: #{defensive_model1_forward.1} parent=11 // pred_check_branch
          %221 = sbr.rel (%p219) target = $region20
        $region19: #{defensive_model1_forward.1} parent=11 // pred_region
          %s223 = ssub.s32 16, 16
          %224 = vsyncadd [#allocation10], %s223
          %s226 = sshll.u32 %s1, 4
          %s227 = int_to_ptr.vmem [resolvable:$true] %s226
          %229 = dma.vmem_to_smem %s227, 16, [#allocation9], [#allocation10]
        $region20: #{defensive_model1_forward.1} parent=11 // pred_fallthru
          _
        // Predicated region
        $region21: #{defensive_model1_forward.1} parent=11 // pred_check
          %p230 = pneg %p78
        $region22: #{defensive_model1_forward.1} parent=11 // pred_check_branch
          %232 = sbr.rel (%p230) target = $region24
        $region23: #{defensive_model1_forward.1} parent=11 // pred_region
          _
        $region24: #{defensive_model1_forward.1} parent=11 // pred_fallthru
          _
        // Predicated region
        $region25: #{defensive_model1_forward.1} parent=11 // pred_check
          %p233 = pneg %p99
        $region26: #{defensive_model1_forward.1} parent=11 // pred_check_branch
          %235 = sbr.rel (%p233) target = $region28
        $region27: #{defensive_model1_forward.1} parent=11 // pred_region
          _
        $region28: #{defensive_model1_forward.1} parent=11 // pred_fallthru
          _
        // Predicated region
        $region29: #{defensive_model1_forward.1} parent=11 // pred_check
          %p236 = pneg %p120
        $region30: #{defensive_model1_forward.1} parent=11 // pred_check_branch
          %238 = sbr.rel (%p236) target = $region32
        $region31: #{defensive_model1_forward.1} parent=11 // pred_region
          _
        $region32: #{defensive_model1_forward.1} parent=11 // pred_fallthru
          _
        // Predicated region
        $region33: #{defensive_model1_forward.1} parent=11 // pred_check
          %p239 = pneg %p141
        $region34: #{defensive_model1_forward.1} parent=11 // pred_check_branch
          %241 = sbr.rel (%p239) target = $region36
        $region35: #{defensive_model1_forward.1} parent=11 // pred_region
          _
        $region36: #{defensive_model1_forward.1} parent=11 // pred_fallthru
          _
      $region12: #{defensive_model1_forward.1} parent=5 // pred_fallthru
        _
      %p242 = scmp.lt.s32.totalorder %s15, 2
      // Predicated region
      $region37: #{defensive_model1_forward.1} parent=5 // pred_check
        %p243 = pneg %p242
      $region38: #{defensive_model1_forward.1} parent=5 // pred_check_branch
        %245 = sbr.rel (%p243) target = $region40
      $region39: #{defensive_model1_forward.1} parent=5 // pred_region
        // Predicated region
        $region41: #{defensive_model1_forward.1} parent=39 // pred_check
          %p246 = pneg %p161
        $region42: #{defensive_model1_forward.1} parent=39 // pred_check_branch
          %248 = sbr.rel (%p246) target = $region44
        $region43: #{defensive_model1_forward.1} parent=39 // pred_region
          %p249 = scmp.lt.s32.totalorder %s15, 1
          %s250 = scalar_select %p249, %s15, 1
          %s251 = smul.addr %s250, 2
          %s252 = smul.addr %s251, 8
          %s253 = scalar_lea.vmem %s6, %s252
        $region44: #{defensive_model1_forward.1} parent=39 // pred_fallthru
          _
      $region40: #{defensive_model1_forward.1} parent=5 // pred_fallthru
        _
      %p254 = scmp.le.s32.totalorder 1, %s15
      %p255 = scmp.lt.s32.totalorder %s15, 3
      %p256 = pnand %p254, %p255
      %p257 = pneg %p256
      // Predicated region
      $region45: #{defensive_model1_forward.1} parent=5 // pred_check
        _
      $region46: #{defensive_model1_forward.1} parent=5 // pred_check_branch
        %259 = sbr.rel (%p256) target = $region48
      $region47: #{defensive_model1_forward.1} parent=5 // pred_region
        %s260 = ssub.s32 %s15, 1
        // Predicated region
        $region49: #{defensive_model1_forward.1} parent=47 // pred_check
          %p261 = pneg %p36
        $region50: #{defensive_model1_forward.1} parent=47 // pred_check_branch
          %263 = sbr.rel (%p261) target = $region52
        $region51: #{defensive_model1_forward.1} parent=47 // pred_region
          %264 = dma.done [#allocation8], 48
        $region52: #{defensive_model1_forward.1} parent=47 // pred_fallthru
          _
        // Predicated region
        $region53: #{defensive_model1_forward.1} parent=47 // pred_check
          %p265 = pneg %p57
        $region54: #{defensive_model1_forward.1} parent=47 // pred_check_branch
          %267 = sbr.rel (%p265) target = $region56
        $region55: #{defensive_model1_forward.1} parent=47 // pred_region
          %268 = dma.done [#allocation10], 16
        $region56: #{defensive_model1_forward.1} parent=47 // pred_fallthru
          _
        %269 = sfence
        %p270 = pneg %p36
        %p271 = pneg %p33
        %p272 = pneg %p57
        %p273 = pneg %p54
        %p274 = pneg %p78
        %p275 = pneg %p75
        %p276 = pneg %p99
        %p277 = pneg %p96
        %p278 = pneg %p120
        %p279 = pneg %p117
        %p280 = pneg %p141
        %p281 = pneg %p138
        %p282 = scmp.lt.s32.totalorder %s20, 1
        %s283 = scalar_select %p282, %s20, 1
        %s284 = smul.addr %s283, 2
        %s285 = smul.addr %s284, 8
        %s286 = scalar_lea.vmem %s6, %s285
        %p287 = pneg %p167
        %p288 = pneg %p164
        %p289 = pneg %p193
        %p290 = pneg %p190
        %p291 = scmp.lt.s32.totalorder %s20, 1
        %s292 = scalar_select %p291, %s20, 1
        %s293 = smul.addr %s292, 2
        %s294 = smul.addr %s293, 8
        %s295 = scalar_lea.vmem %s7, %s294
        %p296 = scmp.lt.s32.totalorder %s20, 1
        %s297 = scalar_select %p296, %s20, 1
        %s298 = smul.addr %s297, 2
        %s299 = smul.addr %s298, 8
        %s300 = scalar_lea.vmem %s6, %s299
        %p301 = scmp.lt.s32.totalorder %s20, 1
        %s302 = scalar_select %p301, %s20, 1
        %s303 = smul.addr %s302, 2
        %s304 = smul.addr %s303, 8
        %s305 = scalar_lea.vmem %s7, %s304
        %306 = vst [vmem:[#allocation2] sm:$0xff] 0.0
        %vm307 = vcmask 130048
        %308 = vst.msk [vmem:[#allocation2 + $0x8] sm:$0xff] %vm307, 0.0
        %309 = vst [vmem:[#allocation2 + $0x10] sm:$0xff] 0.0
        %310 = vst.msk [vmem:[#allocation2 + $0x18] sm:$0xff] %vm307, 0.0
        %311 = vst [vmem:[#allocation2 + $0x20] sm:$0x3] 0.0
        %vm312 = vcmask 123904
        %313 = vst.msk [vmem:[#allocation2 + $0x28] sm:$0x3] %vm312, 0.0
        %314 = vst [vmem:[#allocation3] sm:$0xff] 0.0
        %315 = vst.msk [vmem:[#allocation3 + $0x8] sm:$0xff] %vm307, 0.0
        %316 = vst [vmem:[#allocation3 + $0x10] sm:$0xff] 0.0
        %317 = vst.msk [vmem:[#allocation3 + $0x18] sm:$0xff] %vm307, 0.0
        %318 = vst [vmem:[#allocation3 + $0x20] sm:$0x3] 0.0
        %319 = vst.msk [vmem:[#allocation3 + $0x28] sm:$0x3] %vm312, 0.0
        %320 = vst [vmem:[#allocation3 + $0x30] sm:$0xff] 0.0
        %321 = vst.msk [vmem:[#allocation3 + $0x38] sm:$0xff] %vm307, 0.0
        %322 = vst [vmem:[#allocation3 + $0x40] sm:$0xff] 0.0
        %323 = vst.msk [vmem:[#allocation3 + $0x48] sm:$0xff] %vm307, 0.0
        %324 = vst [vmem:[#allocation3 + $0x50] sm:$0x3] 0.0
        %325 = vst.msk [vmem:[#allocation3 + $0x58] sm:$0x3] %vm312, 0.0
        %326 = vst [vmem:[#allocation3 + $0x60] sm:$0xff] 0.0
        %327 = vst.msk [vmem:[#allocation3 + $0x68] sm:$0xff] %vm307, 0.0
        %328 = vst [vmem:[#allocation3 + $0x70] sm:$0xff] 0.0
        %329 = vst.msk [vmem:[#allocation3 + $0x78] sm:$0xff] %vm307, 0.0
        %330 = vst [vmem:[#allocation3 + $0x80] sm:$0x3] 0.0
        %331 = vst.msk [vmem:[#allocation3 + $0x88] sm:$0x3] %vm312, 0.0
        %332 = vst [vmem:[#allocation4] sm:$0xff] 0.0
        %333 = vst.msk [vmem:[#allocation4 + $0x8] sm:$0xff] %vm307, 0.0
        %334 = vst [vmem:[#allocation4 + $0x10] sm:$0xff] 0.0
        %335 = vst.msk [vmem:[#allocation4 + $0x18] sm:$0xff] %vm307, 0.0
        %336 = vst [vmem:[#allocation4 + $0x20] sm:$0x3] 0.0
        %337 = vst.msk [vmem:[#allocation4 + $0x28] sm:$0x3] %vm312, 0.0
        %338 = vst [vmem:[#allocation4 + $0x30] sm:$0xff] 0.0
        %339 = vst.msk [vmem:[#allocation4 + $0x38] sm:$0xff] %vm307, 0.0
        %340 = vst [vmem:[#allocation4 + $0x40] sm:$0xff] 0.0
        %341 = vst.msk [vmem:[#allocation4 + $0x48] sm:$0xff] %vm307, 0.0
        %342 = vst [vmem:[#allocation4 + $0x50] sm:$0x3] 0.0
        %343 = vst.msk [vmem:[#allocation4 + $0x58] sm:$0x3] %vm312, 0.0
        %344 = vst [vmem:[#allocation4 + $0x60] sm:$0xff] 0.0
        %345 = vst.msk [vmem:[#allocation4 + $0x68] sm:$0xff] %vm307, 0.0
        %346 = vst [vmem:[#allocation4 + $0x70] sm:$0xff] 0.0
        %347 = vst.msk [vmem:[#allocation4 + $0x78] sm:$0xff] %vm307, 0.0
        %348 = vst [vmem:[#allocation4 + $0x80] sm:$0x3] 0.0
        %349 = vst.msk [vmem:[#allocation4 + $0x88] sm:$0x3] %vm312, 0.0
        %vm350 = vcmask 654336
        %351 = vst.msk [vmem:[#allocation5] sm:$0xff] %vm350, 0.0
        %vm352 = vcmask 648192
        %353 = vst.msk [vmem:[#allocation5 + $0x8] sm:$0x3] %vm352, 0.0
        %354 = vst.msk [vmem:[#allocation5 + $0x10] sm:$0xff] %vm350, 0.0
        %355 = vst.msk [vmem:[#allocation5 + $0x18] sm:$0x3] %vm352, 0.0
        %356 = vst.msk [vmem:[#allocation5 + $0x20] sm:$0xff] %vm350, 0.0
        %357 = vst.msk [vmem:[#allocation5 + $0x28] sm:$0x3] %vm352, 0.0
        %358 = vst.msk [vmem:[#allocation6] sm:$0xff] %vm350, 0.0
        %359 = vst.msk [vmem:[#allocation6 + $0x8] sm:$0x3] %vm352, 0.0
        %360 = vst.msk [vmem:[#allocation6 + $0x10] sm:$0xff] %vm350, 0.0
        %361 = vst.msk [vmem:[#allocation6 + $0x18] sm:$0x3] %vm352, 0.0
        %362 = vst.msk [vmem:[#allocation6 + $0x20] sm:$0xff] %vm350, 0.0
        %363 = vst.msk [vmem:[#allocation6 + $0x28] sm:$0x3] %vm352, 0.0
        %v364 = vld [vmem:[%s300] sm:$0xff]
        %v365 = vld [vmem:[%s300 + $0x8] sm:$0xff]
        %vm368 = vcmask 1040384
        %v369 = vrot.slane %v364, 7
        %v370 = vrot.slane %v365, 7
        %v371 = vsel %vm368, %v369, %v370
        %372 = vrot.lane.b32.xlu0 %v369, 8
        %v373 = vpop.permute.xlu0 %372
        %374 = vrot.lane.b32.xlu0 %v371, 8
        %v375 = vpop.permute.xlu0 %374
        %376 = vrot.lane.b32.xlu0 %v370, 8
        %v377 = vpop.permute.xlu0 %376
        %vm381 = vcmask 1047617
        %382 = vst.msk [vmem:[#allocation2] sm:$0xfe] %vm381, %v373
        %vm383 = vcmask 64513
        %384 = vst.msk [vmem:[#allocation2 + $0x8] sm:$0xfe] %vm383, %v373
        %vm385 = vcmask 1047616
        %386 = vst.msk [vmem:[#allocation2 + $0x10] sm:$0xff] %vm385, %v375
        %vm387 = vcmask 64512
        %388 = vst.msk [vmem:[#allocation2 + $0x18] sm:$0xff] %vm387, %v375
        %vm389 = vcmask 1040448
        %390 = vst.msk [vmem:[#allocation2 + $0x20] sm:$0x1] %vm389, %v377
        %vm391 = vcmask 57344
        %392 = vst.msk [vmem:[#allocation2 + $0x28] sm:$0x1] %vm391, %v377
        %v393 = vld [vmem:[#allocation2] sm:$0xff]
        %v394 = vld [vmem:[#allocation2 + $0x10] sm:$0xff]
        %s395 = sld [smem:[#allocation7]]
        %v396 = vstv %s395
        %v397 = vmul.f32 %v393, %v396
        %v398 = vmul.f32 %v394, %v396
        %v399 = vld [vmem:[#allocation2] sm:$0xff]
        %v400 = vld [vmem:[#allocation2 + $0x8] sm:$0xff]
        %v401 = vld [vmem:[#allocation2 + $0x10] sm:$0xff]
        %v402 = vld [vmem:[#allocation2 + $0x18] sm:$0xff]
        %s403 = sld [smem:[#allocation7 + $0x1]]
        %v404 = vstv %s403
        %v405 = vmul.f32 %v399, %v404
        %v406 = vmul.f32 %v400, %v404
        %v407 = vmul.f32 %v401, %v404
        %v408 = vmul.f32 %v402, %v404
        %413 = vrot.lane.b32.xlu0 %v405, 120
        %v414 = vpop.permute.xlu0 %413
        %415 = vrot.lane.b32.xlu0 %v406, 120
        %v416 = vpop.permute.xlu0 %415
        %417 = vrot.lane.b32.xlu0 %v407, 120
        %v418 = vpop.permute.xlu0 %417
        %419 = vrot.lane.b32.xlu0 %v408, 120
        %v420 = vpop.permute.xlu0 %419
        %vm421 = vcmask 982016
        %v422 = vsel %vm421, %v414, %v416
        %v423 = vsel %vm421, %v418, %v420
        %v426 = vadd.f32 %v397, %v422
        %v427 = vadd.f32 %v398, %v423
        %s428 = sld [smem:[#allocation7 + $0x2]]
        %v429 = vstv %s428
        %v430 = vmul.f32 %v399, %v429
        %v431 = vmul.f32 %v400, %v429
        %v432 = vmul.f32 %v401, %v429
        %v433 = vmul.f32 %v402, %v429
        %438 = vrot.lane.b32.xlu0 %v430, 112
        %v439 = vpop.permute.xlu0 %438
        %440 = vrot.lane.b32.xlu0 %v431, 112
        %v441 = vpop.permute.xlu0 %440
        %442 = vrot.lane.b32.xlu0 %v432, 112
        %v443 = vpop.permute.xlu0 %442
        %444 = vrot.lane.b32.xlu0 %v433, 112
        %v445 = vpop.permute.xlu0 %444
        %vm446 = vcmask 916480
        %v447 = vsel %vm446, %v439, %v441
        %v448 = vsel %vm446, %v443, %v445
        %v451 = vadd.f32 %v426, %v447
        %v452 = vadd.f32 %v427, %v448
        %v453 = vld [vmem:[#allocation2] sm:$0xfe]
        %v454 = vld [vmem:[#allocation2 + $0x10] sm:$0xff]
        %v455 = vld [vmem:[#allocation2 + $0x20] sm:$0x1]
        %s456 = sld [smem:[#allocation7 + $0x3]]
        %v457 = vstv %s456
        %v458 = vmul.f32 %v453, %v457
        %v459 = vmul.f32 %v454, %v457
        %v460 = vmul.f32 %v455, %v457
        %v461 = vld [vmem:[#allocation2] sm:$0xfe]
        %v462 = vld [vmem:[#allocation2 + $0x8] sm:$0xfe]
        %v463 = vld [vmem:[#allocation2 + $0x10] sm:$0xff]
        %v464 = vld [vmem:[#allocation2 + $0x18] sm:$0xff]
        %v465 = vld [vmem:[#allocation2 + $0x20] sm:$0x1]
        %v466 = vld [vmem:[#allocation2 + $0x28] sm:$0x1]
        %s467 = sld [smem:[#allocation7 + $0x4]]
        %v468 = vstv %s467
        %v469 = vmul.f32 %v461, %v468
        %v470 = vmul.f32 %v462, %v468
        %v471 = vmul.f32 %v463, %v468
        %v472 = vmul.f32 %v464, %v468
        %v473 = vmul.f32 %v465, %v468
        %v474 = vmul.f32 %v466, %v468
        %481 = vrot.lane.b32.xlu0 %v469, 120
        %v482 = vpop.permute.xlu0 %481
        %483 = vrot.lane.b32.xlu0 %v470, 120
        %v484 = vpop.permute.xlu0 %483
        %485 = vrot.lane.b32.xlu0 %v471, 120
        %v486 = vpop.permute.xlu0 %485
        %487 = vrot.lane.b32.xlu0 %v472, 120
        %v488 = vpop.permute.xlu0 %487
        %489 = vrot.lane.b32.xlu0 %v473, 120
        %v490 = vpop.permute.xlu0 %489
        %491 = vrot.lane.b32.xlu0 %v474, 120
        %v492 = vpop.permute.xlu0 %491
        %v493 = vsel %vm421, %v482, %v484
        %v494 = vsel %vm421, %v486, %v488
        %v495 = vsel %vm421, %v490, %v492
        %v499 = vadd.f32 %v458, %v493
        %v500 = vadd.f32 %v459, %v494
        %v501 = vadd.f32 %v460, %v495
        %s502 = sld [smem:[#allocation7 + $0x5]]
        %v503 = vstv %s502
        %v504 = vmul.f32 %v461, %v503
        %v505 = vmul.f32 %v462, %v503
        %v506 = vmul.f32 %v463, %v503
        %v507 = vmul.f32 %v464, %v503
        %v508 = vmul.f32 %v465, %v503
        %v509 = vmul.f32 %v466, %v503
        %516 = vrot.lane.b32.xlu0 %v504, 112
        %v517 = vpop.permute.xlu0 %516
        %518 = vrot.lane.b32.xlu0 %v505, 112
        %v519 = vpop.permute.xlu0 %518
        %520 = vrot.lane.b32.xlu0 %v506, 112
        %v521 = vpop.permute.xlu0 %520
        %522 = vrot.lane.b32.xlu0 %v507, 112
        %v523 = vpop.permute.xlu0 %522
        %524 = vrot.lane.b32.xlu0 %v508, 112
        %v525 = vpop.permute.xlu0 %524
        %526 = vrot.lane.b32.xlu0 %v509, 112
        %v527 = vpop.permute.xlu0 %526
        %v528 = vsel %vm446, %v517, %v519
        %v529 = vsel %vm446, %v521, %v523
        %v530 = vsel %vm446, %v525, %v527
        %v534 = vadd.f32 %v499, %v528
        %v535 = vadd.f32 %v500, %v529
        %v536 = vadd.f32 %v501, %v530
        %v537 = vld [vmem:[#allocation2] sm:$0xfc]
        %v538 = vld [vmem:[#allocation2 + $0x20] sm:$0x3]
        %s539 = sld [smem:[#allocation7 + $0x6]]
        %v540 = vstv %s539
        %v541 = vmul.f32 %v537, %v540
        %v542 = vmul.f32 %v454, %v540
        %v543 = vmul.f32 %v538, %v540
        %v544 = vld [vmem:[#allocation2] sm:$0xfc]
        %v545 = vld [vmem:[#allocation2 + $0x8] sm:$0xfc]
        %v546 = vld [vmem:[#allocation2 + $0x20] sm:$0x3]
        %v547 = vld [vmem:[#allocation2 + $0x28] sm:$0x3]
        %s548 = sld [smem:[#allocation7 + $0x7]]
        %v549 = vstv %s548
        %v550 = vmul.f32 %v544, %v549
        %v551 = vmul.f32 %v545, %v549
        %v552 = vmul.f32 %v463, %v549
        %v553 = vmul.f32 %v464, %v549
        %v554 = vmul.f32 %v546, %v549
        %v555 = vmul.f32 %v547, %v549
        %562 = vrot.lane.b32.xlu0 %v550, 120
        %v563 = vpop.permute.xlu0 %562
        %564 = vrot.lane.b32.xlu0 %v551, 120
        %v565 = vpop.permute.xlu0 %564
        %566 = vrot.lane.b32.xlu0 %v552, 120
        %v567 = vpop.permute.xlu0 %566
        %568 = vrot.lane.b32.xlu0 %v553, 120
        %v569 = vpop.permute.xlu0 %568
        %570 = vrot.lane.b32.xlu0 %v554, 120
        %v571 = vpop.permute.xlu0 %570
        %572 = vrot.lane.b32.xlu0 %v555, 120
        %v573 = vpop.permute.xlu0 %572
        %v574 = vsel %vm421, %v563, %v565
        %v575 = vsel %vm421, %v567, %v569
        %v576 = vsel %vm421, %v571, %v573
        %v580 = vadd.f32 %v541, %v574
        %v581 = vadd.f32 %v542, %v575
        %v582 = vadd.f32 %v543, %v576
        %s583 = sld [smem:[#allocation7 + $0x8]]
        %v584 = vstv %s583
        %v585 = vmul.f32 %v544, %v584
        %v586 = vmul.f32 %v545, %v584
        %v587 = vmul.f32 %v463, %v584
        %v588 = vmul.f32 %v464, %v584
        %v589 = vmul.f32 %v546, %v584
        %v590 = vmul.f32 %v547, %v584
        %597 = vrot.lane.b32.xlu0 %v585, 112
        %v598 = vpop.permute.xlu0 %597
        %599 = vrot.lane.b32.xlu0 %v586, 112
        %v600 = vpop.permute.xlu0 %599
        %601 = vrot.lane.b32.xlu0 %v587, 112
        %v602 = vpop.permute.xlu0 %601
        %603 = vrot.lane.b32.xlu0 %v588, 112
        %v604 = vpop.permute.xlu0 %603
        %605 = vrot.lane.b32.xlu0 %v589, 112
        %v606 = vpop.permute.xlu0 %605
        %607 = vrot.lane.b32.xlu0 %v590, 112
        %v608 = vpop.permute.xlu0 %607
        %v609 = vsel %vm446, %v598, %v600
        %v610 = vsel %vm446, %v602, %v604
        %v611 = vsel %vm446, %v606, %v608
        %v615 = vadd.f32 %v580, %v609
        %v616 = vadd.f32 %v581, %v610
        %v617 = vadd.f32 %v582, %v611
        %vm621 = vcmask 1046528
        %v622 = vrot.slane %v534, 1
        %v623 = vrot.slane %v535, 1
        %v624 = vsel %vm621, %v622, %v623
        %v625 = vrot.slane %v536, 1
        %v626 = vsel %vm621, %v623, %v625
        %v629 = vadd.f32 %v451, %v624
        %v630 = vadd.f32 %v452, %v626
        %s631 = sld [smem:[#allocation9]]
        %v632 = vstv %s631
        %v633 = vadd.f32 %v615, %v632
        %v634 = vadd.f32 %v616, %v632
        %v635 = vadd.f32 %v617, %v632
        %vm639 = vcmask 1045504
        %v640 = vrot.slane %v633, 2
        %v641 = vrot.slane %v634, 2
        %v642 = vsel %vm639, %v640, %v641
        %v643 = vrot.slane %v635, 2
        %v644 = vsel %vm639, %v641, %v643
        %v647 = vadd.f32 %v629, %v642
        %v648 = vadd.f32 %v630, %v644
        %v649 = vtanh.pop %v647
        %v650 = vtanh.pop %v648
        %v653 = vrot.slane %v649, 7
        %v654 = vrot.slane %v650, 7
        %v655 = vsel %vm368, %v653, %v654
        %656 = vrot.lane.b32.xlu0 %v653, 8
        %v657 = vpop.permute.xlu0 %656
        %658 = vrot.lane.b32.xlu0 %v655, 8
        %v659 = vpop.permute.xlu0 %658
        %660 = vrot.lane.b32.xlu0 %v654, 8
        %v661 = vpop.permute.xlu0 %660
        %665 = vst.msk [vmem:[#allocation3] sm:$0xfe] %vm381, %v657
        %666 = vst.msk [vmem:[#allocation3 + $0x8] sm:$0xfe] %vm383, %v657
        %667 = vst.msk [vmem:[#allocation3 + $0x10] sm:$0xff] %vm385, %v659
        %668 = vst.msk [vmem:[#allocation3 + $0x18] sm:$0xff] %vm387, %v659
        %669 = vst.msk [vmem:[#allocation3 + $0x20] sm:$0x1] %vm389, %v661
        %670 = vst.msk [vmem:[#allocation3 + $0x28] sm:$0x1] %vm391, %v661
        %v671 = vld [vmem:[#allocation2] sm:$0xff]
        %v672 = vld [vmem:[#allocation2 + $0x10] sm:$0xff]
        %s673 = sld [smem:[#allocation7 + $0x9]]
        %v674 = vstv %s673
        %v675 = vmul.f32 %v671, %v674
        %v676 = vmul.f32 %v672, %v674
        %v677 = vld [vmem:[#allocation2] sm:$0xff]
        %v678 = vld [vmem:[#allocation2 + $0x8] sm:$0xff]
        %v679 = vld [vmem:[#allocation2 + $0x10] sm:$0xff]
        %v680 = vld [vmem:[#allocation2 + $0x18] sm:$0xff]
        %s681 = sld [smem:[#allocation7 + $0xa]]
        %v682 = vstv %s681
        %v683 = vmul.f32 %v677, %v682
        %v684 = vmul.f32 %v678, %v682
        %v685 = vmul.f32 %v679, %v682
        %v686 = vmul.f32 %v680, %v682
        %691 = vrot.lane.b32.xlu0 %v683, 120
        %v692 = vpop.permute.xlu0 %691
        %693 = vrot.lane.b32.xlu0 %v684, 120
        %v694 = vpop.permute.xlu0 %693
        %695 = vrot.lane.b32.xlu0 %v685, 120
        %v696 = vpop.permute.xlu0 %695
        %697 = vrot.lane.b32.xlu0 %v686, 120
        %v698 = vpop.permute.xlu0 %697
        %v699 = vsel %vm421, %v692, %v694
        %v700 = vsel %vm421, %v696, %v698
        %v703 = vadd.f32 %v675, %v699
        %v704 = vadd.f32 %v676, %v700
        %s705 = sld [smem:[#allocation7 + $0xb]]
        %v706 = vstv %s705
        %v707 = vmul.f32 %v677, %v706
        %v708 = vmul.f32 %v678, %v706
        %v709 = vmul.f32 %v679, %v706
        %v710 = vmul.f32 %v680, %v706
        %715 = vrot.lane.b32.xlu0 %v707, 112
        %v716 = vpop.permute.xlu0 %715
        %717 = vrot.lane.b32.xlu0 %v708, 112
        %v718 = vpop.permute.xlu0 %717
        %719 = vrot.lane.b32.xlu0 %v709, 112
        %v720 = vpop.permute.xlu0 %719
        %721 = vrot.lane.b32.xlu0 %v710, 112
        %v722 = vpop.permute.xlu0 %721
        %v723 = vsel %vm446, %v716, %v718
        %v724 = vsel %vm446, %v720, %v722
        %v727 = vadd.f32 %v703, %v723
        %v728 = vadd.f32 %v704, %v724
        %v729 = vld [vmem:[#allocation2] sm:$0xfe]
        %v730 = vld [vmem:[#allocation2 + $0x10] sm:$0xff]
        %v731 = vld [vmem:[#allocation2 + $0x20] sm:$0x1]
        %s732 = sld [smem:[#allocation7 + $0xc]]
        %v733 = vstv %s732
        %v734 = vmul.f32 %v729, %v733
        %v735 = vmul.f32 %v730, %v733
        %v736 = vmul.f32 %v731, %v733
        %v737 = vld [vmem:[#allocation2] sm:$0xfe]
        %v738 = vld [vmem:[#allocation2 + $0x8] sm:$0xfe]
        %v739 = vld [vmem:[#allocation2 + $0x10] sm:$0xff]
        %v740 = vld [vmem:[#allocation2 + $0x18] sm:$0xff]
        %v741 = vld [vmem:[#allocation2 + $0x20] sm:$0x1]
        %v742 = vld [vmem:[#allocation2 + $0x28] sm:$0x1]
        %s743 = sld [smem:[#allocation7 + $0xd]]
        %v744 = vstv %s743
        %v745 = vmul.f32 %v737, %v744
        %v746 = vmul.f32 %v738, %v744
        %v747 = vmul.f32 %v739, %v744
        %v748 = vmul.f32 %v740, %v744
        %v749 = vmul.f32 %v741, %v744
        %v750 = vmul.f32 %v742, %v744
        %757 = vrot.lane.b32.xlu0 %v745, 120
        %v758 = vpop.permute.xlu0 %757
        %759 = vrot.lane.b32.xlu0 %v746, 120
        %v760 = vpop.permute.xlu0 %759
        %761 = vrot.lane.b32.xlu0 %v747, 120
        %v762 = vpop.permute.xlu0 %761
        %763 = vrot.lane.b32.xlu0 %v748, 120
        %v764 = vpop.permute.xlu0 %763
        %765 = vrot.lane.b32.xlu0 %v749, 120
        %v766 = vpop.permute.xlu0 %765
        %767 = vrot.lane.b32.xlu0 %v750, 120
        %v768 = vpop.permute.xlu0 %767
        %v769 = vsel %vm421, %v758, %v760
        %v770 = vsel %vm421, %v762, %v764
        %v771 = vsel %vm421, %v766, %v768
        %v775 = vadd.f32 %v734, %v769
        %v776 = vadd.f32 %v735, %v770
        %v777 = vadd.f32 %v736, %v771
        %s778 = sld [smem:[#allocation7 + $0xe]]
        %v779 = vstv %s778
        %v780 = vmul.f32 %v737, %v779
        %v781 = vmul.f32 %v738, %v779
        %v782 = vmul.f32 %v739, %v779
        %v783 = vmul.f32 %v740, %v779
        %v784 = vmul.f32 %v741, %v779
        %v785 = vmul.f32 %v742, %v779
        %792 = vrot.lane.b32.xlu0 %v780, 112
        %v793 = vpop.permute.xlu0 %792
        %794 = vrot.lane.b32.xlu0 %v781, 112
        %v795 = vpop.permute.xlu0 %794
        %796 = vrot.lane.b32.xlu0 %v782, 112
        %v797 = vpop.permute.xlu0 %796
        %798 = vrot.lane.b32.xlu0 %v783, 112
        %v799 = vpop.permute.xlu0 %798
        %800 = vrot.lane.b32.xlu0 %v784, 112
        %v801 = vpop.permute.xlu0 %800
        %802 = vrot.lane.b32.xlu0 %v785, 112
        %v803 = vpop.permute.xlu0 %802
        %v804 = vsel %vm446, %v793, %v795
        %v805 = vsel %vm446, %v797, %v799
        %v806 = vsel %vm446, %v801, %v803
        %v810 = vadd.f32 %v775, %v804
        %v811 = vadd.f32 %v776, %v805
        %v812 = vadd.f32 %v777, %v806
        %v813 = vld [vmem:[#allocation2] sm:$0xfc]
        %v814 = vld [vmem:[#allocation2 + $0x20] sm:$0x3]
        %s815 = sld [smem:[#allocation7 + $0xf]]
        %v816 = vstv %s815
        %v817 = vmul.f32 %v813, %v816
        %v818 = vmul.f32 %v730, %v816
        %v819 = vmul.f32 %v814, %v816
        %v820 = vld [vmem:[#allocation2] sm:$0xfc]
        %v821 = vld [vmem:[#allocation2 + $0x8] sm:$0xfc]
        %v822 = vld [vmem:[#allocation2 + $0x20] sm:$0x3]
        %v823 = vld [vmem:[#allocation2 + $0x28] sm:$0x3]
        %s824 = sld [smem:[#allocation7 + $0x10]]
        %v825 = vstv %s824
        %v826 = vmul.f32 %v820, %v825
        %v827 = vmul.f32 %v821, %v825
        %v828 = vmul.f32 %v739, %v825
        %v829 = vmul.f32 %v740, %v825
        %v830 = vmul.f32 %v822, %v825
        %v831 = vmul.f32 %v823, %v825
        %838 = vrot.lane.b32.xlu0 %v826, 120
        %v839 = vpop.permute.xlu0 %838
        %840 = vrot.lane.b32.xlu0 %v827, 120
        %v841 = vpop.permute.xlu0 %840
        %842 = vrot.lane.b32.xlu0 %v828, 120
        %v843 = vpop.permute.xlu0 %842
        %844 = vrot.lane.b32.xlu0 %v829, 120
        %v845 = vpop.permute.xlu0 %844
        %846 = vrot.lane.b32.xlu0 %v830, 120
        %v847 = vpop.permute.xlu0 %846
        %848 = vrot.lane.b32.xlu0 %v831, 120
        %v849 = vpop.permute.xlu0 %848
        %v850 = vsel %vm421, %v839, %v841
        %v851 = vsel %vm421, %v843, %v845
        %v852 = vsel %vm421, %v847, %v849
        %v856 = vadd.f32 %v817, %v850
        %v857 = vadd.f32 %v818, %v851
        %v858 = vadd.f32 %v819, %v852
        %s859 = sld [smem:[#allocation7 + $0x11]]
        %v860 = vstv %s859
        %v861 = vmul.f32 %v820, %v860
        %v862 = vmul.f32 %v821, %v860
        %v863 = vmul.f32 %v739, %v860
        %v864 = vmul.f32 %v740, %v860
        %v865 = vmul.f32 %v822, %v860
        %v866 = vmul.f32 %v823, %v860
        %873 = vrot.lane.b32.xlu0 %v861, 112
        %v874 = vpop.permute.xlu0 %873
        %875 = vrot.lane.b32.xlu0 %v862, 112
        %v876 = vpop.permute.xlu0 %875
        %877 = vrot.lane.b32.xlu0 %v863, 112
        %v878 = vpop.permute.xlu0 %877
        %879 = vrot.lane.b32.xlu0 %v864, 112
        %v880 = vpop.permute.xlu0 %879
        %881 = vrot.lane.b32.xlu0 %v865, 112
        %v882 = vpop.permute.xlu0 %881
        %883 = vrot.lane.b32.xlu0 %v866, 112
        %v884 = vpop.permute.xlu0 %883
        %v885 = vsel %vm446, %v874, %v876
        %v886 = vsel %vm446, %v878, %v880
        %v887 = vsel %vm446, %v882, %v884
        %v891 = vadd.f32 %v856, %v885
        %v892 = vadd.f32 %v857, %v886
        %v893 = vadd.f32 %v858, %v887
        %v897 = vrot.slane %v810, 1
        %v898 = vrot.slane %v811, 1
        %v899 = vsel %vm621, %v897, %v898
        %v900 = vrot.slane %v812, 1
        %v901 = vsel %vm621, %v898, %v900
        %v904 = vadd.f32 %v727, %v899
        %v905 = vadd.f32 %v728, %v901
        %s906 = sld [smem:[#allocation9 + $0x1]]
        %v907 = vstv %s906
        %v908 = vadd.f32 %v891, %v907
        %v909 = vadd.f32 %v892, %v907
        %v910 = vadd.f32 %v893, %v907
        %v914 = vrot.slane %v908, 2
        %v915 = vrot.slane %v909, 2
        %v916 = vsel %vm639, %v914, %v915
        %v917 = vrot.slane %v910, 2
        %v918 = vsel %vm639, %v915, %v917
        %v921 = vadd.f32 %v904, %v916
        %v922 = vadd.f32 %v905, %v918
        %v923 = vtanh.pop %v921
        %v924 = vtanh.pop %v922
        %v927 = vrot.slane %v923, 7
        %v928 = vrot.slane %v924, 7
        %v929 = vsel %vm368, %v927, %v928
        %930 = vrot.lane.b32.xlu0 %v927, 8
        %v931 = vpop.permute.xlu0 %930
        %932 = vrot.lane.b32.xlu0 %v929, 8
        %v933 = vpop.permute.xlu0 %932
        %934 = vrot.lane.b32.xlu0 %v928, 8
        %v935 = vpop.permute.xlu0 %934
        %s939 = scalar_lea.vmem [#allocation3], 48
        %940 = vst.msk [vmem:[%s939] sm:$0xfe] %vm381, %v931
        %941 = vst.msk [vmem:[%s939 + $0x8] sm:$0xfe] %vm383, %v931
        %942 = vst.msk [vmem:[%s939 + $0x10] sm:$0xff] %vm385, %v933
        %943 = vst.msk [vmem:[%s939 + $0x18] sm:$0xff] %vm387, %v933
        %944 = vst.msk [vmem:[%s939 + $0x20] sm:$0x1] %vm389, %v935
        %945 = vst.msk [vmem:[%s939 + $0x28] sm:$0x1] %vm391, %v935
        %v946 = vld [vmem:[#allocation2] sm:$0xff]
        %v947 = vld [vmem:[#allocation2 + $0x10] sm:$0xff]
        %s948 = sld [smem:[#allocation7 + $0x12]]
        %v949 = vstv %s948
        %v950 = vmul.f32 %v946, %v949
        %v951 = vmul.f32 %v947, %v949
        %v952 = vld [vmem:[#allocation2] sm:$0xff]
        %v953 = vld [vmem:[#allocation2 + $0x8] sm:$0xff]
        %v954 = vld [vmem:[#allocation2 + $0x10] sm:$0xff]
        %v955 = vld [vmem:[#allocation2 + $0x18] sm:$0xff]
        %s956 = sld [smem:[#allocation7 + $0x13]]
        %v957 = vstv %s956
        %v958 = vmul.f32 %v952, %v957
        %v959 = vmul.f32 %v953, %v957
        %v960 = vmul.f32 %v954, %v957
        %v961 = vmul.f32 %v955, %v957
        %966 = vrot.lane.b32.xlu0 %v958, 120
        %v967 = vpop.permute.xlu0 %966
        %968 = vrot.lane.b32.xlu0 %v959, 120
        %v969 = vpop.permute.xlu0 %968
        %970 = vrot.lane.b32.xlu0 %v960, 120
        %v971 = vpop.permute.xlu0 %970
        %972 = vrot.lane.b32.xlu0 %v961, 120
        %v973 = vpop.permute.xlu0 %972
        %v974 = vsel %vm421, %v967, %v969
        %v975 = vsel %vm421, %v971, %v973
        %v978 = vadd.f32 %v950, %v974
        %v979 = vadd.f32 %v951, %v975
        %s980 = sld [smem:[#allocation7 + $0x14]]
        %v981 = vstv %s980
        %v982 = vmul.f32 %v952, %v981
        %v983 = vmul.f32 %v953, %v981
        %v984 = vmul.f32 %v954, %v981
        %v985 = vmul.f32 %v955, %v981
        %990 = vrot.lane.b32.xlu0 %v982, 112
        %v991 = vpop.permute.xlu0 %990
        %992 = vrot.lane.b32.xlu0 %v983, 112
        %v993 = vpop.permute.xlu0 %992
        %994 = vrot.lane.b32.xlu0 %v984, 112
        %v995 = vpop.permute.xlu0 %994
        %996 = vrot.lane.b32.xlu0 %v985, 112
        %v997 = vpop.permute.xlu0 %996
        %v998 = vsel %vm446, %v991, %v993
        %v999 = vsel %vm446, %v995, %v997
        %v1002 = vadd.f32 %v978, %v998
        %v1003 = vadd.f32 %v979, %v999
        %v1004 = vld [vmem:[#allocation2] sm:$0xfe]
        %v1005 = vld [vmem:[#allocation2 + $0x10] sm:$0xff]
        %v1006 = vld [vmem:[#allocation2 + $0x20] sm:$0x1]
        %s1007 = sld [smem:[#allocation7 + $0x15]]
        %v1008 = vstv %s1007
        %v1009 = vmul.f32 %v1004, %v1008
        %v1010 = vmul.f32 %v1005, %v1008
        %v1011 = vmul.f32 %v1006, %v1008
        %v1012 = vld [vmem:[#allocation2] sm:$0xfe]
        %v1013 = vld [vmem:[#allocation2 + $0x8] sm:$0xfe]
        %v1014 = vld [vmem:[#allocation2 + $0x10] sm:$0xff]
        %v1015 = vld [vmem:[#allocation2 + $0x18] sm:$0xff]
        %v1016 = vld [vmem:[#allocation2 + $0x20] sm:$0x1]
        %v1017 = vld [vmem:[#allocation2 + $0x28] sm:$0x1]
        %s1018 = sld [smem:[#allocation7 + $0x16]]
        %v1019 = vstv %s1018
        %v1020 = vmul.f32 %v1012, %v1019
        %v1021 = vmul.f32 %v1013, %v1019
        %v1022 = vmul.f32 %v1014, %v1019
        %v1023 = vmul.f32 %v1015, %v1019
        %v1024 = vmul.f32 %v1016, %v1019
        %v1025 = vmul.f32 %v1017, %v1019
        %1032 = vrot.lane.b32.xlu0 %v1020, 120
        %v1033 = vpop.permute.xlu0 %1032
        %1034 = vrot.lane.b32.xlu0 %v1021, 120
        %v1035 = vpop.permute.xlu0 %1034
        %1036 = vrot.lane.b32.xlu0 %v1022, 120
        %v1037 = vpop.permute.xlu0 %1036
        %1038 = vrot.lane.b32.xlu0 %v1023, 120
        %v1039 = vpop.permute.xlu0 %1038
        %1040 = vrot.lane.b32.xlu0 %v1024, 120
        %v1041 = vpop.permute.xlu0 %1040
        %1042 = vrot.lane.b32.xlu0 %v1025, 120
        %v1043 = vpop.permute.xlu0 %1042
        %v1044 = vsel %vm421, %v1033, %v1035
        %v1045 = vsel %vm421, %v1037, %v1039
        %v1046 = vsel %vm421, %v1041, %v1043
        %v1050 = vadd.f32 %v1009, %v1044
        %v1051 = vadd.f32 %v1010, %v1045
        %v1052 = vadd.f32 %v1011, %v1046
        %s1053 = sld [smem:[#allocation7 + $0x17]]
        %v1054 = vstv %s1053
        %v1055 = vmul.f32 %v1012, %v1054
        %v1056 = vmul.f32 %v1013, %v1054
        %v1057 = vmul.f32 %v1014, %v1054
        %v1058 = vmul.f32 %v1015, %v1054
        %v1059 = vmul.f32 %v1016, %v1054
        %v1060 = vmul.f32 %v1017, %v1054
        %1067 = vrot.lane.b32.xlu0 %v1055, 112
        %v1068 = vpop.permute.xlu0 %1067
        %1069 = vrot.lane.b32.xlu0 %v1056, 112
        %v1070 = vpop.permute.xlu0 %1069
        %1071 = vrot.lane.b32.xlu0 %v1057, 112
        %v1072 = vpop.permute.xlu0 %1071
        %1073 = vrot.lane.b32.xlu0 %v1058, 112
        %v1074 = vpop.permute.xlu0 %1073
        %1075 = vrot.lane.b32.xlu0 %v1059, 112
        %v1076 = vpop.permute.xlu0 %1075
        %1077 = vrot.lane.b32.xlu0 %v1060, 112
        %v1078 = vpop.permute.xlu0 %1077
        %v1079 = vsel %vm446, %v1068, %v1070
        %v1080 = vsel %vm446, %v1072, %v1074
        %v1081 = vsel %vm446, %v1076, %v1078
        %v1085 = vadd.f32 %v1050, %v1079
        %v1086 = vadd.f32 %v1051, %v1080
        %v1087 = vadd.f32 %v1052, %v1081
        %v1088 = vld [vmem:[#allocation2] sm:$0xfc]
        %v1089 = vld [vmem:[#allocation2 + $0x20] sm:$0x3]
        %s1090 = sld [smem:[#allocation7 + $0x18]]
        %v1091 = vstv %s1090
        %v1092 = vmul.f32 %v1088, %v1091
        %v1093 = vmul.f32 %v1005, %v1091
        %v1094 = vmul.f32 %v1089, %v1091
        %v1095 = vld [vmem:[#allocation2] sm:$0xfc]
        %v1096 = vld [vmem:[#allocation2 + $0x8] sm:$0xfc]
        %v1097 = vld [vmem:[#allocation2 + $0x20] sm:$0x3]
        %v1098 = vld [vmem:[#allocation2 + $0x28] sm:$0x3]
        %s1099 = sld [smem:[#allocation7 + $0x19]]
        %v1100 = vstv %s1099
        %v1101 = vmul.f32 %v1095, %v1100
        %v1102 = vmul.f32 %v1096, %v1100
        %v1103 = vmul.f32 %v1014, %v1100
        %v1104 = vmul.f32 %v1015, %v1100
        %v1105 = vmul.f32 %v1097, %v1100
        %v1106 = vmul.f32 %v1098, %v1100
        %1113 = vrot.lane.b32.xlu0 %v1101, 120
        %v1114 = vpop.permute.xlu0 %1113
        %1115 = vrot.lane.b32.xlu0 %v1102, 120
        %v1116 = vpop.permute.xlu0 %1115
        %1117 = vrot.lane.b32.xlu0 %v1103, 120
        %v1118 = vpop.permute.xlu0 %1117
        %1119 = vrot.lane.b32.xlu0 %v1104, 120
        %v1120 = vpop.permute.xlu0 %1119
        %1121 = vrot.lane.b32.xlu0 %v1105, 120
        %v1122 = vpop.permute.xlu0 %1121
        %1123 = vrot.lane.b32.xlu0 %v1106, 120
        %v1124 = vpop.permute.xlu0 %1123
        %v1125 = vsel %vm421, %v1114, %v1116
        %v1126 = vsel %vm421, %v1118, %v1120
        %v1127 = vsel %vm421, %v1122, %v1124
        %v1131 = vadd.f32 %v1092, %v1125
        %v1132 = vadd.f32 %v1093, %v1126
        %v1133 = vadd.f32 %v1094, %v1127
        %s1134 = sld [smem:[#allocation7 + $0x1a]]
        %v1135 = vstv %s1134
        %v1136 = vmul.f32 %v1095, %v1135
        %v1137 = vmul.f32 %v1096, %v1135
        %v1138 = vmul.f32 %v1014, %v1135
        %v1139 = vmul.f32 %v1015, %v1135
        %v1140 = vmul.f32 %v1097, %v1135
        %v1141 = vmul.f32 %v1098, %v1135
        %1148 = vrot.lane.b32.xlu0 %v1136, 112
        %v1149 = vpop.permute.xlu0 %1148
        %1150 = vrot.lane.b32.xlu0 %v1137, 112
        %v1151 = vpop.permute.xlu0 %1150
        %1152 = vrot.lane.b32.xlu0 %v1138, 112
        %v1153 = vpop.permute.xlu0 %1152
        %1154 = vrot.lane.b32.xlu0 %v1139, 112
        %v1155 = vpop.permute.xlu0 %1154
        %1156 = vrot.lane.b32.xlu0 %v1140, 112
        %v1157 = vpop.permute.xlu0 %1156
        %1158 = vrot.lane.b32.xlu0 %v1141, 112
        %v1159 = vpop.permute.xlu0 %1158
        %v1160 = vsel %vm446, %v1149, %v1151
        %v1161 = vsel %vm446, %v1153, %v1155
        %v1162 = vsel %vm446, %v1157, %v1159
        %v1166 = vadd.f32 %v1131, %v1160
        %v1167 = vadd.f32 %v1132, %v1161
        %v1168 = vadd.f32 %v1133, %v1162
        %v1172 = vrot.slane %v1085, 1
        %v1173 = vrot.slane %v1086, 1
        %v1174 = vsel %vm621, %v1172, %v1173
        %v1175 = vrot.slane %v1087, 1
        %v1176 = vsel %vm621, %v1173, %v1175
        %v1179 = vadd.f32 %v1002, %v1174
        %v1180 = vadd.f32 %v1003, %v1176
        %s1181 = sld [smem:[#allocation9 + $0x2]]
        %v1182 = vstv %s1181
        %v1183 = vadd.f32 %v1166, %v1182
        %v1184 = vadd.f32 %v1167, %v1182
        %v1185 = vadd.f32 %v1168, %v1182
        %v1189 = vrot.slane %v1183, 2
        %v1190 = vrot.slane %v1184, 2
        %v1191 = vsel %vm639, %v1189, %v1190
        %v1192 = vrot.slane %v1185, 2
        %v1193 = vsel %vm639, %v1190, %v1192
        %v1196 = vadd.f32 %v1179, %v1191
        %v1197 = vadd.f32 %v1180, %v1193
        %v1198 = vtanh.pop %v1196
        %v1199 = vtanh.pop %v1197
        %v1202 = vrot.slane %v1198, 7
        %v1203 = vrot.slane %v1199, 7
        %v1204 = vsel %vm368, %v1202, %v1203
        %1205 = vrot.lane.b32.xlu0 %v1202, 8
        %v1206 = vpop.permute.xlu0 %1205
        %1207 = vrot.lane.b32.xlu0 %v1204, 8
        %v1208 = vpop.permute.xlu0 %1207
        %1209 = vrot.lane.b32.xlu0 %v1203, 8
        %v1210 = vpop.permute.xlu0 %1209
        %s1214 = scalar_lea.vmem [#allocation3], 96
        %1215 = vst.msk [vmem:[%s1214] sm:$0xfe] %vm381, %v1206
        %1216 = vst.msk [vmem:[%s1214 + $0x8] sm:$0xfe] %vm383, %v1206
        %1217 = vst.msk [vmem:[%s1214 + $0x10] sm:$0xff] %vm385, %v1208
        %1218 = vst.msk [vmem:[%s1214 + $0x18] sm:$0xff] %vm387, %v1208
        %1219 = vst.msk [vmem:[%s1214 + $0x20] sm:$0x1] %vm389, %v1210
        %1220 = vst.msk [vmem:[%s1214 + $0x28] sm:$0x1] %vm391, %v1210
        %v1221 = vld [vmem:[%s2] sm:$0xff]
        %v1222 = vld [vmem:[%s3] sm:$0xff]
        %v1223 = vld [vmem:[%s3 + $0x8] sm:$0xff]
        %v1224 = vld [vmem:[%s3 + $0x10] sm:$0xff]
        %v1225 = vld [vmem:[%s3 + $0x18] sm:$0xff]
        %v1226 = vld [vmem:[%s3 + $0x20] sm:$0xff]
        %v1227 = vld [vmem:[%s3 + $0x28] sm:$0xff]
        %v1228 = vld [vmem:[%s3 + $0x30] sm:$0xff]
        %v1229 = vld [vmem:[%s3 + $0x38] sm:$0xff]
        %v1230 = vld [vmem:[%s3 + $0x40] sm:$0xff]
        %v1231 = vld [vmem:[%s3 + $0x48] sm:$0xff]
        %v1232 = vld [vmem:[%s3 + $0x50] sm:$0xff]
        %v1233 = vld [vmem:[%s3 + $0x58] sm:$0xff]
        %v1234 = vld [vmem:[%s3 + $0x60] sm:$0xff]
        %v1235 = vld [vmem:[%s3 + $0x68] sm:$0xff]
        %v1236 = vld [vmem:[%s3 + $0x70] sm:$0xff]
        %v1237 = vld [vmem:[%s3 + $0x78] sm:$0xff]
        %v1238 = vld [vmem:[#allocation3] sm:$0xfe]
        %v1239 = vld [vmem:[#allocation3 + $0x8] sm:$0xfe]
        %v1240 = vld [vmem:[#allocation3 + $0x10] sm:$0xff]
        %v1241 = vld [vmem:[#allocation3 + $0x18] sm:$0xff]
        %v1242 = vld [vmem:[#allocation3 + $0x20] sm:$0x1]
        %v1243 = vld [vmem:[#allocation3 + $0x28] sm:$0x1]
        %v1250 = vrot.slane %v1238, 1
        %v1251 = vrot.slane %v1240, 1
        %v1252 = vsel %vm621, %v1250, %v1251
        %v1253 = vrot.slane %v1239, 1
        %v1254 = vrot.slane %v1241, 1
        %v1255 = vsel %vm621, %v1253, %v1254
        %v1256 = vrot.slane %v1242, 1
        %v1257 = vsel %vm621, %v1251, %v1256
        %v1258 = vrot.slane %v1243, 1
        %v1259 = vsel %vm621, %v1254, %v1258
        %1260 = vrot.lane.b32.xlu0 %v1252, 120
        %v1261 = vpop.permute.xlu0 %1260
        %1262 = vrot.lane.b32.xlu0 %v1255, 120
        %v1263 = vpop.permute.xlu0 %1262
        %1264 = vrot.lane.b32.xlu0 %v1257, 120
        %v1265 = vpop.permute.xlu0 %1264
        %1266 = vrot.lane.b32.xlu0 %v1259, 120
        %v1267 = vpop.permute.xlu0 %1266
        %v1268 = vsel %vm421, %v1261, %v1263
        %v1269 = vsel %vm421, %v1265, %v1267
        %v1273 = vsel %vm307, %v1221, 0
        %1275 = vmatprep.subr.mxu0 0.0
        %1276 = vmatpush1.msra.mxu0 %v1268
        %1277 = vmatprep.subr.mxu0 0.0
        %1278 = vmatpush1.msra.mxu0 %v1269
        %1279 = vmatprep.subr.mxu0 0.0
        %1280 = vmatpush1.msra.mxu0 0.0
        %1281 = vmatprep.subr.mxu0 0.0
        %1282 = vmatpush1.msra.mxu0 0.0
        %1283 = vmatprep.subr.mxu0 0.0
        %1284 = vmatpush1.msra.mxu0 0.0
        %1285 = vmatprep.subr.mxu0 0.0
        %1286 = vmatpush1.msra.mxu0 0.0
        %1287 = vmatprep.subr.mxu0 0.0
        %1288 = vmatpush1.msra.mxu0 0.0
        %1289 = vmatprep.subr.mxu0 0.0
        %1290 = vmatpush1.msra.mxu0 0.0
        %1291 = vmatprep.subr.mxu0 0.0
        %1292 = vmatpush1.msra.mxu0 0.0
        %1293 = vmatprep.subr.mxu0 0.0
        %1294 = vmatpush1.msra.mxu0 0.0
        %1295 = vmatprep.subr.mxu0 0.0
        %1296 = vmatpush1.msra.mxu0 0.0
        %1297 = vmatprep.subr.mxu0 0.0
        %1298 = vmatpush1.msra.mxu0 0.0
        %1299 = vmatprep.subr.mxu0 0.0
        %1300 = vmatpush1.msra.mxu0 0.0
        %1301 = vmatprep.subr.mxu0 0.0
        %1302 = vmatpush1.msra.mxu0 0.0
        %1303 = vmatprep.subr.mxu0 0.0
        %1304 = vmatpush1.msra.mxu0 0.0
        %1305 = vmatprep.subr.mxu0 0.0
        %1306 = vmatpush1.msra.mxu0 0.0
        %1307 = vmatprep.subr.mxu0 0.0
        %1308 = vmatpush1.msra.mxu0 0.0
        %1309 = vmatprep.subr.mxu0 0.0
        %1310 = vmatpush1.msra.mxu0 0.0
        %1311 = vmatprep.subr.mxu0 0.0
        %1312 = vmatpush1.msra.mxu0 0.0
        %1313 = vmatprep.subr.mxu0 0.0
        %1314 = vmatpush1.msra.mxu0 0.0
        %1315 = vmatprep.subr.mxu0 0.0
        %1316 = vmatpush1.msra.mxu0 0.0
        %1317 = vmatprep.subr.mxu0 0.0
        %1318 = vmatpush1.msra.mxu0 0.0
        %1319 = vmatprep.subr.mxu0 0.0
        %1320 = vmatpush1.msra.mxu0 0.0
        %1321 = vmatprep.subr.mxu0 0.0
        %1322 = vmatpush1.msra.mxu0 0.0
        %1323 = vmatprep.subr.mxu0 0.0
        %1324 = vmatpush1.msra.mxu0 0.0
        %1325 = vmatprep.subr.mxu0 0.0
        %1326 = vmatpush1.msra.mxu0 0.0
        %1327 = vmatprep.subr.mxu0 0.0
        %1328 = vmatpush1.msra.mxu0 0.0
        %1329 = vmatprep.subr.mxu0 0.0
        %1330 = vmatpush1.msra.mxu0 0.0
        %1331 = vmatprep.subr.mxu0 0.0
        %1332 = vmatpush1.msra.mxu0 0.0
        %1333 = vmatprep.subr.mxu0 0.0
        %1334 = vmatpush1.msra.mxu0 0.0
        %1335 = vmatprep.subr.mxu0 0.0
        %1336 = vmatpush1.msra.mxu0 0.0
        %1337 = vmatprep.subr.mxu0 0.0
        %1338 = vmatpush1.msra.mxu0 0.0
        %1339 = vmatprep.mubr.f32.mxu0 0.0
        %1340 = vmatmul.mubr.f32.gmra.mrb[0].mxu0 %v1273
        %v1341 = vpop.f32.mrb[0].mxu0
        %v1342 = vadd.f32 0.0, %v1341
        %v1343 = vpop.f32.mrb[0].mxu0
        %1344 = vdwg.mxu0
        %1345 = vmatprep.subr.mxu0 0.0
        %1346 = vmatpush1.msra.mxu0 %v1222
        %1347 = vmatprep.subr.mxu0 0.0
        %1348 = vmatpush1.msra.mxu0 %v1223
        %1349 = vmatprep.subr.mxu0 0.0
        %1350 = vmatpush1.msra.mxu0 %v1224
        %1351 = vmatprep.subr.mxu0 0.0
        %1352 = vmatpush1.msra.mxu0 %v1225
        %1353 = vmatprep.subr.mxu0 0.0
        %1354 = vmatpush1.msra.mxu0 %v1226
        %1355 = vmatprep.subr.mxu0 0.0
        %1356 = vmatpush1.msra.mxu0 %v1227
        %1357 = vmatprep.subr.mxu0 0.0
        %1358 = vmatpush1.msra.mxu0 %v1228
        %1359 = vmatprep.subr.mxu0 0.0
        %1360 = vmatpush1.msra.mxu0 %v1229
        %1361 = vmatprep.subr.mxu0 0.0
        %1362 = vmatpush1.msra.mxu0 %v1230
        %1363 = vmatprep.subr.mxu0 0.0
        %1364 = vmatpush1.msra.mxu0 %v1231
        %1365 = vmatprep.subr.mxu0 0.0
        %1366 = vmatpush1.msra.mxu0 %v1232
        %1367 = vmatprep.subr.mxu0 0.0
        %1368 = vmatpush1.msra.mxu0 %v1233
        %1369 = vmatprep.subr.mxu0 0.0
        %1370 = vmatpush1.msra.mxu0 %v1234
        %1371 = vmatprep.subr.mxu0 0.0
        %1372 = vmatpush1.msra.mxu0 %v1235
        %1373 = vmatprep.subr.mxu0 0.0
        %1374 = vmatpush1.msra.mxu0 %v1236
        %1375 = vmatprep.subr.mxu0 0.0
        %1376 = vmatpush1.msra.mxu0 %v1237
        %1377 = vmatprep.subr.mxu0 0.0
        %1378 = vmatpush1.msra.mxu0 0.0
        %1379 = vmatprep.subr.mxu0 0.0
        %1380 = vmatpush1.msra.mxu0 0.0
        %1381 = vmatprep.subr.mxu0 0.0
        %1382 = vmatpush1.msra.mxu0 0.0
        %1383 = vmatprep.subr.mxu0 0.0
        %1384 = vmatpush1.msra.mxu0 0.0
        %1385 = vmatprep.subr.mxu0 0.0
        %1386 = vmatpush1.msra.mxu0 0.0
        %1387 = vmatprep.subr.mxu0 0.0
        %1388 = vmatpush1.msra.mxu0 0.0
        %1389 = vmatprep.subr.mxu0 0.0
        %1390 = vmatpush1.msra.mxu0 0.0
        %1391 = vmatprep.subr.mxu0 0.0
        %1392 = vmatpush1.msra.mxu0 0.0
        %1393 = vmatprep.subr.mxu0 0.0
        %1394 = vmatpush1.msra.mxu0 0.0
        %1395 = vmatprep.subr.mxu0 0.0
        %1396 = vmatpush1.msra.mxu0 0.0
        %1397 = vmatprep.subr.mxu0 0.0
        %1398 = vmatpush1.msra.mxu0 0.0
        %1399 = vmatprep.subr.mxu0 0.0
        %1400 = vmatpush1.msra.mxu0 0.0
        %1401 = vmatprep.subr.mxu0 0.0
        %1402 = vmatpush1.msra.mxu0 0.0
        %1403 = vmatprep.subr.mxu0 0.0
        %1404 = vmatpush1.msra.mxu0 0.0
        %1405 = vmatprep.subr.mxu0 0.0
        %1406 = vmatpush1.msra.mxu0 0.0
        %1407 = vmatprep.subr.mxu0 0.0
        %1408 = vmatpush1.msra.mxu0 0.0
        %1409 = vmatprep.mubr.f32.mxu0 0.0
        %1410 = vmatmul.mubr.f32.gmra.mrb[0].mxu0 %v1342
        %v1411 = vpop.f32.mrb[0].mxu0
        %v1412 = vadd.f32 0.0, %v1411
        %v1413 = vpop.f32.mrb[0].mxu0
        %1414 = vdwg.mxu0
        %1416 = vrot.lane.b32.xlu0 %v1412, 8
        %v1417 = vpop.permute.xlu0 %1416
        %vm1419 = vcmask 588864
        %1420 = vst.msk [vmem:[#allocation5 + $0x1] sm:$0xff] %vm1419, %v1417
        %v1421 = vld [vmem:[%s939] sm:$0xfe]
        %v1422 = vld [vmem:[%s939 + $0x8] sm:$0xfe]
        %v1423 = vld [vmem:[%s939 + $0x10] sm:$0xff]
        %v1424 = vld [vmem:[%s939 + $0x18] sm:$0xff]
        %v1425 = vld [vmem:[%s939 + $0x20] sm:$0x1]
        %v1426 = vld [vmem:[%s939 + $0x28] sm:$0x1]
        %v1433 = vrot.slane %v1421, 1
        %v1434 = vrot.slane %v1423, 1
        %v1435 = vsel %vm621, %v1433, %v1434
        %v1436 = vrot.slane %v1422, 1
        %v1437 = vrot.slane %v1424, 1
        %v1438 = vsel %vm621, %v1436, %v1437
        %v1439 = vrot.slane %v1425, 1
        %v1440 = vsel %vm621, %v1434, %v1439
        %v1441 = vrot.slane %v1426, 1
        %v1442 = vsel %vm621, %v1437, %v1441
        %1443 = vrot.lane.b32.xlu0 %v1435, 120
        %v1444 = vpop.permute.xlu0 %1443
        %1445 = vrot.lane.b32.xlu0 %v1438, 120
        %v1446 = vpop.permute.xlu0 %1445
        %1447 = vrot.lane.b32.xlu0 %v1440, 120
        %v1448 = vpop.permute.xlu0 %1447
        %1449 = vrot.lane.b32.xlu0 %v1442, 120
        %v1450 = vpop.permute.xlu0 %1449
        %v1451 = vsel %vm421, %v1444, %v1446
        %v1452 = vsel %vm421, %v1448, %v1450
        %1455 = vmatprep.subr.mxu0 0.0
        %1456 = vmatpush1.msra.mxu0 %v1451
        %1457 = vmatprep.subr.mxu0 0.0
        %1458 = vmatpush1.msra.mxu0 %v1452
        %1459 = vmatprep.subr.mxu0 0.0
        %1460 = vmatpush1.msra.mxu0 0.0
        %1461 = vmatprep.subr.mxu0 0.0
        %1462 = vmatpush1.msra.mxu0 0.0
        %1463 = vmatprep.subr.mxu0 0.0
        %1464 = vmatpush1.msra.mxu0 0.0
        %1465 = vmatprep.subr.mxu0 0.0
        %1466 = vmatpush1.msra.mxu0 0.0
        %1467 = vmatprep.subr.mxu0 0.0
        %1468 = vmatpush1.msra.mxu0 0.0
        %1469 = vmatprep.subr.mxu0 0.0
        %1470 = vmatpush1.msra.mxu0 0.0
        %1471 = vmatprep.subr.mxu0 0.0
        %1472 = vmatpush1.msra.mxu0 0.0
        %1473 = vmatprep.subr.mxu0 0.0
        %1474 = vmatpush1.msra.mxu0 0.0
        %1475 = vmatprep.subr.mxu0 0.0
        %1476 = vmatpush1.msra.mxu0 0.0
        %1477 = vmatprep.subr.mxu0 0.0
        %1478 = vmatpush1.msra.mxu0 0.0
        %1479 = vmatprep.subr.mxu0 0.0
        %1480 = vmatpush1.msra.mxu0 0.0
        %1481 = vmatprep.subr.mxu0 0.0
        %1482 = vmatpush1.msra.mxu0 0.0
        %1483 = vmatprep.subr.mxu0 0.0
        %1484 = vmatpush1.msra.mxu0 0.0
        %1485 = vmatprep.subr.mxu0 0.0
        %1486 = vmatpush1.msra.mxu0 0.0
        %1487 = vmatprep.subr.mxu0 0.0
        %1488 = vmatpush1.msra.mxu0 0.0
        %1489 = vmatprep.subr.mxu0 0.0
        %1490 = vmatpush1.msra.mxu0 0.0
        %1491 = vmatprep.subr.mxu0 0.0
        %1492 = vmatpush1.msra.mxu0 0.0
        %1493 = vmatprep.subr.mxu0 0.0
        %1494 = vmatpush1.msra.mxu0 0.0
        %1495 = vmatprep.subr.mxu0 0.0
        %1496 = vmatpush1.msra.mxu0 0.0
        %1497 = vmatprep.subr.mxu0 0.0
        %1498 = vmatpush1.msra.mxu0 0.0
        %1499 = vmatprep.subr.mxu0 0.0
        %1500 = vmatpush1.msra.mxu0 0.0
        %1501 = vmatprep.subr.mxu0 0.0
        %1502 = vmatpush1.msra.mxu0 0.0
        %1503 = vmatprep.subr.mxu0 0.0
        %1504 = vmatpush1.msra.mxu0 0.0
        %1505 = vmatprep.subr.mxu0 0.0
        %1506 = vmatpush1.msra.mxu0 0.0
        %1507 = vmatprep.subr.mxu0 0.0
        %1508 = vmatpush1.msra.mxu0 0.0
        %1509 = vmatprep.subr.mxu0 0.0
        %1510 = vmatpush1.msra.mxu0 0.0
        %1511 = vmatprep.subr.mxu0 0.0
        %1512 = vmatpush1.msra.mxu0 0.0
        %1513 = vmatprep.subr.mxu0 0.0
        %1514 = vmatpush1.msra.mxu0 0.0
        %1515 = vmatprep.subr.mxu0 0.0
        %1516 = vmatpush1.msra.mxu0 0.0
        %1517 = vmatprep.subr.mxu0 0.0
        %1518 = vmatpush1.msra.mxu0 0.0
        %1519 = vmatprep.mubr.f32.mxu0 0.0
        %1520 = vmatmul.mubr.f32.gmra.mrb[0].mxu0 %v1273
        %v1521 = vpop.f32.mrb[0].mxu0
        %v1522 = vadd.f32 0.0, %v1521
        %v1523 = vpop.f32.mrb[0].mxu0
        %1524 = vdwg.mxu0
        %1525 = vmatprep.subr.mxu0 0.0
        %1526 = vmatpush1.msra.mxu0 %v1222
        %1527 = vmatprep.subr.mxu0 0.0
        %1528 = vmatpush1.msra.mxu0 %v1223
        %1529 = vmatprep.subr.mxu0 0.0
        %1530 = vmatpush1.msra.mxu0 %v1224
        %1531 = vmatprep.subr.mxu0 0.0
        %1532 = vmatpush1.msra.mxu0 %v1225
        %1533 = vmatprep.subr.mxu0 0.0
        %1534 = vmatpush1.msra.mxu0 %v1226
        %1535 = vmatprep.subr.mxu0 0.0
        %1536 = vmatpush1.msra.mxu0 %v1227
        %1537 = vmatprep.subr.mxu0 0.0
        %1538 = vmatpush1.msra.mxu0 %v1228
        %1539 = vmatprep.subr.mxu0 0.0
        %1540 = vmatpush1.msra.mxu0 %v1229
        %1541 = vmatprep.subr.mxu0 0.0
        %1542 = vmatpush1.msra.mxu0 %v1230
        %1543 = vmatprep.subr.mxu0 0.0
        %1544 = vmatpush1.msra.mxu0 %v1231
        %1545 = vmatprep.subr.mxu0 0.0
        %1546 = vmatpush1.msra.mxu0 %v1232
        %1547 = vmatprep.subr.mxu0 0.0
        %1548 = vmatpush1.msra.mxu0 %v1233
        %1549 = vmatprep.subr.mxu0 0.0
        %1550 = vmatpush1.msra.mxu0 %v1234
        %1551 = vmatprep.subr.mxu0 0.0
        %1552 = vmatpush1.msra.mxu0 %v1235
        %1553 = vmatprep.subr.mxu0 0.0
        %1554 = vmatpush1.msra.mxu0 %v1236
        %1555 = vmatprep.subr.mxu0 0.0
        %1556 = vmatpush1.msra.mxu0 %v1237
        %1557 = vmatprep.subr.mxu0 0.0
        %1558 = vmatpush1.msra.mxu0 0.0
        %1559 = vmatprep.subr.mxu0 0.0
        %1560 = vmatpush1.msra.mxu0 0.0
        %1561 = vmatprep.subr.mxu0 0.0
        %1562 = vmatpush1.msra.mxu0 0.0
        %1563 = vmatprep.subr.mxu0 0.0
        %1564 = vmatpush1.msra.mxu0 0.0
        %1565 = vmatprep.subr.mxu0 0.0
        %1566 = vmatpush1.msra.mxu0 0.0
        %1567 = vmatprep.subr.mxu0 0.0
        %1568 = vmatpush1.msra.mxu0 0.0
        %1569 = vmatprep.subr.mxu0 0.0
        %1570 = vmatpush1.msra.mxu0 0.0
        %1571 = vmatprep.subr.mxu0 0.0
        %1572 = vmatpush1.msra.mxu0 0.0
        %1573 = vmatprep.subr.mxu0 0.0
        %1574 = vmatpush1.msra.mxu0 0.0
        %1575 = vmatprep.subr.mxu0 0.0
        %1576 = vmatpush1.msra.mxu0 0.0
        %1577 = vmatprep.subr.mxu0 0.0
        %1578 = vmatpush1.msra.mxu0 0.0
        %1579 = vmatprep.subr.mxu0 0.0
        %1580 = vmatpush1.msra.mxu0 0.0
        %1581 = vmatprep.subr.mxu0 0.0
        %1582 = vmatpush1.msra.mxu0 0.0
        %1583 = vmatprep.subr.mxu0 0.0
        %1584 = vmatpush1.msra.mxu0 0.0
        %1585 = vmatprep.subr.mxu0 0.0
        %1586 = vmatpush1.msra.mxu0 0.0
        %1587 = vmatprep.subr.mxu0 0.0
        %1588 = vmatpush1.msra.mxu0 0.0
        %1589 = vmatprep.mubr.f32.mxu0 0.0
        %1590 = vmatmul.mubr.f32.gmra.mrb[0].mxu0 %v1522
        %v1591 = vpop.f32.mrb[0].mxu0
        %v1592 = vadd.f32 0.0, %v1591
        %v1593 = vpop.f32.mrb[0].mxu0
        %1594 = vdwg.mxu0
        %1596 = vrot.lane.b32.xlu0 %v1592, 8
        %v1597 = vpop.permute.xlu0 %1596
        %s1599 = scalar_lea.vmem [#allocation5], 16
        %1600 = vst.msk [vmem:[%s1599 + $0x1] sm:$0xff] %vm1419, %v1597
        %v1601 = vld [vmem:[%s1214] sm:$0xfe]
        %v1602 = vld [vmem:[%s1214 + $0x8] sm:$0xfe]
        %v1603 = vld [vmem:[%s1214 + $0x10] sm:$0xff]
        %v1604 = vld [vmem:[%s1214 + $0x18] sm:$0xff]
        %v1605 = vld [vmem:[%s1214 + $0x20] sm:$0x1]
        %v1606 = vld [vmem:[%s1214 + $0x28] sm:$0x1]
        %v1613 = vrot.slane %v1601, 1
        %v1614 = vrot.slane %v1603, 1
        %v1615 = vsel %vm621, %v1613, %v1614
        %v1616 = vrot.slane %v1602, 1
        %v1617 = vrot.slane %v1604, 1
        %v1618 = vsel %vm621, %v1616, %v1617
        %v1619 = vrot.slane %v1605, 1
        %v1620 = vsel %vm621, %v1614, %v1619
        %v1621 = vrot.slane %v1606, 1
        %v1622 = vsel %vm621, %v1617, %v1621
        %1623 = vrot.lane.b32.xlu0 %v1615, 120
        %v1624 = vpop.permute.xlu0 %1623
        %1625 = vrot.lane.b32.xlu0 %v1618, 120
        %v1626 = vpop.permute.xlu0 %1625
        %1627 = vrot.lane.b32.xlu0 %v1620, 120
        %v1628 = vpop.permute.xlu0 %1627
        %1629 = vrot.lane.b32.xlu0 %v1622, 120
        %v1630 = vpop.permute.xlu0 %1629
        %v1631 = vsel %vm421, %v1624, %v1626
        %v1632 = vsel %vm421, %v1628, %v1630
        %1635 = vmatprep.subr.mxu0 0.0
        %1636 = vmatpush1.msra.mxu0 %v1631
        %1637 = vmatprep.subr.mxu0 0.0
        %1638 = vmatpush1.msra.mxu0 %v1632
        %1639 = vmatprep.subr.mxu0 0.0
        %1640 = vmatpush1.msra.mxu0 0.0
        %1641 = vmatprep.subr.mxu0 0.0
        %1642 = vmatpush1.msra.mxu0 0.0
        %1643 = vmatprep.subr.mxu0 0.0
        %1644 = vmatpush1.msra.mxu0 0.0
        %1645 = vmatprep.subr.mxu0 0.0
        %1646 = vmatpush1.msra.mxu0 0.0
        %1647 = vmatprep.subr.mxu0 0.0
        %1648 = vmatpush1.msra.mxu0 0.0
        %1649 = vmatprep.subr.mxu0 0.0
        %1650 = vmatpush1.msra.mxu0 0.0
        %1651 = vmatprep.subr.mxu0 0.0
        %1652 = vmatpush1.msra.mxu0 0.0
        %1653 = vmatprep.subr.mxu0 0.0
        %1654 = vmatpush1.msra.mxu0 0.0
        %1655 = vmatprep.subr.mxu0 0.0
        %1656 = vmatpush1.msra.mxu0 0.0
        %1657 = vmatprep.subr.mxu0 0.0
        %1658 = vmatpush1.msra.mxu0 0.0
        %1659 = vmatprep.subr.mxu0 0.0
        %1660 = vmatpush1.msra.mxu0 0.0
        %1661 = vmatprep.subr.mxu0 0.0
        %1662 = vmatpush1.msra.mxu0 0.0
        %1663 = vmatprep.subr.mxu0 0.0
        %1664 = vmatpush1.msra.mxu0 0.0
        %1665 = vmatprep.subr.mxu0 0.0
        %1666 = vmatpush1.msra.mxu0 0.0
        %1667 = vmatprep.subr.mxu0 0.0
        %1668 = vmatpush1.msra.mxu0 0.0
        %1669 = vmatprep.subr.mxu0 0.0
        %1670 = vmatpush1.msra.mxu0 0.0
        %1671 = vmatprep.subr.mxu0 0.0
        %1672 = vmatpush1.msra.mxu0 0.0
        %1673 = vmatprep.subr.mxu0 0.0
        %1674 = vmatpush1.msra.mxu0 0.0
        %1675 = vmatprep.subr.mxu0 0.0
        %1676 = vmatpush1.msra.mxu0 0.0
        %1677 = vmatprep.subr.mxu0 0.0
        %1678 = vmatpush1.msra.mxu0 0.0
        %1679 = vmatprep.subr.mxu0 0.0
        %1680 = vmatpush1.msra.mxu0 0.0
        %1681 = vmatprep.subr.mxu0 0.0
        %1682 = vmatpush1.msra.mxu0 0.0
        %1683 = vmatprep.subr.mxu0 0.0
        %1684 = vmatpush1.msra.mxu0 0.0
        %1685 = vmatprep.subr.mxu0 0.0
        %1686 = vmatpush1.msra.mxu0 0.0
        %1687 = vmatprep.subr.mxu0 0.0
        %1688 = vmatpush1.msra.mxu0 0.0
        %1689 = vmatprep.subr.mxu0 0.0
        %1690 = vmatpush1.msra.mxu0 0.0
        %1691 = vmatprep.subr.mxu0 0.0
        %1692 = vmatpush1.msra.mxu0 0.0
        %1693 = vmatprep.subr.mxu0 0.0
        %1694 = vmatpush1.msra.mxu0 0.0
        %1695 = vmatprep.subr.mxu0 0.0
        %1696 = vmatpush1.msra.mxu0 0.0
        %1697 = vmatprep.subr.mxu0 0.0
        %1698 = vmatpush1.msra.mxu0 0.0
        %1699 = vmatprep.mubr.f32.mxu0 0.0
        %1700 = vmatmul.mubr.f32.gmra.mrb[0].mxu0 %v1273
        %v1701 = vpop.f32.mrb[0].mxu0
        %v1702 = vadd.f32 0.0, %v1701
        %v1703 = vpop.f32.mrb[0].mxu0
        %1704 = vdwg.mxu0
        %1705 = vmatprep.subr.mxu0 0.0
        %1706 = vmatpush1.msra.mxu0 %v1222
        %1707 = vmatprep.subr.mxu0 0.0
        %1708 = vmatpush1.msra.mxu0 %v1223
        %1709 = vmatprep.subr.mxu0 0.0
        %1710 = vmatpush1.msra.mxu0 %v1224
        %1711 = vmatprep.subr.mxu0 0.0
        %1712 = vmatpush1.msra.mxu0 %v1225
        %1713 = vmatprep.subr.mxu0 0.0
        %1714 = vmatpush1.msra.mxu0 %v1226
        %1715 = vmatprep.subr.mxu0 0.0
        %1716 = vmatpush1.msra.mxu0 %v1227
        %1717 = vmatprep.subr.mxu0 0.0
        %1718 = vmatpush1.msra.mxu0 %v1228
        %1719 = vmatprep.subr.mxu0 0.0
        %1720 = vmatpush1.msra.mxu0 %v1229
        %1721 = vmatprep.subr.mxu0 0.0
        %1722 = vmatpush1.msra.mxu0 %v1230
        %1723 = vmatprep.subr.mxu0 0.0
        %1724 = vmatpush1.msra.mxu0 %v1231
        %1725 = vmatprep.subr.mxu0 0.0
        %1726 = vmatpush1.msra.mxu0 %v1232
        %1727 = vmatprep.subr.mxu0 0.0
        %1728 = vmatpush1.msra.mxu0 %v1233
        %1729 = vmatprep.subr.mxu0 0.0
        %1730 = vmatpush1.msra.mxu0 %v1234
        %1731 = vmatprep.subr.mxu0 0.0
        %1732 = vmatpush1.msra.mxu0 %v1235
        %1733 = vmatprep.subr.mxu0 0.0
        %1734 = vmatpush1.msra.mxu0 %v1236
        %1735 = vmatprep.subr.mxu0 0.0
        %1736 = vmatpush1.msra.mxu0 %v1237
        %1737 = vmatprep.subr.mxu0 0.0
        %1738 = vmatpush1.msra.mxu0 0.0
        %1739 = vmatprep.subr.mxu0 0.0
        %1740 = vmatpush1.msra.mxu0 0.0
        %1741 = vmatprep.subr.mxu0 0.0
        %1742 = vmatpush1.msra.mxu0 0.0
        %1743 = vmatprep.subr.mxu0 0.0
        %1744 = vmatpush1.msra.mxu0 0.0
        %1745 = vmatprep.subr.mxu0 0.0
        %1746 = vmatpush1.msra.mxu0 0.0
        %1747 = vmatprep.subr.mxu0 0.0
        %1748 = vmatpush1.msra.mxu0 0.0
        %1749 = vmatprep.subr.mxu0 0.0
        %1750 = vmatpush1.msra.mxu0 0.0
        %1751 = vmatprep.subr.mxu0 0.0
        %1752 = vmatpush1.msra.mxu0 0.0
        %1753 = vmatprep.subr.mxu0 0.0
        %1754 = vmatpush1.msra.mxu0 0.0
        %1755 = vmatprep.subr.mxu0 0.0
        %1756 = vmatpush1.msra.mxu0 0.0
        %1757 = vmatprep.subr.mxu0 0.0
        %1758 = vmatpush1.msra.mxu0 0.0
        %1759 = vmatprep.subr.mxu0 0.0
        %1760 = vmatpush1.msra.mxu0 0.0
        %1761 = vmatprep.subr.mxu0 0.0
        %1762 = vmatpush1.msra.mxu0 0.0
        %1763 = vmatprep.subr.mxu0 0.0
        %1764 = vmatpush1.msra.mxu0 0.0
        %1765 = vmatprep.subr.mxu0 0.0
        %1766 = vmatpush1.msra.mxu0 0.0
        %1767 = vmatprep.subr.mxu0 0.0
        %1768 = vmatpush1.msra.mxu0 0.0
        %1769 = vmatprep.mubr.f32.mxu0 0.0
        %1770 = vmatmul.mubr.f32.gmra.mrb[0].mxu0 %v1702
        %v1771 = vpop.f32.mrb[0].mxu0
        %v1772 = vadd.f32 0.0, %v1771
        %v1773 = vpop.f32.mrb[0].mxu0
        %1774 = vdwg.mxu0
        %1776 = vrot.lane.b32.xlu0 %v1772, 8
        %v1777 = vpop.permute.xlu0 %1776
        %s1779 = scalar_lea.vmem [#allocation5], 32
        %1780 = vst.msk [vmem:[%s1779 + $0x1] sm:$0xff] %vm1419, %v1777
        %v1781 = vld [vmem:[#allocation5] sm:$0xff]
        %s1782 = sld [smem:[#allocation7 + $0x1b]]
        %v1783 = vstv %s1782
        %v1784 = vmul.f32 %v1781, %v1783
        %s1785 = sld [smem:[#allocation7 + $0x1c]]
        %v1786 = vstv %s1785
        %v1787 = vmul.f32 %v1781, %v1786
        %1789 = vrot.lane.b32.xlu0 %v1787, 120
        %v1790 = vpop.permute.xlu0 %1789
        %v1792 = vadd.f32 %v1784, %v1790
        %s1793 = sld [smem:[#allocation7 + $0x1d]]
        %v1794 = vstv %s1793
        %v1795 = vmul.f32 %v1781, %v1794
        %1797 = vrot.lane.b32.xlu0 %v1795, 112
        %v1798 = vpop.permute.xlu0 %1797
        %v1800 = vadd.f32 %v1792, %v1798
        %v1801 = vld [vmem:[%s1599] sm:$0xff]
        %s1802 = sld [smem:[#allocation7 + $0x24]]
        %v1803 = vstv %s1802
        %v1804 = vmul.f32 %v1801, %v1803
        %v1805 = vadd.f32 %v1800, %v1804
        %s1806 = sld [smem:[#allocation7 + $0x25]]
        %v1807 = vstv %s1806
        %v1808 = vmul.f32 %v1801, %v1807
        %1810 = vrot.lane.b32.xlu0 %v1808, 120
        %v1811 = vpop.permute.xlu0 %1810
        %v1813 = vadd.f32 %v1805, %v1811
        %s1814 = sld [smem:[#allocation7 + $0x26]]
        %v1815 = vstv %s1814
        %v1816 = vmul.f32 %v1801, %v1815
        %1818 = vrot.lane.b32.xlu0 %v1816, 112
        %v1819 = vpop.permute.xlu0 %1818
        %v1821 = vadd.f32 %v1813, %v1819
        %v1822 = vld [vmem:[%s1779] sm:$0xff]
        %s1823 = sld [smem:[#allocation7 + $0x2d]]
        %v1824 = vstv %s1823
        %v1825 = vmul.f32 %v1822, %v1824
        %v1826 = vadd.f32 %v1821, %v1825
        %s1827 = sld [smem:[#allocation7 + $0x2e]]
        %v1828 = vstv %s1827
        %v1829 = vmul.f32 %v1822, %v1828
        %1831 = vrot.lane.b32.xlu0 %v1829, 120
        %v1832 = vpop.permute.xlu0 %1831
        %v1834 = vadd.f32 %v1826, %v1832
        %s1835 = sld [smem:[#allocation7 + $0x2f]]
        %v1836 = vstv %s1835
        %v1837 = vmul.f32 %v1822, %v1836
        %1839 = vrot.lane.b32.xlu0 %v1837, 112
        %v1840 = vpop.permute.xlu0 %1839
        %v1842 = vadd.f32 %v1834, %v1840
        %v1843 = vld [vmem:[#allocation5 + $0x1] sm:$0xff]
        %s1844 = sld [smem:[#allocation7 + $0x1e]]
        %v1845 = vstv %s1844
        %v1846 = vmul.f32 %v1843, %v1845
        %s1847 = sld [smem:[#allocation7 + $0x1f]]
        %v1848 = vstv %s1847
        %v1849 = vmul.f32 %v1843, %v1848
        %1851 = vrot.lane.b32.xlu0 %v1849, 120
        %v1852 = vpop.permute.xlu0 %1851
        %v1854 = vadd.f32 %v1846, %v1852
        %s1855 = sld [smem:[#allocation7 + $0x20]]
        %v1856 = vstv %s1855
        %v1857 = vmul.f32 %v1843, %v1856
        %1859 = vrot.lane.b32.xlu0 %v1857, 112
        %v1860 = vpop.permute.xlu0 %1859
        %v1862 = vadd.f32 %v1854, %v1860
        %v1863 = vld [vmem:[%s1599 + $0x1] sm:$0xff]
        %s1864 = sld [smem:[#allocation7 + $0x27]]
        %v1865 = vstv %s1864
        %v1866 = vmul.f32 %v1863, %v1865
        %v1867 = vadd.f32 %v1862, %v1866
        %s1868 = sld [smem:[#allocation7 + $0x28]]
        %v1869 = vstv %s1868
        %v1870 = vmul.f32 %v1863, %v1869
        %1872 = vrot.lane.b32.xlu0 %v1870, 120
        %v1873 = vpop.permute.xlu0 %1872
        %v1875 = vadd.f32 %v1867, %v1873
        %s1876 = sld [smem:[#allocation7 + $0x29]]
        %v1877 = vstv %s1876
        %v1878 = vmul.f32 %v1863, %v1877
        %1880 = vrot.lane.b32.xlu0 %v1878, 112
        %v1881 = vpop.permute.xlu0 %1880
        %v1883 = vadd.f32 %v1875, %v1881
        %v1884 = vld [vmem:[%s1779 + $0x1] sm:$0xff]
        %s1885 = sld [smem:[#allocation7 + $0x30]]
        %v1886 = vstv %s1885
        %v1887 = vmul.f32 %v1884, %v1886
        %v1888 = vadd.f32 %v1883, %v1887
        %s1889 = sld [smem:[#allocation7 + $0x31]]
        %v1890 = vstv %s1889
        %v1891 = vmul.f32 %v1884, %v1890
        %1893 = vrot.lane.b32.xlu0 %v1891, 120
        %v1894 = vpop.permute.xlu0 %1893
        %v1896 = vadd.f32 %v1888, %v1894
        %s1897 = sld [smem:[#allocation7 + $0x32]]
        %v1898 = vstv %s1897
        %v1899 = vmul.f32 %v1884, %v1898
        %1901 = vrot.lane.b32.xlu0 %v1899, 112
        %v1902 = vpop.permute.xlu0 %1901
        %v1904 = vadd.f32 %v1896, %v1902
        %v1905 = vld [vmem:[#allocation5 + $0x2] sm:$0xff]
        %s1906 = sld [smem:[#allocation7 + $0x21]]
        %v1907 = vstv %s1906
        %v1908 = vmul.f32 %v1905, %v1907
        %s1909 = sld [smem:[#allocation7 + $0x22]]
        %v1910 = vstv %s1909
        %v1911 = vmul.f32 %v1905, %v1910
        %1913 = vrot.lane.b32.xlu0 %v1911, 120
        %v1914 = vpop.permute.xlu0 %1913
        %v1916 = vadd.f32 %v1908, %v1914
        %s1917 = sld [smem:[#allocation7 + $0x23]]
        %v1918 = vstv %s1917
        %v1919 = vmul.f32 %v1905, %v1918
        %1921 = vrot.lane.b32.xlu0 %v1919, 112
        %v1922 = vpop.permute.xlu0 %1921
        %v1924 = vadd.f32 %v1916, %v1922
        %v1925 = vld [vmem:[%s1599 + $0x2] sm:$0xff]
        %s1926 = sld [smem:[#allocation7 + $0x2a]]
        %v1927 = vstv %s1926
        %v1928 = vmul.f32 %v1925, %v1927
        %v1929 = vadd.f32 %v1924, %v1928
        %s1930 = sld [smem:[#allocation7 + $0x2b]]
        %v1931 = vstv %s1930
        %v1932 = vmul.f32 %v1925, %v1931
        %1934 = vrot.lane.b32.xlu0 %v1932, 120
        %v1935 = vpop.permute.xlu0 %1934
        %v1937 = vadd.f32 %v1929, %v1935
        %s1938 = sld [smem:[#allocation7 + $0x2c]]
        %v1939 = vstv %s1938
        %v1940 = vmul.f32 %v1925, %v1939
        %1942 = vrot.lane.b32.xlu0 %v1940, 112
        %v1943 = vpop.permute.xlu0 %1942
        %v1945 = vadd.f32 %v1937, %v1943
        %v1946 = vld [vmem:[%s1779 + $0x2] sm:$0xff]
        %s1947 = sld [smem:[#allocation7 + $0x33]]
        %v1948 = vstv %s1947
        %v1949 = vmul.f32 %v1946, %v1948
        %v1950 = vadd.f32 %v1945, %v1949
        %s1951 = sld [smem:[#allocation7 + $0x34]]
        %v1952 = vstv %s1951
        %v1953 = vmul.f32 %v1946, %v1952
        %1955 = vrot.lane.b32.xlu0 %v1953, 120
        %v1956 = vpop.permute.xlu0 %1955
        %v1958 = vadd.f32 %v1950, %v1956
        %s1959 = sld [smem:[#allocation7 + $0x35]]
        %v1960 = vstv %s1959
        %v1961 = vmul.f32 %v1946, %v1960
        %1963 = vrot.lane.b32.xlu0 %v1961, 112
        %v1964 = vpop.permute.xlu0 %1963
        %v1966 = vadd.f32 %v1958, %v1964
        %v1967 = vadd.f32 %v1842, %v1904
        %s1968 = sld [smem:[#allocation9 + $0x3]]
        %v1969 = vstv %s1968
        %v1970 = vadd.f32 %v1966, %v1969
        %v1971 = vadd.f32 %v1967, %v1970
        %v1972 = vtanh.pop %v1971
        %1974 = vrot.lane.b32.xlu0 %v1972, 8
        %v1975 = vpop.permute.xlu0 %1974
        %1977 = vst.msk [vmem:[#allocation6 + $0x1] sm:$0xff] %vm1419, %v1975
        %v1978 = vld [vmem:[#allocation5] sm:$0xff]
        %s1979 = sld [smem:[#allocation7 + $0x36]]
        %v1980 = vstv %s1979
        %v1981 = vmul.f32 %v1978, %v1980
        %s1982 = sld [smem:[#allocation7 + $0x37]]
        %v1983 = vstv %s1982
        %v1984 = vmul.f32 %v1978, %v1983
        %1986 = vrot.lane.b32.xlu0 %v1984, 120
        %v1987 = vpop.permute.xlu0 %1986
        %v1989 = vadd.f32 %v1981, %v1987
        %s1990 = sld [smem:[#allocation7 + $0x38]]
        %v1991 = vstv %s1990
        %v1992 = vmul.f32 %v1978, %v1991
        %1994 = vrot.lane.b32.xlu0 %v1992, 112
        %v1995 = vpop.permute.xlu0 %1994
        %v1997 = vadd.f32 %v1989, %v1995
        %v1998 = vld [vmem:[%s1599] sm:$0xff]
        %s1999 = sld [smem:[#allocation7 + $0x3f]]
        %v2000 = vstv %s1999
        %v2001 = vmul.f32 %v1998, %v2000
        %v2002 = vadd.f32 %v1997, %v2001
        %s2003 = sld [smem:[#allocation7 + $0x40]]
        %v2004 = vstv %s2003
        %v2005 = vmul.f32 %v1998, %v2004
        %2007 = vrot.lane.b32.xlu0 %v2005, 120
        %v2008 = vpop.permute.xlu0 %2007
        %v2010 = vadd.f32 %v2002, %v2008
        %s2011 = sld [smem:[#allocation7 + $0x41]]
        %v2012 = vstv %s2011
        %v2013 = vmul.f32 %v1998, %v2012
        %2015 = vrot.lane.b32.xlu0 %v2013, 112
        %v2016 = vpop.permute.xlu0 %2015
        %v2018 = vadd.f32 %v2010, %v2016
        %v2019 = vld [vmem:[%s1779] sm:$0xff]
        %s2020 = sld [smem:[#allocation7 + $0x48]]
        %v2021 = vstv %s2020
        %v2022 = vmul.f32 %v2019, %v2021
        %v2023 = vadd.f32 %v2018, %v2022
        %s2024 = sld [smem:[#allocation7 + $0x49]]
        %v2025 = vstv %s2024
        %v2026 = vmul.f32 %v2019, %v2025
        %2028 = vrot.lane.b32.xlu0 %v2026, 120
        %v2029 = vpop.permute.xlu0 %2028
        %v2031 = vadd.f32 %v2023, %v2029
        %s2032 = sld [smem:[#allocation7 + $0x4a]]
        %v2033 = vstv %s2032
        %v2034 = vmul.f32 %v2019, %v2033
        %2036 = vrot.lane.b32.xlu0 %v2034, 112
        %v2037 = vpop.permute.xlu0 %2036
        %v2039 = vadd.f32 %v2031, %v2037
        %v2040 = vld [vmem:[#allocation5 + $0x1] sm:$0xff]
        %s2041 = sld [smem:[#allocation7 + $0x39]]
        %v2042 = vstv %s2041
        %v2043 = vmul.f32 %v2040, %v2042
        %s2044 = sld [smem:[#allocation7 + $0x3a]]
        %v2045 = vstv %s2044
        %v2046 = vmul.f32 %v2040, %v2045
        %2048 = vrot.lane.b32.xlu0 %v2046, 120
        %v2049 = vpop.permute.xlu0 %2048
        %v2051 = vadd.f32 %v2043, %v2049
        %s2052 = sld [smem:[#allocation7 + $0x3b]]
        %v2053 = vstv %s2052
        %v2054 = vmul.f32 %v2040, %v2053
        %2056 = vrot.lane.b32.xlu0 %v2054, 112
        %v2057 = vpop.permute.xlu0 %2056
        %v2059 = vadd.f32 %v2051, %v2057
        %v2060 = vld [vmem:[%s1599 + $0x1] sm:$0xff]
        %s2061 = sld [smem:[#allocation7 + $0x42]]
        %v2062 = vstv %s2061
        %v2063 = vmul.f32 %v2060, %v2062
        %v2064 = vadd.f32 %v2059, %v2063
        %s2065 = sld [smem:[#allocation7 + $0x43]]
        %v2066 = vstv %s2065
        %v2067 = vmul.f32 %v2060, %v2066
        %2069 = vrot.lane.b32.xlu0 %v2067, 120
        %v2070 = vpop.permute.xlu0 %2069
        %v2072 = vadd.f32 %v2064, %v2070
        %s2073 = sld [smem:[#allocation7 + $0x44]]
        %v2074 = vstv %s2073
        %v2075 = vmul.f32 %v2060, %v2074
        %2077 = vrot.lane.b32.xlu0 %v2075, 112
        %v2078 = vpop.permute.xlu0 %2077
        %v2080 = vadd.f32 %v2072, %v2078
        %v2081 = vld [vmem:[%s1779 + $0x1] sm:$0xff]
        %s2082 = sld [smem:[#allocation7 + $0x4b]]
        %v2083 = vstv %s2082
        %v2084 = vmul.f32 %v2081, %v2083
        %v2085 = vadd.f32 %v2080, %v2084
        %s2086 = sld [smem:[#allocation7 + $0x4c]]
        %v2087 = vstv %s2086
        %v2088 = vmul.f32 %v2081, %v2087
        %2090 = vrot.lane.b32.xlu0 %v2088, 120
        %v2091 = vpop.permute.xlu0 %2090
        %v2093 = vadd.f32 %v2085, %v2091
        %s2094 = sld [smem:[#allocation7 + $0x4d]]
        %v2095 = vstv %s2094
        %v2096 = vmul.f32 %v2081, %v2095
        %2098 = vrot.lane.b32.xlu0 %v2096, 112
        %v2099 = vpop.permute.xlu0 %2098
        %v2101 = vadd.f32 %v2093, %v2099
        %v2102 = vld [vmem:[#allocation5 + $0x2] sm:$0xff]
        %s2103 = sld [smem:[#allocation7 + $0x3c]]
        %v2104 = vstv %s2103
        %v2105 = vmul.f32 %v2102, %v2104
        %s2106 = sld [smem:[#allocation7 + $0x3d]]
        %v2107 = vstv %s2106
        %v2108 = vmul.f32 %v2102, %v2107
        %2110 = vrot.lane.b32.xlu0 %v2108, 120
        %v2111 = vpop.permute.xlu0 %2110
        %v2113 = vadd.f32 %v2105, %v2111
        %s2114 = sld [smem:[#allocation7 + $0x3e]]
        %v2115 = vstv %s2114
        %v2116 = vmul.f32 %v2102, %v2115
        %2118 = vrot.lane.b32.xlu0 %v2116, 112
        %v2119 = vpop.permute.xlu0 %2118
        %v2121 = vadd.f32 %v2113, %v2119
        %v2122 = vld [vmem:[%s1599 + $0x2] sm:$0xff]
        %s2123 = sld [smem:[#allocation7 + $0x45]]
        %v2124 = vstv %s2123
        %v2125 = vmul.f32 %v2122, %v2124
        %v2126 = vadd.f32 %v2121, %v2125
        %s2127 = sld [smem:[#allocation7 + $0x46]]
        %v2128 = vstv %s2127
        %v2129 = vmul.f32 %v2122, %v2128
        %2131 = vrot.lane.b32.xlu0 %v2129, 120
        %v2132 = vpop.permute.xlu0 %2131
        %v2134 = vadd.f32 %v2126, %v2132
        %s2135 = sld [smem:[#allocation7 + $0x47]]
        %v2136 = vstv %s2135
        %v2137 = vmul.f32 %v2122, %v2136
        %2139 = vrot.lane.b32.xlu0 %v2137, 112
        %v2140 = vpop.permute.xlu0 %2139
        %v2142 = vadd.f32 %v2134, %v2140
        %v2143 = vld [vmem:[%s1779 + $0x2] sm:$0xff]
        %s2144 = sld [smem:[#allocation7 + $0x4e]]
        %v2145 = vstv %s2144
        %v2146 = vmul.f32 %v2143, %v2145
        %v2147 = vadd.f32 %v2142, %v2146
        %s2148 = sld [smem:[#allocation7 + $0x4f]]
        %v2149 = vstv %s2148
        %v2150 = vmul.f32 %v2143, %v2149
        %2152 = vrot.lane.b32.xlu0 %v2150, 120
        %v2153 = vpop.permute.xlu0 %2152
        %v2155 = vadd.f32 %v2147, %v2153
        %s2156 = sld [smem:[#allocation7 + $0x50]]
        %v2157 = vstv %s2156
        %v2158 = vmul.f32 %v2143, %v2157
        %2160 = vrot.lane.b32.xlu0 %v2158, 112
        %v2161 = vpop.permute.xlu0 %2160
        %v2163 = vadd.f32 %v2155, %v2161
        %v2164 = vadd.f32 %v2039, %v2101
        %s2165 = sld [smem:[#allocation9 + $0x4]]
        %v2166 = vstv %s2165
        %v2167 = vadd.f32 %v2163, %v2166
        %v2168 = vadd.f32 %v2164, %v2167
        %v2169 = vtanh.pop %v2168
        %2171 = vrot.lane.b32.xlu0 %v2169, 8
        %v2172 = vpop.permute.xlu0 %2171
        %s2174 = scalar_lea.vmem [#allocation6], 16
        %2175 = vst.msk [vmem:[%s2174 + $0x1] sm:$0xff] %vm1419, %v2172
        %v2176 = vld [vmem:[#allocation5] sm:$0xff]
        %s2177 = sld [smem:[#allocation7 + $0x51]]
        %v2178 = vstv %s2177
        %v2179 = vmul.f32 %v2176, %v2178
        %s2180 = sld [smem:[#allocation7 + $0x52]]
        %v2181 = vstv %s2180
        %v2182 = vmul.f32 %v2176, %v2181
        %2184 = vrot.lane.b32.xlu0 %v2182, 120
        %v2185 = vpop.permute.xlu0 %2184
        %v2187 = vadd.f32 %v2179, %v2185
        %s2188 = sld [smem:[#allocation7 + $0x53]]
        %v2189 = vstv %s2188
        %v2190 = vmul.f32 %v2176, %v2189
        %2192 = vrot.lane.b32.xlu0 %v2190, 112
        %v2193 = vpop.permute.xlu0 %2192
        %v2195 = vadd.f32 %v2187, %v2193
        %v2196 = vld [vmem:[%s1599] sm:$0xff]
        %s2197 = sld [smem:[#allocation7 + $0x5a]]
        %v2198 = vstv %s2197
        %v2199 = vmul.f32 %v2196, %v2198
        %v2200 = vadd.f32 %v2195, %v2199
        %s2201 = sld [smem:[#allocation7 + $0x5b]]
        %v2202 = vstv %s2201
        %v2203 = vmul.f32 %v2196, %v2202
        %2205 = vrot.lane.b32.xlu0 %v2203, 120
        %v2206 = vpop.permute.xlu0 %2205
        %v2208 = vadd.f32 %v2200, %v2206
        %s2209 = sld [smem:[#allocation7 + $0x5c]]
        %v2210 = vstv %s2209
        %v2211 = vmul.f32 %v2196, %v2210
        %2213 = vrot.lane.b32.xlu0 %v2211, 112
        %v2214 = vpop.permute.xlu0 %2213
        %v2216 = vadd.f32 %v2208, %v2214
        %v2217 = vld [vmem:[%s1779] sm:$0xff]
        %s2218 = sld [smem:[#allocation7 + $0x63]]
        %v2219 = vstv %s2218
        %v2220 = vmul.f32 %v2217, %v2219
        %v2221 = vadd.f32 %v2216, %v2220
        %s2222 = sld [smem:[#allocation7 + $0x64]]
        %v2223 = vstv %s2222
        %v2224 = vmul.f32 %v2217, %v2223
        %2226 = vrot.lane.b32.xlu0 %v2224, 120
        %v2227 = vpop.permute.xlu0 %2226
        %v2229 = vadd.f32 %v2221, %v2227
        %s2230 = sld [smem:[#allocation7 + $0x65]]
        %v2231 = vstv %s2230
        %v2232 = vmul.f32 %v2217, %v2231
        %2234 = vrot.lane.b32.xlu0 %v2232, 112
        %v2235 = vpop.permute.xlu0 %2234
        %v2237 = vadd.f32 %v2229, %v2235
        %v2238 = vld [vmem:[#allocation5 + $0x1] sm:$0xff]
        %s2239 = sld [smem:[#allocation7 + $0x54]]
        %v2240 = vstv %s2239
        %v2241 = vmul.f32 %v2238, %v2240
        %s2242 = sld [smem:[#allocation7 + $0x55]]
        %v2243 = vstv %s2242
        %v2244 = vmul.f32 %v2238, %v2243
        %2246 = vrot.lane.b32.xlu0 %v2244, 120
        %v2247 = vpop.permute.xlu0 %2246
        %v2249 = vadd.f32 %v2241, %v2247
        %s2250 = sld [smem:[#allocation7 + $0x56]]
        %v2251 = vstv %s2250
        %v2252 = vmul.f32 %v2238, %v2251
        %2254 = vrot.lane.b32.xlu0 %v2252, 112
        %v2255 = vpop.permute.xlu0 %2254
        %v2257 = vadd.f32 %v2249, %v2255
        %v2258 = vld [vmem:[%s1599 + $0x1] sm:$0xff]
        %s2259 = sld [smem:[#allocation7 + $0x5d]]
        %v2260 = vstv %s2259
        %v2261 = vmul.f32 %v2258, %v2260
        %v2262 = vadd.f32 %v2257, %v2261
        %s2263 = sld [smem:[#allocation7 + $0x5e]]
        %v2264 = vstv %s2263
        %v2265 = vmul.f32 %v2258, %v2264
        %2267 = vrot.lane.b32.xlu0 %v2265, 120
        %v2268 = vpop.permute.xlu0 %2267
        %v2270 = vadd.f32 %v2262, %v2268
        %s2271 = sld [smem:[#allocation7 + $0x5f]]
        %v2272 = vstv %s2271
        %v2273 = vmul.f32 %v2258, %v2272
        %2275 = vrot.lane.b32.xlu0 %v2273, 112
        %v2276 = vpop.permute.xlu0 %2275
        %v2278 = vadd.f32 %v2270, %v2276
        %v2279 = vld [vmem:[%s1779 + $0x1] sm:$0xff]
        %s2280 = sld [smem:[#allocation7 + $0x66]]
        %v2281 = vstv %s2280
        %v2282 = vmul.f32 %v2279, %v2281
        %v2283 = vadd.f32 %v2278, %v2282
        %s2284 = sld [smem:[#allocation7 + $0x67]]
        %v2285 = vstv %s2284
        %v2286 = vmul.f32 %v2279, %v2285
        %2288 = vrot.lane.b32.xlu0 %v2286, 120
        %v2289 = vpop.permute.xlu0 %2288
        %v2291 = vadd.f32 %v2283, %v2289
        %s2292 = sld [smem:[#allocation7 + $0x68]]
        %v2293 = vstv %s2292
        %v2294 = vmul.f32 %v2279, %v2293
        %2296 = vrot.lane.b32.xlu0 %v2294, 112
        %v2297 = vpop.permute.xlu0 %2296
        %v2299 = vadd.f32 %v2291, %v2297
        %v2300 = vld [vmem:[#allocation5 + $0x2] sm:$0xff]
        %s2301 = sld [smem:[#allocation7 + $0x57]]
        %v2302 = vstv %s2301
        %v2303 = vmul.f32 %v2300, %v2302
        %s2304 = sld [smem:[#allocation7 + $0x58]]
        %v2305 = vstv %s2304
        %v2306 = vmul.f32 %v2300, %v2305
        %2308 = vrot.lane.b32.xlu0 %v2306, 120
        %v2309 = vpop.permute.xlu0 %2308
        %v2311 = vadd.f32 %v2303, %v2309
        %s2312 = sld [smem:[#allocation7 + $0x59]]
        %v2313 = vstv %s2312
        %v2314 = vmul.f32 %v2300, %v2313
        %2316 = vrot.lane.b32.xlu0 %v2314, 112
        %v2317 = vpop.permute.xlu0 %2316
        %v2319 = vadd.f32 %v2311, %v2317
        %v2320 = vld [vmem:[%s1599 + $0x2] sm:$0xff]
        %s2321 = sld [smem:[#allocation7 + $0x60]]
        %v2322 = vstv %s2321
        %v2323 = vmul.f32 %v2320, %v2322
        %v2324 = vadd.f32 %v2319, %v2323
        %s2325 = sld [smem:[#allocation7 + $0x61]]
        %v2326 = vstv %s2325
        %v2327 = vmul.f32 %v2320, %v2326
        %2329 = vrot.lane.b32.xlu0 %v2327, 120
        %v2330 = vpop.permute.xlu0 %2329
        %v2332 = vadd.f32 %v2324, %v2330
        %s2333 = sld [smem:[#allocation7 + $0x62]]
        %v2334 = vstv %s2333
        %v2335 = vmul.f32 %v2320, %v2334
        %2337 = vrot.lane.b32.xlu0 %v2335, 112
        %v2338 = vpop.permute.xlu0 %2337
        %v2340 = vadd.f32 %v2332, %v2338
        %v2341 = vld [vmem:[%s1779 + $0x2] sm:$0xff]
        %s2342 = sld [smem:[#allocation7 + $0x69]]
        %v2343 = vstv %s2342
        %v2344 = vmul.f32 %v2341, %v2343
        %v2345 = vadd.f32 %v2340, %v2344
        %s2346 = sld [smem:[#allocation7 + $0x6a]]
        %v2347 = vstv %s2346
        %v2348 = vmul.f32 %v2341, %v2347
        %2350 = vrot.lane.b32.xlu0 %v2348, 120
        %v2351 = vpop.permute.xlu0 %2350
        %v2353 = vadd.f32 %v2345, %v2351
        %s2354 = sld [smem:[#allocation7 + $0x6b]]
        %v2355 = vstv %s2354
        %v2356 = vmul.f32 %v2341, %v2355
        %2358 = vrot.lane.b32.xlu0 %v2356, 112
        %v2359 = vpop.permute.xlu0 %2358
        %v2361 = vadd.f32 %v2353, %v2359
        %v2362 = vadd.f32 %v2237, %v2299
        %s2363 = sld [smem:[#allocation9 + $0x5]]
        %v2364 = vstv %s2363
        %v2365 = vadd.f32 %v2361, %v2364
        %v2366 = vadd.f32 %v2362, %v2365
        %v2367 = vtanh.pop %v2366
        %2369 = vrot.lane.b32.xlu0 %v2367, 8
        %v2370 = vpop.permute.xlu0 %2369
        %s2372 = scalar_lea.vmem [#allocation6], 32
        %2373 = vst.msk [vmem:[%s2372 + $0x1] sm:$0xff] %vm1419, %v2370
        %v2374 = vld [vmem:[#allocation6] sm:$0xff]
        %s2375 = sld [smem:[#allocation7 + $0x6c]]
        %v2376 = vstv %s2375
        %v2377 = vmul.f32 %v2374, %v2376
        %s2378 = sld [smem:[#allocation7 + $0x6d]]
        %v2379 = vstv %s2378
        %v2380 = vmul.f32 %v2374, %v2379
        %2382 = vrot.lane.b32.xlu0 %v2380, 120
        %v2383 = vpop.permute.xlu0 %2382
        %v2385 = vadd.f32 %v2377, %v2383
        %s2386 = sld [smem:[#allocation7 + $0x6e]]
        %v2387 = vstv %s2386
        %v2388 = vmul.f32 %v2374, %v2387
        %2390 = vrot.lane.b32.xlu0 %v2388, 112
        %v2391 = vpop.permute.xlu0 %2390
        %v2393 = vadd.f32 %v2385, %v2391
        %v2394 = vld [vmem:[%s2174] sm:$0xff]
        %s2395 = sld [smem:[#allocation7 + $0x75]]
        %v2396 = vstv %s2395
        %v2397 = vmul.f32 %v2394, %v2396
        %v2398 = vadd.f32 %v2393, %v2397
        %s2399 = sld [smem:[#allocation7 + $0x76]]
        %v2400 = vstv %s2399
        %v2401 = vmul.f32 %v2394, %v2400
        %2403 = vrot.lane.b32.xlu0 %v2401, 120
        %v2404 = vpop.permute.xlu0 %2403
        %v2406 = vadd.f32 %v2398, %v2404
        %s2407 = sld [smem:[#allocation7 + $0x77]]
        %v2408 = vstv %s2407
        %v2409 = vmul.f32 %v2394, %v2408
        %2411 = vrot.lane.b32.xlu0 %v2409, 112
        %v2412 = vpop.permute.xlu0 %2411
        %v2414 = vadd.f32 %v2406, %v2412
        %v2415 = vld [vmem:[%s2372] sm:$0xff]
        %s2416 = sld [smem:[#allocation7 + $0x7e]]
        %v2417 = vstv %s2416
        %v2418 = vmul.f32 %v2415, %v2417
        %v2419 = vadd.f32 %v2414, %v2418
        %s2420 = sld [smem:[#allocation7 + $0x7f]]
        %v2421 = vstv %s2420
        %v2422 = vmul.f32 %v2415, %v2421
        %2424 = vrot.lane.b32.xlu0 %v2422, 120
        %v2425 = vpop.permute.xlu0 %2424
        %v2427 = vadd.f32 %v2419, %v2425
        %s2428 = sld [smem:[#allocation7 + $0x80]]
        %v2429 = vstv %s2428
        %v2430 = vmul.f32 %v2415, %v2429
        %2432 = vrot.lane.b32.xlu0 %v2430, 112
        %v2433 = vpop.permute.xlu0 %2432
        %v2435 = vadd.f32 %v2427, %v2433
        %v2436 = vld [vmem:[#allocation6 + $0x1] sm:$0xff]
        %s2437 = sld [smem:[#allocation7 + $0x6f]]
        %v2438 = vstv %s2437
        %v2439 = vmul.f32 %v2436, %v2438
        %s2440 = sld [smem:[#allocation7 + $0x70]]
        %v2441 = vstv %s2440
        %v2442 = vmul.f32 %v2436, %v2441
        %2444 = vrot.lane.b32.xlu0 %v2442, 120
        %v2445 = vpop.permute.xlu0 %2444
        %v2447 = vadd.f32 %v2439, %v2445
        %s2448 = sld [smem:[#allocation7 + $0x71]]
        %v2449 = vstv %s2448
        %v2450 = vmul.f32 %v2436, %v2449
        %2452 = vrot.lane.b32.xlu0 %v2450, 112
        %v2453 = vpop.permute.xlu0 %2452
        %v2455 = vadd.f32 %v2447, %v2453
        %v2456 = vld [vmem:[%s2174 + $0x1] sm:$0xff]
        %s2457 = sld [smem:[#allocation7 + $0x78]]
        %v2458 = vstv %s2457
        %v2459 = vmul.f32 %v2456, %v2458
        %v2460 = vadd.f32 %v2455, %v2459
        %s2461 = sld [smem:[#allocation7 + $0x79]]
        %v2462 = vstv %s2461
        %v2463 = vmul.f32 %v2456, %v2462
        %2465 = vrot.lane.b32.xlu0 %v2463, 120
        %v2466 = vpop.permute.xlu0 %2465
        %v2468 = vadd.f32 %v2460, %v2466
        %s2469 = sld [smem:[#allocation7 + $0x7a]]
        %v2470 = vstv %s2469
        %v2471 = vmul.f32 %v2456, %v2470
        %2473 = vrot.lane.b32.xlu0 %v2471, 112
        %v2474 = vpop.permute.xlu0 %2473
        %v2476 = vadd.f32 %v2468, %v2474
        %v2477 = vld [vmem:[%s2372 + $0x1] sm:$0xff]
        %s2478 = sld [smem:[#allocation7 + $0x81]]
        %v2479 = vstv %s2478
        %v2480 = vmul.f32 %v2477, %v2479
        %v2481 = vadd.f32 %v2476, %v2480
        %s2482 = sld [smem:[#allocation7 + $0x82]]
        %v2483 = vstv %s2482
        %v2484 = vmul.f32 %v2477, %v2483
        %2486 = vrot.lane.b32.xlu0 %v2484, 120
        %v2487 = vpop.permute.xlu0 %2486
        %v2489 = vadd.f32 %v2481, %v2487
        %s2490 = sld [smem:[#allocation7 + $0x83]]
        %v2491 = vstv %s2490
        %v2492 = vmul.f32 %v2477, %v2491
        %2494 = vrot.lane.b32.xlu0 %v2492, 112
        %v2495 = vpop.permute.xlu0 %2494
        %v2497 = vadd.f32 %v2489, %v2495
        %v2498 = vld [vmem:[#allocation6 + $0x2] sm:$0xff]
        %s2499 = sld [smem:[#allocation7 + $0x72]]
        %v2500 = vstv %s2499
        %v2501 = vmul.f32 %v2498, %v2500
        %s2502 = sld [smem:[#allocation7 + $0x73]]
        %v2503 = vstv %s2502
        %v2504 = vmul.f32 %v2498, %v2503
        %2506 = vrot.lane.b32.xlu0 %v2504, 120
        %v2507 = vpop.permute.xlu0 %2506
        %v2509 = vadd.f32 %v2501, %v2507
        %s2510 = sld [smem:[#allocation7 + $0x74]]
        %v2511 = vstv %s2510
        %v2512 = vmul.f32 %v2498, %v2511
        %2514 = vrot.lane.b32.xlu0 %v2512, 112
        %v2515 = vpop.permute.xlu0 %2514
        %v2517 = vadd.f32 %v2509, %v2515
        %v2518 = vld [vmem:[%s2174 + $0x2] sm:$0xff]
        %s2519 = sld [smem:[#allocation7 + $0x7b]]
        %v2520 = vstv %s2519
        %v2521 = vmul.f32 %v2518, %v2520
        %v2522 = vadd.f32 %v2517, %v2521
        %s2523 = sld [smem:[#allocation7 + $0x7c]]
        %v2524 = vstv %s2523
        %v2525 = vmul.f32 %v2518, %v2524
        %2527 = vrot.lane.b32.xlu0 %v2525, 120
        %v2528 = vpop.permute.xlu0 %2527
        %v2530 = vadd.f32 %v2522, %v2528
        %s2531 = sld [smem:[#allocation7 + $0x7d]]
        %v2532 = vstv %s2531
        %v2533 = vmul.f32 %v2518, %v2532
        %2535 = vrot.lane.b32.xlu0 %v2533, 112
        %v2536 = vpop.permute.xlu0 %2535
        %v2538 = vadd.f32 %v2530, %v2536
        %v2539 = vld [vmem:[%s2372 + $0x2] sm:$0xff]
        %s2540 = sld [smem:[#allocation7 + $0x84]]
        %v2541 = vstv %s2540
        %v2542 = vmul.f32 %v2539, %v2541
        %v2543 = vadd.f32 %v2538, %v2542
        %s2544 = sld [smem:[#allocation7 + $0x85]]
        %v2545 = vstv %s2544
        %v2546 = vmul.f32 %v2539, %v2545
        %2548 = vrot.lane.b32.xlu0 %v2546, 120
        %v2549 = vpop.permute.xlu0 %2548
        %v2551 = vadd.f32 %v2543, %v2549
        %s2552 = sld [smem:[#allocation7 + $0x86]]
        %v2553 = vstv %s2552
        %v2554 = vmul.f32 %v2539, %v2553
        %2556 = vrot.lane.b32.xlu0 %v2554, 112
        %v2557 = vpop.permute.xlu0 %2556
        %v2559 = vadd.f32 %v2551, %v2557
        %v2560 = vadd.f32 %v2435, %v2497
        %s2561 = sld [smem:[#allocation9 + $0x6]]
        %v2562 = vstv %s2561
        %v2563 = vadd.f32 %v2559, %v2562
        %v2564 = vadd.f32 %v2560, %v2563
        %v2565 = vtanh.pop %v2564
        %2567 = vrot.lane.b32.xlu0 %v2565, 8
        %v2568 = vpop.permute.xlu0 %2567
        %2570 = vst.msk [vmem:[#allocation5 + $0x1] sm:$0xff] %vm1419, %v2568
        %v2571 = vld [vmem:[#allocation6] sm:$0xff]
        %s2572 = sld [smem:[#allocation7 + $0x87]]
        %v2573 = vstv %s2572
        %v2574 = vmul.f32 %v2571, %v2573
        %s2575 = sld [smem:[#allocation7 + $0x88]]
        %v2576 = vstv %s2575
        %v2577 = vmul.f32 %v2571, %v2576
        %2579 = vrot.lane.b32.xlu0 %v2577, 120
        %v2580 = vpop.permute.xlu0 %2579
        %v2582 = vadd.f32 %v2574, %v2580
        %s2583 = sld [smem:[#allocation7 + $0x89]]
        %v2584 = vstv %s2583
        %v2585 = vmul.f32 %v2571, %v2584
        %2587 = vrot.lane.b32.xlu0 %v2585, 112
        %v2588 = vpop.permute.xlu0 %2587
        %v2590 = vadd.f32 %v2582, %v2588
        %v2591 = vld [vmem:[%s2174] sm:$0xff]
        %s2592 = sld [smem:[#allocation7 + $0x90]]
        %v2593 = vstv %s2592
        %v2594 = vmul.f32 %v2591, %v2593
        %v2595 = vadd.f32 %v2590, %v2594
        %s2596 = sld [smem:[#allocation7 + $0x91]]
        %v2597 = vstv %s2596
        %v2598 = vmul.f32 %v2591, %v2597
        %2600 = vrot.lane.b32.xlu0 %v2598, 120
        %v2601 = vpop.permute.xlu0 %2600
        %v2603 = vadd.f32 %v2595, %v2601
        %s2604 = sld [smem:[#allocation7 + $0x92]]
        %v2605 = vstv %s2604
        %v2606 = vmul.f32 %v2591, %v2605
        %2608 = vrot.lane.b32.xlu0 %v2606, 112
        %v2609 = vpop.permute.xlu0 %2608
        %v2611 = vadd.f32 %v2603, %v2609
        %v2612 = vld [vmem:[%s2372] sm:$0xff]
        %s2613 = sld [smem:[#allocation7 + $0x99]]
        %v2614 = vstv %s2613
        %v2615 = vmul.f32 %v2612, %v2614
        %v2616 = vadd.f32 %v2611, %v2615
        %s2617 = sld [smem:[#allocation7 + $0x9a]]
        %v2618 = vstv %s2617
        %v2619 = vmul.f32 %v2612, %v2618
        %2621 = vrot.lane.b32.xlu0 %v2619, 120
        %v2622 = vpop.permute.xlu0 %2621
        %v2624 = vadd.f32 %v2616, %v2622
        %s2625 = sld [smem:[#allocation7 + $0x9b]]
        %v2626 = vstv %s2625
        %v2627 = vmul.f32 %v2612, %v2626
        %2629 = vrot.lane.b32.xlu0 %v2627, 112
        %v2630 = vpop.permute.xlu0 %2629
        %v2632 = vadd.f32 %v2624, %v2630
        %v2633 = vld [vmem:[#allocation6 + $0x1] sm:$0xff]
        %s2634 = sld [smem:[#allocation7 + $0x8a]]
        %v2635 = vstv %s2634
        %v2636 = vmul.f32 %v2633, %v2635
        %s2637 = sld [smem:[#allocation7 + $0x8b]]
        %v2638 = vstv %s2637
        %v2639 = vmul.f32 %v2633, %v2638
        %2641 = vrot.lane.b32.xlu0 %v2639, 120
        %v2642 = vpop.permute.xlu0 %2641
        %v2644 = vadd.f32 %v2636, %v2642
        %s2645 = sld [smem:[#allocation7 + $0x8c]]
        %v2646 = vstv %s2645
        %v2647 = vmul.f32 %v2633, %v2646
        %2649 = vrot.lane.b32.xlu0 %v2647, 112
        %v2650 = vpop.permute.xlu0 %2649
        %v2652 = vadd.f32 %v2644, %v2650
        %v2653 = vld [vmem:[%s2174 + $0x1] sm:$0xff]
        %s2654 = sld [smem:[#allocation7 + $0x93]]
        %v2655 = vstv %s2654
        %v2656 = vmul.f32 %v2653, %v2655
        %v2657 = vadd.f32 %v2652, %v2656
        %s2658 = sld [smem:[#allocation7 + $0x94]]
        %v2659 = vstv %s2658
        %v2660 = vmul.f32 %v2653, %v2659
        %2662 = vrot.lane.b32.xlu0 %v2660, 120
        %v2663 = vpop.permute.xlu0 %2662
        %v2665 = vadd.f32 %v2657, %v2663
        %s2666 = sld [smem:[#allocation7 + $0x95]]
        %v2667 = vstv %s2666
        %v2668 = vmul.f32 %v2653, %v2667
        %2670 = vrot.lane.b32.xlu0 %v2668, 112
        %v2671 = vpop.permute.xlu0 %2670
        %v2673 = vadd.f32 %v2665, %v2671
        %v2674 = vld [vmem:[%s2372 + $0x1] sm:$0xff]
        %s2675 = sld [smem:[#allocation7 + $0x9c]]
        %v2676 = vstv %s2675
        %v2677 = vmul.f32 %v2674, %v2676
        %v2678 = vadd.f32 %v2673, %v2677
        %s2679 = sld [smem:[#allocation7 + $0x9d]]
        %v2680 = vstv %s2679
        %v2681 = vmul.f32 %v2674, %v2680
        %2683 = vrot.lane.b32.xlu0 %v2681, 120
        %v2684 = vpop.permute.xlu0 %2683
        %v2686 = vadd.f32 %v2678, %v2684
        %s2687 = sld [smem:[#allocation7 + $0x9e]]
        %v2688 = vstv %s2687
        %v2689 = vmul.f32 %v2674, %v2688
        %2691 = vrot.lane.b32.xlu0 %v2689, 112
        %v2692 = vpop.permute.xlu0 %2691
        %v2694 = vadd.f32 %v2686, %v2692
        %v2695 = vld [vmem:[#allocation6 + $0x2] sm:$0xff]
        %s2696 = sld [smem:[#allocation7 + $0x8d]]
        %v2697 = vstv %s2696
        %v2698 = vmul.f32 %v2695, %v2697
        %s2699 = sld [smem:[#allocation7 + $0x8e]]
        %v2700 = vstv %s2699
        %v2701 = vmul.f32 %v2695, %v2700
        %2703 = vrot.lane.b32.xlu0 %v2701, 120
        %v2704 = vpop.permute.xlu0 %2703
        %v2706 = vadd.f32 %v2698, %v2704
        %s2707 = sld [smem:[#allocation7 + $0x8f]]
        %v2708 = vstv %s2707
        %v2709 = vmul.f32 %v2695, %v2708
        %2711 = vrot.lane.b32.xlu0 %v2709, 112
        %v2712 = vpop.permute.xlu0 %2711
        %v2714 = vadd.f32 %v2706, %v2712
        %v2715 = vld [vmem:[%s2174 + $0x2] sm:$0xff]
        %s2716 = sld [smem:[#allocation7 + $0x96]]
        %v2717 = vstv %s2716
        %v2718 = vmul.f32 %v2715, %v2717
        %v2719 = vadd.f32 %v2714, %v2718
        %s2720 = sld [smem:[#allocation7 + $0x97]]
        %v2721 = vstv %s2720
        %v2722 = vmul.f32 %v2715, %v2721
        %2724 = vrot.lane.b32.xlu0 %v2722, 120
        %v2725 = vpop.permute.xlu0 %2724
        %v2727 = vadd.f32 %v2719, %v2725
        %s2728 = sld [smem:[#allocation7 + $0x98]]
        %v2729 = vstv %s2728
        %v2730 = vmul.f32 %v2715, %v2729
        %2732 = vrot.lane.b32.xlu0 %v2730, 112
        %v2733 = vpop.permute.xlu0 %2732
        %v2735 = vadd.f32 %v2727, %v2733
        %v2736 = vld [vmem:[%s2372 + $0x2] sm:$0xff]
        %s2737 = sld [smem:[#allocation7 + $0x9f]]
        %v2738 = vstv %s2737
        %v2739 = vmul.f32 %v2736, %v2738
        %v2740 = vadd.f32 %v2735, %v2739
        %s2741 = sld [smem:[#allocation7 + $0xa0]]
        %v2742 = vstv %s2741
        %v2743 = vmul.f32 %v2736, %v2742
        %2745 = vrot.lane.b32.xlu0 %v2743, 120
        %v2746 = vpop.permute.xlu0 %2745
        %v2748 = vadd.f32 %v2740, %v2746
        %s2749 = sld [smem:[#allocation7 + $0xa1]]
        %v2750 = vstv %s2749
        %v2751 = vmul.f32 %v2736, %v2750
        %2753 = vrot.lane.b32.xlu0 %v2751, 112
        %v2754 = vpop.permute.xlu0 %2753
        %v2756 = vadd.f32 %v2748, %v2754
        %v2757 = vadd.f32 %v2632, %v2694
        %s2758 = sld [smem:[#allocation9 + $0x7]]
        %v2759 = vstv %s2758
        %v2760 = vadd.f32 %v2756, %v2759
        %v2761 = vadd.f32 %v2757, %v2760
        %v2762 = vtanh.pop %v2761
        %2764 = vrot.lane.b32.xlu0 %v2762, 8
        %v2765 = vpop.permute.xlu0 %2764
        %2767 = vst.msk [vmem:[%s1599 + $0x1] sm:$0xff] %vm1419, %v2765
        %v2768 = vld [vmem:[#allocation6] sm:$0xff]
        %s2769 = sld [smem:[#allocation7 + $0xa2]]
        %v2770 = vstv %s2769
        %v2771 = vmul.f32 %v2768, %v2770
        %s2772 = sld [smem:[#allocation7 + $0xa3]]
        %v2773 = vstv %s2772
        %v2774 = vmul.f32 %v2768, %v2773
        %2776 = vrot.lane.b32.xlu0 %v2774, 120
        %v2777 = vpop.permute.xlu0 %2776
        %v2779 = vadd.f32 %v2771, %v2777
        %s2780 = sld [smem:[#allocation7 + $0xa4]]
        %v2781 = vstv %s2780
        %v2782 = vmul.f32 %v2768, %v2781
        %2784 = vrot.lane.b32.xlu0 %v2782, 112
        %v2785 = vpop.permute.xlu0 %2784
        %v2787 = vadd.f32 %v2779, %v2785
        %v2788 = vld [vmem:[%s2174] sm:$0xff]
        %s2789 = sld [smem:[#allocation7 + $0xab]]
        %v2790 = vstv %s2789
        %v2791 = vmul.f32 %v2788, %v2790
        %v2792 = vadd.f32 %v2787, %v2791
        %s2793 = sld [smem:[#allocation7 + $0xac]]
        %v2794 = vstv %s2793
        %v2795 = vmul.f32 %v2788, %v2794
        %2797 = vrot.lane.b32.xlu0 %v2795, 120
        %v2798 = vpop.permute.xlu0 %2797
        %v2800 = vadd.f32 %v2792, %v2798
        %s2801 = sld [smem:[#allocation7 + $0xad]]
        %v2802 = vstv %s2801
        %v2803 = vmul.f32 %v2788, %v2802
        %2805 = vrot.lane.b32.xlu0 %v2803, 112
        %v2806 = vpop.permute.xlu0 %2805
        %v2808 = vadd.f32 %v2800, %v2806
        %v2809 = vld [vmem:[%s2372] sm:$0xff]
        %s2810 = sld [smem:[#allocation7 + $0xb4]]
        %v2811 = vstv %s2810
        %v2812 = vmul.f32 %v2809, %v2811
        %v2813 = vadd.f32 %v2808, %v2812
        %s2814 = sld [smem:[#allocation7 + $0xb5]]
        %v2815 = vstv %s2814
        %v2816 = vmul.f32 %v2809, %v2815
        %2818 = vrot.lane.b32.xlu0 %v2816, 120
        %v2819 = vpop.permute.xlu0 %2818
        %v2821 = vadd.f32 %v2813, %v2819
        %s2822 = sld [smem:[#allocation7 + $0xb6]]
        %v2823 = vstv %s2822
        %v2824 = vmul.f32 %v2809, %v2823
        %2826 = vrot.lane.b32.xlu0 %v2824, 112
        %v2827 = vpop.permute.xlu0 %2826
        %v2829 = vadd.f32 %v2821, %v2827
        %v2830 = vld [vmem:[#allocation6 + $0x1] sm:$0xff]
        %s2831 = sld [smem:[#allocation7 + $0xa5]]
        %v2832 = vstv %s2831
        %v2833 = vmul.f32 %v2830, %v2832
        %s2834 = sld [smem:[#allocation7 + $0xa6]]
        %v2835 = vstv %s2834
        %v2836 = vmul.f32 %v2830, %v2835
        %2838 = vrot.lane.b32.xlu0 %v2836, 120
        %v2839 = vpop.permute.xlu0 %2838
        %v2841 = vadd.f32 %v2833, %v2839
        %s2842 = sld [smem:[#allocation7 + $0xa7]]
        %v2843 = vstv %s2842
        %v2844 = vmul.f32 %v2830, %v2843
        %2846 = vrot.lane.b32.xlu0 %v2844, 112
        %v2847 = vpop.permute.xlu0 %2846
        %v2849 = vadd.f32 %v2841, %v2847
        %v2850 = vld [vmem:[%s2174 + $0x1] sm:$0xff]
        %s2851 = sld [smem:[#allocation7 + $0xae]]
        %v2852 = vstv %s2851
        %v2853 = vmul.f32 %v2850, %v2852
        %v2854 = vadd.f32 %v2849, %v2853
        %s2855 = sld [smem:[#allocation7 + $0xaf]]
        %v2856 = vstv %s2855
        %v2857 = vmul.f32 %v2850, %v2856
        %2859 = vrot.lane.b32.xlu0 %v2857, 120
        %v2860 = vpop.permute.xlu0 %2859
        %v2862 = vadd.f32 %v2854, %v2860
        %s2863 = sld [smem:[#allocation7 + $0xb0]]
        %v2864 = vstv %s2863
        %v2865 = vmul.f32 %v2850, %v2864
        %2867 = vrot.lane.b32.xlu0 %v2865, 112
        %v2868 = vpop.permute.xlu0 %2867
        %v2870 = vadd.f32 %v2862, %v2868
        %v2871 = vld [vmem:[%s2372 + $0x1] sm:$0xff]
        %s2872 = sld [smem:[#allocation7 + $0xb7]]
        %v2873 = vstv %s2872
        %v2874 = vmul.f32 %v2871, %v2873
        %v2875 = vadd.f32 %v2870, %v2874
        %s2876 = sld [smem:[#allocation7 + $0xb8]]
        %v2877 = vstv %s2876
        %v2878 = vmul.f32 %v2871, %v2877
        %2880 = vrot.lane.b32.xlu0 %v2878, 120
        %v2881 = vpop.permute.xlu0 %2880
        %v2883 = vadd.f32 %v2875, %v2881
        %s2884 = sld [smem:[#allocation7 + $0xb9]]
        %v2885 = vstv %s2884
        %v2886 = vmul.f32 %v2871, %v2885
        %2888 = vrot.lane.b32.xlu0 %v2886, 112
        %v2889 = vpop.permute.xlu0 %2888
        %v2891 = vadd.f32 %v2883, %v2889
        %v2892 = vld [vmem:[#allocation6 + $0x2] sm:$0xff]
        %s2893 = sld [smem:[#allocation7 + $0xa8]]
        %v2894 = vstv %s2893
        %v2895 = vmul.f32 %v2892, %v2894
        %s2896 = sld [smem:[#allocation7 + $0xa9]]
        %v2897 = vstv %s2896
        %v2898 = vmul.f32 %v2892, %v2897
        %2900 = vrot.lane.b32.xlu0 %v2898, 120
        %v2901 = vpop.permute.xlu0 %2900
        %v2903 = vadd.f32 %v2895, %v2901
        %s2904 = sld [smem:[#allocation7 + $0xaa]]
        %v2905 = vstv %s2904
        %v2906 = vmul.f32 %v2892, %v2905
        %2908 = vrot.lane.b32.xlu0 %v2906, 112
        %v2909 = vpop.permute.xlu0 %2908
        %v2911 = vadd.f32 %v2903, %v2909
        %v2912 = vld [vmem:[%s2174 + $0x2] sm:$0xff]
        %s2913 = sld [smem:[#allocation7 + $0xb1]]
        %v2914 = vstv %s2913
        %v2915 = vmul.f32 %v2912, %v2914
        %v2916 = vadd.f32 %v2911, %v2915
        %s2917 = sld [smem:[#allocation7 + $0xb2]]
        %v2918 = vstv %s2917
        %v2919 = vmul.f32 %v2912, %v2918
        %2921 = vrot.lane.b32.xlu0 %v2919, 120
        %v2922 = vpop.permute.xlu0 %2921
        %v2924 = vadd.f32 %v2916, %v2922
        %s2925 = sld [smem:[#allocation7 + $0xb3]]
        %v2926 = vstv %s2925
        %v2927 = vmul.f32 %v2912, %v2926
        %2929 = vrot.lane.b32.xlu0 %v2927, 112
        %v2930 = vpop.permute.xlu0 %2929
        %v2932 = vadd.f32 %v2924, %v2930
        %v2933 = vld [vmem:[%s2372 + $0x2] sm:$0xff]
        %s2934 = sld [smem:[#allocation7 + $0xba]]
        %v2935 = vstv %s2934
        %v2936 = vmul.f32 %v2933, %v2935
        %v2937 = vadd.f32 %v2932, %v2936
        %s2938 = sld [smem:[#allocation7 + $0xbb]]
        %v2939 = vstv %s2938
        %v2940 = vmul.f32 %v2933, %v2939
        %2942 = vrot.lane.b32.xlu0 %v2940, 120
        %v2943 = vpop.permute.xlu0 %2942
        %v2945 = vadd.f32 %v2937, %v2943
        %s2946 = sld [smem:[#allocation7 + $0xbc]]
        %v2947 = vstv %s2946
        %v2948 = vmul.f32 %v2933, %v2947
        %2950 = vrot.lane.b32.xlu0 %v2948, 112
        %v2951 = vpop.permute.xlu0 %2950
        %v2953 = vadd.f32 %v2945, %v2951
        %v2954 = vadd.f32 %v2829, %v2891
        %s2955 = sld [smem:[#allocation9 + $0x8]]
        %v2956 = vstv %s2955
        %v2957 = vadd.f32 %v2953, %v2956
        %v2958 = vadd.f32 %v2954, %v2957
        %v2959 = vtanh.pop %v2958
        %2961 = vrot.lane.b32.xlu0 %v2959, 8
        %v2962 = vpop.permute.xlu0 %2961
        %2964 = vst.msk [vmem:[%s1779 + $0x1] sm:$0xff] %vm1419, %v2962
        %v2965 = vld [vmem:[%s4] sm:$0xff]
        %v2966 = vld [vmem:[%s4 + $0x8] sm:$0xff]
        %v2967 = vld [vmem:[%s5] sm:$0xff]
        %v2968 = vld [vmem:[%s5 + $0x8] sm:$0xff]
        %v2969 = vld [vmem:[%s5 + $0x10] sm:$0xff]
        %v2970 = vld [vmem:[%s5 + $0x18] sm:$0xff]
        %v2971 = vld [vmem:[%s5 + $0x20] sm:$0xff]
        %v2972 = vld [vmem:[%s5 + $0x28] sm:$0xff]
        %v2973 = vld [vmem:[%s5 + $0x30] sm:$0xff]
        %v2974 = vld [vmem:[%s5 + $0x38] sm:$0xff]
        %v2975 = vld [vmem:[#allocation5 + $0x1] sm:$0xff]
        %2977 = vrot.lane.b32.xlu0 %v2975, 120
        %v2978 = vpop.permute.xlu0 %2977
        %v2981 = vsel %vm387, %v2965, 0
        %v2984 = vsel %vm387, %v2966, 0
        %2986 = vmatprep.subr.mxu0 0.0
        %2987 = vmatpush1.msra.mxu0 %v2978
        %2988 = vmatprep.subr.mxu0 0.0
        %2989 = vmatpush1.msra.mxu0 0.0
        %2990 = vmatprep.subr.mxu0 0.0
        %2991 = vmatpush1.msra.mxu0 0.0
        %2992 = vmatprep.subr.mxu0 0.0
        %2993 = vmatpush1.msra.mxu0 0.0
        %2994 = vmatprep.subr.mxu0 0.0
        %2995 = vmatpush1.msra.mxu0 0.0
        %2996 = vmatprep.subr.mxu0 0.0
        %2997 = vmatpush1.msra.mxu0 0.0
        %2998 = vmatprep.subr.mxu0 0.0
        %2999 = vmatpush1.msra.mxu0 0.0
        %3000 = vmatprep.subr.mxu0 0.0
        %3001 = vmatpush1.msra.mxu0 0.0
        %3002 = vmatprep.subr.mxu0 0.0
        %3003 = vmatpush1.msra.mxu0 0.0
        %3004 = vmatprep.subr.mxu0 0.0
        %3005 = vmatpush1.msra.mxu0 0.0
        %3006 = vmatprep.subr.mxu0 0.0
        %3007 = vmatpush1.msra.mxu0 0.0
        %3008 = vmatprep.subr.mxu0 0.0
        %3009 = vmatpush1.msra.mxu0 0.0
        %3010 = vmatprep.subr.mxu0 0.0
        %3011 = vmatpush1.msra.mxu0 0.0
        %3012 = vmatprep.subr.mxu0 0.0
        %3013 = vmatpush1.msra.mxu0 0.0
        %3014 = vmatprep.subr.mxu0 0.0
        %3015 = vmatpush1.msra.mxu0 0.0
        %3016 = vmatprep.subr.mxu0 0.0
        %3017 = vmatpush1.msra.mxu0 0.0
        %3018 = vmatprep.subr.mxu0 0.0
        %3019 = vmatpush1.msra.mxu0 0.0
        %3020 = vmatprep.subr.mxu0 0.0
        %3021 = vmatpush1.msra.mxu0 0.0
        %3022 = vmatprep.subr.mxu0 0.0
        %3023 = vmatpush1.msra.mxu0 0.0
        %3024 = vmatprep.subr.mxu0 0.0
        %3025 = vmatpush1.msra.mxu0 0.0
        %3026 = vmatprep.subr.mxu0 0.0
        %3027 = vmatpush1.msra.mxu0 0.0
        %3028 = vmatprep.subr.mxu0 0.0
        %3029 = vmatpush1.msra.mxu0 0.0
        %3030 = vmatprep.subr.mxu0 0.0
        %3031 = vmatpush1.msra.mxu0 0.0
        %3032 = vmatprep.subr.mxu0 0.0
        %3033 = vmatpush1.msra.mxu0 0.0
        %3034 = vmatprep.subr.mxu0 0.0
        %3035 = vmatpush1.msra.mxu0 0.0
        %3036 = vmatprep.subr.mxu0 0.0
        %3037 = vmatpush1.msra.mxu0 0.0
        %3038 = vmatprep.subr.mxu0 0.0
        %3039 = vmatpush1.msra.mxu0 0.0
        %3040 = vmatprep.subr.mxu0 0.0
        %3041 = vmatpush1.msra.mxu0 0.0
        %3042 = vmatprep.subr.mxu0 0.0
        %3043 = vmatpush1.msra.mxu0 0.0
        %3044 = vmatprep.subr.mxu0 0.0
        %3045 = vmatpush1.msra.mxu0 0.0
        %3046 = vmatprep.subr.mxu0 0.0
        %3047 = vmatpush1.msra.mxu0 0.0
        %3048 = vmatprep.subr.mxu0 0.0
        %3049 = vmatpush1.msra.mxu0 0.0
        %3050 = vmatprep.mubr.f32.mxu0 0.0
        %3051 = vmatmul.mubr.f32.gmra.mrb[0].mxu0 %v2981
        %v3052 = vpop.f32.mrb[0].mxu0
        %v3053 = vadd.f32 0.0, %v3052
        %v3054 = vpop.f32.mrb[0].mxu0
        %3055 = vmatprep.mubr.f32.mxu0 0.0
        %3056 = vmatmul.mubr.f32.gmra.mrb[0].mxu0 %v2984
        %v3057 = vpop.f32.mrb[0].mxu0
        %v3058 = vadd.f32 0.0, %v3057
        %v3059 = vpop.f32.mrb[0].mxu0
        %3060 = vdwg.mxu0
        %vm3061 = vcmask 523264
        %v3063 = vsel %vm3061, %v3053, 0
        %v3066 = vsel %vm3061, %v3058, 0
        %3068 = vmatprep.subr.mxu0 0.0
        %3069 = vmatpush1.msra.mxu0 %v2967
        %3070 = vmatprep.subr.mxu0 0.0
        %3071 = vmatpush1.msra.mxu0 %v2968
        %3072 = vmatprep.subr.mxu0 0.0
        %3073 = vmatpush1.msra.mxu0 %v2969
        %3074 = vmatprep.subr.mxu0 0.0
        %3075 = vmatpush1.msra.mxu0 %v2970
        %3076 = vmatprep.subr.mxu0 0.0
        %3077 = vmatpush1.msra.mxu0 %v2971
        %3078 = vmatprep.subr.mxu0 0.0
        %3079 = vmatpush1.msra.mxu0 %v2972
        %3080 = vmatprep.subr.mxu0 0.0
        %3081 = vmatpush1.msra.mxu0 %v2973
        %3082 = vmatprep.subr.mxu0 0.0
        %3083 = vmatpush1.msra.mxu0 %v2974
        %3084 = vmatprep.subr.mxu0 0.0
        %3085 = vmatpush1.msra.mxu0 0.0
        %3086 = vmatprep.subr.mxu0 0.0
        %3087 = vmatpush1.msra.mxu0 0.0
        %3088 = vmatprep.subr.mxu0 0.0
        %3089 = vmatpush1.msra.mxu0 0.0
        %3090 = vmatprep.subr.mxu0 0.0
        %3091 = vmatpush1.msra.mxu0 0.0
        %3092 = vmatprep.subr.mxu0 0.0
        %3093 = vmatpush1.msra.mxu0 0.0
        %3094 = vmatprep.subr.mxu0 0.0
        %3095 = vmatpush1.msra.mxu0 0.0
        %3096 = vmatprep.subr.mxu0 0.0
        %3097 = vmatpush1.msra.mxu0 0.0
        %3098 = vmatprep.subr.mxu0 0.0
        %3099 = vmatpush1.msra.mxu0 0.0
        %3100 = vmatprep.subr.mxu0 0.0
        %3101 = vmatpush1.msra.mxu0 0.0
        %3102 = vmatprep.subr.mxu0 0.0
        %3103 = vmatpush1.msra.mxu0 0.0
        %3104 = vmatprep.subr.mxu0 0.0
        %3105 = vmatpush1.msra.mxu0 0.0
        %3106 = vmatprep.subr.mxu0 0.0
        %3107 = vmatpush1.msra.mxu0 0.0
        %3108 = vmatprep.subr.mxu0 0.0
        %3109 = vmatpush1.msra.mxu0 0.0
        %3110 = vmatprep.subr.mxu0 0.0
        %3111 = vmatpush1.msra.mxu0 0.0
        %3112 = vmatprep.subr.mxu0 0.0
        %3113 = vmatpush1.msra.mxu0 0.0
        %3114 = vmatprep.subr.mxu0 0.0
        %3115 = vmatpush1.msra.mxu0 0.0
        %3116 = vmatprep.subr.mxu0 0.0
        %3117 = vmatpush1.msra.mxu0 0.0
        %3118 = vmatprep.subr.mxu0 0.0
        %3119 = vmatpush1.msra.mxu0 0.0
        %3120 = vmatprep.subr.mxu0 0.0
        %3121 = vmatpush1.msra.mxu0 0.0
        %3122 = vmatprep.subr.mxu0 0.0
        %3123 = vmatpush1.msra.mxu0 0.0
        %3124 = vmatprep.subr.mxu0 0.0
        %3125 = vmatpush1.msra.mxu0 0.0
        %3126 = vmatprep.subr.mxu0 0.0
        %3127 = vmatpush1.msra.mxu0 0.0
        %3128 = vmatprep.subr.mxu0 0.0
        %3129 = vmatpush1.msra.mxu0 0.0
        %3130 = vmatprep.subr.mxu0 0.0
        %3131 = vmatpush1.msra.mxu0 0.0
        %3132 = vmatprep.mubr.f32.mxu0 0.0
        %3133 = vmatmul.mubr.f32.gmra.mrb[0].mxu0 %v3063
        %v3134 = vpop.f32.mrb[0].mxu0
        %v3135 = vadd.f32 0.0, %v3134
        %v3136 = vpop.f32.mrb[0].mxu0
        %3137 = vmatprep.mubr.f32.mxu0 0.0
        %3138 = vmatmul.mubr.f32.gmra.mrb[0].mxu0 %v3066
        %v3139 = vpop.f32.mrb[0].mxu0
        %v3140 = vadd.f32 0.0, %v3139
        %v3141 = vpop.f32.mrb[0].mxu0
        %3142 = vdwg.mxu0
        %v3145 = vrot.slane %v3135, 7
        %v3146 = vrot.slane %v3140, 7
        %v3147 = vsel %vm368, %v3145, %v3146
        %3148 = vrot.lane.b32.xlu0 %v3145, 8
        %v3149 = vpop.permute.xlu0 %3148
        %3150 = vrot.lane.b32.xlu0 %v3147, 8
        %v3151 = vpop.permute.xlu0 %3150
        %3152 = vrot.lane.b32.xlu0 %v3146, 8
        %v3153 = vpop.permute.xlu0 %3152
        %3157 = vst.msk [vmem:[#allocation3] sm:$0xfe] %vm381, %v3149
        %3158 = vst.msk [vmem:[#allocation3 + $0x8] sm:$0xfe] %vm383, %v3149
        %3159 = vst.msk [vmem:[#allocation3 + $0x10] sm:$0xff] %vm385, %v3151
        %3160 = vst.msk [vmem:[#allocation3 + $0x18] sm:$0xff] %vm387, %v3151
        %3161 = vst.msk [vmem:[#allocation3 + $0x20] sm:$0x1] %vm389, %v3153
        %3162 = vst.msk [vmem:[#allocation3 + $0x28] sm:$0x1] %vm391, %v3153
        %v3163 = vld [vmem:[%s1599 + $0x1] sm:$0xff]
        %3165 = vrot.lane.b32.xlu0 %v3163, 120
        %v3166 = vpop.permute.xlu0 %3165
        %3168 = vmatprep.subr.mxu0 0.0
        %3169 = vmatpush1.msra.mxu0 %v3166
        %3170 = vmatprep.subr.mxu0 0.0
        %3171 = vmatpush1.msra.mxu0 0.0
        %3172 = vmatprep.subr.mxu0 0.0
        %3173 = vmatpush1.msra.mxu0 0.0
        %3174 = vmatprep.subr.mxu0 0.0
        %3175 = vmatpush1.msra.mxu0 0.0
        %3176 = vmatprep.subr.mxu0 0.0
        %3177 = vmatpush1.msra.mxu0 0.0
        %3178 = vmatprep.subr.mxu0 0.0
        %3179 = vmatpush1.msra.mxu0 0.0
        %3180 = vmatprep.subr.mxu0 0.0
        %3181 = vmatpush1.msra.mxu0 0.0
        %3182 = vmatprep.subr.mxu0 0.0
        %3183 = vmatpush1.msra.mxu0 0.0
        %3184 = vmatprep.subr.mxu0 0.0
        %3185 = vmatpush1.msra.mxu0 0.0
        %3186 = vmatprep.subr.mxu0 0.0
        %3187 = vmatpush1.msra.mxu0 0.0
        %3188 = vmatprep.subr.mxu0 0.0
        %3189 = vmatpush1.msra.mxu0 0.0
        %3190 = vmatprep.subr.mxu0 0.0
        %3191 = vmatpush1.msra.mxu0 0.0
        %3192 = vmatprep.subr.mxu0 0.0
        %3193 = vmatpush1.msra.mxu0 0.0
        %3194 = vmatprep.subr.mxu0 0.0
        %3195 = vmatpush1.msra.mxu0 0.0
        %3196 = vmatprep.subr.mxu0 0.0
        %3197 = vmatpush1.msra.mxu0 0.0
        %3198 = vmatprep.subr.mxu0 0.0
        %3199 = vmatpush1.msra.mxu0 0.0
        %3200 = vmatprep.subr.mxu0 0.0
        %3201 = vmatpush1.msra.mxu0 0.0
        %3202 = vmatprep.subr.mxu0 0.0
        %3203 = vmatpush1.msra.mxu0 0.0
        %3204 = vmatprep.subr.mxu0 0.0
        %3205 = vmatpush1.msra.mxu0 0.0
        %3206 = vmatprep.subr.mxu0 0.0
        %3207 = vmatpush1.msra.mxu0 0.0
        %3208 = vmatprep.subr.mxu0 0.0
        %3209 = vmatpush1.msra.mxu0 0.0
        %3210 = vmatprep.subr.mxu0 0.0
        %3211 = vmatpush1.msra.mxu0 0.0
        %3212 = vmatprep.subr.mxu0 0.0
        %3213 = vmatpush1.msra.mxu0 0.0
        %3214 = vmatprep.subr.mxu0 0.0
        %3215 = vmatpush1.msra.mxu0 0.0
        %3216 = vmatprep.subr.mxu0 0.0
        %3217 = vmatpush1.msra.mxu0 0.0
        %3218 = vmatprep.subr.mxu0 0.0
        %3219 = vmatpush1.msra.mxu0 0.0
        %3220 = vmatprep.subr.mxu0 0.0
        %3221 = vmatpush1.msra.mxu0 0.0
        %3222 = vmatprep.subr.mxu0 0.0
        %3223 = vmatpush1.msra.mxu0 0.0
        %3224 = vmatprep.subr.mxu0 0.0
        %3225 = vmatpush1.msra.mxu0 0.0
        %3226 = vmatprep.subr.mxu0 0.0
        %3227 = vmatpush1.msra.mxu0 0.0
        %3228 = vmatprep.subr.mxu0 0.0
        %3229 = vmatpush1.msra.mxu0 0.0
        %3230 = vmatprep.subr.mxu0 0.0
        %3231 = vmatpush1.msra.mxu0 0.0
        %3232 = vmatprep.mubr.f32.mxu0 0.0
        %3233 = vmatmul.mubr.f32.gmra.mrb[0].mxu0 %v2981
        %v3234 = vpop.f32.mrb[0].mxu0
        %v3235 = vadd.f32 0.0, %v3234
        %v3236 = vpop.f32.mrb[0].mxu0
        %3237 = vmatprep.mubr.f32.mxu0 0.0
        %3238 = vmatmul.mubr.f32.gmra.mrb[0].mxu0 %v2984
        %v3239 = vpop.f32.mrb[0].mxu0
        %v3240 = vadd.f32 0.0, %v3239
        %v3241 = vpop.f32.mrb[0].mxu0
        %3242 = vdwg.mxu0
        %v3244 = vsel %vm3061, %v3235, 0
        %v3247 = vsel %vm3061, %v3240, 0
        %3249 = vmatprep.subr.mxu0 0.0
        %3250 = vmatpush1.msra.mxu0 %v2967
        %3251 = vmatprep.subr.mxu0 0.0
        %3252 = vmatpush1.msra.mxu0 %v2968
        %3253 = vmatprep.subr.mxu0 0.0
        %3254 = vmatpush1.msra.mxu0 %v2969
        %3255 = vmatprep.subr.mxu0 0.0
        %3256 = vmatpush1.msra.mxu0 %v2970
        %3257 = vmatprep.subr.mxu0 0.0
        %3258 = vmatpush1.msra.mxu0 %v2971
        %3259 = vmatprep.subr.mxu0 0.0
        %3260 = vmatpush1.msra.mxu0 %v2972
        %3261 = vmatprep.subr.mxu0 0.0
        %3262 = vmatpush1.msra.mxu0 %v2973
        %3263 = vmatprep.subr.mxu0 0.0
        %3264 = vmatpush1.msra.mxu0 %v2974
        %3265 = vmatprep.subr.mxu0 0.0
        %3266 = vmatpush1.msra.mxu0 0.0
        %3267 = vmatprep.subr.mxu0 0.0
        %3268 = vmatpush1.msra.mxu0 0.0
        %3269 = vmatprep.subr.mxu0 0.0
        %3270 = vmatpush1.msra.mxu0 0.0
        %3271 = vmatprep.subr.mxu0 0.0
        %3272 = vmatpush1.msra.mxu0 0.0
        %3273 = vmatprep.subr.mxu0 0.0
        %3274 = vmatpush1.msra.mxu0 0.0
        %3275 = vmatprep.subr.mxu0 0.0
        %3276 = vmatpush1.msra.mxu0 0.0
        %3277 = vmatprep.subr.mxu0 0.0
        %3278 = vmatpush1.msra.mxu0 0.0
        %3279 = vmatprep.subr.mxu0 0.0
        %3280 = vmatpush1.msra.mxu0 0.0
        %3281 = vmatprep.subr.mxu0 0.0
        %3282 = vmatpush1.msra.mxu0 0.0
        %3283 = vmatprep.subr.mxu0 0.0
        %3284 = vmatpush1.msra.mxu0 0.0
        %3285 = vmatprep.subr.mxu0 0.0
        %3286 = vmatpush1.msra.mxu0 0.0
        %3287 = vmatprep.subr.mxu0 0.0
        %3288 = vmatpush1.msra.mxu0 0.0
        %3289 = vmatprep.subr.mxu0 0.0
        %3290 = vmatpush1.msra.mxu0 0.0
        %3291 = vmatprep.subr.mxu0 0.0
        %3292 = vmatpush1.msra.mxu0 0.0
        %3293 = vmatprep.subr.mxu0 0.0
        %3294 = vmatpush1.msra.mxu0 0.0
        %3295 = vmatprep.subr.mxu0 0.0
        %3296 = vmatpush1.msra.mxu0 0.0
        %3297 = vmatprep.subr.mxu0 0.0
        %3298 = vmatpush1.msra.mxu0 0.0
        %3299 = vmatprep.subr.mxu0 0.0
        %3300 = vmatpush1.msra.mxu0 0.0
        %3301 = vmatprep.subr.mxu0 0.0
        %3302 = vmatpush1.msra.mxu0 0.0
        %3303 = vmatprep.subr.mxu0 0.0
        %3304 = vmatpush1.msra.mxu0 0.0
        %3305 = vmatprep.subr.mxu0 0.0
        %3306 = vmatpush1.msra.mxu0 0.0
        %3307 = vmatprep.subr.mxu0 0.0
        %3308 = vmatpush1.msra.mxu0 0.0
        %3309 = vmatprep.subr.mxu0 0.0
        %3310 = vmatpush1.msra.mxu0 0.0
        %3311 = vmatprep.subr.mxu0 0.0
        %3312 = vmatpush1.msra.mxu0 0.0
        %3313 = vmatprep.mubr.f32.mxu0 0.0
        %3314 = vmatmul.mubr.f32.gmra.mrb[0].mxu0 %v3244
        %v3315 = vpop.f32.mrb[0].mxu0
        %v3316 = vadd.f32 0.0, %v3315
        %v3317 = vpop.f32.mrb[0].mxu0
        %3318 = vmatprep.mubr.f32.mxu0 0.0
        %3319 = vmatmul.mubr.f32.gmra.mrb[0].mxu0 %v3247
        %v3320 = vpop.f32.mrb[0].mxu0
        %v3321 = vadd.f32 0.0, %v3320
        %v3322 = vpop.f32.mrb[0].mxu0
        %3323 = vdwg.mxu0
        %v3326 = vrot.slane %v3316, 7
        %v3327 = vrot.slane %v3321, 7
        %v3328 = vsel %vm368, %v3326, %v3327
        %3329 = vrot.lane.b32.xlu0 %v3326, 8
        %v3330 = vpop.permute.xlu0 %3329
        %3331 = vrot.lane.b32.xlu0 %v3328, 8
        %v3332 = vpop.permute.xlu0 %3331
        %3333 = vrot.lane.b32.xlu0 %v3327, 8
        %v3334 = vpop.permute.xlu0 %3333
        %3338 = vst.msk [vmem:[%s939] sm:$0xfe] %vm381, %v3330
        %3339 = vst.msk [vmem:[%s939 + $0x8] sm:$0xfe] %vm383, %v3330
        %3340 = vst.msk [vmem:[%s939 + $0x10] sm:$0xff] %vm385, %v3332
        %3341 = vst.msk [vmem:[%s939 + $0x18] sm:$0xff] %vm387, %v3332
        %3342 = vst.msk [vmem:[%s939 + $0x20] sm:$0x1] %vm389, %v3334
        %3343 = vst.msk [vmem:[%s939 + $0x28] sm:$0x1] %vm391, %v3334
        %v3344 = vld [vmem:[%s1779 + $0x1] sm:$0xff]
        %3346 = vrot.lane.b32.xlu0 %v3344, 120
        %v3347 = vpop.permute.xlu0 %3346
        %3349 = vmatprep.subr.mxu0 0.0
        %3350 = vmatpush1.msra.mxu0 %v3347
        %3351 = vmatprep.subr.mxu0 0.0
        %3352 = vmatpush1.msra.mxu0 0.0
        %3353 = vmatprep.subr.mxu0 0.0
        %3354 = vmatpush1.msra.mxu0 0.0
        %3355 = vmatprep.subr.mxu0 0.0
        %3356 = vmatpush1.msra.mxu0 0.0
        %3357 = vmatprep.subr.mxu0 0.0
        %3358 = vmatpush1.msra.mxu0 0.0
        %3359 = vmatprep.subr.mxu0 0.0
        %3360 = vmatpush1.msra.mxu0 0.0
        %3361 = vmatprep.subr.mxu0 0.0
        %3362 = vmatpush1.msra.mxu0 0.0
        %3363 = vmatprep.subr.mxu0 0.0
        %3364 = vmatpush1.msra.mxu0 0.0
        %3365 = vmatprep.subr.mxu0 0.0
        %3366 = vmatpush1.msra.mxu0 0.0
        %3367 = vmatprep.subr.mxu0 0.0
        %3368 = vmatpush1.msra.mxu0 0.0
        %3369 = vmatprep.subr.mxu0 0.0
        %3370 = vmatpush1.msra.mxu0 0.0
        %3371 = vmatprep.subr.mxu0 0.0
        %3372 = vmatpush1.msra.mxu0 0.0
        %3373 = vmatprep.subr.mxu0 0.0
        %3374 = vmatpush1.msra.mxu0 0.0
        %3375 = vmatprep.subr.mxu0 0.0
        %3376 = vmatpush1.msra.mxu0 0.0
        %3377 = vmatprep.subr.mxu0 0.0
        %3378 = vmatpush1.msra.mxu0 0.0
        %3379 = vmatprep.subr.mxu0 0.0
        %3380 = vmatpush1.msra.mxu0 0.0
        %3381 = vmatprep.subr.mxu0 0.0
        %3382 = vmatpush1.msra.mxu0 0.0
        %3383 = vmatprep.subr.mxu0 0.0
        %3384 = vmatpush1.msra.mxu0 0.0
        %3385 = vmatprep.subr.mxu0 0.0
        %3386 = vmatpush1.msra.mxu0 0.0
        %3387 = vmatprep.subr.mxu0 0.0
        %3388 = vmatpush1.msra.mxu0 0.0
        %3389 = vmatprep.subr.mxu0 0.0
        %3390 = vmatpush1.msra.mxu0 0.0
        %3391 = vmatprep.subr.mxu0 0.0
        %3392 = vmatpush1.msra.mxu0 0.0
        %3393 = vmatprep.subr.mxu0 0.0
        %3394 = vmatpush1.msra.mxu0 0.0
        %3395 = vmatprep.subr.mxu0 0.0
        %3396 = vmatpush1.msra.mxu0 0.0
        %3397 = vmatprep.subr.mxu0 0.0
        %3398 = vmatpush1.msra.mxu0 0.0
        %3399 = vmatprep.subr.mxu0 0.0
        %3400 = vmatpush1.msra.mxu0 0.0
        %3401 = vmatprep.subr.mxu0 0.0
        %3402 = vmatpush1.msra.mxu0 0.0
        %3403 = vmatprep.subr.mxu0 0.0
        %3404 = vmatpush1.msra.mxu0 0.0
        %3405 = vmatprep.subr.mxu0 0.0
        %3406 = vmatpush1.msra.mxu0 0.0
        %3407 = vmatprep.subr.mxu0 0.0
        %3408 = vmatpush1.msra.mxu0 0.0
        %3409 = vmatprep.subr.mxu0 0.0
        %3410 = vmatpush1.msra.mxu0 0.0
        %3411 = vmatprep.subr.mxu0 0.0
        %3412 = vmatpush1.msra.mxu0 0.0
        %3413 = vmatprep.mubr.f32.mxu0 0.0
        %3414 = vmatmul.mubr.f32.gmra.mrb[0].mxu0 %v2981
        %v3415 = vpop.f32.mrb[0].mxu0
        %v3416 = vadd.f32 0.0, %v3415
        %v3417 = vpop.f32.mrb[0].mxu0
        %3418 = vmatprep.mubr.f32.mxu0 0.0
        %3419 = vmatmul.mubr.f32.gmra.mrb[0].mxu0 %v2984
        %v3420 = vpop.f32.mrb[0].mxu0
        %v3421 = vadd.f32 0.0, %v3420
        %v3422 = vpop.f32.mrb[0].mxu0
        %3423 = vdwg.mxu0
        %v3425 = vsel %vm3061, %v3416, 0
        %v3428 = vsel %vm3061, %v3421, 0
        %3430 = vmatprep.subr.mxu0 0.0
        %3431 = vmatpush1.msra.mxu0 %v2967
        %3432 = vmatprep.subr.mxu0 0.0
        %3433 = vmatpush1.msra.mxu0 %v2968
        %3434 = vmatprep.subr.mxu0 0.0
        %3435 = vmatpush1.msra.mxu0 %v2969
        %3436 = vmatprep.subr.mxu0 0.0
        %3437 = vmatpush1.msra.mxu0 %v2970
        %3438 = vmatprep.subr.mxu0 0.0
        %3439 = vmatpush1.msra.mxu0 %v2971
        %3440 = vmatprep.subr.mxu0 0.0
        %3441 = vmatpush1.msra.mxu0 %v2972
        %3442 = vmatprep.subr.mxu0 0.0
        %3443 = vmatpush1.msra.mxu0 %v2973
        %3444 = vmatprep.subr.mxu0 0.0
        %3445 = vmatpush1.msra.mxu0 %v2974
        %3446 = vmatprep.subr.mxu0 0.0
        %3447 = vmatpush1.msra.mxu0 0.0
        %3448 = vmatprep.subr.mxu0 0.0
        %3449 = vmatpush1.msra.mxu0 0.0
        %3450 = vmatprep.subr.mxu0 0.0
        %3451 = vmatpush1.msra.mxu0 0.0
        %3452 = vmatprep.subr.mxu0 0.0
        %3453 = vmatpush1.msra.mxu0 0.0
        %3454 = vmatprep.subr.mxu0 0.0
        %3455 = vmatpush1.msra.mxu0 0.0
        %3456 = vmatprep.subr.mxu0 0.0
        %3457 = vmatpush1.msra.mxu0 0.0
        %3458 = vmatprep.subr.mxu0 0.0
        %3459 = vmatpush1.msra.mxu0 0.0
        %3460 = vmatprep.subr.mxu0 0.0
        %3461 = vmatpush1.msra.mxu0 0.0
        %3462 = vmatprep.subr.mxu0 0.0
        %3463 = vmatpush1.msra.mxu0 0.0
        %3464 = vmatprep.subr.mxu0 0.0
        %3465 = vmatpush1.msra.mxu0 0.0
        %3466 = vmatprep.subr.mxu0 0.0
        %3467 = vmatpush1.msra.mxu0 0.0
        %3468 = vmatprep.subr.mxu0 0.0
        %3469 = vmatpush1.msra.mxu0 0.0
        %3470 = vmatprep.subr.mxu0 0.0
        %3471 = vmatpush1.msra.mxu0 0.0
        %3472 = vmatprep.subr.mxu0 0.0
        %3473 = vmatpush1.msra.mxu0 0.0
        %3474 = vmatprep.subr.mxu0 0.0
        %3475 = vmatpush1.msra.mxu0 0.0
        %3476 = vmatprep.subr.mxu0 0.0
        %3477 = vmatpush1.msra.mxu0 0.0
        %3478 = vmatprep.subr.mxu0 0.0
        %3479 = vmatpush1.msra.mxu0 0.0
        %3480 = vmatprep.subr.mxu0 0.0
        %3481 = vmatpush1.msra.mxu0 0.0
        %3482 = vmatprep.subr.mxu0 0.0
        %3483 = vmatpush1.msra.mxu0 0.0
        %3484 = vmatprep.subr.mxu0 0.0
        %3485 = vmatpush1.msra.mxu0 0.0
        %3486 = vmatprep.subr.mxu0 0.0
        %3487 = vmatpush1.msra.mxu0 0.0
        %3488 = vmatprep.subr.mxu0 0.0
        %3489 = vmatpush1.msra.mxu0 0.0
        %3490 = vmatprep.subr.mxu0 0.0
        %3491 = vmatpush1.msra.mxu0 0.0
        %3492 = vmatprep.subr.mxu0 0.0
        %3493 = vmatpush1.msra.mxu0 0.0
        %3494 = vmatprep.mubr.f32.mxu0 0.0
        %3495 = vmatmul.mubr.f32.gmra.mrb[0].mxu0 %v3425
        %v3496 = vpop.f32.mrb[0].mxu0
        %v3497 = vadd.f32 0.0, %v3496
        %v3498 = vpop.f32.mrb[0].mxu0
        %3499 = vmatprep.mubr.f32.mxu0 0.0
        %3500 = vmatmul.mubr.f32.gmra.mrb[0].mxu0 %v3428
        %v3501 = vpop.f32.mrb[0].mxu0
        %v3502 = vadd.f32 0.0, %v3501
        %v3503 = vpop.f32.mrb[0].mxu0
        %3504 = vdwg.mxu0
        %v3507 = vrot.slane %v3497, 7
        %v3508 = vrot.slane %v3502, 7
        %v3509 = vsel %vm368, %v3507, %v3508
        %3510 = vrot.lane.b32.xlu0 %v3507, 8
        %v3511 = vpop.permute.xlu0 %3510
        %3512 = vrot.lane.b32.xlu0 %v3509, 8
        %v3513 = vpop.permute.xlu0 %3512
        %3514 = vrot.lane.b32.xlu0 %v3508, 8
        %v3515 = vpop.permute.xlu0 %3514
        %3519 = vst.msk [vmem:[%s1214] sm:$0xfe] %vm381, %v3511
        %3520 = vst.msk [vmem:[%s1214 + $0x8] sm:$0xfe] %vm383, %v3511
        %3521 = vst.msk [vmem:[%s1214 + $0x10] sm:$0xff] %vm385, %v3513
        %3522 = vst.msk [vmem:[%s1214 + $0x18] sm:$0xff] %vm387, %v3513
        %3523 = vst.msk [vmem:[%s1214 + $0x20] sm:$0x1] %vm389, %v3515
        %3524 = vst.msk [vmem:[%s1214 + $0x28] sm:$0x1] %vm391, %v3515
        %v3525 = vld [vmem:[#allocation3] sm:$0xff]
        %v3526 = vld [vmem:[#allocation3 + $0x10] sm:$0xff]
        %s3527 = sld [smem:[#allocation7 + $0xbd]]
        %v3528 = vstv %s3527
        %v3529 = vmul.f32 %v3525, %v3528
        %v3530 = vmul.f32 %v3526, %v3528
        %v3531 = vld [vmem:[#allocation3] sm:$0xff]
        %v3532 = vld [vmem:[#allocation3 + $0x8] sm:$0xff]
        %v3533 = vld [vmem:[#allocation3 + $0x10] sm:$0xff]
        %v3534 = vld [vmem:[#allocation3 + $0x18] sm:$0xff]
        %s3535 = sld [smem:[#allocation7 + $0xbe]]
        %v3536 = vstv %s3535
        %v3537 = vmul.f32 %v3531, %v3536
        %v3538 = vmul.f32 %v3532, %v3536
        %v3539 = vmul.f32 %v3533, %v3536
        %v3540 = vmul.f32 %v3534, %v3536
        %3545 = vrot.lane.b32.xlu0 %v3537, 120
        %v3546 = vpop.permute.xlu0 %3545
        %3547 = vrot.lane.b32.xlu0 %v3538, 120
        %v3548 = vpop.permute.xlu0 %3547
        %3549 = vrot.lane.b32.xlu0 %v3539, 120
        %v3550 = vpop.permute.xlu0 %3549
        %3551 = vrot.lane.b32.xlu0 %v3540, 120
        %v3552 = vpop.permute.xlu0 %3551
        %v3553 = vsel %vm421, %v3546, %v3548
        %v3554 = vsel %vm421, %v3550, %v3552
        %v3557 = vadd.f32 %v3529, %v3553
        %v3558 = vadd.f32 %v3530, %v3554
        %s3559 = sld [smem:[#allocation7 + $0xbf]]
        %v3560 = vstv %s3559
        %v3561 = vmul.f32 %v3531, %v3560
        %v3562 = vmul.f32 %v3532, %v3560
        %v3563 = vmul.f32 %v3533, %v3560
        %v3564 = vmul.f32 %v3534, %v3560
        %3569 = vrot.lane.b32.xlu0 %v3561, 112
        %v3570 = vpop.permute.xlu0 %3569
        %3571 = vrot.lane.b32.xlu0 %v3562, 112
        %v3572 = vpop.permute.xlu0 %3571
        %3573 = vrot.lane.b32.xlu0 %v3563, 112
        %v3574 = vpop.permute.xlu0 %3573
        %3575 = vrot.lane.b32.xlu0 %v3564, 112
        %v3576 = vpop.permute.xlu0 %3575
        %v3577 = vsel %vm446, %v3570, %v3572
        %v3578 = vsel %vm446, %v3574, %v3576
        %v3581 = vadd.f32 %v3557, %v3577
        %v3582 = vadd.f32 %v3558, %v3578
        %v3583 = vld [vmem:[%s939] sm:$0xff]
        %v3584 = vld [vmem:[%s939 + $0x10] sm:$0xff]
        %s3585 = sld [smem:[#allocation7 + $0xc6]]
        %v3586 = vstv %s3585
        %v3587 = vmul.f32 %v3583, %v3586
        %v3588 = vmul.f32 %v3584, %v3586
        %v3589 = vadd.f32 %v3581, %v3587
        %v3590 = vadd.f32 %v3582, %v3588
        %v3591 = vld [vmem:[%s939] sm:$0xff]
        %v3592 = vld [vmem:[%s939 + $0x8] sm:$0xff]
        %v3593 = vld [vmem:[%s939 + $0x10] sm:$0xff]
        %v3594 = vld [vmem:[%s939 + $0x18] sm:$0xff]
        %s3595 = sld [smem:[#allocation7 + $0xc7]]
        %v3596 = vstv %s3595
        %v3597 = vmul.f32 %v3591, %v3596
        %v3598 = vmul.f32 %v3592, %v3596
        %v3599 = vmul.f32 %v3593, %v3596
        %v3600 = vmul.f32 %v3594, %v3596
        %3605 = vrot.lane.b32.xlu0 %v3597, 120
        %v3606 = vpop.permute.xlu0 %3605
        %3607 = vrot.lane.b32.xlu0 %v3598, 120
        %v3608 = vpop.permute.xlu0 %3607
        %3609 = vrot.lane.b32.xlu0 %v3599, 120
        %v3610 = vpop.permute.xlu0 %3609
        %3611 = vrot.lane.b32.xlu0 %v3600, 120
        %v3612 = vpop.permute.xlu0 %3611
        %v3613 = vsel %vm421, %v3606, %v3608
        %v3614 = vsel %vm421, %v3610, %v3612
        %v3617 = vadd.f32 %v3589, %v3613
        %v3618 = vadd.f32 %v3590, %v3614
        %s3619 = sld [smem:[#allocation7 + $0xc8]]
        %v3620 = vstv %s3619
        %v3621 = vmul.f32 %v3591, %v3620
        %v3622 = vmul.f32 %v3592, %v3620
        %v3623 = vmul.f32 %v3593, %v3620
        %v3624 = vmul.f32 %v3594, %v3620
        %3629 = vrot.lane.b32.xlu0 %v3621, 112
        %v3630 = vpop.permute.xlu0 %3629
        %3631 = vrot.lane.b32.xlu0 %v3622, 112
        %v3632 = vpop.permute.xlu0 %3631
        %3633 = vrot.lane.b32.xlu0 %v3623, 112
        %v3634 = vpop.permute.xlu0 %3633
        %3635 = vrot.lane.b32.xlu0 %v3624, 112
        %v3636 = vpop.permute.xlu0 %3635
        %v3637 = vsel %vm446, %v3630, %v3632
        %v3638 = vsel %vm446, %v3634, %v3636
        %v3641 = vadd.f32 %v3617, %v3637
        %v3642 = vadd.f32 %v3618, %v3638
        %v3643 = vld [vmem:[%s1214] sm:$0xff]
        %v3644 = vld [vmem:[%s1214 + $0x10] sm:$0xff]
        %s3645 = sld [smem:[#allocation7 + $0xcf]]
        %v3646 = vstv %s3645
        %v3647 = vmul.f32 %v3643, %v3646
        %v3648 = vmul.f32 %v3644, %v3646
        %v3649 = vadd.f32 %v3641, %v3647
        %v3650 = vadd.f32 %v3642, %v3648
        %v3651 = vld [vmem:[%s1214] sm:$0xff]
        %v3652 = vld [vmem:[%s1214 + $0x8] sm:$0xff]
        %v3653 = vld [vmem:[%s1214 + $0x10] sm:$0xff]
        %v3654 = vld [vmem:[%s1214 + $0x18] sm:$0xff]
        %s3655 = sld [smem:[#allocation7 + $0xd0]]
        %v3656 = vstv %s3655
        %v3657 = vmul.f32 %v3651, %v3656
        %v3658 = vmul.f32 %v3652, %v3656
        %v3659 = vmul.f32 %v3653, %v3656
        %v3660 = vmul.f32 %v3654, %v3656
        %3665 = vrot.lane.b32.xlu0 %v3657, 120
        %v3666 = vpop.permute.xlu0 %3665
        %3667 = vrot.lane.b32.xlu0 %v3658, 120
        %v3668 = vpop.permute.xlu0 %3667
        %3669 = vrot.lane.b32.xlu0 %v3659, 120
        %v3670 = vpop.permute.xlu0 %3669
        %3671 = vrot.lane.b32.xlu0 %v3660, 120
        %v3672 = vpop.permute.xlu0 %3671
        %v3673 = vsel %vm421, %v3666, %v3668
        %v3674 = vsel %vm421, %v3670, %v3672
        %v3677 = vadd.f32 %v3649, %v3673
        %v3678 = vadd.f32 %v3650, %v3674
        %s3679 = sld [smem:[#allocation7 + $0xd1]]
        %v3680 = vstv %s3679
        %v3681 = vmul.f32 %v3651, %v3680
        %v3682 = vmul.f32 %v3652, %v3680
        %v3683 = vmul.f32 %v3653, %v3680
        %v3684 = vmul.f32 %v3654, %v3680
        %3689 = vrot.lane.b32.xlu0 %v3681, 112
        %v3690 = vpop.permute.xlu0 %3689
        %3691 = vrot.lane.b32.xlu0 %v3682, 112
        %v3692 = vpop.permute.xlu0 %3691
        %3693 = vrot.lane.b32.xlu0 %v3683, 112
        %v3694 = vpop.permute.xlu0 %3693
        %3695 = vrot.lane.b32.xlu0 %v3684, 112
        %v3696 = vpop.permute.xlu0 %3695
        %v3697 = vsel %vm446, %v3690, %v3692
        %v3698 = vsel %vm446, %v3694, %v3696
        %v3701 = vadd.f32 %v3677, %v3697
        %v3702 = vadd.f32 %v3678, %v3698
        %v3703 = vld [vmem:[#allocation3] sm:$0xfe]
        %v3704 = vld [vmem:[#allocation3 + $0x10] sm:$0xff]
        %v3705 = vld [vmem:[#allocation3 + $0x20] sm:$0x1]
        %s3706 = sld [smem:[#allocation7 + $0xc0]]
        %v3707 = vstv %s3706
        %v3708 = vmul.f32 %v3703, %v3707
        %v3709 = vmul.f32 %v3704, %v3707
        %v3710 = vmul.f32 %v3705, %v3707
        %v3711 = vld [vmem:[#allocation3] sm:$0xfe]
        %v3712 = vld [vmem:[#allocation3 + $0x8] sm:$0xfe]
        %v3713 = vld [vmem:[#allocation3 + $0x10] sm:$0xff]
        %v3714 = vld [vmem:[#allocation3 + $0x18] sm:$0xff]
        %v3715 = vld [vmem:[#allocation3 + $0x20] sm:$0x1]
        %v3716 = vld [vmem:[#allocation3 + $0x28] sm:$0x1]
        %s3717 = sld [smem:[#allocation7 + $0xc1]]
        %v3718 = vstv %s3717
        %v3719 = vmul.f32 %v3711, %v3718
        %v3720 = vmul.f32 %v3712, %v3718
        %v3721 = vmul.f32 %v3713, %v3718
        %v3722 = vmul.f32 %v3714, %v3718
        %v3723 = vmul.f32 %v3715, %v3718
        %v3724 = vmul.f32 %v3716, %v3718
        %3731 = vrot.lane.b32.xlu0 %v3719, 120
        %v3732 = vpop.permute.xlu0 %3731
        %3733 = vrot.lane.b32.xlu0 %v3720, 120
        %v3734 = vpop.permute.xlu0 %3733
        %3735 = vrot.lane.b32.xlu0 %v3721, 120
        %v3736 = vpop.permute.xlu0 %3735
        %3737 = vrot.lane.b32.xlu0 %v3722, 120
        %v3738 = vpop.permute.xlu0 %3737
        %3739 = vrot.lane.b32.xlu0 %v3723, 120
        %v3740 = vpop.permute.xlu0 %3739
        %3741 = vrot.lane.b32.xlu0 %v3724, 120
        %v3742 = vpop.permute.xlu0 %3741
        %v3743 = vsel %vm421, %v3732, %v3734
        %v3744 = vsel %vm421, %v3736, %v3738
        %v3745 = vsel %vm421, %v3740, %v3742
        %v3749 = vadd.f32 %v3708, %v3743
        %v3750 = vadd.f32 %v3709, %v3744
        %v3751 = vadd.f32 %v3710, %v3745
        %s3752 = sld [smem:[#allocation7 + $0xc2]]
        %v3753 = vstv %s3752
        %v3754 = vmul.f32 %v3711, %v3753
        %v3755 = vmul.f32 %v3712, %v3753
        %v3756 = vmul.f32 %v3713, %v3753
        %v3757 = vmul.f32 %v3714, %v3753
        %v3758 = vmul.f32 %v3715, %v3753
        %v3759 = vmul.f32 %v3716, %v3753
        %3766 = vrot.lane.b32.xlu0 %v3754, 112
        %v3767 = vpop.permute.xlu0 %3766
        %3768 = vrot.lane.b32.xlu0 %v3755, 112
        %v3769 = vpop.permute.xlu0 %3768
        %3770 = vrot.lane.b32.xlu0 %v3756, 112
        %v3771 = vpop.permute.xlu0 %3770
        %3772 = vrot.lane.b32.xlu0 %v3757, 112
        %v3773 = vpop.permute.xlu0 %3772
        %3774 = vrot.lane.b32.xlu0 %v3758, 112
        %v3775 = vpop.permute.xlu0 %3774
        %3776 = vrot.lane.b32.xlu0 %v3759, 112
        %v3777 = vpop.permute.xlu0 %3776
        %v3778 = vsel %vm446, %v3767, %v3769
        %v3779 = vsel %vm446, %v3771, %v3773
        %v3780 = vsel %vm446, %v3775, %v3777
        %v3784 = vadd.f32 %v3749, %v3778
        %v3785 = vadd.f32 %v3750, %v3779
        %v3786 = vadd.f32 %v3751, %v3780
        %v3787 = vld [vmem:[%s939] sm:$0xfe]
        %v3788 = vld [vmem:[%s939 + $0x10] sm:$0xff]
        %v3789 = vld [vmem:[%s939 + $0x20] sm:$0x1]
        %s3790 = sld [smem:[#allocation7 + $0xc9]]
        %v3791 = vstv %s3790
        %v3792 = vmul.f32 %v3787, %v3791
        %v3793 = vmul.f32 %v3788, %v3791
        %v3794 = vmul.f32 %v3789, %v3791
        %v3795 = vadd.f32 %v3784, %v3792
        %v3796 = vadd.f32 %v3785, %v3793
        %v3797 = vadd.f32 %v3786, %v3794
        %v3798 = vld [vmem:[%s939] sm:$0xfe]
        %v3799 = vld [vmem:[%s939 + $0x8] sm:$0xfe]
        %v3800 = vld [vmem:[%s939 + $0x10] sm:$0xff]
        %v3801 = vld [vmem:[%s939 + $0x18] sm:$0xff]
        %v3802 = vld [vmem:[%s939 + $0x20] sm:$0x1]
        %v3803 = vld [vmem:[%s939 + $0x28] sm:$0x1]
        %s3804 = sld [smem:[#allocation7 + $0xca]]
        %v3805 = vstv %s3804
        %v3806 = vmul.f32 %v3798, %v3805
        %v3807 = vmul.f32 %v3799, %v3805
        %v3808 = vmul.f32 %v3800, %v3805
        %v3809 = vmul.f32 %v3801, %v3805
        %v3810 = vmul.f32 %v3802, %v3805
        %v3811 = vmul.f32 %v3803, %v3805
        %3818 = vrot.lane.b32.xlu0 %v3806, 120
        %v3819 = vpop.permute.xlu0 %3818
        %3820 = vrot.lane.b32.xlu0 %v3807, 120
        %v3821 = vpop.permute.xlu0 %3820
        %3822 = vrot.lane.b32.xlu0 %v3808, 120
        %v3823 = vpop.permute.xlu0 %3822
        %3824 = vrot.lane.b32.xlu0 %v3809, 120
        %v3825 = vpop.permute.xlu0 %3824
        %3826 = vrot.lane.b32.xlu0 %v3810, 120
        %v3827 = vpop.permute.xlu0 %3826
        %3828 = vrot.lane.b32.xlu0 %v3811, 120
        %v3829 = vpop.permute.xlu0 %3828
        %v3830 = vsel %vm421, %v3819, %v3821
        %v3831 = vsel %vm421, %v3823, %v3825
        %v3832 = vsel %vm421, %v3827, %v3829
        %v3836 = vadd.f32 %v3795, %v3830
        %v3837 = vadd.f32 %v3796, %v3831
        %v3838 = vadd.f32 %v3797, %v3832
        %s3839 = sld [smem:[#allocation7 + $0xcb]]
        %v3840 = vstv %s3839
        %v3841 = vmul.f32 %v3798, %v3840
        %v3842 = vmul.f32 %v3799, %v3840
        %v3843 = vmul.f32 %v3800, %v3840
        %v3844 = vmul.f32 %v3801, %v3840
        %v3845 = vmul.f32 %v3802, %v3840
        %v3846 = vmul.f32 %v3803, %v3840
        %3853 = vrot.lane.b32.xlu0 %v3841, 112
        %v3854 = vpop.permute.xlu0 %3853
        %3855 = vrot.lane.b32.xlu0 %v3842, 112
        %v3856 = vpop.permute.xlu0 %3855
        %3857 = vrot.lane.b32.xlu0 %v3843, 112
        %v3858 = vpop.permute.xlu0 %3857
        %3859 = vrot.lane.b32.xlu0 %v3844, 112
        %v3860 = vpop.permute.xlu0 %3859
        %3861 = vrot.lane.b32.xlu0 %v3845, 112
        %v3862 = vpop.permute.xlu0 %3861
        %3863 = vrot.lane.b32.xlu0 %v3846, 112
        %v3864 = vpop.permute.xlu0 %3863
        %v3865 = vsel %vm446, %v3854, %v3856
        %v3866 = vsel %vm446, %v3858, %v3860
        %v3867 = vsel %vm446, %v3862, %v3864
        %v3871 = vadd.f32 %v3836, %v3865
        %v3872 = vadd.f32 %v3837, %v3866
        %v3873 = vadd.f32 %v3838, %v3867
        %v3874 = vld [vmem:[%s1214] sm:$0xfe]
        %v3875 = vld [vmem:[%s1214 + $0x10] sm:$0xff]
        %v3876 = vld [vmem:[%s1214 + $0x20] sm:$0x1]
        %s3877 = sld [smem:[#allocation7 + $0xd2]]
        %v3878 = vstv %s3877
        %v3879 = vmul.f32 %v3874, %v3878
        %v3880 = vmul.f32 %v3875, %v3878
        %v3881 = vmul.f32 %v3876, %v3878
        %v3882 = vadd.f32 %v3871, %v3879
        %v3883 = vadd.f32 %v3872, %v3880
        %v3884 = vadd.f32 %v3873, %v3881
        %v3885 = vld [vmem:[%s1214] sm:$0xfe]
        %v3886 = vld [vmem:[%s1214 + $0x8] sm:$0xfe]
        %v3887 = vld [vmem:[%s1214 + $0x10] sm:$0xff]
        %v3888 = vld [vmem:[%s1214 + $0x18] sm:$0xff]
        %v3889 = vld [vmem:[%s1214 + $0x20] sm:$0x1]
        %v3890 = vld [vmem:[%s1214 + $0x28] sm:$0x1]
        %s3891 = sld [smem:[#allocation7 + $0xd3]]
        %v3892 = vstv %s3891
        %v3893 = vmul.f32 %v3885, %v3892
        %v3894 = vmul.f32 %v3886, %v3892
        %v3895 = vmul.f32 %v3887, %v3892
        %v3896 = vmul.f32 %v3888, %v3892
        %v3897 = vmul.f32 %v3889, %v3892
        %v3898 = vmul.f32 %v3890, %v3892
        %3905 = vrot.lane.b32.xlu0 %v3893, 120
        %v3906 = vpop.permute.xlu0 %3905
        %3907 = vrot.lane.b32.xlu0 %v3894, 120
        %v3908 = vpop.permute.xlu0 %3907
        %3909 = vrot.lane.b32.xlu0 %v3895, 120
        %v3910 = vpop.permute.xlu0 %3909
        %3911 = vrot.lane.b32.xlu0 %v3896, 120
        %v3912 = vpop.permute.xlu0 %3911
        %3913 = vrot.lane.b32.xlu0 %v3897, 120
        %v3914 = vpop.permute.xlu0 %3913
        %3915 = vrot.lane.b32.xlu0 %v3898, 120
        %v3916 = vpop.permute.xlu0 %3915
        %v3917 = vsel %vm421, %v3906, %v3908
        %v3918 = vsel %vm421, %v3910, %v3912
        %v3919 = vsel %vm421, %v3914, %v3916
        %v3923 = vadd.f32 %v3882, %v3917
        %v3924 = vadd.f32 %v3883, %v3918
        %v3925 = vadd.f32 %v3884, %v3919
        %s3926 = sld [smem:[#allocation7 + $0xd4]]
        %v3927 = vstv %s3926
        %v3928 = vmul.f32 %v3885, %v3927
        %v3929 = vmul.f32 %v3886, %v3927
        %v3930 = vmul.f32 %v3887, %v3927
        %v3931 = vmul.f32 %v3888, %v3927
        %v3932 = vmul.f32 %v3889, %v3927
        %v3933 = vmul.f32 %v3890, %v3927
        %3940 = vrot.lane.b32.xlu0 %v3928, 112
        %v3941 = vpop.permute.xlu0 %3940
        %3942 = vrot.lane.b32.xlu0 %v3929, 112
        %v3943 = vpop.permute.xlu0 %3942
        %3944 = vrot.lane.b32.xlu0 %v3930, 112
        %v3945 = vpop.permute.xlu0 %3944
        %3946 = vrot.lane.b32.xlu0 %v3931, 112
        %v3947 = vpop.permute.xlu0 %3946
        %3948 = vrot.lane.b32.xlu0 %v3932, 112
        %v3949 = vpop.permute.xlu0 %3948
        %3950 = vrot.lane.b32.xlu0 %v3933, 112
        %v3951 = vpop.permute.xlu0 %3950
        %v3952 = vsel %vm446, %v3941, %v3943
        %v3953 = vsel %vm446, %v3945, %v3947
        %v3954 = vsel %vm446, %v3949, %v3951
        %v3958 = vadd.f32 %v3923, %v3952
        %v3959 = vadd.f32 %v3924, %v3953
        %v3960 = vadd.f32 %v3925, %v3954
        %v3961 = vld [vmem:[#allocation3] sm:$0xfc]
        %v3962 = vld [vmem:[#allocation3 + $0x20] sm:$0x3]
        %s3963 = sld [smem:[#allocation7 + $0xc3]]
        %v3964 = vstv %s3963
        %v3965 = vmul.f32 %v3961, %v3964
        %v3966 = vmul.f32 %v3704, %v3964
        %v3967 = vmul.f32 %v3962, %v3964
        %v3968 = vld [vmem:[#allocation3] sm:$0xfc]
        %v3969 = vld [vmem:[#allocation3 + $0x8] sm:$0xfc]
        %v3970 = vld [vmem:[#allocation3 + $0x20] sm:$0x3]
        %v3971 = vld [vmem:[#allocation3 + $0x28] sm:$0x3]
        %s3972 = sld [smem:[#allocation7 + $0xc4]]
        %v3973 = vstv %s3972
        %v3974 = vmul.f32 %v3968, %v3973
        %v3975 = vmul.f32 %v3969, %v3973
        %v3976 = vmul.f32 %v3713, %v3973
        %v3977 = vmul.f32 %v3714, %v3973
        %v3978 = vmul.f32 %v3970, %v3973
        %v3979 = vmul.f32 %v3971, %v3973
        %3986 = vrot.lane.b32.xlu0 %v3974, 120
        %v3987 = vpop.permute.xlu0 %3986
        %3988 = vrot.lane.b32.xlu0 %v3975, 120
        %v3989 = vpop.permute.xlu0 %3988
        %3990 = vrot.lane.b32.xlu0 %v3976, 120
        %v3991 = vpop.permute.xlu0 %3990
        %3992 = vrot.lane.b32.xlu0 %v3977, 120
        %v3993 = vpop.permute.xlu0 %3992
        %3994 = vrot.lane.b32.xlu0 %v3978, 120
        %v3995 = vpop.permute.xlu0 %3994
        %3996 = vrot.lane.b32.xlu0 %v3979, 120
        %v3997 = vpop.permute.xlu0 %3996
        %v3998 = vsel %vm421, %v3987, %v3989
        %v3999 = vsel %vm421, %v3991, %v3993
        %v4000 = vsel %vm421, %v3995, %v3997
        %v4004 = vadd.f32 %v3965, %v3998
        %v4005 = vadd.f32 %v3966, %v3999
        %v4006 = vadd.f32 %v3967, %v4000
        %s4007 = sld [smem:[#allocation7 + $0xc5]]
        %v4008 = vstv %s4007
        %v4009 = vmul.f32 %v3968, %v4008
        %v4010 = vmul.f32 %v3969, %v4008
        %v4011 = vmul.f32 %v3713, %v4008
        %v4012 = vmul.f32 %v3714, %v4008
        %v4013 = vmul.f32 %v3970, %v4008
        %v4014 = vmul.f32 %v3971, %v4008
        %4021 = vrot.lane.b32.xlu0 %v4009, 112
        %v4022 = vpop.permute.xlu0 %4021
        %4023 = vrot.lane.b32.xlu0 %v4010, 112
        %v4024 = vpop.permute.xlu0 %4023
        %4025 = vrot.lane.b32.xlu0 %v4011, 112
        %v4026 = vpop.permute.xlu0 %4025
        %4027 = vrot.lane.b32.xlu0 %v4012, 112
        %v4028 = vpop.permute.xlu0 %4027
        %4029 = vrot.lane.b32.xlu0 %v4013, 112
        %v4030 = vpop.permute.xlu0 %4029
        %4031 = vrot.lane.b32.xlu0 %v4014, 112
        %v4032 = vpop.permute.xlu0 %4031
        %v4033 = vsel %vm446, %v4022, %v4024
        %v4034 = vsel %vm446, %v4026, %v4028
        %v4035 = vsel %vm446, %v4030, %v4032
        %v4039 = vadd.f32 %v4004, %v4033
        %v4040 = vadd.f32 %v4005, %v4034
        %v4041 = vadd.f32 %v4006, %v4035
        %v4042 = vld [vmem:[%s939] sm:$0xfc]
        %v4043 = vld [vmem:[%s939 + $0x20] sm:$0x3]
        %s4044 = sld [smem:[#allocation7 + $0xcc]]
        %v4045 = vstv %s4044
        %v4046 = vmul.f32 %v4042, %v4045
        %v4047 = vmul.f32 %v3788, %v4045
        %v4048 = vmul.f32 %v4043, %v4045
        %v4049 = vadd.f32 %v4039, %v4046
        %v4050 = vadd.f32 %v4040, %v4047
        %v4051 = vadd.f32 %v4041, %v4048
        %v4052 = vld [vmem:[%s939] sm:$0xfc]
        %v4053 = vld [vmem:[%s939 + $0x8] sm:$0xfc]
        %v4054 = vld [vmem:[%s939 + $0x20] sm:$0x3]
        %v4055 = vld [vmem:[%s939 + $0x28] sm:$0x3]
        %s4056 = sld [smem:[#allocation7 + $0xcd]]
        %v4057 = vstv %s4056
        %v4058 = vmul.f32 %v4052, %v4057
        %v4059 = vmul.f32 %v4053, %v4057
        %v4060 = vmul.f32 %v3800, %v4057
        %v4061 = vmul.f32 %v3801, %v4057
        %v4062 = vmul.f32 %v4054, %v4057
        %v4063 = vmul.f32 %v4055, %v4057
        %4070 = vrot.lane.b32.xlu0 %v4058, 120
        %v4071 = vpop.permute.xlu0 %4070
        %4072 = vrot.lane.b32.xlu0 %v4059, 120
        %v4073 = vpop.permute.xlu0 %4072
        %4074 = vrot.lane.b32.xlu0 %v4060, 120
        %v4075 = vpop.permute.xlu0 %4074
        %4076 = vrot.lane.b32.xlu0 %v4061, 120
        %v4077 = vpop.permute.xlu0 %4076
        %4078 = vrot.lane.b32.xlu0 %v4062, 120
        %v4079 = vpop.permute.xlu0 %4078
        %4080 = vrot.lane.b32.xlu0 %v4063, 120
        %v4081 = vpop.permute.xlu0 %4080
        %v4082 = vsel %vm421, %v4071, %v4073
        %v4083 = vsel %vm421, %v4075, %v4077
        %v4084 = vsel %vm421, %v4079, %v4081
        %v4088 = vadd.f32 %v4049, %v4082
        %v4089 = vadd.f32 %v4050, %v4083
        %v4090 = vadd.f32 %v4051, %v4084
        %s4091 = sld [smem:[#allocation7 + $0xce]]
        %v4092 = vstv %s4091
        %v4093 = vmul.f32 %v4052, %v4092
        %v4094 = vmul.f32 %v4053, %v4092
        %v4095 = vmul.f32 %v3800, %v4092
        %v4096 = vmul.f32 %v3801, %v4092
        %v4097 = vmul.f32 %v4054, %v4092
        %v4098 = vmul.f32 %v4055, %v4092
        %4105 = vrot.lane.b32.xlu0 %v4093, 112
        %v4106 = vpop.permute.xlu0 %4105
        %4107 = vrot.lane.b32.xlu0 %v4094, 112
        %v4108 = vpop.permute.xlu0 %4107
        %4109 = vrot.lane.b32.xlu0 %v4095, 112
        %v4110 = vpop.permute.xlu0 %4109
        %4111 = vrot.lane.b32.xlu0 %v4096, 112
        %v4112 = vpop.permute.xlu0 %4111
        %4113 = vrot.lane.b32.xlu0 %v4097, 112
        %v4114 = vpop.permute.xlu0 %4113
        %4115 = vrot.lane.b32.xlu0 %v4098, 112
        %v4116 = vpop.permute.xlu0 %4115
        %v4117 = vsel %vm446, %v4106, %v4108
        %v4118 = vsel %vm446, %v4110, %v4112
        %v4119 = vsel %vm446, %v4114, %v4116
        %v4123 = vadd.f32 %v4088, %v4117
        %v4124 = vadd.f32 %v4089, %v4118
        %v4125 = vadd.f32 %v4090, %v4119
        %v4126 = vld [vmem:[%s1214] sm:$0xfc]
        %v4127 = vld [vmem:[%s1214 + $0x20] sm:$0x3]
        %s4128 = sld [smem:[#allocation7 + $0xd5]]
        %v4129 = vstv %s4128
        %v4130 = vmul.f32 %v4126, %v4129
        %v4131 = vmul.f32 %v3875, %v4129
        %v4132 = vmul.f32 %v4127, %v4129
        %v4133 = vadd.f32 %v4123, %v4130
        %v4134 = vadd.f32 %v4124, %v4131
        %v4135 = vadd.f32 %v4125, %v4132
        %v4136 = vld [vmem:[%s1214] sm:$0xfc]
        %v4137 = vld [vmem:[%s1214 + $0x8] sm:$0xfc]
        %v4138 = vld [vmem:[%s1214 + $0x20] sm:$0x3]
        %v4139 = vld [vmem:[%s1214 + $0x28] sm:$0x3]
        %s4140 = sld [smem:[#allocation7 + $0xd6]]
        %v4141 = vstv %s4140
        %v4142 = vmul.f32 %v4136, %v4141
        %v4143 = vmul.f32 %v4137, %v4141
        %v4144 = vmul.f32 %v3887, %v4141
        %v4145 = vmul.f32 %v3888, %v4141
        %v4146 = vmul.f32 %v4138, %v4141
        %v4147 = vmul.f32 %v4139, %v4141
        %4154 = vrot.lane.b32.xlu0 %v4142, 120
        %v4155 = vpop.permute.xlu0 %4154
        %4156 = vrot.lane.b32.xlu0 %v4143, 120
        %v4157 = vpop.permute.xlu0 %4156
        %4158 = vrot.lane.b32.xlu0 %v4144, 120
        %v4159 = vpop.permute.xlu0 %4158
        %4160 = vrot.lane.b32.xlu0 %v4145, 120
        %v4161 = vpop.permute.xlu0 %4160
        %4162 = vrot.lane.b32.xlu0 %v4146, 120
        %v4163 = vpop.permute.xlu0 %4162
        %4164 = vrot.lane.b32.xlu0 %v4147, 120
        %v4165 = vpop.permute.xlu0 %4164
        %v4166 = vsel %vm421, %v4155, %v4157
        %v4167 = vsel %vm421, %v4159, %v4161
        %v4168 = vsel %vm421, %v4163, %v4165
        %v4172 = vadd.f32 %v4133, %v4166
        %v4173 = vadd.f32 %v4134, %v4167
        %v4174 = vadd.f32 %v4135, %v4168
        %s4175 = sld [smem:[#allocation7 + $0xd7]]
        %v4176 = vstv %s4175
        %v4177 = vmul.f32 %v4136, %v4176
        %v4178 = vmul.f32 %v4137, %v4176
        %v4179 = vmul.f32 %v3887, %v4176
        %v4180 = vmul.f32 %v3888, %v4176
        %v4181 = vmul.f32 %v4138, %v4176
        %v4182 = vmul.f32 %v4139, %v4176
        %4189 = vrot.lane.b32.xlu0 %v4177, 112
        %v4190 = vpop.permute.xlu0 %4189
        %4191 = vrot.lane.b32.xlu0 %v4178, 112
        %v4192 = vpop.permute.xlu0 %4191
        %4193 = vrot.lane.b32.xlu0 %v4179, 112
        %v4194 = vpop.permute.xlu0 %4193
        %4195 = vrot.lane.b32.xlu0 %v4180, 112
        %v4196 = vpop.permute.xlu0 %4195
        %4197 = vrot.lane.b32.xlu0 %v4181, 112
        %v4198 = vpop.permute.xlu0 %4197
        %4199 = vrot.lane.b32.xlu0 %v4182, 112
        %v4200 = vpop.permute.xlu0 %4199
        %v4201 = vsel %vm446, %v4190, %v4192
        %v4202 = vsel %vm446, %v4194, %v4196
        %v4203 = vsel %vm446, %v4198, %v4200
        %v4207 = vadd.f32 %v4172, %v4201
        %v4208 = vadd.f32 %v4173, %v4202
        %v4209 = vadd.f32 %v4174, %v4203
        %v4213 = vrot.slane %v3958, 1
        %v4214 = vrot.slane %v3959, 1
        %v4215 = vsel %vm621, %v4213, %v4214
        %v4216 = vrot.slane %v3960, 1
        %v4217 = vsel %vm621, %v4214, %v4216
        %v4220 = vadd.f32 %v3701, %v4215
        %v4221 = vadd.f32 %v3702, %v4217
        %s4222 = sld [smem:[#allocation9 + $0x9]]
        %v4223 = vstv %s4222
        %v4224 = vadd.f32 %v4207, %v4223
        %v4225 = vadd.f32 %v4208, %v4223
        %v4226 = vadd.f32 %v4209, %v4223
        %v4230 = vrot.slane %v4224, 2
        %v4231 = vrot.slane %v4225, 2
        %v4232 = vsel %vm639, %v4230, %v4231
        %v4233 = vrot.slane %v4226, 2
        %v4234 = vsel %vm639, %v4231, %v4233
        %v4237 = vadd.f32 %v4220, %v4232
        %v4238 = vadd.f32 %v4221, %v4234
        %v4239 = vtanh.pop %v4237
        %v4240 = vtanh.pop %v4238
        %v4243 = vrot.slane %v4239, 7
        %v4244 = vrot.slane %v4240, 7
        %v4245 = vsel %vm368, %v4243, %v4244
        %4246 = vrot.lane.b32.xlu0 %v4243, 8
        %v4247 = vpop.permute.xlu0 %4246
        %4248 = vrot.lane.b32.xlu0 %v4245, 8
        %v4249 = vpop.permute.xlu0 %4248
        %4250 = vrot.lane.b32.xlu0 %v4244, 8
        %v4251 = vpop.permute.xlu0 %4250
        %4255 = vst.msk [vmem:[#allocation4] sm:$0xfe] %vm381, %v4247
        %4256 = vst.msk [vmem:[#allocation4 + $0x8] sm:$0xfe] %vm383, %v4247
        %4257 = vst.msk [vmem:[#allocation4 + $0x10] sm:$0xff] %vm385, %v4249
        %4258 = vst.msk [vmem:[#allocation4 + $0x18] sm:$0xff] %vm387, %v4249
        %4259 = vst.msk [vmem:[#allocation4 + $0x20] sm:$0x1] %vm389, %v4251
        %4260 = vst.msk [vmem:[#allocation4 + $0x28] sm:$0x1] %vm391, %v4251
        %v4261 = vld [vmem:[#allocation3] sm:$0xff]
        %v4262 = vld [vmem:[#allocation3 + $0x10] sm:$0xff]
        %s4263 = sld [smem:[#allocation7 + $0xd8]]
        %v4264 = vstv %s4263
        %v4265 = vmul.f32 %v4261, %v4264
        %v4266 = vmul.f32 %v4262, %v4264
        %v4267 = vld [vmem:[#allocation3] sm:$0xff]
        %v4268 = vld [vmem:[#allocation3 + $0x8] sm:$0xff]
        %v4269 = vld [vmem:[#allocation3 + $0x10] sm:$0xff]
        %v4270 = vld [vmem:[#allocation3 + $0x18] sm:$0xff]
        %s4271 = sld [smem:[#allocation7 + $0xd9]]
        %v4272 = vstv %s4271
        %v4273 = vmul.f32 %v4267, %v4272
        %v4274 = vmul.f32 %v4268, %v4272
        %v4275 = vmul.f32 %v4269, %v4272
        %v4276 = vmul.f32 %v4270, %v4272
        %4281 = vrot.lane.b32.xlu0 %v4273, 120
        %v4282 = vpop.permute.xlu0 %4281
        %4283 = vrot.lane.b32.xlu0 %v4274, 120
        %v4284 = vpop.permute.xlu0 %4283
        %4285 = vrot.lane.b32.xlu0 %v4275, 120
        %v4286 = vpop.permute.xlu0 %4285
        %4287 = vrot.lane.b32.xlu0 %v4276, 120
        %v4288 = vpop.permute.xlu0 %4287
        %v4289 = vsel %vm421, %v4282, %v4284
        %v4290 = vsel %vm421, %v4286, %v4288
        %v4293 = vadd.f32 %v4265, %v4289
        %v4294 = vadd.f32 %v4266, %v4290
        %s4295 = sld [smem:[#allocation7 + $0xda]]
        %v4296 = vstv %s4295
        %v4297 = vmul.f32 %v4267, %v4296
        %v4298 = vmul.f32 %v4268, %v4296
        %v4299 = vmul.f32 %v4269, %v4296
        %v4300 = vmul.f32 %v4270, %v4296
        %4305 = vrot.lane.b32.xlu0 %v4297, 112
        %v4306 = vpop.permute.xlu0 %4305
        %4307 = vrot.lane.b32.xlu0 %v4298, 112
        %v4308 = vpop.permute.xlu0 %4307
        %4309 = vrot.lane.b32.xlu0 %v4299, 112
        %v4310 = vpop.permute.xlu0 %4309
        %4311 = vrot.lane.b32.xlu0 %v4300, 112
        %v4312 = vpop.permute.xlu0 %4311
        %v4313 = vsel %vm446, %v4306, %v4308
        %v4314 = vsel %vm446, %v4310, %v4312
        %v4317 = vadd.f32 %v4293, %v4313
        %v4318 = vadd.f32 %v4294, %v4314
        %v4319 = vld [vmem:[%s939] sm:$0xff]
        %v4320 = vld [vmem:[%s939 + $0x10] sm:$0xff]
        %s4321 = sld [smem:[#allocation7 + $0xe1]]
        %v4322 = vstv %s4321
        %v4323 = vmul.f32 %v4319, %v4322
        %v4324 = vmul.f32 %v4320, %v4322
        %v4325 = vadd.f32 %v4317, %v4323
        %v4326 = vadd.f32 %v4318, %v4324
        %v4327 = vld [vmem:[%s939] sm:$0xff]
        %v4328 = vld [vmem:[%s939 + $0x8] sm:$0xff]
        %v4329 = vld [vmem:[%s939 + $0x10] sm:$0xff]
        %v4330 = vld [vmem:[%s939 + $0x18] sm:$0xff]
        %s4331 = sld [smem:[#allocation7 + $0xe2]]
        %v4332 = vstv %s4331
        %v4333 = vmul.f32 %v4327, %v4332
        %v4334 = vmul.f32 %v4328, %v4332
        %v4335 = vmul.f32 %v4329, %v4332
        %v4336 = vmul.f32 %v4330, %v4332
        %4341 = vrot.lane.b32.xlu0 %v4333, 120
        %v4342 = vpop.permute.xlu0 %4341
        %4343 = vrot.lane.b32.xlu0 %v4334, 120
        %v4344 = vpop.permute.xlu0 %4343
        %4345 = vrot.lane.b32.xlu0 %v4335, 120
        %v4346 = vpop.permute.xlu0 %4345
        %4347 = vrot.lane.b32.xlu0 %v4336, 120
        %v4348 = vpop.permute.xlu0 %4347
        %v4349 = vsel %vm421, %v4342, %v4344
        %v4350 = vsel %vm421, %v4346, %v4348
        %v4353 = vadd.f32 %v4325, %v4349
        %v4354 = vadd.f32 %v4326, %v4350
        %s4355 = sld [smem:[#allocation7 + $0xe3]]
        %v4356 = vstv %s4355
        %v4357 = vmul.f32 %v4327, %v4356
        %v4358 = vmul.f32 %v4328, %v4356
        %v4359 = vmul.f32 %v4329, %v4356
        %v4360 = vmul.f32 %v4330, %v4356
        %4365 = vrot.lane.b32.xlu0 %v4357, 112
        %v4366 = vpop.permute.xlu0 %4365
        %4367 = vrot.lane.b32.xlu0 %v4358, 112
        %v4368 = vpop.permute.xlu0 %4367
        %4369 = vrot.lane.b32.xlu0 %v4359, 112
        %v4370 = vpop.permute.xlu0 %4369
        %4371 = vrot.lane.b32.xlu0 %v4360, 112
        %v4372 = vpop.permute.xlu0 %4371
        %v4373 = vsel %vm446, %v4366, %v4368
        %v4374 = vsel %vm446, %v4370, %v4372
        %v4377 = vadd.f32 %v4353, %v4373
        %v4378 = vadd.f32 %v4354, %v4374
        %v4379 = vld [vmem:[%s1214] sm:$0xff]
        %v4380 = vld [vmem:[%s1214 + $0x10] sm:$0xff]
        %s4381 = sld [smem:[#allocation7 + $0xea]]
        %v4382 = vstv %s4381
        %v4383 = vmul.f32 %v4379, %v4382
        %v4384 = vmul.f32 %v4380, %v4382
        %v4385 = vadd.f32 %v4377, %v4383
        %v4386 = vadd.f32 %v4378, %v4384
        %v4387 = vld [vmem:[%s1214] sm:$0xff]
        %v4388 = vld [vmem:[%s1214 + $0x8] sm:$0xff]
        %v4389 = vld [vmem:[%s1214 + $0x10] sm:$0xff]
        %v4390 = vld [vmem:[%s1214 + $0x18] sm:$0xff]
        %s4391 = sld [smem:[#allocation7 + $0xeb]]
        %v4392 = vstv %s4391
        %v4393 = vmul.f32 %v4387, %v4392
        %v4394 = vmul.f32 %v4388, %v4392
        %v4395 = vmul.f32 %v4389, %v4392
        %v4396 = vmul.f32 %v4390, %v4392
        %4401 = vrot.lane.b32.xlu0 %v4393, 120
        %v4402 = vpop.permute.xlu0 %4401
        %4403 = vrot.lane.b32.xlu0 %v4394, 120
        %v4404 = vpop.permute.xlu0 %4403
        %4405 = vrot.lane.b32.xlu0 %v4395, 120
        %v4406 = vpop.permute.xlu0 %4405
        %4407 = vrot.lane.b32.xlu0 %v4396, 120
        %v4408 = vpop.permute.xlu0 %4407
        %v4409 = vsel %vm421, %v4402, %v4404
        %v4410 = vsel %vm421, %v4406, %v4408
        %v4413 = vadd.f32 %v4385, %v4409
        %v4414 = vadd.f32 %v4386, %v4410
        %s4415 = sld [smem:[#allocation7 + $0xec]]
        %v4416 = vstv %s4415
        %v4417 = vmul.f32 %v4387, %v4416
        %v4418 = vmul.f32 %v4388, %v4416
        %v4419 = vmul.f32 %v4389, %v4416
        %v4420 = vmul.f32 %v4390, %v4416
        %4425 = vrot.lane.b32.xlu0 %v4417, 112
        %v4426 = vpop.permute.xlu0 %4425
        %4427 = vrot.lane.b32.xlu0 %v4418, 112
        %v4428 = vpop.permute.xlu0 %4427
        %4429 = vrot.lane.b32.xlu0 %v4419, 112
        %v4430 = vpop.permute.xlu0 %4429
        %4431 = vrot.lane.b32.xlu0 %v4420, 112
        %v4432 = vpop.permute.xlu0 %4431
        %v4433 = vsel %vm446, %v4426, %v4428
        %v4434 = vsel %vm446, %v4430, %v4432
        %v4437 = vadd.f32 %v4413, %v4433
        %v4438 = vadd.f32 %v4414, %v4434
        %v4439 = vld [vmem:[#allocation3] sm:$0xfe]
        %v4440 = vld [vmem:[#allocation3 + $0x10] sm:$0xff]
        %v4441 = vld [vmem:[#allocation3 + $0x20] sm:$0x1]
        %s4442 = sld [smem:[#allocation7 + $0xdb]]
        %v4443 = vstv %s4442
        %v4444 = vmul.f32 %v4439, %v4443
        %v4445 = vmul.f32 %v4440, %v4443
        %v4446 = vmul.f32 %v4441, %v4443
        %v4447 = vld [vmem:[#allocation3] sm:$0xfe]
        %v4448 = vld [vmem:[#allocation3 + $0x8] sm:$0xfe]
        %v4449 = vld [vmem:[#allocation3 + $0x10] sm:$0xff]
        %v4450 = vld [vmem:[#allocation3 + $0x18] sm:$0xff]
        %v4451 = vld [vmem:[#allocation3 + $0x20] sm:$0x1]
        %v4452 = vld [vmem:[#allocation3 + $0x28] sm:$0x1]
        %s4453 = sld [smem:[#allocation7 + $0xdc]]
        %v4454 = vstv %s4453
        %v4455 = vmul.f32 %v4447, %v4454
        %v4456 = vmul.f32 %v4448, %v4454
        %v4457 = vmul.f32 %v4449, %v4454
        %v4458 = vmul.f32 %v4450, %v4454
        %v4459 = vmul.f32 %v4451, %v4454
        %v4460 = vmul.f32 %v4452, %v4454
        %4467 = vrot.lane.b32.xlu0 %v4455, 120
        %v4468 = vpop.permute.xlu0 %4467
        %4469 = vrot.lane.b32.xlu0 %v4456, 120
        %v4470 = vpop.permute.xlu0 %4469
        %4471 = vrot.lane.b32.xlu0 %v4457, 120
        %v4472 = vpop.permute.xlu0 %4471
        %4473 = vrot.lane.b32.xlu0 %v4458, 120
        %v4474 = vpop.permute.xlu0 %4473
        %4475 = vrot.lane.b32.xlu0 %v4459, 120
        %v4476 = vpop.permute.xlu0 %4475
        %4477 = vrot.lane.b32.xlu0 %v4460, 120
        %v4478 = vpop.permute.xlu0 %4477
        %v4479 = vsel %vm421, %v4468, %v4470
        %v4480 = vsel %vm421, %v4472, %v4474
        %v4481 = vsel %vm421, %v4476, %v4478
        %v4485 = vadd.f32 %v4444, %v4479
        %v4486 = vadd.f32 %v4445, %v4480
        %v4487 = vadd.f32 %v4446, %v4481
        %s4488 = sld [smem:[#allocation7 + $0xdd]]
        %v4489 = vstv %s4488
        %v4490 = vmul.f32 %v4447, %v4489
        %v4491 = vmul.f32 %v4448, %v4489
        %v4492 = vmul.f32 %v4449, %v4489
        %v4493 = vmul.f32 %v4450, %v4489
        %v4494 = vmul.f32 %v4451, %v4489
        %v4495 = vmul.f32 %v4452, %v4489
        %4502 = vrot.lane.b32.xlu0 %v4490, 112
        %v4503 = vpop.permute.xlu0 %4502
        %4504 = vrot.lane.b32.xlu0 %v4491, 112
        %v4505 = vpop.permute.xlu0 %4504
        %4506 = vrot.lane.b32.xlu0 %v4492, 112
        %v4507 = vpop.permute.xlu0 %4506
        %4508 = vrot.lane.b32.xlu0 %v4493, 112
        %v4509 = vpop.permute.xlu0 %4508
        %4510 = vrot.lane.b32.xlu0 %v4494, 112
        %v4511 = vpop.permute.xlu0 %4510
        %4512 = vrot.lane.b32.xlu0 %v4495, 112
        %v4513 = vpop.permute.xlu0 %4512
        %v4514 = vsel %vm446, %v4503, %v4505
        %v4515 = vsel %vm446, %v4507, %v4509
        %v4516 = vsel %vm446, %v4511, %v4513
        %v4520 = vadd.f32 %v4485, %v4514
        %v4521 = vadd.f32 %v4486, %v4515
        %v4522 = vadd.f32 %v4487, %v4516
        %v4523 = vld [vmem:[%s939] sm:$0xfe]
        %v4524 = vld [vmem:[%s939 + $0x10] sm:$0xff]
        %v4525 = vld [vmem:[%s939 + $0x20] sm:$0x1]
        %s4526 = sld [smem:[#allocation7 + $0xe4]]
        %v4527 = vstv %s4526
        %v4528 = vmul.f32 %v4523, %v4527
        %v4529 = vmul.f32 %v4524, %v4527
        %v4530 = vmul.f32 %v4525, %v4527
        %v4531 = vadd.f32 %v4520, %v4528
        %v4532 = vadd.f32 %v4521, %v4529
        %v4533 = vadd.f32 %v4522, %v4530
        %v4534 = vld [vmem:[%s939] sm:$0xfe]
        %v4535 = vld [vmem:[%s939 + $0x8] sm:$0xfe]
        %v4536 = vld [vmem:[%s939 + $0x10] sm:$0xff]
        %v4537 = vld [vmem:[%s939 + $0x18] sm:$0xff]
        %v4538 = vld [vmem:[%s939 + $0x20] sm:$0x1]
        %v4539 = vld [vmem:[%s939 + $0x28] sm:$0x1]
        %s4540 = sld [smem:[#allocation7 + $0xe5]]
        %v4541 = vstv %s4540
        %v4542 = vmul.f32 %v4534, %v4541
        %v4543 = vmul.f32 %v4535, %v4541
        %v4544 = vmul.f32 %v4536, %v4541
        %v4545 = vmul.f32 %v4537, %v4541
        %v4546 = vmul.f32 %v4538, %v4541
        %v4547 = vmul.f32 %v4539, %v4541
        %4554 = vrot.lane.b32.xlu0 %v4542, 120
        %v4555 = vpop.permute.xlu0 %4554
        %4556 = vrot.lane.b32.xlu0 %v4543, 120
        %v4557 = vpop.permute.xlu0 %4556
        %4558 = vrot.lane.b32.xlu0 %v4544, 120
        %v4559 = vpop.permute.xlu0 %4558
        %4560 = vrot.lane.b32.xlu0 %v4545, 120
        %v4561 = vpop.permute.xlu0 %4560
        %4562 = vrot.lane.b32.xlu0 %v4546, 120
        %v4563 = vpop.permute.xlu0 %4562
        %4564 = vrot.lane.b32.xlu0 %v4547, 120
        %v4565 = vpop.permute.xlu0 %4564
        %v4566 = vsel %vm421, %v4555, %v4557
        %v4567 = vsel %vm421, %v4559, %v4561
        %v4568 = vsel %vm421, %v4563, %v4565
        %v4572 = vadd.f32 %v4531, %v4566
        %v4573 = vadd.f32 %v4532, %v4567
        %v4574 = vadd.f32 %v4533, %v4568
        %s4575 = sld [smem:[#allocation7 + $0xe6]]
        %v4576 = vstv %s4575
        %v4577 = vmul.f32 %v4534, %v4576
        %v4578 = vmul.f32 %v4535, %v4576
        %v4579 = vmul.f32 %v4536, %v4576
        %v4580 = vmul.f32 %v4537, %v4576
        %v4581 = vmul.f32 %v4538, %v4576
        %v4582 = vmul.f32 %v4539, %v4576
        %4589 = vrot.lane.b32.xlu0 %v4577, 112
        %v4590 = vpop.permute.xlu0 %4589
        %4591 = vrot.lane.b32.xlu0 %v4578, 112
        %v4592 = vpop.permute.xlu0 %4591
        %4593 = vrot.lane.b32.xlu0 %v4579, 112
        %v4594 = vpop.permute.xlu0 %4593
        %4595 = vrot.lane.b32.xlu0 %v4580, 112
        %v4596 = vpop.permute.xlu0 %4595
        %4597 = vrot.lane.b32.xlu0 %v4581, 112
        %v4598 = vpop.permute.xlu0 %4597
        %4599 = vrot.lane.b32.xlu0 %v4582, 112
        %v4600 = vpop.permute.xlu0 %4599
        %v4601 = vsel %vm446, %v4590, %v4592
        %v4602 = vsel %vm446, %v4594, %v4596
        %v4603 = vsel %vm446, %v4598, %v4600
        %v4607 = vadd.f32 %v4572, %v4601
        %v4608 = vadd.f32 %v4573, %v4602
        %v4609 = vadd.f32 %v4574, %v4603
        %v4610 = vld [vmem:[%s1214] sm:$0xfe]
        %v4611 = vld [vmem:[%s1214 + $0x10] sm:$0xff]
        %v4612 = vld [vmem:[%s1214 + $0x20] sm:$0x1]
        %s4613 = sld [smem:[#allocation7 + $0xed]]
        %v4614 = vstv %s4613
        %v4615 = vmul.f32 %v4610, %v4614
        %v4616 = vmul.f32 %v4611, %v4614
        %v4617 = vmul.f32 %v4612, %v4614
        %v4618 = vadd.f32 %v4607, %v4615
        %v4619 = vadd.f32 %v4608, %v4616
        %v4620 = vadd.f32 %v4609, %v4617
        %v4621 = vld [vmem:[%s1214] sm:$0xfe]
        %v4622 = vld [vmem:[%s1214 + $0x8] sm:$0xfe]
        %v4623 = vld [vmem:[%s1214 + $0x10] sm:$0xff]
        %v4624 = vld [vmem:[%s1214 + $0x18] sm:$0xff]
        %v4625 = vld [vmem:[%s1214 + $0x20] sm:$0x1]
        %v4626 = vld [vmem:[%s1214 + $0x28] sm:$0x1]
        %s4627 = sld [smem:[#allocation7 + $0xee]]
        %v4628 = vstv %s4627
        %v4629 = vmul.f32 %v4621, %v4628
        %v4630 = vmul.f32 %v4622, %v4628
        %v4631 = vmul.f32 %v4623, %v4628
        %v4632 = vmul.f32 %v4624, %v4628
        %v4633 = vmul.f32 %v4625, %v4628
        %v4634 = vmul.f32 %v4626, %v4628
        %4641 = vrot.lane.b32.xlu0 %v4629, 120
        %v4642 = vpop.permute.xlu0 %4641
        %4643 = vrot.lane.b32.xlu0 %v4630, 120
        %v4644 = vpop.permute.xlu0 %4643
        %4645 = vrot.lane.b32.xlu0 %v4631, 120
        %v4646 = vpop.permute.xlu0 %4645
        %4647 = vrot.lane.b32.xlu0 %v4632, 120
        %v4648 = vpop.permute.xlu0 %4647
        %4649 = vrot.lane.b32.xlu0 %v4633, 120
        %v4650 = vpop.permute.xlu0 %4649
        %4651 = vrot.lane.b32.xlu0 %v4634, 120
        %v4652 = vpop.permute.xlu0 %4651
        %v4653 = vsel %vm421, %v4642, %v4644
        %v4654 = vsel %vm421, %v4646, %v4648
        %v4655 = vsel %vm421, %v4650, %v4652
        %v4659 = vadd.f32 %v4618, %v4653
        %v4660 = vadd.f32 %v4619, %v4654
        %v4661 = vadd.f32 %v4620, %v4655
        %s4662 = sld [smem:[#allocation7 + $0xef]]
        %v4663 = vstv %s4662
        %v4664 = vmul.f32 %v4621, %v4663
        %v4665 = vmul.f32 %v4622, %v4663
        %v4666 = vmul.f32 %v4623, %v4663
        %v4667 = vmul.f32 %v4624, %v4663
        %v4668 = vmul.f32 %v4625, %v4663
        %v4669 = vmul.f32 %v4626, %v4663
        %4676 = vrot.lane.b32.xlu0 %v4664, 112
        %v4677 = vpop.permute.xlu0 %4676
        %4678 = vrot.lane.b32.xlu0 %v4665, 112
        %v4679 = vpop.permute.xlu0 %4678
        %4680 = vrot.lane.b32.xlu0 %v4666, 112
        %v4681 = vpop.permute.xlu0 %4680
        %4682 = vrot.lane.b32.xlu0 %v4667, 112
        %v4683 = vpop.permute.xlu0 %4682
        %4684 = vrot.lane.b32.xlu0 %v4668, 112
        %v4685 = vpop.permute.xlu0 %4684
        %4686 = vrot.lane.b32.xlu0 %v4669, 112
        %v4687 = vpop.permute.xlu0 %4686
        %v4688 = vsel %vm446, %v4677, %v4679
        %v4689 = vsel %vm446, %v4681, %v4683
        %v4690 = vsel %vm446, %v4685, %v4687
        %v4694 = vadd.f32 %v4659, %v4688
        %v4695 = vadd.f32 %v4660, %v4689
        %v4696 = vadd.f32 %v4661, %v4690
        %v4697 = vld [vmem:[#allocation3] sm:$0xfc]
        %v4698 = vld [vmem:[#allocation3 + $0x20] sm:$0x3]
        %s4699 = sld [smem:[#allocation7 + $0xde]]
        %v4700 = vstv %s4699
        %v4701 = vmul.f32 %v4697, %v4700
        %v4702 = vmul.f32 %v4440, %v4700
        %v4703 = vmul.f32 %v4698, %v4700
        %v4704 = vld [vmem:[#allocation3] sm:$0xfc]
        %v4705 = vld [vmem:[#allocation3 + $0x8] sm:$0xfc]
        %v4706 = vld [vmem:[#allocation3 + $0x20] sm:$0x3]
        %v4707 = vld [vmem:[#allocation3 + $0x28] sm:$0x3]
        %s4708 = sld [smem:[#allocation7 + $0xdf]]
        %v4709 = vstv %s4708
        %v4710 = vmul.f32 %v4704, %v4709
        %v4711 = vmul.f32 %v4705, %v4709
        %v4712 = vmul.f32 %v4449, %v4709
        %v4713 = vmul.f32 %v4450, %v4709
        %v4714 = vmul.f32 %v4706, %v4709
        %v4715 = vmul.f32 %v4707, %v4709
        %4722 = vrot.lane.b32.xlu0 %v4710, 120
        %v4723 = vpop.permute.xlu0 %4722
        %4724 = vrot.lane.b32.xlu0 %v4711, 120
        %v4725 = vpop.permute.xlu0 %4724
        %4726 = vrot.lane.b32.xlu0 %v4712, 120
        %v4727 = vpop.permute.xlu0 %4726
        %4728 = vrot.lane.b32.xlu0 %v4713, 120
        %v4729 = vpop.permute.xlu0 %4728
        %4730 = vrot.lane.b32.xlu0 %v4714, 120
        %v4731 = vpop.permute.xlu0 %4730
        %4732 = vrot.lane.b32.xlu0 %v4715, 120
        %v4733 = vpop.permute.xlu0 %4732
        %v4734 = vsel %vm421, %v4723, %v4725
        %v4735 = vsel %vm421, %v4727, %v4729
        %v4736 = vsel %vm421, %v4731, %v4733
        %v4740 = vadd.f32 %v4701, %v4734
        %v4741 = vadd.f32 %v4702, %v4735
        %v4742 = vadd.f32 %v4703, %v4736
        %s4743 = sld [smem:[#allocation7 + $0xe0]]
        %v4744 = vstv %s4743
        %v4745 = vmul.f32 %v4704, %v4744
        %v4746 = vmul.f32 %v4705, %v4744
        %v4747 = vmul.f32 %v4449, %v4744
        %v4748 = vmul.f32 %v4450, %v4744
        %v4749 = vmul.f32 %v4706, %v4744
        %v4750 = vmul.f32 %v4707, %v4744
        %4757 = vrot.lane.b32.xlu0 %v4745, 112
        %v4758 = vpop.permute.xlu0 %4757
        %4759 = vrot.lane.b32.xlu0 %v4746, 112
        %v4760 = vpop.permute.xlu0 %4759
        %4761 = vrot.lane.b32.xlu0 %v4747, 112
        %v4762 = vpop.permute.xlu0 %4761
        %4763 = vrot.lane.b32.xlu0 %v4748, 112
        %v4764 = vpop.permute.xlu0 %4763
        %4765 = vrot.lane.b32.xlu0 %v4749, 112
        %v4766 = vpop.permute.xlu0 %4765
        %4767 = vrot.lane.b32.xlu0 %v4750, 112
        %v4768 = vpop.permute.xlu0 %4767
        %v4769 = vsel %vm446, %v4758, %v4760
        %v4770 = vsel %vm446, %v4762, %v4764
        %v4771 = vsel %vm446, %v4766, %v4768
        %v4775 = vadd.f32 %v4740, %v4769
        %v4776 = vadd.f32 %v4741, %v4770
        %v4777 = vadd.f32 %v4742, %v4771
        %v4778 = vld [vmem:[%s939] sm:$0xfc]
        %v4779 = vld [vmem:[%s939 + $0x20] sm:$0x3]
        %s4780 = sld [smem:[#allocation7 + $0xe7]]
        %v4781 = vstv %s4780
        %v4782 = vmul.f32 %v4778, %v4781
        %v4783 = vmul.f32 %v4524, %v4781
        %v4784 = vmul.f32 %v4779, %v4781
        %v4785 = vadd.f32 %v4775, %v4782
        %v4786 = vadd.f32 %v4776, %v4783
        %v4787 = vadd.f32 %v4777, %v4784
        %v4788 = vld [vmem:[%s939] sm:$0xfc]
        %v4789 = vld [vmem:[%s939 + $0x8] sm:$0xfc]
        %v4790 = vld [vmem:[%s939 + $0x20] sm:$0x3]
        %v4791 = vld [vmem:[%s939 + $0x28] sm:$0x3]
        %s4792 = sld [smem:[#allocation7 + $0xe8]]
        %v4793 = vstv %s4792
        %v4794 = vmul.f32 %v4788, %v4793
        %v4795 = vmul.f32 %v4789, %v4793
        %v4796 = vmul.f32 %v4536, %v4793
        %v4797 = vmul.f32 %v4537, %v4793
        %v4798 = vmul.f32 %v4790, %v4793
        %v4799 = vmul.f32 %v4791, %v4793
        %4806 = vrot.lane.b32.xlu0 %v4794, 120
        %v4807 = vpop.permute.xlu0 %4806
        %4808 = vrot.lane.b32.xlu0 %v4795, 120
        %v4809 = vpop.permute.xlu0 %4808
        %4810 = vrot.lane.b32.xlu0 %v4796, 120
        %v4811 = vpop.permute.xlu0 %4810
        %4812 = vrot.lane.b32.xlu0 %v4797, 120
        %v4813 = vpop.permute.xlu0 %4812
        %4814 = vrot.lane.b32.xlu0 %v4798, 120
        %v4815 = vpop.permute.xlu0 %4814
        %4816 = vrot.lane.b32.xlu0 %v4799, 120
        %v4817 = vpop.permute.xlu0 %4816
        %v4818 = vsel %vm421, %v4807, %v4809
        %v4819 = vsel %vm421, %v4811, %v4813
        %v4820 = vsel %vm421, %v4815, %v4817
        %v4824 = vadd.f32 %v4785, %v4818
        %v4825 = vadd.f32 %v4786, %v4819
        %v4826 = vadd.f32 %v4787, %v4820
        %s4827 = sld [smem:[#allocation7 + $0xe9]]
        %v4828 = vstv %s4827
        %v4829 = vmul.f32 %v4788, %v4828
        %v4830 = vmul.f32 %v4789, %v4828
        %v4831 = vmul.f32 %v4536, %v4828
        %v4832 = vmul.f32 %v4537, %v4828
        %v4833 = vmul.f32 %v4790, %v4828
        %v4834 = vmul.f32 %v4791, %v4828
        %4841 = vrot.lane.b32.xlu0 %v4829, 112
        %v4842 = vpop.permute.xlu0 %4841
        %4843 = vrot.lane.b32.xlu0 %v4830, 112
        %v4844 = vpop.permute.xlu0 %4843
        %4845 = vrot.lane.b32.xlu0 %v4831, 112
        %v4846 = vpop.permute.xlu0 %4845
        %4847 = vrot.lane.b32.xlu0 %v4832, 112
        %v4848 = vpop.permute.xlu0 %4847
        %4849 = vrot.lane.b32.xlu0 %v4833, 112
        %v4850 = vpop.permute.xlu0 %4849
        %4851 = vrot.lane.b32.xlu0 %v4834, 112
        %v4852 = vpop.permute.xlu0 %4851
        %v4853 = vsel %vm446, %v4842, %v4844
        %v4854 = vsel %vm446, %v4846, %v4848
        %v4855 = vsel %vm446, %v4850, %v4852
        %v4859 = vadd.f32 %v4824, %v4853
        %v4860 = vadd.f32 %v4825, %v4854
        %v4861 = vadd.f32 %v4826, %v4855
        %v4862 = vld [vmem:[%s1214] sm:$0xfc]
        %v4863 = vld [vmem:[%s1214 + $0x20] sm:$0x3]
        %s4864 = sld [smem:[#allocation7 + $0xf0]]
        %v4865 = vstv %s4864
        %v4866 = vmul.f32 %v4862, %v4865
        %v4867 = vmul.f32 %v4611, %v4865
        %v4868 = vmul.f32 %v4863, %v4865
        %v4869 = vadd.f32 %v4859, %v4866
        %v4870 = vadd.f32 %v4860, %v4867
        %v4871 = vadd.f32 %v4861, %v4868
        %v4872 = vld [vmem:[%s1214] sm:$0xfc]
        %v4873 = vld [vmem:[%s1214 + $0x8] sm:$0xfc]
        %v4874 = vld [vmem:[%s1214 + $0x20] sm:$0x3]
        %v4875 = vld [vmem:[%s1214 + $0x28] sm:$0x3]
        %s4876 = sld [smem:[#allocation7 + $0xf1]]
        %v4877 = vstv %s4876
        %v4878 = vmul.f32 %v4872, %v4877
        %v4879 = vmul.f32 %v4873, %v4877
        %v4880 = vmul.f32 %v4623, %v4877
        %v4881 = vmul.f32 %v4624, %v4877
        %v4882 = vmul.f32 %v4874, %v4877
        %v4883 = vmul.f32 %v4875, %v4877
        %4890 = vrot.lane.b32.xlu0 %v4878, 120
        %v4891 = vpop.permute.xlu0 %4890
        %4892 = vrot.lane.b32.xlu0 %v4879, 120
        %v4893 = vpop.permute.xlu0 %4892
        %4894 = vrot.lane.b32.xlu0 %v4880, 120
        %v4895 = vpop.permute.xlu0 %4894
        %4896 = vrot.lane.b32.xlu0 %v4881, 120
        %v4897 = vpop.permute.xlu0 %4896
        %4898 = vrot.lane.b32.xlu0 %v4882, 120
        %v4899 = vpop.permute.xlu0 %4898
        %4900 = vrot.lane.b32.xlu0 %v4883, 120
        %v4901 = vpop.permute.xlu0 %4900
        %v4902 = vsel %vm421, %v4891, %v4893
        %v4903 = vsel %vm421, %v4895, %v4897
        %v4904 = vsel %vm421, %v4899, %v4901
        %v4908 = vadd.f32 %v4869, %v4902
        %v4909 = vadd.f32 %v4870, %v4903
        %v4910 = vadd.f32 %v4871, %v4904
        %s4911 = sld [smem:[#allocation7 + $0xf2]]
        %v4912 = vstv %s4911
        %v4913 = vmul.f32 %v4872, %v4912
        %v4914 = vmul.f32 %v4873, %v4912
        %v4915 = vmul.f32 %v4623, %v4912
        %v4916 = vmul.f32 %v4624, %v4912
        %v4917 = vmul.f32 %v4874, %v4912
        %v4918 = vmul.f32 %v4875, %v4912
        %4925 = vrot.lane.b32.xlu0 %v4913, 112
        %v4926 = vpop.permute.xlu0 %4925
        %4927 = vrot.lane.b32.xlu0 %v4914, 112
        %v4928 = vpop.permute.xlu0 %4927
        %4929 = vrot.lane.b32.xlu0 %v4915, 112
        %v4930 = vpop.permute.xlu0 %4929
        %4931 = vrot.lane.b32.xlu0 %v4916, 112
        %v4932 = vpop.permute.xlu0 %4931
        %4933 = vrot.lane.b32.xlu0 %v4917, 112
        %v4934 = vpop.permute.xlu0 %4933
        %4935 = vrot.lane.b32.xlu0 %v4918, 112
        %v4936 = vpop.permute.xlu0 %4935
        %v4937 = vsel %vm446, %v4926, %v4928
        %v4938 = vsel %vm446, %v4930, %v4932
        %v4939 = vsel %vm446, %v4934, %v4936
        %v4943 = vadd.f32 %v4908, %v4937
        %v4944 = vadd.f32 %v4909, %v4938
        %v4945 = vadd.f32 %v4910, %v4939
        %v4949 = vrot.slane %v4694, 1
        %v4950 = vrot.slane %v4695, 1
        %v4951 = vsel %vm621, %v4949, %v4950
        %v4952 = vrot.slane %v4696, 1
        %v4953 = vsel %vm621, %v4950, %v4952
        %v4956 = vadd.f32 %v4437, %v4951
        %v4957 = vadd.f32 %v4438, %v4953
        %s4958 = sld [smem:[#allocation9 + $0xa]]
        %v4959 = vstv %s4958
        %v4960 = vadd.f32 %v4943, %v4959
        %v4961 = vadd.f32 %v4944, %v4959
        %v4962 = vadd.f32 %v4945, %v4959
        %v4966 = vrot.slane %v4960, 2
        %v4967 = vrot.slane %v4961, 2
        %v4968 = vsel %vm639, %v4966, %v4967
        %v4969 = vrot.slane %v4962, 2
        %v4970 = vsel %vm639, %v4967, %v4969
        %v4973 = vadd.f32 %v4956, %v4968
        %v4974 = vadd.f32 %v4957, %v4970
        %v4975 = vtanh.pop %v4973
        %v4976 = vtanh.pop %v4974
        %v4979 = vrot.slane %v4975, 7
        %v4980 = vrot.slane %v4976, 7
        %v4981 = vsel %vm368, %v4979, %v4980
        %4982 = vrot.lane.b32.xlu0 %v4979, 8
        %v4983 = vpop.permute.xlu0 %4982
        %4984 = vrot.lane.b32.xlu0 %v4981, 8
        %v4985 = vpop.permute.xlu0 %4984
        %4986 = vrot.lane.b32.xlu0 %v4980, 8
        %v4987 = vpop.permute.xlu0 %4986
        %s4991 = scalar_lea.vmem [#allocation4], 48
        %4992 = vst.msk [vmem:[%s4991] sm:$0xfe] %vm381, %v4983
        %4993 = vst.msk [vmem:[%s4991 + $0x8] sm:$0xfe] %vm383, %v4983
        %4994 = vst.msk [vmem:[%s4991 + $0x10] sm:$0xff] %vm385, %v4985
        %4995 = vst.msk [vmem:[%s4991 + $0x18] sm:$0xff] %vm387, %v4985
        %4996 = vst.msk [vmem:[%s4991 + $0x20] sm:$0x1] %vm389, %v4987
        %4997 = vst.msk [vmem:[%s4991 + $0x28] sm:$0x1] %vm391, %v4987
        %v4998 = vld [vmem:[#allocation3] sm:$0xff]
        %v4999 = vld [vmem:[#allocation3 + $0x10] sm:$0xff]
        %s5000 = sld [smem:[#allocation7 + $0xf3]]
        %v5001 = vstv %s5000
        %v5002 = vmul.f32 %v4998, %v5001
        %v5003 = vmul.f32 %v4999, %v5001
        %v5004 = vld [vmem:[#allocation3] sm:$0xff]
        %v5005 = vld [vmem:[#allocation3 + $0x8] sm:$0xff]
        %v5006 = vld [vmem:[#allocation3 + $0x10] sm:$0xff]
        %v5007 = vld [vmem:[#allocation3 + $0x18] sm:$0xff]
        %s5008 = sld [smem:[#allocation7 + $0xf4]]
        %v5009 = vstv %s5008
        %v5010 = vmul.f32 %v5004, %v5009
        %v5011 = vmul.f32 %v5005, %v5009
        %v5012 = vmul.f32 %v5006, %v5009
        %v5013 = vmul.f32 %v5007, %v5009
        %5018 = vrot.lane.b32.xlu0 %v5010, 120
        %v5019 = vpop.permute.xlu0 %5018
        %5020 = vrot.lane.b32.xlu0 %v5011, 120
        %v5021 = vpop.permute.xlu0 %5020
        %5022 = vrot.lane.b32.xlu0 %v5012, 120
        %v5023 = vpop.permute.xlu0 %5022
        %5024 = vrot.lane.b32.xlu0 %v5013, 120
        %v5025 = vpop.permute.xlu0 %5024
        %v5026 = vsel %vm421, %v5019, %v5021
        %v5027 = vsel %vm421, %v5023, %v5025
        %v5030 = vadd.f32 %v5002, %v5026
        %v5031 = vadd.f32 %v5003, %v5027
        %s5032 = sld [smem:[#allocation7 + $0xf5]]
        %v5033 = vstv %s5032
        %v5034 = vmul.f32 %v5004, %v5033
        %v5035 = vmul.f32 %v5005, %v5033
        %v5036 = vmul.f32 %v5006, %v5033
        %v5037 = vmul.f32 %v5007, %v5033
        %5042 = vrot.lane.b32.xlu0 %v5034, 112
        %v5043 = vpop.permute.xlu0 %5042
        %5044 = vrot.lane.b32.xlu0 %v5035, 112
        %v5045 = vpop.permute.xlu0 %5044
        %5046 = vrot.lane.b32.xlu0 %v5036, 112
        %v5047 = vpop.permute.xlu0 %5046
        %5048 = vrot.lane.b32.xlu0 %v5037, 112
        %v5049 = vpop.permute.xlu0 %5048
        %v5050 = vsel %vm446, %v5043, %v5045
        %v5051 = vsel %vm446, %v5047, %v5049
        %v5054 = vadd.f32 %v5030, %v5050
        %v5055 = vadd.f32 %v5031, %v5051
        %v5056 = vld [vmem:[%s939] sm:$0xff]
        %v5057 = vld [vmem:[%s939 + $0x10] sm:$0xff]
        %s5058 = sld [smem:[#allocation7 + $0xfc]]
        %v5059 = vstv %s5058
        %v5060 = vmul.f32 %v5056, %v5059
        %v5061 = vmul.f32 %v5057, %v5059
        %v5062 = vadd.f32 %v5054, %v5060
        %v5063 = vadd.f32 %v5055, %v5061
        %v5064 = vld [vmem:[%s939] sm:$0xff]
        %v5065 = vld [vmem:[%s939 + $0x8] sm:$0xff]
        %v5066 = vld [vmem:[%s939 + $0x10] sm:$0xff]
        %v5067 = vld [vmem:[%s939 + $0x18] sm:$0xff]
        %s5068 = sld [smem:[#allocation7 + $0xfd]]
        %v5069 = vstv %s5068
        %v5070 = vmul.f32 %v5064, %v5069
        %v5071 = vmul.f32 %v5065, %v5069
        %v5072 = vmul.f32 %v5066, %v5069
        %v5073 = vmul.f32 %v5067, %v5069
        %5078 = vrot.lane.b32.xlu0 %v5070, 120
        %v5079 = vpop.permute.xlu0 %5078
        %5080 = vrot.lane.b32.xlu0 %v5071, 120
        %v5081 = vpop.permute.xlu0 %5080
        %5082 = vrot.lane.b32.xlu0 %v5072, 120
        %v5083 = vpop.permute.xlu0 %5082
        %5084 = vrot.lane.b32.xlu0 %v5073, 120
        %v5085 = vpop.permute.xlu0 %5084
        %v5086 = vsel %vm421, %v5079, %v5081
        %v5087 = vsel %vm421, %v5083, %v5085
        %v5090 = vadd.f32 %v5062, %v5086
        %v5091 = vadd.f32 %v5063, %v5087
        %s5092 = sld [smem:[#allocation7 + $0xfe]]
        %v5093 = vstv %s5092
        %v5094 = vmul.f32 %v5064, %v5093
        %v5095 = vmul.f32 %v5065, %v5093
        %v5096 = vmul.f32 %v5066, %v5093
        %v5097 = vmul.f32 %v5067, %v5093
        %5102 = vrot.lane.b32.xlu0 %v5094, 112
        %v5103 = vpop.permute.xlu0 %5102
        %5104 = vrot.lane.b32.xlu0 %v5095, 112
        %v5105 = vpop.permute.xlu0 %5104
        %5106 = vrot.lane.b32.xlu0 %v5096, 112
        %v5107 = vpop.permute.xlu0 %5106
        %5108 = vrot.lane.b32.xlu0 %v5097, 112
        %v5109 = vpop.permute.xlu0 %5108
        %v5110 = vsel %vm446, %v5103, %v5105
        %v5111 = vsel %vm446, %v5107, %v5109
        %v5114 = vadd.f32 %v5090, %v5110
        %v5115 = vadd.f32 %v5091, %v5111
        %v5116 = vld [vmem:[%s1214] sm:$0xff]
        %v5117 = vld [vmem:[%s1214 + $0x10] sm:$0xff]
        %s5118 = sld [smem:[#allocation7 + $0x105]]
        %v5119 = vstv %s5118
        %v5120 = vmul.f32 %v5116, %v5119
        %v5121 = vmul.f32 %v5117, %v5119
        %v5122 = vadd.f32 %v5114, %v5120
        %v5123 = vadd.f32 %v5115, %v5121
        %v5124 = vld [vmem:[%s1214] sm:$0xff]
        %v5125 = vld [vmem:[%s1214 + $0x8] sm:$0xff]
        %v5126 = vld [vmem:[%s1214 + $0x10] sm:$0xff]
        %v5127 = vld [vmem:[%s1214 + $0x18] sm:$0xff]
        %s5128 = sld [smem:[#allocation7 + $0x106]]
        %v5129 = vstv %s5128
        %v5130 = vmul.f32 %v5124, %v5129
        %v5131 = vmul.f32 %v5125, %v5129
        %v5132 = vmul.f32 %v5126, %v5129
        %v5133 = vmul.f32 %v5127, %v5129
        %5138 = vrot.lane.b32.xlu0 %v5130, 120
        %v5139 = vpop.permute.xlu0 %5138
        %5140 = vrot.lane.b32.xlu0 %v5131, 120
        %v5141 = vpop.permute.xlu0 %5140
        %5142 = vrot.lane.b32.xlu0 %v5132, 120
        %v5143 = vpop.permute.xlu0 %5142
        %5144 = vrot.lane.b32.xlu0 %v5133, 120
        %v5145 = vpop.permute.xlu0 %5144
        %v5146 = vsel %vm421, %v5139, %v5141
        %v5147 = vsel %vm421, %v5143, %v5145
        %v5150 = vadd.f32 %v5122, %v5146
        %v5151 = vadd.f32 %v5123, %v5147
        %s5152 = sld [smem:[#allocation7 + $0x107]]
        %v5153 = vstv %s5152
        %v5154 = vmul.f32 %v5124, %v5153
        %v5155 = vmul.f32 %v5125, %v5153
        %v5156 = vmul.f32 %v5126, %v5153
        %v5157 = vmul.f32 %v5127, %v5153
        %5162 = vrot.lane.b32.xlu0 %v5154, 112
        %v5163 = vpop.permute.xlu0 %5162
        %5164 = vrot.lane.b32.xlu0 %v5155, 112
        %v5165 = vpop.permute.xlu0 %5164
        %5166 = vrot.lane.b32.xlu0 %v5156, 112
        %v5167 = vpop.permute.xlu0 %5166
        %5168 = vrot.lane.b32.xlu0 %v5157, 112
        %v5169 = vpop.permute.xlu0 %5168
        %v5170 = vsel %vm446, %v5163, %v5165
        %v5171 = vsel %vm446, %v5167, %v5169
        %v5174 = vadd.f32 %v5150, %v5170
        %v5175 = vadd.f32 %v5151, %v5171
        %v5176 = vld [vmem:[#allocation3] sm:$0xfe]
        %v5177 = vld [vmem:[#allocation3 + $0x10] sm:$0xff]
        %v5178 = vld [vmem:[#allocation3 + $0x20] sm:$0x1]
        %s5179 = sld [smem:[#allocation7 + $0xf6]]
        %v5180 = vstv %s5179
        %v5181 = vmul.f32 %v5176, %v5180
        %v5182 = vmul.f32 %v5177, %v5180
        %v5183 = vmul.f32 %v5178, %v5180
        %v5184 = vld [vmem:[#allocation3] sm:$0xfe]
        %v5185 = vld [vmem:[#allocation3 + $0x8] sm:$0xfe]
        %v5186 = vld [vmem:[#allocation3 + $0x10] sm:$0xff]
        %v5187 = vld [vmem:[#allocation3 + $0x18] sm:$0xff]
        %v5188 = vld [vmem:[#allocation3 + $0x20] sm:$0x1]
        %v5189 = vld [vmem:[#allocation3 + $0x28] sm:$0x1]
        %s5190 = sld [smem:[#allocation7 + $0xf7]]
        %v5191 = vstv %s5190
        %v5192 = vmul.f32 %v5184, %v5191
        %v5193 = vmul.f32 %v5185, %v5191
        %v5194 = vmul.f32 %v5186, %v5191
        %v5195 = vmul.f32 %v5187, %v5191
        %v5196 = vmul.f32 %v5188, %v5191
        %v5197 = vmul.f32 %v5189, %v5191
        %5204 = vrot.lane.b32.xlu0 %v5192, 120
        %v5205 = vpop.permute.xlu0 %5204
        %5206 = vrot.lane.b32.xlu0 %v5193, 120
        %v5207 = vpop.permute.xlu0 %5206
        %5208 = vrot.lane.b32.xlu0 %v5194, 120
        %v5209 = vpop.permute.xlu0 %5208
        %5210 = vrot.lane.b32.xlu0 %v5195, 120
        %v5211 = vpop.permute.xlu0 %5210
        %5212 = vrot.lane.b32.xlu0 %v5196, 120
        %v5213 = vpop.permute.xlu0 %5212
        %5214 = vrot.lane.b32.xlu0 %v5197, 120
        %v5215 = vpop.permute.xlu0 %5214
        %v5216 = vsel %vm421, %v5205, %v5207
        %v5217 = vsel %vm421, %v5209, %v5211
        %v5218 = vsel %vm421, %v5213, %v5215
        %v5222 = vadd.f32 %v5181, %v5216
        %v5223 = vadd.f32 %v5182, %v5217
        %v5224 = vadd.f32 %v5183, %v5218
        %s5225 = sld [smem:[#allocation7 + $0xf8]]
        %v5226 = vstv %s5225
        %v5227 = vmul.f32 %v5184, %v5226
        %v5228 = vmul.f32 %v5185, %v5226
        %v5229 = vmul.f32 %v5186, %v5226
        %v5230 = vmul.f32 %v5187, %v5226
        %v5231 = vmul.f32 %v5188, %v5226
        %v5232 = vmul.f32 %v5189, %v5226
        %5239 = vrot.lane.b32.xlu0 %v5227, 112
        %v5240 = vpop.permute.xlu0 %5239
        %5241 = vrot.lane.b32.xlu0 %v5228, 112
        %v5242 = vpop.permute.xlu0 %5241
        %5243 = vrot.lane.b32.xlu0 %v5229, 112
        %v5244 = vpop.permute.xlu0 %5243
        %5245 = vrot.lane.b32.xlu0 %v5230, 112
        %v5246 = vpop.permute.xlu0 %5245
        %5247 = vrot.lane.b32.xlu0 %v5231, 112
        %v5248 = vpop.permute.xlu0 %5247
        %5249 = vrot.lane.b32.xlu0 %v5232, 112
        %v5250 = vpop.permute.xlu0 %5249
        %v5251 = vsel %vm446, %v5240, %v5242
        %v5252 = vsel %vm446, %v5244, %v5246
        %v5253 = vsel %vm446, %v5248, %v5250
        %v5257 = vadd.f32 %v5222, %v5251
        %v5258 = vadd.f32 %v5223, %v5252
        %v5259 = vadd.f32 %v5224, %v5253
        %v5260 = vld [vmem:[%s939] sm:$0xfe]
        %v5261 = vld [vmem:[%s939 + $0x10] sm:$0xff]
        %v5262 = vld [vmem:[%s939 + $0x20] sm:$0x1]
        %s5263 = sld [smem:[#allocation7 + $0xff]]
        %v5264 = vstv %s5263
        %v5265 = vmul.f32 %v5260, %v5264
        %v5266 = vmul.f32 %v5261, %v5264
        %v5267 = vmul.f32 %v5262, %v5264
        %v5268 = vadd.f32 %v5257, %v5265
        %v5269 = vadd.f32 %v5258, %v5266
        %v5270 = vadd.f32 %v5259, %v5267
        %v5271 = vld [vmem:[%s939] sm:$0xfe]
        %v5272 = vld [vmem:[%s939 + $0x8] sm:$0xfe]
        %v5273 = vld [vmem:[%s939 + $0x10] sm:$0xff]
        %v5274 = vld [vmem:[%s939 + $0x18] sm:$0xff]
        %v5275 = vld [vmem:[%s939 + $0x20] sm:$0x1]
        %v5276 = vld [vmem:[%s939 + $0x28] sm:$0x1]
        %s5277 = sld [smem:[#allocation7 + $0x100]]
        %v5278 = vstv %s5277
        %v5279 = vmul.f32 %v5271, %v5278
        %v5280 = vmul.f32 %v5272, %v5278
        %v5281 = vmul.f32 %v5273, %v5278
        %v5282 = vmul.f32 %v5274, %v5278
        %v5283 = vmul.f32 %v5275, %v5278
        %v5284 = vmul.f32 %v5276, %v5278
        %5291 = vrot.lane.b32.xlu0 %v5279, 120
        %v5292 = vpop.permute.xlu0 %5291
        %5293 = vrot.lane.b32.xlu0 %v5280, 120
        %v5294 = vpop.permute.xlu0 %5293
        %5295 = vrot.lane.b32.xlu0 %v5281, 120
        %v5296 = vpop.permute.xlu0 %5295
        %5297 = vrot.lane.b32.xlu0 %v5282, 120
        %v5298 = vpop.permute.xlu0 %5297
        %5299 = vrot.lane.b32.xlu0 %v5283, 120
        %v5300 = vpop.permute.xlu0 %5299
        %5301 = vrot.lane.b32.xlu0 %v5284, 120
        %v5302 = vpop.permute.xlu0 %5301
        %v5303 = vsel %vm421, %v5292, %v5294
        %v5304 = vsel %vm421, %v5296, %v5298
        %v5305 = vsel %vm421, %v5300, %v5302
        %v5309 = vadd.f32 %v5268, %v5303
        %v5310 = vadd.f32 %v5269, %v5304
        %v5311 = vadd.f32 %v5270, %v5305
        %s5312 = sld [smem:[#allocation7 + $0x101]]
        %v5313 = vstv %s5312
        %v5314 = vmul.f32 %v5271, %v5313
        %v5315 = vmul.f32 %v5272, %v5313
        %v5316 = vmul.f32 %v5273, %v5313
        %v5317 = vmul.f32 %v5274, %v5313
        %v5318 = vmul.f32 %v5275, %v5313
        %v5319 = vmul.f32 %v5276, %v5313
        %5326 = vrot.lane.b32.xlu0 %v5314, 112
        %v5327 = vpop.permute.xlu0 %5326
        %5328 = vrot.lane.b32.xlu0 %v5315, 112
        %v5329 = vpop.permute.xlu0 %5328
        %5330 = vrot.lane.b32.xlu0 %v5316, 112
        %v5331 = vpop.permute.xlu0 %5330
        %5332 = vrot.lane.b32.xlu0 %v5317, 112
        %v5333 = vpop.permute.xlu0 %5332
        %5334 = vrot.lane.b32.xlu0 %v5318, 112
        %v5335 = vpop.permute.xlu0 %5334
        %5336 = vrot.lane.b32.xlu0 %v5319, 112
        %v5337 = vpop.permute.xlu0 %5336
        %v5338 = vsel %vm446, %v5327, %v5329
        %v5339 = vsel %vm446, %v5331, %v5333
        %v5340 = vsel %vm446, %v5335, %v5337
        %v5344 = vadd.f32 %v5309, %v5338
        %v5345 = vadd.f32 %v5310, %v5339
        %v5346 = vadd.f32 %v5311, %v5340
        %v5347 = vld [vmem:[%s1214] sm:$0xfe]
        %v5348 = vld [vmem:[%s1214 + $0x10] sm:$0xff]
        %v5349 = vld [vmem:[%s1214 + $0x20] sm:$0x1]
        %s5350 = sld [smem:[#allocation7 + $0x108]]
        %v5351 = vstv %s5350
        %v5352 = vmul.f32 %v5347, %v5351
        %v5353 = vmul.f32 %v5348, %v5351
        %v5354 = vmul.f32 %v5349, %v5351
        %v5355 = vadd.f32 %v5344, %v5352
        %v5356 = vadd.f32 %v5345, %v5353
        %v5357 = vadd.f32 %v5346, %v5354
        %v5358 = vld [vmem:[%s1214] sm:$0xfe]
        %v5359 = vld [vmem:[%s1214 + $0x8] sm:$0xfe]
        %v5360 = vld [vmem:[%s1214 + $0x10] sm:$0xff]
        %v5361 = vld [vmem:[%s1214 + $0x18] sm:$0xff]
        %v5362 = vld [vmem:[%s1214 + $0x20] sm:$0x1]
        %v5363 = vld [vmem:[%s1214 + $0x28] sm:$0x1]
        %s5364 = sld [smem:[#allocation7 + $0x109]]
        %v5365 = vstv %s5364
        %v5366 = vmul.f32 %v5358, %v5365
        %v5367 = vmul.f32 %v5359, %v5365
        %v5368 = vmul.f32 %v5360, %v5365
        %v5369 = vmul.f32 %v5361, %v5365
        %v5370 = vmul.f32 %v5362, %v5365
        %v5371 = vmul.f32 %v5363, %v5365
        %5378 = vrot.lane.b32.xlu0 %v5366, 120
        %v5379 = vpop.permute.xlu0 %5378
        %5380 = vrot.lane.b32.xlu0 %v5367, 120
        %v5381 = vpop.permute.xlu0 %5380
        %5382 = vrot.lane.b32.xlu0 %v5368, 120
        %v5383 = vpop.permute.xlu0 %5382
        %5384 = vrot.lane.b32.xlu0 %v5369, 120
        %v5385 = vpop.permute.xlu0 %5384
        %5386 = vrot.lane.b32.xlu0 %v5370, 120
        %v5387 = vpop.permute.xlu0 %5386
        %5388 = vrot.lane.b32.xlu0 %v5371, 120
        %v5389 = vpop.permute.xlu0 %5388
        %v5390 = vsel %vm421, %v5379, %v5381
        %v5391 = vsel %vm421, %v5383, %v5385
        %v5392 = vsel %vm421, %v5387, %v5389
        %v5396 = vadd.f32 %v5355, %v5390
        %v5397 = vadd.f32 %v5356, %v5391
        %v5398 = vadd.f32 %v5357, %v5392
        %s5399 = sld [smem:[#allocation7 + $0x10a]]
        %v5400 = vstv %s5399
        %v5401 = vmul.f32 %v5358, %v5400
        %v5402 = vmul.f32 %v5359, %v5400
        %v5403 = vmul.f32 %v5360, %v5400
        %v5404 = vmul.f32 %v5361, %v5400
        %v5405 = vmul.f32 %v5362, %v5400
        %v5406 = vmul.f32 %v5363, %v5400
        %5413 = vrot.lane.b32.xlu0 %v5401, 112
        %v5414 = vpop.permute.xlu0 %5413
        %5415 = vrot.lane.b32.xlu0 %v5402, 112
        %v5416 = vpop.permute.xlu0 %5415
        %5417 = vrot.lane.b32.xlu0 %v5403, 112
        %v5418 = vpop.permute.xlu0 %5417
        %5419 = vrot.lane.b32.xlu0 %v5404, 112
        %v5420 = vpop.permute.xlu0 %5419
        %5421 = vrot.lane.b32.xlu0 %v5405, 112
        %v5422 = vpop.permute.xlu0 %5421
        %5423 = vrot.lane.b32.xlu0 %v5406, 112
        %v5424 = vpop.permute.xlu0 %5423
        %v5425 = vsel %vm446, %v5414, %v5416
        %v5426 = vsel %vm446, %v5418, %v5420
        %v5427 = vsel %vm446, %v5422, %v5424
        %v5431 = vadd.f32 %v5396, %v5425
        %v5432 = vadd.f32 %v5397, %v5426
        %v5433 = vadd.f32 %v5398, %v5427
        %v5434 = vld [vmem:[#allocation3] sm:$0xfc]
        %v5435 = vld [vmem:[#allocation3 + $0x20] sm:$0x3]
        %s5436 = sld [smem:[#allocation7 + $0xf9]]
        %v5437 = vstv %s5436
        %v5438 = vmul.f32 %v5434, %v5437
        %v5439 = vmul.f32 %v5177, %v5437
        %v5440 = vmul.f32 %v5435, %v5437
        %v5441 = vld [vmem:[#allocation3] sm:$0xfc]
        %v5442 = vld [vmem:[#allocation3 + $0x8] sm:$0xfc]
        %v5443 = vld [vmem:[#allocation3 + $0x20] sm:$0x3]
        %v5444 = vld [vmem:[#allocation3 + $0x28] sm:$0x3]
        %s5445 = sld [smem:[#allocation7 + $0xfa]]
        %v5446 = vstv %s5445
        %v5447 = vmul.f32 %v5441, %v5446
        %v5448 = vmul.f32 %v5442, %v5446
        %v5449 = vmul.f32 %v5186, %v5446
        %v5450 = vmul.f32 %v5187, %v5446
        %v5451 = vmul.f32 %v5443, %v5446
        %v5452 = vmul.f32 %v5444, %v5446
        %5459 = vrot.lane.b32.xlu0 %v5447, 120
        %v5460 = vpop.permute.xlu0 %5459
        %5461 = vrot.lane.b32.xlu0 %v5448, 120
        %v5462 = vpop.permute.xlu0 %5461
        %5463 = vrot.lane.b32.xlu0 %v5449, 120
        %v5464 = vpop.permute.xlu0 %5463
        %5465 = vrot.lane.b32.xlu0 %v5450, 120
        %v5466 = vpop.permute.xlu0 %5465
        %5467 = vrot.lane.b32.xlu0 %v5451, 120
        %v5468 = vpop.permute.xlu0 %5467
        %5469 = vrot.lane.b32.xlu0 %v5452, 120
        %v5470 = vpop.permute.xlu0 %5469
        %v5471 = vsel %vm421, %v5460, %v5462
        %v5472 = vsel %vm421, %v5464, %v5466
        %v5473 = vsel %vm421, %v5468, %v5470
        %v5477 = vadd.f32 %v5438, %v5471
        %v5478 = vadd.f32 %v5439, %v5472
        %v5479 = vadd.f32 %v5440, %v5473
        %s5480 = sld [smem:[#allocation7 + $0xfb]]
        %v5481 = vstv %s5480
        %v5482 = vmul.f32 %v5441, %v5481
        %v5483 = vmul.f32 %v5442, %v5481
        %v5484 = vmul.f32 %v5186, %v5481
        %v5485 = vmul.f32 %v5187, %v5481
        %v5486 = vmul.f32 %v5443, %v5481
        %v5487 = vmul.f32 %v5444, %v5481
        %5494 = vrot.lane.b32.xlu0 %v5482, 112
        %v5495 = vpop.permute.xlu0 %5494
        %5496 = vrot.lane.b32.xlu0 %v5483, 112
        %v5497 = vpop.permute.xlu0 %5496
        %5498 = vrot.lane.b32.xlu0 %v5484, 112
        %v5499 = vpop.permute.xlu0 %5498
        %5500 = vrot.lane.b32.xlu0 %v5485, 112
        %v5501 = vpop.permute.xlu0 %5500
        %5502 = vrot.lane.b32.xlu0 %v5486, 112
        %v5503 = vpop.permute.xlu0 %5502
        %5504 = vrot.lane.b32.xlu0 %v5487, 112
        %v5505 = vpop.permute.xlu0 %5504
        %v5506 = vsel %vm446, %v5495, %v5497
        %v5507 = vsel %vm446, %v5499, %v5501
        %v5508 = vsel %vm446, %v5503, %v5505
        %v5512 = vadd.f32 %v5477, %v5506
        %v5513 = vadd.f32 %v5478, %v5507
        %v5514 = vadd.f32 %v5479, %v5508
        %v5515 = vld [vmem:[%s939] sm:$0xfc]
        %v5516 = vld [vmem:[%s939 + $0x20] sm:$0x3]
        %s5517 = sld [smem:[#allocation7 + $0x102]]
        %v5518 = vstv %s5517
        %v5519 = vmul.f32 %v5515, %v5518
        %v5520 = vmul.f32 %v5261, %v5518
        %v5521 = vmul.f32 %v5516, %v5518
        %v5522 = vadd.f32 %v5512, %v5519
        %v5523 = vadd.f32 %v5513, %v5520
        %v5524 = vadd.f32 %v5514, %v5521
        %v5525 = vld [vmem:[%s939] sm:$0xfc]
        %v5526 = vld [vmem:[%s939 + $0x8] sm:$0xfc]
        %v5527 = vld [vmem:[%s939 + $0x20] sm:$0x3]
        %v5528 = vld [vmem:[%s939 + $0x28] sm:$0x3]
        %s5529 = sld [smem:[#allocation7 + $0x103]]
        %v5530 = vstv %s5529
        %v5531 = vmul.f32 %v5525, %v5530
        %v5532 = vmul.f32 %v5526, %v5530
        %v5533 = vmul.f32 %v5273, %v5530
        %v5534 = vmul.f32 %v5274, %v5530
        %v5535 = vmul.f32 %v5527, %v5530
        %v5536 = vmul.f32 %v5528, %v5530
        %5543 = vrot.lane.b32.xlu0 %v5531, 120
        %v5544 = vpop.permute.xlu0 %5543
        %5545 = vrot.lane.b32.xlu0 %v5532, 120
        %v5546 = vpop.permute.xlu0 %5545
        %5547 = vrot.lane.b32.xlu0 %v5533, 120
        %v5548 = vpop.permute.xlu0 %5547
        %5549 = vrot.lane.b32.xlu0 %v5534, 120
        %v5550 = vpop.permute.xlu0 %5549
        %5551 = vrot.lane.b32.xlu0 %v5535, 120
        %v5552 = vpop.permute.xlu0 %5551
        %5553 = vrot.lane.b32.xlu0 %v5536, 120
        %v5554 = vpop.permute.xlu0 %5553
        %v5555 = vsel %vm421, %v5544, %v5546
        %v5556 = vsel %vm421, %v5548, %v5550
        %v5557 = vsel %vm421, %v5552, %v5554
        %v5561 = vadd.f32 %v5522, %v5555
        %v5562 = vadd.f32 %v5523, %v5556
        %v5563 = vadd.f32 %v5524, %v5557
        %s5564 = sld [smem:[#allocation7 + $0x104]]
        %v5565 = vstv %s5564
        %v5566 = vmul.f32 %v5525, %v5565
        %v5567 = vmul.f32 %v5526, %v5565
        %v5568 = vmul.f32 %v5273, %v5565
        %v5569 = vmul.f32 %v5274, %v5565
        %v5570 = vmul.f32 %v5527, %v5565
        %v5571 = vmul.f32 %v5528, %v5565
        %5578 = vrot.lane.b32.xlu0 %v5566, 112
        %v5579 = vpop.permute.xlu0 %5578
        %5580 = vrot.lane.b32.xlu0 %v5567, 112
        %v5581 = vpop.permute.xlu0 %5580
        %5582 = vrot.lane.b32.xlu0 %v5568, 112
        %v5583 = vpop.permute.xlu0 %5582
        %5584 = vrot.lane.b32.xlu0 %v5569, 112
        %v5585 = vpop.permute.xlu0 %5584
        %5586 = vrot.lane.b32.xlu0 %v5570, 112
        %v5587 = vpop.permute.xlu0 %5586
        %5588 = vrot.lane.b32.xlu0 %v5571, 112
        %v5589 = vpop.permute.xlu0 %5588
        %v5590 = vsel %vm446, %v5579, %v5581
        %v5591 = vsel %vm446, %v5583, %v5585
        %v5592 = vsel %vm446, %v5587, %v5589
        %v5596 = vadd.f32 %v5561, %v5590
        %v5597 = vadd.f32 %v5562, %v5591
        %v5598 = vadd.f32 %v5563, %v5592
        %v5599 = vld [vmem:[%s1214] sm:$0xfc]
        %v5600 = vld [vmem:[%s1214 + $0x20] sm:$0x3]
        %s5601 = sld [smem:[#allocation7 + $0x10b]]
        %v5602 = vstv %s5601
        %v5603 = vmul.f32 %v5599, %v5602
        %v5604 = vmul.f32 %v5348, %v5602
        %v5605 = vmul.f32 %v5600, %v5602
        %v5606 = vadd.f32 %v5596, %v5603
        %v5607 = vadd.f32 %v5597, %v5604
        %v5608 = vadd.f32 %v5598, %v5605
        %v5609 = vld [vmem:[%s1214] sm:$0xfc]
        %v5610 = vld [vmem:[%s1214 + $0x8] sm:$0xfc]
        %v5611 = vld [vmem:[%s1214 + $0x20] sm:$0x3]
        %v5612 = vld [vmem:[%s1214 + $0x28] sm:$0x3]
        %s5613 = sld [smem:[#allocation7 + $0x10c]]
        %v5614 = vstv %s5613
        %v5615 = vmul.f32 %v5609, %v5614
        %v5616 = vmul.f32 %v5610, %v5614
        %v5617 = vmul.f32 %v5360, %v5614
        %v5618 = vmul.f32 %v5361, %v5614
        %v5619 = vmul.f32 %v5611, %v5614
        %v5620 = vmul.f32 %v5612, %v5614
        %5627 = vrot.lane.b32.xlu0 %v5615, 120
        %v5628 = vpop.permute.xlu0 %5627
        %5629 = vrot.lane.b32.xlu0 %v5616, 120
        %v5630 = vpop.permute.xlu0 %5629
        %5631 = vrot.lane.b32.xlu0 %v5617, 120
        %v5632 = vpop.permute.xlu0 %5631
        %5633 = vrot.lane.b32.xlu0 %v5618, 120
        %v5634 = vpop.permute.xlu0 %5633
        %5635 = vrot.lane.b32.xlu0 %v5619, 120
        %v5636 = vpop.permute.xlu0 %5635
        %5637 = vrot.lane.b32.xlu0 %v5620, 120
        %v5638 = vpop.permute.xlu0 %5637
        %v5639 = vsel %vm421, %v5628, %v5630
        %v5640 = vsel %vm421, %v5632, %v5634
        %v5641 = vsel %vm421, %v5636, %v5638
        %v5645 = vadd.f32 %v5606, %v5639
        %v5646 = vadd.f32 %v5607, %v5640
        %v5647 = vadd.f32 %v5608, %v5641
        %s5648 = sld [smem:[#allocation7 + $0x10d]]
        %v5649 = vstv %s5648
        %v5650 = vmul.f32 %v5609, %v5649
        %v5651 = vmul.f32 %v5610, %v5649
        %v5652 = vmul.f32 %v5360, %v5649
        %v5653 = vmul.f32 %v5361, %v5649
        %v5654 = vmul.f32 %v5611, %v5649
        %v5655 = vmul.f32 %v5612, %v5649
        %5662 = vrot.lane.b32.xlu0 %v5650, 112
        %v5663 = vpop.permute.xlu0 %5662
        %5664 = vrot.lane.b32.xlu0 %v5651, 112
        %v5665 = vpop.permute.xlu0 %5664
        %5666 = vrot.lane.b32.xlu0 %v5652, 112
        %v5667 = vpop.permute.xlu0 %5666
        %5668 = vrot.lane.b32.xlu0 %v5653, 112
        %v5669 = vpop.permute.xlu0 %5668
        %5670 = vrot.lane.b32.xlu0 %v5654, 112
        %v5671 = vpop.permute.xlu0 %5670
        %5672 = vrot.lane.b32.xlu0 %v5655, 112
        %v5673 = vpop.permute.xlu0 %5672
        %v5674 = vsel %vm446, %v5663, %v5665
        %v5675 = vsel %vm446, %v5667, %v5669
        %v5676 = vsel %vm446, %v5671, %v5673
        %v5680 = vadd.f32 %v5645, %v5674
        %v5681 = vadd.f32 %v5646, %v5675
        %v5682 = vadd.f32 %v5647, %v5676
        %v5686 = vrot.slane %v5431, 1
        %v5687 = vrot.slane %v5432, 1
        %v5688 = vsel %vm621, %v5686, %v5687
        %v5689 = vrot.slane %v5433, 1
        %v5690 = vsel %vm621, %v5687, %v5689
        %v5693 = vadd.f32 %v5174, %v5688
        %v5694 = vadd.f32 %v5175, %v5690
        %s5695 = sld [smem:[#allocation9 + $0xb]]
        %v5696 = vstv %s5695
        %v5697 = vadd.f32 %v5680, %v5696
        %v5698 = vadd.f32 %v5681, %v5696
        %v5699 = vadd.f32 %v5682, %v5696
        %v5703 = vrot.slane %v5697, 2
        %v5704 = vrot.slane %v5698, 2
        %v5705 = vsel %vm639, %v5703, %v5704
        %v5706 = vrot.slane %v5699, 2
        %v5707 = vsel %vm639, %v5704, %v5706
        %v5710 = vadd.f32 %v5693, %v5705
        %v5711 = vadd.f32 %v5694, %v5707
        %v5712 = vtanh.pop %v5710
        %v5713 = vtanh.pop %v5711
        %v5716 = vrot.slane %v5712, 7
        %v5717 = vrot.slane %v5713, 7
        %v5718 = vsel %vm368, %v5716, %v5717
        %5719 = vrot.lane.b32.xlu0 %v5716, 8
        %v5720 = vpop.permute.xlu0 %5719
        %5721 = vrot.lane.b32.xlu0 %v5718, 8
        %v5722 = vpop.permute.xlu0 %5721
        %5723 = vrot.lane.b32.xlu0 %v5717, 8
        %v5724 = vpop.permute.xlu0 %5723
        %s5728 = scalar_lea.vmem [#allocation4], 96
        %5729 = vst.msk [vmem:[%s5728] sm:$0xfe] %vm381, %v5720
        %5730 = vst.msk [vmem:[%s5728 + $0x8] sm:$0xfe] %vm383, %v5720
        %5731 = vst.msk [vmem:[%s5728 + $0x10] sm:$0xff] %vm385, %v5722
        %5732 = vst.msk [vmem:[%s5728 + $0x18] sm:$0xff] %vm387, %v5722
        %5733 = vst.msk [vmem:[%s5728 + $0x20] sm:$0x1] %vm389, %v5724
        %5734 = vst.msk [vmem:[%s5728 + $0x28] sm:$0x1] %vm391, %v5724
        %v5735 = vld [vmem:[#allocation4] sm:$0xff]
        %v5736 = vld [vmem:[#allocation4 + $0x10] sm:$0xff]
        %s5737 = sld [smem:[#allocation7 + $0x10e]]
        %v5738 = vstv %s5737
        %v5739 = vmul.f32 %v5735, %v5738
        %v5740 = vmul.f32 %v5736, %v5738
        %v5741 = vld [vmem:[#allocation4] sm:$0xff]
        %v5742 = vld [vmem:[#allocation4 + $0x8] sm:$0xff]
        %v5743 = vld [vmem:[#allocation4 + $0x10] sm:$0xff]
        %v5744 = vld [vmem:[#allocation4 + $0x18] sm:$0xff]
        %s5745 = sld [smem:[#allocation7 + $0x10f]]
        %v5746 = vstv %s5745
        %v5747 = vmul.f32 %v5741, %v5746
        %v5748 = vmul.f32 %v5742, %v5746
        %v5749 = vmul.f32 %v5743, %v5746
        %v5750 = vmul.f32 %v5744, %v5746
        %5755 = vrot.lane.b32.xlu0 %v5747, 120
        %v5756 = vpop.permute.xlu0 %5755
        %5757 = vrot.lane.b32.xlu0 %v5748, 120
        %v5758 = vpop.permute.xlu0 %5757
        %5759 = vrot.lane.b32.xlu0 %v5749, 120
        %v5760 = vpop.permute.xlu0 %5759
        %5761 = vrot.lane.b32.xlu0 %v5750, 120
        %v5762 = vpop.permute.xlu0 %5761
        %v5763 = vsel %vm421, %v5756, %v5758
        %v5764 = vsel %vm421, %v5760, %v5762
        %v5767 = vadd.f32 %v5739, %v5763
        %v5768 = vadd.f32 %v5740, %v5764
        %s5769 = sld [smem:[#allocation7 + $0x110]]
        %v5770 = vstv %s5769
        %v5771 = vmul.f32 %v5741, %v5770
        %v5772 = vmul.f32 %v5742, %v5770
        %v5773 = vmul.f32 %v5743, %v5770
        %v5774 = vmul.f32 %v5744, %v5770
        %5779 = vrot.lane.b32.xlu0 %v5771, 112
        %v5780 = vpop.permute.xlu0 %5779
        %5781 = vrot.lane.b32.xlu0 %v5772, 112
        %v5782 = vpop.permute.xlu0 %5781
        %5783 = vrot.lane.b32.xlu0 %v5773, 112
        %v5784 = vpop.permute.xlu0 %5783
        %5785 = vrot.lane.b32.xlu0 %v5774, 112
        %v5786 = vpop.permute.xlu0 %5785
        %v5787 = vsel %vm446, %v5780, %v5782
        %v5788 = vsel %vm446, %v5784, %v5786
        %v5791 = vadd.f32 %v5767, %v5787
        %v5792 = vadd.f32 %v5768, %v5788
        %v5793 = vld [vmem:[%s4991] sm:$0xff]
        %v5794 = vld [vmem:[%s4991 + $0x10] sm:$0xff]
        %s5795 = sld [smem:[#allocation7 + $0x117]]
        %v5796 = vstv %s5795
        %v5797 = vmul.f32 %v5793, %v5796
        %v5798 = vmul.f32 %v5794, %v5796
        %v5799 = vadd.f32 %v5791, %v5797
        %v5800 = vadd.f32 %v5792, %v5798
        %v5801 = vld [vmem:[%s4991] sm:$0xff]
        %v5802 = vld [vmem:[%s4991 + $0x8] sm:$0xff]
        %v5803 = vld [vmem:[%s4991 + $0x10] sm:$0xff]
        %v5804 = vld [vmem:[%s4991 + $0x18] sm:$0xff]
        %s5805 = sld [smem:[#allocation7 + $0x118]]
        %v5806 = vstv %s5805
        %v5807 = vmul.f32 %v5801, %v5806
        %v5808 = vmul.f32 %v5802, %v5806
        %v5809 = vmul.f32 %v5803, %v5806
        %v5810 = vmul.f32 %v5804, %v5806
        %5815 = vrot.lane.b32.xlu0 %v5807, 120
        %v5816 = vpop.permute.xlu0 %5815
        %5817 = vrot.lane.b32.xlu0 %v5808, 120
        %v5818 = vpop.permute.xlu0 %5817
        %5819 = vrot.lane.b32.xlu0 %v5809, 120
        %v5820 = vpop.permute.xlu0 %5819
        %5821 = vrot.lane.b32.xlu0 %v5810, 120
        %v5822 = vpop.permute.xlu0 %5821
        %v5823 = vsel %vm421, %v5816, %v5818
        %v5824 = vsel %vm421, %v5820, %v5822
        %v5827 = vadd.f32 %v5799, %v5823
        %v5828 = vadd.f32 %v5800, %v5824
        %s5829 = sld [smem:[#allocation7 + $0x119]]
        %v5830 = vstv %s5829
        %v5831 = vmul.f32 %v5801, %v5830
        %v5832 = vmul.f32 %v5802, %v5830
        %v5833 = vmul.f32 %v5803, %v5830
        %v5834 = vmul.f32 %v5804, %v5830
        %5839 = vrot.lane.b32.xlu0 %v5831, 112
        %v5840 = vpop.permute.xlu0 %5839
        %5841 = vrot.lane.b32.xlu0 %v5832, 112
        %v5842 = vpop.permute.xlu0 %5841
        %5843 = vrot.lane.b32.xlu0 %v5833, 112
        %v5844 = vpop.permute.xlu0 %5843
        %5845 = vrot.lane.b32.xlu0 %v5834, 112
        %v5846 = vpop.permute.xlu0 %5845
        %v5847 = vsel %vm446, %v5840, %v5842
        %v5848 = vsel %vm446, %v5844, %v5846
        %v5851 = vadd.f32 %v5827, %v5847
        %v5852 = vadd.f32 %v5828, %v5848
        %v5853 = vld [vmem:[%s5728] sm:$0xff]
        %v5854 = vld [vmem:[%s5728 + $0x10] sm:$0xff]
        %s5855 = sld [smem:[#allocation7 + $0x120]]
        %v5856 = vstv %s5855
        %v5857 = vmul.f32 %v5853, %v5856
        %v5858 = vmul.f32 %v5854, %v5856
        %v5859 = vadd.f32 %v5851, %v5857
        %v5860 = vadd.f32 %v5852, %v5858
        %v5861 = vld [vmem:[%s5728] sm:$0xff]
        %v5862 = vld [vmem:[%s5728 + $0x8] sm:$0xff]
        %v5863 = vld [vmem:[%s5728 + $0x10] sm:$0xff]
        %v5864 = vld [vmem:[%s5728 + $0x18] sm:$0xff]
        %s5865 = sld [smem:[#allocation7 + $0x121]]
        %v5866 = vstv %s5865
        %v5867 = vmul.f32 %v5861, %v5866
        %v5868 = vmul.f32 %v5862, %v5866
        %v5869 = vmul.f32 %v5863, %v5866
        %v5870 = vmul.f32 %v5864, %v5866
        %5875 = vrot.lane.b32.xlu0 %v5867, 120
        %v5876 = vpop.permute.xlu0 %5875
        %5877 = vrot.lane.b32.xlu0 %v5868, 120
        %v5878 = vpop.permute.xlu0 %5877
        %5879 = vrot.lane.b32.xlu0 %v5869, 120
        %v5880 = vpop.permute.xlu0 %5879
        %5881 = vrot.lane.b32.xlu0 %v5870, 120
        %v5882 = vpop.permute.xlu0 %5881
        %v5883 = vsel %vm421, %v5876, %v5878
        %v5884 = vsel %vm421, %v5880, %v5882
        %v5887 = vadd.f32 %v5859, %v5883
        %v5888 = vadd.f32 %v5860, %v5884
        %s5889 = sld [smem:[#allocation7 + $0x122]]
        %v5890 = vstv %s5889
        %v5891 = vmul.f32 %v5861, %v5890
        %v5892 = vmul.f32 %v5862, %v5890
        %v5893 = vmul.f32 %v5863, %v5890
        %v5894 = vmul.f32 %v5864, %v5890
        %5899 = vrot.lane.b32.xlu0 %v5891, 112
        %v5900 = vpop.permute.xlu0 %5899
        %5901 = vrot.lane.b32.xlu0 %v5892, 112
        %v5902 = vpop.permute.xlu0 %5901
        %5903 = vrot.lane.b32.xlu0 %v5893, 112
        %v5904 = vpop.permute.xlu0 %5903
        %5905 = vrot.lane.b32.xlu0 %v5894, 112
        %v5906 = vpop.permute.xlu0 %5905
        %v5907 = vsel %vm446, %v5900, %v5902
        %v5908 = vsel %vm446, %v5904, %v5906
        %v5911 = vadd.f32 %v5887, %v5907
        %v5912 = vadd.f32 %v5888, %v5908
        %v5913 = vld [vmem:[#allocation4] sm:$0xfe]
        %v5914 = vld [vmem:[#allocation4 + $0x10] sm:$0xff]
        %v5915 = vld [vmem:[#allocation4 + $0x20] sm:$0x1]
        %s5916 = sld [smem:[#allocation7 + $0x111]]
        %v5917 = vstv %s5916
        %v5918 = vmul.f32 %v5913, %v5917
        %v5919 = vmul.f32 %v5914, %v5917
        %v5920 = vmul.f32 %v5915, %v5917
        %v5921 = vld [vmem:[#allocation4] sm:$0xfe]
        %v5922 = vld [vmem:[#allocation4 + $0x8] sm:$0xfe]
        %v5923 = vld [vmem:[#allocation4 + $0x10] sm:$0xff]
        %v5924 = vld [vmem:[#allocation4 + $0x18] sm:$0xff]
        %v5925 = vld [vmem:[#allocation4 + $0x20] sm:$0x1]
        %v5926 = vld [vmem:[#allocation4 + $0x28] sm:$0x1]
        %s5927 = sld [smem:[#allocation7 + $0x112]]
        %v5928 = vstv %s5927
        %v5929 = vmul.f32 %v5921, %v5928
        %v5930 = vmul.f32 %v5922, %v5928
        %v5931 = vmul.f32 %v5923, %v5928
        %v5932 = vmul.f32 %v5924, %v5928
        %v5933 = vmul.f32 %v5925, %v5928
        %v5934 = vmul.f32 %v5926, %v5928
        %5941 = vrot.lane.b32.xlu0 %v5929, 120
        %v5942 = vpop.permute.xlu0 %5941
        %5943 = vrot.lane.b32.xlu0 %v5930, 120
        %v5944 = vpop.permute.xlu0 %5943
        %5945 = vrot.lane.b32.xlu0 %v5931, 120
        %v5946 = vpop.permute.xlu0 %5945
        %5947 = vrot.lane.b32.xlu0 %v5932, 120
        %v5948 = vpop.permute.xlu0 %5947
        %5949 = vrot.lane.b32.xlu0 %v5933, 120
        %v5950 = vpop.permute.xlu0 %5949
        %5951 = vrot.lane.b32.xlu0 %v5934, 120
        %v5952 = vpop.permute.xlu0 %5951
        %v5953 = vsel %vm421, %v5942, %v5944
        %v5954 = vsel %vm421, %v5946, %v5948
        %v5955 = vsel %vm421, %v5950, %v5952
        %v5959 = vadd.f32 %v5918, %v5953
        %v5960 = vadd.f32 %v5919, %v5954
        %v5961 = vadd.f32 %v5920, %v5955
        %s5962 = sld [smem:[#allocation7 + $0x113]]
        %v5963 = vstv %s5962
        %v5964 = vmul.f32 %v5921, %v5963
        %v5965 = vmul.f32 %v5922, %v5963
        %v5966 = vmul.f32 %v5923, %v5963
        %v5967 = vmul.f32 %v5924, %v5963
        %v5968 = vmul.f32 %v5925, %v5963
        %v5969 = vmul.f32 %v5926, %v5963
        %5976 = vrot.lane.b32.xlu0 %v5964, 112
        %v5977 = vpop.permute.xlu0 %5976
        %5978 = vrot.lane.b32.xlu0 %v5965, 112
        %v5979 = vpop.permute.xlu0 %5978
        %5980 = vrot.lane.b32.xlu0 %v5966, 112
        %v5981 = vpop.permute.xlu0 %5980
        %5982 = vrot.lane.b32.xlu0 %v5967, 112
        %v5983 = vpop.permute.xlu0 %5982
        %5984 = vrot.lane.b32.xlu0 %v5968, 112
        %v5985 = vpop.permute.xlu0 %5984
        %5986 = vrot.lane.b32.xlu0 %v5969, 112
        %v5987 = vpop.permute.xlu0 %5986
        %v5988 = vsel %vm446, %v5977, %v5979
        %v5989 = vsel %vm446, %v5981, %v5983
        %v5990 = vsel %vm446, %v5985, %v5987
        %v5994 = vadd.f32 %v5959, %v5988
        %v5995 = vadd.f32 %v5960, %v5989
        %v5996 = vadd.f32 %v5961, %v5990
        %v5997 = vld [vmem:[%s4991] sm:$0xfe]
        %v5998 = vld [vmem:[%s4991 + $0x10] sm:$0xff]
        %v5999 = vld [vmem:[%s4991 + $0x20] sm:$0x1]
        %s6000 = sld [smem:[#allocation7 + $0x11a]]
        %v6001 = vstv %s6000
        %v6002 = vmul.f32 %v5997, %v6001
        %v6003 = vmul.f32 %v5998, %v6001
        %v6004 = vmul.f32 %v5999, %v6001
        %v6005 = vadd.f32 %v5994, %v6002
        %v6006 = vadd.f32 %v5995, %v6003
        %v6007 = vadd.f32 %v5996, %v6004
        %v6008 = vld [vmem:[%s4991] sm:$0xfe]
        %v6009 = vld [vmem:[%s4991 + $0x8] sm:$0xfe]
        %v6010 = vld [vmem:[%s4991 + $0x10] sm:$0xff]
        %v6011 = vld [vmem:[%s4991 + $0x18] sm:$0xff]
        %v6012 = vld [vmem:[%s4991 + $0x20] sm:$0x1]
        %v6013 = vld [vmem:[%s4991 + $0x28] sm:$0x1]
        %s6014 = sld [smem:[#allocation7 + $0x11b]]
        %v6015 = vstv %s6014
        %v6016 = vmul.f32 %v6008, %v6015
        %v6017 = vmul.f32 %v6009, %v6015
        %v6018 = vmul.f32 %v6010, %v6015
        %v6019 = vmul.f32 %v6011, %v6015
        %v6020 = vmul.f32 %v6012, %v6015
        %v6021 = vmul.f32 %v6013, %v6015
        %6028 = vrot.lane.b32.xlu0 %v6016, 120
        %v6029 = vpop.permute.xlu0 %6028
        %6030 = vrot.lane.b32.xlu0 %v6017, 120
        %v6031 = vpop.permute.xlu0 %6030
        %6032 = vrot.lane.b32.xlu0 %v6018, 120
        %v6033 = vpop.permute.xlu0 %6032
        %6034 = vrot.lane.b32.xlu0 %v6019, 120
        %v6035 = vpop.permute.xlu0 %6034
        %6036 = vrot.lane.b32.xlu0 %v6020, 120
        %v6037 = vpop.permute.xlu0 %6036
        %6038 = vrot.lane.b32.xlu0 %v6021, 120
        %v6039 = vpop.permute.xlu0 %6038
        %v6040 = vsel %vm421, %v6029, %v6031
        %v6041 = vsel %vm421, %v6033, %v6035
        %v6042 = vsel %vm421, %v6037, %v6039
        %v6046 = vadd.f32 %v6005, %v6040
        %v6047 = vadd.f32 %v6006, %v6041
        %v6048 = vadd.f32 %v6007, %v6042
        %s6049 = sld [smem:[#allocation7 + $0x11c]]
        %v6050 = vstv %s6049
        %v6051 = vmul.f32 %v6008, %v6050
        %v6052 = vmul.f32 %v6009, %v6050
        %v6053 = vmul.f32 %v6010, %v6050
        %v6054 = vmul.f32 %v6011, %v6050
        %v6055 = vmul.f32 %v6012, %v6050
        %v6056 = vmul.f32 %v6013, %v6050
        %6063 = vrot.lane.b32.xlu0 %v6051, 112
        %v6064 = vpop.permute.xlu0 %6063
        %6065 = vrot.lane.b32.xlu0 %v6052, 112
        %v6066 = vpop.permute.xlu0 %6065
        %6067 = vrot.lane.b32.xlu0 %v6053, 112
        %v6068 = vpop.permute.xlu0 %6067
        %6069 = vrot.lane.b32.xlu0 %v6054, 112
        %v6070 = vpop.permute.xlu0 %6069
        %6071 = vrot.lane.b32.xlu0 %v6055, 112
        %v6072 = vpop.permute.xlu0 %6071
        %6073 = vrot.lane.b32.xlu0 %v6056, 112
        %v6074 = vpop.permute.xlu0 %6073
        %v6075 = vsel %vm446, %v6064, %v6066
        %v6076 = vsel %vm446, %v6068, %v6070
        %v6077 = vsel %vm446, %v6072, %v6074
        %v6081 = vadd.f32 %v6046, %v6075
        %v6082 = vadd.f32 %v6047, %v6076
        %v6083 = vadd.f32 %v6048, %v6077
        %v6084 = vld [vmem:[%s5728] sm:$0xfe]
        %v6085 = vld [vmem:[%s5728 + $0x10] sm:$0xff]
        %v6086 = vld [vmem:[%s5728 + $0x20] sm:$0x1]
        %s6087 = sld [smem:[#allocation7 + $0x123]]
        %v6088 = vstv %s6087
        %v6089 = vmul.f32 %v6084, %v6088
        %v6090 = vmul.f32 %v6085, %v6088
        %v6091 = vmul.f32 %v6086, %v6088
        %v6092 = vadd.f32 %v6081, %v6089
        %v6093 = vadd.f32 %v6082, %v6090
        %v6094 = vadd.f32 %v6083, %v6091
        %v6095 = vld [vmem:[%s5728] sm:$0xfe]
        %v6096 = vld [vmem:[%s5728 + $0x8] sm:$0xfe]
        %v6097 = vld [vmem:[%s5728 + $0x10] sm:$0xff]
        %v6098 = vld [vmem:[%s5728 + $0x18] sm:$0xff]
        %v6099 = vld [vmem:[%s5728 + $0x20] sm:$0x1]
        %v6100 = vld [vmem:[%s5728 + $0x28] sm:$0x1]
        %s6101 = sld [smem:[#allocation7 + $0x124]]
        %v6102 = vstv %s6101
        %v6103 = vmul.f32 %v6095, %v6102
        %v6104 = vmul.f32 %v6096, %v6102
        %v6105 = vmul.f32 %v6097, %v6102
        %v6106 = vmul.f32 %v6098, %v6102
        %v6107 = vmul.f32 %v6099, %v6102
        %v6108 = vmul.f32 %v6100, %v6102
        %6115 = vrot.lane.b32.xlu0 %v6103, 120
        %v6116 = vpop.permute.xlu0 %6115
        %6117 = vrot.lane.b32.xlu0 %v6104, 120
        %v6118 = vpop.permute.xlu0 %6117
        %6119 = vrot.lane.b32.xlu0 %v6105, 120
        %v6120 = vpop.permute.xlu0 %6119
        %6121 = vrot.lane.b32.xlu0 %v6106, 120
        %v6122 = vpop.permute.xlu0 %6121
        %6123 = vrot.lane.b32.xlu0 %v6107, 120
        %v6124 = vpop.permute.xlu0 %6123
        %6125 = vrot.lane.b32.xlu0 %v6108, 120
        %v6126 = vpop.permute.xlu0 %6125
        %v6127 = vsel %vm421, %v6116, %v6118
        %v6128 = vsel %vm421, %v6120, %v6122
        %v6129 = vsel %vm421, %v6124, %v6126
        %v6133 = vadd.f32 %v6092, %v6127
        %v6134 = vadd.f32 %v6093, %v6128
        %v6135 = vadd.f32 %v6094, %v6129
        %s6136 = sld [smem:[#allocation7 + $0x125]]
        %v6137 = vstv %s6136
        %v6138 = vmul.f32 %v6095, %v6137
        %v6139 = vmul.f32 %v6096, %v6137
        %v6140 = vmul.f32 %v6097, %v6137
        %v6141 = vmul.f32 %v6098, %v6137
        %v6142 = vmul.f32 %v6099, %v6137
        %v6143 = vmul.f32 %v6100, %v6137
        %6150 = vrot.lane.b32.xlu0 %v6138, 112
        %v6151 = vpop.permute.xlu0 %6150
        %6152 = vrot.lane.b32.xlu0 %v6139, 112
        %v6153 = vpop.permute.xlu0 %6152
        %6154 = vrot.lane.b32.xlu0 %v6140, 112
        %v6155 = vpop.permute.xlu0 %6154
        %6156 = vrot.lane.b32.xlu0 %v6141, 112
        %v6157 = vpop.permute.xlu0 %6156
        %6158 = vrot.lane.b32.xlu0 %v6142, 112
        %v6159 = vpop.permute.xlu0 %6158
        %6160 = vrot.lane.b32.xlu0 %v6143, 112
        %v6161 = vpop.permute.xlu0 %6160
        %v6162 = vsel %vm446, %v6151, %v6153
        %v6163 = vsel %vm446, %v6155, %v6157
        %v6164 = vsel %vm446, %v6159, %v6161
        %v6168 = vadd.f32 %v6133, %v6162
        %v6169 = vadd.f32 %v6134, %v6163
        %v6170 = vadd.f32 %v6135, %v6164
        %v6171 = vld [vmem:[#allocation4] sm:$0xfc]
        %v6172 = vld [vmem:[#allocation4 + $0x20] sm:$0x3]
        %s6173 = sld [smem:[#allocation7 + $0x114]]
        %v6174 = vstv %s6173
        %v6175 = vmul.f32 %v6171, %v6174
        %v6176 = vmul.f32 %v5914, %v6174
        %v6177 = vmul.f32 %v6172, %v6174
        %v6178 = vld [vmem:[#allocation4] sm:$0xfc]
        %v6179 = vld [vmem:[#allocation4 + $0x8] sm:$0xfc]
        %v6180 = vld [vmem:[#allocation4 + $0x20] sm:$0x3]
        %v6181 = vld [vmem:[#allocation4 + $0x28] sm:$0x3]
        %s6182 = sld [smem:[#allocation7 + $0x115]]
        %v6183 = vstv %s6182
        %v6184 = vmul.f32 %v6178, %v6183
        %v6185 = vmul.f32 %v6179, %v6183
        %v6186 = vmul.f32 %v5923, %v6183
        %v6187 = vmul.f32 %v5924, %v6183
        %v6188 = vmul.f32 %v6180, %v6183
        %v6189 = vmul.f32 %v6181, %v6183
        %6196 = vrot.lane.b32.xlu0 %v6184, 120
        %v6197 = vpop.permute.xlu0 %6196
        %6198 = vrot.lane.b32.xlu0 %v6185, 120
        %v6199 = vpop.permute.xlu0 %6198
        %6200 = vrot.lane.b32.xlu0 %v6186, 120
        %v6201 = vpop.permute.xlu0 %6200
        %6202 = vrot.lane.b32.xlu0 %v6187, 120
        %v6203 = vpop.permute.xlu0 %6202
        %6204 = vrot.lane.b32.xlu0 %v6188, 120
        %v6205 = vpop.permute.xlu0 %6204
        %6206 = vrot.lane.b32.xlu0 %v6189, 120
        %v6207 = vpop.permute.xlu0 %6206
        %v6208 = vsel %vm421, %v6197, %v6199
        %v6209 = vsel %vm421, %v6201, %v6203
        %v6210 = vsel %vm421, %v6205, %v6207
        %v6214 = vadd.f32 %v6175, %v6208
        %v6215 = vadd.f32 %v6176, %v6209
        %v6216 = vadd.f32 %v6177, %v6210
        %s6217 = sld [smem:[#allocation7 + $0x116]]
        %v6218 = vstv %s6217
        %v6219 = vmul.f32 %v6178, %v6218
        %v6220 = vmul.f32 %v6179, %v6218
        %v6221 = vmul.f32 %v5923, %v6218
        %v6222 = vmul.f32 %v5924, %v6218
        %v6223 = vmul.f32 %v6180, %v6218
        %v6224 = vmul.f32 %v6181, %v6218
        %6231 = vrot.lane.b32.xlu0 %v6219, 112
        %v6232 = vpop.permute.xlu0 %6231
        %6233 = vrot.lane.b32.xlu0 %v6220, 112
        %v6234 = vpop.permute.xlu0 %6233
        %6235 = vrot.lane.b32.xlu0 %v6221, 112
        %v6236 = vpop.permute.xlu0 %6235
        %6237 = vrot.lane.b32.xlu0 %v6222, 112
        %v6238 = vpop.permute.xlu0 %6237
        %6239 = vrot.lane.b32.xlu0 %v6223, 112
        %v6240 = vpop.permute.xlu0 %6239
        %6241 = vrot.lane.b32.xlu0 %v6224, 112
        %v6242 = vpop.permute.xlu0 %6241
        %v6243 = vsel %vm446, %v6232, %v6234
        %v6244 = vsel %vm446, %v6236, %v6238
        %v6245 = vsel %vm446, %v6240, %v6242
        %v6249 = vadd.f32 %v6214, %v6243
        %v6250 = vadd.f32 %v6215, %v6244
        %v6251 = vadd.f32 %v6216, %v6245
        %v6252 = vld [vmem:[%s4991] sm:$0xfc]
        %v6253 = vld [vmem:[%s4991 + $0x20] sm:$0x3]
        %s6254 = sld [smem:[#allocation7 + $0x11d]]
        %v6255 = vstv %s6254
        %v6256 = vmul.f32 %v6252, %v6255
        %v6257 = vmul.f32 %v5998, %v6255
        %v6258 = vmul.f32 %v6253, %v6255
        %v6259 = vadd.f32 %v6249, %v6256
        %v6260 = vadd.f32 %v6250, %v6257
        %v6261 = vadd.f32 %v6251, %v6258
        %v6262 = vld [vmem:[%s4991] sm:$0xfc]
        %v6263 = vld [vmem:[%s4991 + $0x8] sm:$0xfc]
        %v6264 = vld [vmem:[%s4991 + $0x20] sm:$0x3]
        %v6265 = vld [vmem:[%s4991 + $0x28] sm:$0x3]
        %s6266 = sld [smem:[#allocation7 + $0x11e]]
        %v6267 = vstv %s6266
        %v6268 = vmul.f32 %v6262, %v6267
        %v6269 = vmul.f32 %v6263, %v6267
        %v6270 = vmul.f32 %v6010, %v6267
        %v6271 = vmul.f32 %v6011, %v6267
        %v6272 = vmul.f32 %v6264, %v6267
        %v6273 = vmul.f32 %v6265, %v6267
        %6280 = vrot.lane.b32.xlu0 %v6268, 120
        %v6281 = vpop.permute.xlu0 %6280
        %6282 = vrot.lane.b32.xlu0 %v6269, 120
        %v6283 = vpop.permute.xlu0 %6282
        %6284 = vrot.lane.b32.xlu0 %v6270, 120
        %v6285 = vpop.permute.xlu0 %6284
        %6286 = vrot.lane.b32.xlu0 %v6271, 120
        %v6287 = vpop.permute.xlu0 %6286
        %6288 = vrot.lane.b32.xlu0 %v6272, 120
        %v6289 = vpop.permute.xlu0 %6288
        %6290 = vrot.lane.b32.xlu0 %v6273, 120
        %v6291 = vpop.permute.xlu0 %6290
        %v6292 = vsel %vm421, %v6281, %v6283
        %v6293 = vsel %vm421, %v6285, %v6287
        %v6294 = vsel %vm421, %v6289, %v6291
        %v6298 = vadd.f32 %v6259, %v6292
        %v6299 = vadd.f32 %v6260, %v6293
        %v6300 = vadd.f32 %v6261, %v6294
        %s6301 = sld [smem:[#allocation7 + $0x11f]]
        %v6302 = vstv %s6301
        %v6303 = vmul.f32 %v6262, %v6302
        %v6304 = vmul.f32 %v6263, %v6302
        %v6305 = vmul.f32 %v6010, %v6302
        %v6306 = vmul.f32 %v6011, %v6302
        %v6307 = vmul.f32 %v6264, %v6302
        %v6308 = vmul.f32 %v6265, %v6302
        %6315 = vrot.lane.b32.xlu0 %v6303, 112
        %v6316 = vpop.permute.xlu0 %6315
        %6317 = vrot.lane.b32.xlu0 %v6304, 112
        %v6318 = vpop.permute.xlu0 %6317
        %6319 = vrot.lane.b32.xlu0 %v6305, 112
        %v6320 = vpop.permute.xlu0 %6319
        %6321 = vrot.lane.b32.xlu0 %v6306, 112
        %v6322 = vpop.permute.xlu0 %6321
        %6323 = vrot.lane.b32.xlu0 %v6307, 112
        %v6324 = vpop.permute.xlu0 %6323
        %6325 = vrot.lane.b32.xlu0 %v6308, 112
        %v6326 = vpop.permute.xlu0 %6325
        %v6327 = vsel %vm446, %v6316, %v6318
        %v6328 = vsel %vm446, %v6320, %v6322
        %v6329 = vsel %vm446, %v6324, %v6326
        %v6333 = vadd.f32 %v6298, %v6327
        %v6334 = vadd.f32 %v6299, %v6328
        %v6335 = vadd.f32 %v6300, %v6329
        %v6336 = vld [vmem:[%s5728] sm:$0xfc]
        %v6337 = vld [vmem:[%s5728 + $0x20] sm:$0x3]
        %s6338 = sld [smem:[#allocation7 + $0x126]]
        %v6339 = vstv %s6338
        %v6340 = vmul.f32 %v6336, %v6339
        %v6341 = vmul.f32 %v6085, %v6339
        %v6342 = vmul.f32 %v6337, %v6339
        %v6343 = vadd.f32 %v6333, %v6340
        %v6344 = vadd.f32 %v6334, %v6341
        %v6345 = vadd.f32 %v6335, %v6342
        %v6346 = vld [vmem:[%s5728] sm:$0xfc]
        %v6347 = vld [vmem:[%s5728 + $0x8] sm:$0xfc]
        %v6348 = vld [vmem:[%s5728 + $0x20] sm:$0x3]
        %v6349 = vld [vmem:[%s5728 + $0x28] sm:$0x3]
        %s6350 = sld [smem:[#allocation7 + $0x127]]
        %v6351 = vstv %s6350
        %v6352 = vmul.f32 %v6346, %v6351
        %v6353 = vmul.f32 %v6347, %v6351
        %v6354 = vmul.f32 %v6097, %v6351
        %v6355 = vmul.f32 %v6098, %v6351
        %v6356 = vmul.f32 %v6348, %v6351
        %v6357 = vmul.f32 %v6349, %v6351
        %6364 = vrot.lane.b32.xlu0 %v6352, 120
        %v6365 = vpop.permute.xlu0 %6364
        %6366 = vrot.lane.b32.xlu0 %v6353, 120
        %v6367 = vpop.permute.xlu0 %6366
        %6368 = vrot.lane.b32.xlu0 %v6354, 120
        %v6369 = vpop.permute.xlu0 %6368
        %6370 = vrot.lane.b32.xlu0 %v6355, 120
        %v6371 = vpop.permute.xlu0 %6370
        %6372 = vrot.lane.b32.xlu0 %v6356, 120
        %v6373 = vpop.permute.xlu0 %6372
        %6374 = vrot.lane.b32.xlu0 %v6357, 120
        %v6375 = vpop.permute.xlu0 %6374
        %v6376 = vsel %vm421, %v6365, %v6367
        %v6377 = vsel %vm421, %v6369, %v6371
        %v6378 = vsel %vm421, %v6373, %v6375
        %v6382 = vadd.f32 %v6343, %v6376
        %v6383 = vadd.f32 %v6344, %v6377
        %v6384 = vadd.f32 %v6345, %v6378
        %s6385 = sld [smem:[#allocation7 + $0x128]]
        %v6386 = vstv %s6385
        %v6387 = vmul.f32 %v6346, %v6386
        %v6388 = vmul.f32 %v6347, %v6386
        %v6389 = vmul.f32 %v6097, %v6386
        %v6390 = vmul.f32 %v6098, %v6386
        %v6391 = vmul.f32 %v6348, %v6386
        %v6392 = vmul.f32 %v6349, %v6386
        %6399 = vrot.lane.b32.xlu0 %v6387, 112
        %v6400 = vpop.permute.xlu0 %6399
        %6401 = vrot.lane.b32.xlu0 %v6388, 112
        %v6402 = vpop.permute.xlu0 %6401
        %6403 = vrot.lane.b32.xlu0 %v6389, 112
        %v6404 = vpop.permute.xlu0 %6403
        %6405 = vrot.lane.b32.xlu0 %v6390, 112
        %v6406 = vpop.permute.xlu0 %6405
        %6407 = vrot.lane.b32.xlu0 %v6391, 112
        %v6408 = vpop.permute.xlu0 %6407
        %6409 = vrot.lane.b32.xlu0 %v6392, 112
        %v6410 = vpop.permute.xlu0 %6409
        %v6411 = vsel %vm446, %v6400, %v6402
        %v6412 = vsel %vm446, %v6404, %v6406
        %v6413 = vsel %vm446, %v6408, %v6410
        %v6417 = vadd.f32 %v6382, %v6411
        %v6418 = vadd.f32 %v6383, %v6412
        %v6419 = vadd.f32 %v6384, %v6413
        %v6423 = vrot.slane %v6168, 1
        %v6424 = vrot.slane %v6169, 1
        %v6425 = vsel %vm621, %v6423, %v6424
        %v6426 = vrot.slane %v6170, 1
        %v6427 = vsel %vm621, %v6424, %v6426
        %v6430 = vadd.f32 %v5911, %v6425
        %v6431 = vadd.f32 %v5912, %v6427
        %s6432 = sld [smem:[#allocation9 + $0xc]]
        %v6433 = vstv %s6432
        %v6434 = vadd.f32 %v6417, %v6433
        %v6435 = vadd.f32 %v6418, %v6433
        %v6436 = vadd.f32 %v6419, %v6433
        %v6440 = vrot.slane %v6434, 2
        %v6441 = vrot.slane %v6435, 2
        %v6442 = vsel %vm639, %v6440, %v6441
        %v6443 = vrot.slane %v6436, 2
        %v6444 = vsel %vm639, %v6441, %v6443
        %v6447 = vadd.f32 %v6430, %v6442
        %v6448 = vadd.f32 %v6431, %v6444
        %v6449 = vtanh.pop %v6447
        %v6450 = vtanh.pop %v6448
        %6451 = vst [vmem:[%s305] sm:$0xff] %v6449
        %6452 = vst [vmem:[%s305 + $0x8] sm:$0xff] %v6450
        %p6453 = scmp.lt.s32.totalorder %s20, 1
        %s6454 = scalar_select %p6453, %s20, 1
        %s6455 = smul.addr %s6454, 2
        %s6456 = smul.addr %s6455, 8
        %s6457 = scalar_lea.vmem %s7, %s6456
        // Predicated region
        $region57: #{defensive_model1_forward.1} parent=47 // pred_check
          %p6458 = pneg %p190
        $region58: #{defensive_model1_forward.1} parent=47 // pred_check_branch
          %6460 = sbr.rel (%p6458) target = $region60
        $region59: #{defensive_model1_forward.1} parent=47 // pred_region
          _
        $region60: #{defensive_model1_forward.1} parent=47 // pred_fallthru
          _
      $region48: #{defensive_model1_forward.1} parent=5 // pred_fallthru
        _
      %p6461 = scmp.le.s32.totalorder 2, %s15
      // Predicated region
      $region61: #{defensive_model1_forward.1} parent=5 // pred_check
        %p6462 = pneg %p6461
      $region62: #{defensive_model1_forward.1} parent=5 // pred_check_branch
        %6464 = sbr.rel (%p6462) target = $region64
      $region63: #{defensive_model1_forward.1} parent=5 // pred_region
        %s6465 = ssub.s32 %s15, 2
        // Predicated region
        $region65: #{defensive_model1_forward.1} parent=63 // pred_check
          %p6466 = pneg %p196
        $region66: #{defensive_model1_forward.1} parent=63 // pred_check_branch
          %6468 = sbr.rel (%p6466) target = $region68
        $region67: #{defensive_model1_forward.1} parent=63 // pred_region
          %p6469 = scmp.lt.s32.totalorder %s21, 1
          %s6470 = scalar_select %p6469, %s21, 1
          %s6471 = smul.addr %s6470, 2
          %s6472 = smul.addr %s6471, 8
          %s6473 = scalar_lea.vmem %s7, %s6472
        $region68: #{defensive_model1_forward.1} parent=63 // pred_fallthru
          _
      $region64: #{defensive_model1_forward.1} parent=5 // pred_fallthru
        _
    $region6: #{defensive_model1_forward.1} parent=1 // loop_footer
      %s19 = sadd.s32 1, %s15
    $region7: #{defensive_model1_forward.1} parent=1 // loop_footer_branch
      %14 = sbr.rel target = $region3
    $region8: #{defensive_model1_forward.1} parent=1 // loop_exit
      _
    %6474 = vsyncpa [#allocation8], 1
    %s6475 = scalar_lea.sflag [#allocation8], 1
    %6476 = vsyncpa %s6475, 1
    %6477 = vsyncpa [#allocation10], 1

</llo_original>
